<compile_context>
chip_gen: v7x
topology: tpu7x:2x2x1
jax: 0.10.0
libtpu: 0.0.40
codegen_flags: <defaults>
</compile_context>

<pallas_src>
import jax
import jax.numpy as jnp
from jax import lax
from jax.experimental import pallas as pl
from jax.experimental.pallas import tpu as pltpu

# Keep kernel and pure-JAX reference matmuls at full f32 precision so the
# correctness comparison is tight and deterministic.
jax.config.update("jax_default_matmul_precision", "highest")

OUT_PAD = 128  # lane-dense padded output width; wrapper slices back to 1


# ----------------------------------------------------------------------------
# Fused kernel: one-hot embedding gather + NUM_BLOCKS transformer blocks +
#               mean-pool + final fc
# ----------------------------------------------------------------------------
def fused_transformer_kernel(tok_ref,                       # SMEM (N, T) int32 (scalar prefetch)
                             emb_ref,                       # VMEM (VOCAB, D) f32
                             wqkv_ref, bqkv_ref,            # (L, D, 3D), (L, 1, 3D)
                             g1_ref, be1_ref,               # (L, T, D) x2
                             w1_ref, b1_ref, w2_ref, b2_ref,
                             g2_ref, be2_ref,
                             wf_ref, bf_ref,                # (1, D), (1, 1)
                             o_ref):                        # VMEM (1, 1, OUT_PAD)
    i = pl.program_id(0)            # batch element handled by this grid step
    VOCAB, D = emb_ref.shape
    L, T, _ = g1_ref.shape
    eps = jnp.float32(1e-8)

    # --- embedding gather as a one-hot MXU matmul ----------------------------
    # Build a (T, 1) column of token ids from SMEM scalars via tiny selects,
    # compare against a lane-iota to get the (T, VOCAB) one-hot, then matmul.
    sub_iota = lax.broadcasted_iota(jnp.int32, (T, 1), 0)
    tok_col = jnp.zeros((T, 1), jnp.int32)
    for t in range(T):                                   # static unroll (T=8)
        tok_col = jnp.where(sub_iota == t, tok_ref[i, t], tok_col)
    vocab_iota = lax.broadcasted_iota(jnp.int32, (T, VOCAB), 1)
    onehot = (tok_col == vocab_iota).astype(jnp.float32)              # (T, VOCAB)
    x = jnp.dot(onehot, emb_ref[...], preferred_element_type=jnp.float32)  # (T, D)

    # --- transformer blocks, fully unrolled, weights stay VMEM-resident ------
    for b in range(L):
        # fused QKV projection; 1/sqrt(d) already folded into the Q slice
        qkv = (jnp.dot(x, wqkv_ref[b], preferred_element_type=jnp.float32)
               + bqkv_ref[b])                                          # (T, 3D)
        q = qkv[:, 0:D]
        k = qkv[:, D:2 * D]
        v = qkv[:, 2 * D:3 * D]

        # contract last dims of q and k directly -> no explicit k.T relayout
        scores = lax.dot_general(q, k,
                                 dimension_numbers=(((1,), (1,)), ((), ())),
                                 preferred_element_type=jnp.float32)   # (T, T)
        m = jnp.max(scores, axis=-1, keepdims=True)
        e = jnp.exp(scores - m)
        attn = e * pl.reciprocal(jnp.sum(e, axis=-1, keepdims=True), approx=True)
        att_out = jnp.dot(attn, v, preferred_element_type=jnp.float32)  # (T, D)

        # TODO(synk): nn.Dropout(0.1) is stochastic; identity here (eval behavior).
        x1 = att_out + x

        # MyLayerNorm #1: one-pass stats over the whole (T*d) slab of this example
        mu1 = jnp.mean(x1)
        var1 = jnp.mean(x1 * x1) - mu1 * mu1
        x1n = g1_ref[b] * ((x1 - mu1) * lax.rsqrt(var1 + eps)) + be1_ref[b]

        # feed-forward
        h = jnp.maximum(
            jnp.dot(x1n, w1_ref[b], preferred_element_type=jnp.float32) + b1_ref[b],
            0.0)
        ff = jnp.dot(h, w2_ref[b], preferred_element_type=jnp.float32) + b2_ref[b]
        x2 = ff + x1n

        # MyLayerNorm #2: one-pass stats
        mu2 = jnp.mean(x2)
        var2 = jnp.mean(x2 * x2) - mu2 * mu2
        x = g2_ref[b] * ((x2 - mu2) * lax.rsqrt(var2 + eps)) + be2_ref[b]

    # --- pool (1/T folded into wf) + Linear(d -> 1), lane-dense padded output
    pooled = jnp.sum(x, axis=0, keepdims=True)                                # (1, D)
    val = jnp.sum(pooled * wf_ref[...], axis=-1, keepdims=True) + bf_ref[...]  # (1, 1)
    o_ref[...] = jnp.broadcast_to(val, (1, 1, OUT_PAD))


# ----------------------------------------------------------------------------
# Wrapper
# ----------------------------------------------------------------------------
def my_transformer_forward(token_ids, emb_table, block_params, wf, bf):
    N, T = token_ids.shape
    VOCAB, D = emb_table.shape

    # Stack per-block weights to (L, ...) so the whole model is one pallas_call.
    stacks = [jnp.stack([bp[j] for bp in block_params], axis=0) for j in range(14)]
    (wq_s, bq_s, wk_s, bk_s, wv_s, bv_s,
     g1_s, be1_s, w1_s, b1_s, w2_s, b2_s, g2_s, be2_s) = stacks

    # Fold the 1/sqrt(d) attention scale into WQ / bQ, then fuse Q/K/V into one
    # (L, D, 3D) weight and one (L, 1, 3D) bias (one-time weight transforms).
    scale = jnp.float32(1.0) / jnp.sqrt(jnp.float32(D))
    wqkv_s = jnp.concatenate([wq_s * scale, wk_s, wv_s], axis=-1)   # (L, D, 3D)
    bqkv_s = jnp.concatenate([bq_s * scale, bk_s, bv_s], axis=-1)   # (L, 1, 3D)

    emb_f32 = emb_table.astype(jnp.float32)                          # natural (VOCAB, D)
    # Fold the 1/T mean-pool into the final fc weight; pool becomes a sum.
    wf_t = (wf.reshape(1, D) / jnp.float32(T)).astype(jnp.float32)
    bf_m = bf.reshape(1, 1).astype(jnp.float32)

    def full_spec(shape):
        return pl.BlockSpec(shape, lambda *_, n=len(shape): (0,) * n)

    weight_arrays = [wqkv_s, bqkv_s,
                     g1_s, be1_s, w1_s, b1_s, w2_s, b2_s, g2_s, be2_s]

    in_specs = [full_spec(emb_f32.shape)]
    in_specs += [full_spec(w.shape) for w in weight_arrays]
    in_specs += [full_spec(wf_t.shape), full_spec(bf_m.shape)]

    out_padded = pl.pallas_call(
        fused_transformer_kernel,
        out_shape=jax.ShapeDtypeStruct((N, 1, OUT_PAD), jnp.float32),
        grid_spec=pltpu.PrefetchScalarGridSpec(
            num_scalar_prefetch=1,                 # token_ids -> SMEM
            grid=(N,),
            in_specs=in_specs,
            out_specs=pl.BlockSpec((1, 1, OUT_PAD), lambda i, tok: (i, 0, 0)),
        ),
        compiler_params=pltpu.CompilerParams(dimension_semantics=("parallel",)),
    )(token_ids, emb_f32, *weight_arrays, wf_t, bf_m)

    return out_padded[:, 0, :1]                    # (N, 1)


# ----------------------------------------------------------------------------
# Pure-JAX reference (for correctness check)
# ----------------------------------------------------------------------------
def reference_forward(token_ids, emb_table, block_params, wf, bf):
    x = jnp.take(emb_table, token_ids, axis=0).astype(jnp.float32)
    eps = 1e-8
    d = x.shape[-1]
    for (wq, bq, wk, bk, wv, bv, g1, be1, w1, b1, w2, b2, g2, be2) in block_params:
        q = x @ wq + bq
        k = x @ wk + bk
        v = x @ wv + bv
        s = jnp.einsum('ntd,nsd->nts', q, k) / jnp.sqrt(jnp.float32(d))
        a = jax.nn.softmax(s, axis=-1)
        att = jnp.einsum('nts,nsd->ntd', a, v)
        x1 = att + x
        flat = x1.reshape(x1.shape[0], -1)
        mu = flat.mean(axis=1, keepdims=True)
        var = ((flat - mu) ** 2).mean(axis=1, keepdims=True)
        x1n = (g1 * ((flat - mu) / jnp.sqrt(var + eps)).reshape(x1.shape)) + be1
        h = jax.nn.relu(x1n @ w1 + b1)
        ff = h @ w2 + b2
        x2 = ff + x1n
        flat2 = x2.reshape(x2.shape[0], -1)
        mu2 = flat2.mean(axis=1, keepdims=True)
        var2 = ((flat2 - mu2) ** 2).mean(axis=1, keepdims=True)
        x = (g2 * ((flat2 - mu2) / jnp.sqrt(var2 + eps)).reshape(x2.shape)) + be2
    pooled = x.mean(axis=1)
    return pooled @ wf + bf


# ----------------------------------------------------------------------------
# Main
# ----------------------------------------------------------------------------
if __name__ == "__main__":
    N, T, D = 2, 8, 32          # batch, max_len (seq), embedding dim
    VOCAB = 50
    NUM_BLOCKS = 2

    key = jax.random.PRNGKey(0)
    keys = jax.random.split(key, 64)
    ki = iter(keys)

    emb_table = jax.random.normal(next(ki), (VOCAB, D), dtype=jnp.float32) * 0.5

    def make_block_params():
        scale = 1.0 / jnp.sqrt(jnp.float32(D))
        wq = jax.random.normal(next(ki), (D, D), jnp.float32) * scale
        bq = jax.random.normal(next(ki), (1, D), jnp.float32) * 0.01
        wk = jax.random.normal(next(ki), (D, D), jnp.float32) * scale
        bk = jax.random.normal(next(ki), (1, D), jnp.float32) * 0.01
        wv = jax.random.normal(next(ki), (D, D), jnp.float32) * scale
        bv = jax.random.normal(next(ki), (1, D), jnp.float32) * 0.01
        g1 = 1.0 + 0.1 * jax.random.normal(next(ki), (T, D), jnp.float32)
        be1 = 0.01 * jax.random.normal(next(ki), (T, D), jnp.float32)
        w1 = jax.random.normal(next(ki), (D, D), jnp.float32) * scale
        b1 = jax.random.normal(next(ki), (1, D), jnp.float32) * 0.01
        w2 = jax.random.normal(next(ki), (D, D), jnp.float32) * scale
        b2 = jax.random.normal(next(ki), (1, D), jnp.float32) * 0.01
        g2 = 1.0 + 0.1 * jax.random.normal(next(ki), (T, D), jnp.float32)
        be2 = 0.01 * jax.random.normal(next(ki), (T, D), jnp.float32)
        return (wq, bq, wk, bk, wv, bv, g1, be1, w1, b1, w2, b2, g2, be2)

    block_params = [make_block_params() for _ in range(NUM_BLOCKS)]
    wf = jax.random.normal(next(ki), (D, 1), jnp.float32) * (1.0 / jnp.sqrt(jnp.float32(D)))
    bf = jax.random.normal(next(ki), (1, 1), jnp.float32) * 0.01

    token_ids = jax.random.randint(next(ki), (N, T), 0, VOCAB, dtype=jnp.int32)

    out = jax.block_until_ready(
        my_transformer_forward(token_ids, emb_table, block_params, wf, bf))
    ref = jax.block_until_ready(
        reference_forward(token_ids, emb_table, block_params, wf, bf))

    assert out.shape == (N, 1), out.shape
    assert jnp.allclose(out, ref, atol=1e-3, rtol=1e-3), (out, ref)

    print("KERNEL_OK")
</pallas_src>

<mosaic_0001>
module attributes {stable_mosaic.version = 11 : i64} {
  func.func @fused_transformer_kernel(%arg0: i32, %arg1: memref<2x8xi32, #tpu.memory_space<smem>>, %arg2: memref<50x32xf32, #tpu.memory_space<vmem>>, %arg3: memref<2x32x96xf32, #tpu.memory_space<vmem>>, %arg4: memref<2x1x96xf32, #tpu.memory_space<vmem>>, %arg5: memref<2x8x32xf32, #tpu.memory_space<vmem>>, %arg6: memref<2x8x32xf32, #tpu.memory_space<vmem>>, %arg7: memref<2x32x32xf32, #tpu.memory_space<vmem>>, %arg8: memref<2x1x32xf32, #tpu.memory_space<vmem>>, %arg9: memref<2x32x32xf32, #tpu.memory_space<vmem>>, %arg10: memref<2x1x32xf32, #tpu.memory_space<vmem>>, %arg11: memref<2x8x32xf32, #tpu.memory_space<vmem>>, %arg12: memref<2x8x32xf32, #tpu.memory_space<vmem>>, %arg13: memref<1x32xf32, #tpu.memory_space<vmem>>, %arg14: memref<1x1xf32, #tpu.memory_space<vmem>>, %arg15: memref<1x1x128xf32, #tpu.memory_space<vmem>>) attributes {dimension_semantics = [#tpu.dimension_semantics<parallel>], iteration_bounds = array<i64: 2>, scalar_prefetch = 1 : i64, scratch_operands = 0 : i64, tpu.core_type = #tpu.core_type<tc>, window_params = [{pipeline_mode = #tpu.pipeline_mode<synchronous>, transform_indices = @transform_0, window_bounds = array<i64: 50, 32>}, {pipeline_mode = #tpu.pipeline_mode<synchronous>, transform_indices = @transform_1, window_bounds = array<i64: 2, 32, 96>}, {pipeline_mode = #tpu.pipeline_mode<synchronous>, transform_indices = @transform_2, window_bounds = array<i64: 2, 1, 96>}, {pipeline_mode = #tpu.pipeline_mode<synchronous>, transform_indices = @transform_3, window_bounds = array<i64: 2, 8, 32>}, {pipeline_mode = #tpu.pipeline_mode<synchronous>, transform_indices = @transform_4, window_bounds = array<i64: 2, 8, 32>}, {pipeline_mode = #tpu.pipeline_mode<synchronous>, transform_indices = @transform_5, window_bounds = array<i64: 2, 32, 32>}, {pipeline_mode = #tpu.pipeline_mode<synchronous>, transform_indices = @transform_6, window_bounds = array<i64: 2, 1, 32>}, {pipeline_mode = #tpu.pipeline_mode<synchronous>, transform_indices = @transform_7, window_bounds = array<i64: 2, 32, 32>}, {pipeline_mode = #tpu.pipeline_mode<synchronous>, transform_indices = @transform_8, window_bounds = array<i64: 2, 1, 32>}, {pipeline_mode = #tpu.pipeline_mode<synchronous>, transform_indices = @transform_9, window_bounds = array<i64: 2, 8, 32>}, {pipeline_mode = #tpu.pipeline_mode<synchronous>, transform_indices = @transform_10, window_bounds = array<i64: 2, 8, 32>}, {pipeline_mode = #tpu.pipeline_mode<synchronous>, transform_indices = @transform_11, window_bounds = array<i64: 1, 32>}, {pipeline_mode = #tpu.pipeline_mode<synchronous>, transform_indices = @transform_12, window_bounds = array<i64: 1, 1>}, {transform_indices = @transform_13, window_bounds = array<i64: 1, 1, 128>}]} {
    %0 = tpu.iota {dimensions = array<i32: 0>} : vector<8x1xi32>
    %c0_i32 = arith.constant 0 : i32
    %1 = vector.broadcast %c0_i32 : i32 to vector<8x1xi32>
    %c0_i32_0 = arith.constant 0 : i32
    %2 = vector.broadcast %c0_i32_0 : i32 to vector<8x1xi32>
    %3 = arith.cmpi eq, %0, %2 : vector<8x1xi32>
    %4 = arith.index_cast %arg0 : i32 to index
    %c0 = arith.constant 0 : index
    %5 = memref.load %arg1[%4, %c0] : memref<2x8xi32, #tpu.memory_space<smem>>
    %6 = vector.broadcast %5 : i32 to vector<8x1xi32>
    %7 = arith.select %3, %6, %1 : vector<8x1xi1>, vector<8x1xi32>
    %c1_i32 = arith.constant 1 : i32
    %8 = vector.broadcast %c1_i32 : i32 to vector<8x1xi32>
    %9 = arith.cmpi eq, %0, %8 : vector<8x1xi32>
    %10 = arith.index_cast %arg0 : i32 to index
    %c1 = arith.constant 1 : index
    %11 = memref.load %arg1[%10, %c1] : memref<2x8xi32, #tpu.memory_space<smem>>
    %12 = vector.broadcast %11 : i32 to vector<8x1xi32>
    %13 = arith.select %9, %12, %7 : vector<8x1xi1>, vector<8x1xi32>
    %c2_i32 = arith.constant 2 : i32
    %14 = vector.broadcast %c2_i32 : i32 to vector<8x1xi32>
    %15 = arith.cmpi eq, %0, %14 : vector<8x1xi32>
    %16 = arith.index_cast %arg0 : i32 to index
    %c2 = arith.constant 2 : index
    %17 = memref.load %arg1[%16, %c2] : memref<2x8xi32, #tpu.memory_space<smem>>
    %18 = vector.broadcast %17 : i32 to vector<8x1xi32>
    %19 = arith.select %15, %18, %13 : vector<8x1xi1>, vector<8x1xi32>
    %c3_i32 = arith.constant 3 : i32
    %20 = vector.broadcast %c3_i32 : i32 to vector<8x1xi32>
    %21 = arith.cmpi eq, %0, %20 : vector<8x1xi32>
    %22 = arith.index_cast %arg0 : i32 to index
    %c3 = arith.constant 3 : index
    %23 = memref.load %arg1[%22, %c3] : memref<2x8xi32, #tpu.memory_space<smem>>
    %24 = vector.broadcast %23 : i32 to vector<8x1xi32>
    %25 = arith.select %21, %24, %19 : vector<8x1xi1>, vector<8x1xi32>
    %c4_i32 = arith.constant 4 : i32
    %26 = vector.broadcast %c4_i32 : i32 to vector<8x1xi32>
    %27 = arith.cmpi eq, %0, %26 : vector<8x1xi32>
    %28 = arith.index_cast %arg0 : i32 to index
    %c4 = arith.constant 4 : index
    %29 = memref.load %arg1[%28, %c4] : memref<2x8xi32, #tpu.memory_space<smem>>
    %30 = vector.broadcast %29 : i32 to vector<8x1xi32>
    %31 = arith.select %27, %30, %25 : vector<8x1xi1>, vector<8x1xi32>
    %c5_i32 = arith.constant 5 : i32
    %32 = vector.broadcast %c5_i32 : i32 to vector<8x1xi32>
    %33 = arith.cmpi eq, %0, %32 : vector<8x1xi32>
    %34 = arith.index_cast %arg0 : i32 to index
    %c5 = arith.constant 5 : index
    %35 = memref.load %arg1[%34, %c5] : memref<2x8xi32, #tpu.memory_space<smem>>
    %36 = vector.broadcast %35 : i32 to vector<8x1xi32>
    %37 = arith.select %33, %36, %31 : vector<8x1xi1>, vector<8x1xi32>
    %c6_i32 = arith.constant 6 : i32
    %38 = vector.broadcast %c6_i32 : i32 to vector<8x1xi32>
    %39 = arith.cmpi eq, %0, %38 : vector<8x1xi32>
    %40 = arith.index_cast %arg0 : i32 to index
    %c6 = arith.constant 6 : index
    %41 = memref.load %arg1[%40, %c6] : memref<2x8xi32, #tpu.memory_space<smem>>
    %42 = vector.broadcast %41 : i32 to vector<8x1xi32>
    %43 = arith.select %39, %42, %37 : vector<8x1xi1>, vector<8x1xi32>
    %c7_i32 = arith.constant 7 : i32
    %44 = vector.broadcast %c7_i32 : i32 to vector<8x1xi32>
    %45 = arith.cmpi eq, %0, %44 : vector<8x1xi32>
    %46 = arith.index_cast %arg0 : i32 to index
    %c7 = arith.constant 7 : index
    %47 = memref.load %arg1[%46, %c7] : memref<2x8xi32, #tpu.memory_space<smem>>
    %48 = vector.broadcast %47 : i32 to vector<8x1xi32>
    %49 = arith.select %45, %48, %43 : vector<8x1xi1>, vector<8x1xi32>
    %50 = tpu.iota {dimensions = array<i32: 1>} : vector<8x50xi32>
    %51 = vector.broadcast %49 : vector<8x1xi32> to vector<8x50xi32>
    %52 = arith.cmpi eq, %51, %50 : vector<8x50xi32>
    %53 = arith.extui %52 : vector<8x50xi1> to vector<8x50xi32>
    %54 = arith.sitofp %53 : vector<8x50xi32> to vector<8x50xf32>
    %c0_1 = arith.constant 0 : index
    %c0_2 = arith.constant 0 : index
    %55 = vector.load %arg2[%c0_1, %c0_2] : memref<50x32xf32, #tpu.memory_space<vmem>>, vector<50x32xf32>
    %cst = arith.constant dense<0.000000e+00> : vector<8x32xf32>
    %56 = tpu.matmul %54, %55, %cst {dimension_numbers = #tpu.dot_dimension_numbers<[1], [0], [0], [1], [0, 0, 1, 1], [], []>, precision = #tpu.contract_precision<fp32>} : vector<8x50xf32>, vector<50x32xf32>, vector<8x32xf32> -> vector<8x32xf32>
    %c0_3 = arith.constant 0 : index
    %c0_4 = arith.constant 0 : index
    %c0_5 = arith.constant 0 : index
    %57 = vector.load %arg3[%c0_3, %c0_4, %c0_5] : memref<2x32x96xf32, #tpu.memory_space<vmem>>, vector<1x32x96xf32>
    %58 = vector.shape_cast %57 : vector<1x32x96xf32> to vector<32x96xf32>
    %cst_6 = arith.constant dense<0.000000e+00> : vector<8x96xf32>
    %59 = tpu.matmul %56, %58, %cst_6 {dimension_numbers = #tpu.dot_dimension_numbers<[1], [0], [0], [1], [0, 0, 1, 1], [], []>, precision = #tpu.contract_precision<fp32>} : vector<8x32xf32>, vector<32x96xf32>, vector<8x96xf32> -> vector<8x96xf32>
    %c0_7 = arith.constant 0 : index
    %c0_8 = arith.constant 0 : index
    %c0_9 = arith.constant 0 : index
    %60 = vector.load %arg4[%c0_7, %c0_8, %c0_9] : memref<2x1x96xf32, #tpu.memory_space<vmem>>, vector<1x1x96xf32>
    %61 = vector.shape_cast %60 : vector<1x1x96xf32> to vector<1x96xf32>
    %62 = vector.broadcast %61 : vector<1x96xf32> to vector<8x96xf32>
    %63 = arith.addf %59, %62 : vector<8x96xf32>
    %64 = vector.extract_strided_slice %63 {offsets = [0, 0], sizes = [8, 32], strides = [1, 1]} : vector<8x96xf32> to vector<8x32xf32>
    %65 = vector.extract_strided_slice %63 {offsets = [0, 32], sizes = [8, 32], strides = [1, 1]} : vector<8x96xf32> to vector<8x32xf32>
    %66 = vector.extract_strided_slice %63 {offsets = [0, 64], sizes = [8, 32], strides = [1, 1]} : vector<8x96xf32> to vector<8x32xf32>
    %cst_10 = arith.constant dense<0.000000e+00> : vector<8x8xf32>
    %67 = tpu.matmul %64, %65, %cst_10 {dimension_numbers = #tpu.dot_dimension_numbers<[1], [1], [0], [0], [0, 0, 1, 0], [], []>, precision = #tpu.contract_precision<fp32>} : vector<8x32xf32>, vector<8x32xf32>, vector<8x8xf32> -> vector<8x8xf32>
    %cst_11 = arith.constant dense<0xFF800000> : vector<8xf32>
    %68 = vector.multi_reduction <maximumf>, %67, %cst_11 [1] : vector<8x8xf32> to vector<8xf32>
    %69 = vector.shape_cast %68 : vector<8xf32> to vector<8x1xf32>
    %70 = vector.broadcast %69 : vector<8x1xf32> to vector<8x8xf32>
    %71 = arith.subf %67, %70 : vector<8x8xf32>
    %72 = math.exp %71 : vector<8x8xf32>
    %cst_12 = arith.constant dense<0.000000e+00> : vector<8xf32>
    %73 = vector.multi_reduction <add>, %72, %cst_12 [1] : vector<8x8xf32> to vector<8xf32>
    %74 = vector.shape_cast %73 : vector<8xf32> to vector<8x1xf32>
    %75 = tpu.reciprocal %74 {approx = true} : vector<8x1xf32> -> vector<8x1xf32>
    %76 = vector.broadcast %75 : vector<8x1xf32> to vector<8x8xf32>
    %77 = arith.mulf %72, %76 : vector<8x8xf32>
    %cst_13 = arith.constant dense<0.000000e+00> : vector<8x32xf32>
    %78 = tpu.matmul %77, %66, %cst_13 {dimension_numbers = #tpu.dot_dimension_numbers<[1], [0], [0], [1], [0, 0, 1, 1], [], []>, precision = #tpu.contract_precision<fp32>} : vector<8x8xf32>, vector<8x32xf32>, vector<8x32xf32> -> vector<8x32xf32>
    %79 = arith.addf %78, %56 : vector<8x32xf32>
    %80 = vector.shape_cast %79 : vector<8x32xf32> to vector<1x8x32xf32>
    %cst_14 = arith.constant dense<0.000000e+00> : vector<1xf32>
    %81 = vector.multi_reduction <add>, %80, %cst_14 [1, 2] : vector<1x8x32xf32> to vector<1xf32>
    %82 = vector.shape_cast %81 : vector<1xf32> to vector<1x1x1xf32>
    %83 = vector.extract %82[0, 0, 0] : f32 from vector<1x1x1xf32>
    %cst_15 = arith.constant 2.560000e+02 : f32
    %84 = arith.divf %83, %cst_15 : f32
    %85 = arith.mulf %79, %79 : vector<8x32xf32>
    %86 = vector.shape_cast %85 : vector<8x32xf32> to vector<1x8x32xf32>
    %cst_16 = arith.constant dense<0.000000e+00> : vector<1xf32>
    %87 = vector.multi_reduction <add>, %86, %cst_16 [1, 2] : vector<1x8x32xf32> to vector<1xf32>
    %88 = vector.shape_cast %87 : vector<1xf32> to vector<1x1x1xf32>
    %89 = vector.extract %88[0, 0, 0] : f32 from vector<1x1x1xf32>
    %cst_17 = arith.constant 2.560000e+02 : f32
    %90 = arith.divf %89, %cst_17 : f32
    %91 = arith.mulf %84, %84 : f32
    %92 = arith.subf %90, %91 : f32
    %c0_18 = arith.constant 0 : index
    %c0_19 = arith.constant 0 : index
    %c0_20 = arith.constant 0 : index
    %93 = vector.load %arg5[%c0_18, %c0_19, %c0_20] : memref<2x8x32xf32, #tpu.memory_space<vmem>>, vector<1x8x32xf32>
    %94 = vector.shape_cast %93 : vector<1x8x32xf32> to vector<8x32xf32>
    %95 = vector.broadcast %84 : f32 to vector<8x32xf32>
    %96 = arith.subf %79, %95 : vector<8x32xf32>
    %cst_21 = arith.constant 9.99999993E-9 : f32
    %97 = arith.addf %92, %cst_21 : f32
    %98 = math.rsqrt %97 : f32
    %99 = vector.broadcast %98 : f32 to vector<8x32xf32>
    %100 = arith.mulf %96, %99 : vector<8x32xf32>
    %101 = arith.mulf %94, %100 : vector<8x32xf32>
    %c0_22 = arith.constant 0 : index
    %c0_23 = arith.constant 0 : index
    %c0_24 = arith.constant 0 : index
    %102 = vector.load %arg6[%c0_22, %c0_23, %c0_24] : memref<2x8x32xf32, #tpu.memory_space<vmem>>, vector<1x8x32xf32>
    %103 = vector.shape_cast %102 : vector<1x8x32xf32> to vector<8x32xf32>
    %104 = arith.addf %101, %103 : vector<8x32xf32>
    %c0_25 = arith.constant 0 : index
    %c0_26 = arith.constant 0 : index
    %c0_27 = arith.constant 0 : index
    %105 = vector.load %arg7[%c0_25, %c0_26, %c0_27] : memref<2x32x32xf32, #tpu.memory_space<vmem>>, vector<1x32x32xf32>
    %106 = vector.shape_cast %105 : vector<1x32x32xf32> to vector<32x32xf32>
    %cst_28 = arith.constant dense<0.000000e+00> : vector<8x32xf32>
    %107 = tpu.matmul %104, %106, %cst_28 {dimension_numbers = #tpu.dot_dimension_numbers<[1], [0], [0], [1], [0, 0, 1, 1], [], []>, precision = #tpu.contract_precision<fp32>} : vector<8x32xf32>, vector<32x32xf32>, vector<8x32xf32> -> vector<8x32xf32>
    %c0_29 = arith.constant 0 : index
    %c0_30 = arith.constant 0 : index
    %c0_31 = arith.constant 0 : index
    %108 = vector.load %arg8[%c0_29, %c0_30, %c0_31] : memref<2x1x32xf32, #tpu.memory_space<vmem>>, vector<1x1x32xf32>
    %109 = vector.shape_cast %108 : vector<1x1x32xf32> to vector<1x32xf32>
    %110 = vector.broadcast %109 : vector<1x32xf32> to vector<8x32xf32>
    %111 = arith.addf %107, %110 : vector<8x32xf32>
    %cst_32 = arith.constant 0.000000e+00 : f32
    %112 = vector.broadcast %cst_32 : f32 to vector<8x32xf32>
    %113 = arith.maximumf %111, %112 : vector<8x32xf32>
    %c0_33 = arith.constant 0 : index
    %c0_34 = arith.constant 0 : index
    %c0_35 = arith.constant 0 : index
    %114 = vector.load %arg9[%c0_33, %c0_34, %c0_35] : memref<2x32x32xf32, #tpu.memory_space<vmem>>, vector<1x32x32xf32>
    %115 = vector.shape_cast %114 : vector<1x32x32xf32> to vector<32x32xf32>
    %cst_36 = arith.constant dense<0.000000e+00> : vector<8x32xf32>
    %116 = tpu.matmul %113, %115, %cst_36 {dimension_numbers = #tpu.dot_dimension_numbers<[1], [0], [0], [1], [0, 0, 1, 1], [], []>, precision = #tpu.contract_precision<fp32>} : vector<8x32xf32>, vector<32x32xf32>, vector<8x32xf32> -> vector<8x32xf32>
    %c0_37 = arith.constant 0 : index
    %c0_38 = arith.constant 0 : index
    %c0_39 = arith.constant 0 : index
    %117 = vector.load %arg10[%c0_37, %c0_38, %c0_39] : memref<2x1x32xf32, #tpu.memory_space<vmem>>, vector<1x1x32xf32>
    %118 = vector.shape_cast %117 : vector<1x1x32xf32> to vector<1x32xf32>
    %119 = vector.broadcast %118 : vector<1x32xf32> to vector<8x32xf32>
    %120 = arith.addf %116, %119 : vector<8x32xf32>
    %121 = arith.addf %120, %104 : vector<8x32xf32>
    %122 = vector.shape_cast %121 : vector<8x32xf32> to vector<1x8x32xf32>
    %cst_40 = arith.constant dense<0.000000e+00> : vector<1xf32>
    %123 = vector.multi_reduction <add>, %122, %cst_40 [1, 2] : vector<1x8x32xf32> to vector<1xf32>
    %124 = vector.shape_cast %123 : vector<1xf32> to vector<1x1x1xf32>
    %125 = vector.extract %124[0, 0, 0] : f32 from vector<1x1x1xf32>
    %cst_41 = arith.constant 2.560000e+02 : f32
    %126 = arith.divf %125, %cst_41 : f32
    %127 = arith.mulf %121, %121 : vector<8x32xf32>
    %128 = vector.shape_cast %127 : vector<8x32xf32> to vector<1x8x32xf32>
    %cst_42 = arith.constant dense<0.000000e+00> : vector<1xf32>
    %129 = vector.multi_reduction <add>, %128, %cst_42 [1, 2] : vector<1x8x32xf32> to vector<1xf32>
    %130 = vector.shape_cast %129 : vector<1xf32> to vector<1x1x1xf32>
    %131 = vector.extract %130[0, 0, 0] : f32 from vector<1x1x1xf32>
    %cst_43 = arith.constant 2.560000e+02 : f32
    %132 = arith.divf %131, %cst_43 : f32
    %133 = arith.mulf %126, %126 : f32
    %134 = arith.subf %132, %133 : f32
    %c0_44 = arith.constant 0 : index
    %c0_45 = arith.constant 0 : index
    %c0_46 = arith.constant 0 : index
    %135 = vector.load %arg11[%c0_44, %c0_45, %c0_46] : memref<2x8x32xf32, #tpu.memory_space<vmem>>, vector<1x8x32xf32>
    %136 = vector.shape_cast %135 : vector<1x8x32xf32> to vector<8x32xf32>
    %137 = vector.broadcast %126 : f32 to vector<8x32xf32>
    %138 = arith.subf %121, %137 : vector<8x32xf32>
    %cst_47 = arith.constant 9.99999993E-9 : f32
    %139 = arith.addf %134, %cst_47 : f32
    %140 = math.rsqrt %139 : f32
    %141 = vector.broadcast %140 : f32 to vector<8x32xf32>
    %142 = arith.mulf %138, %141 : vector<8x32xf32>
    %143 = arith.mulf %136, %142 : vector<8x32xf32>
    %c0_48 = arith.constant 0 : index
    %c0_49 = arith.constant 0 : index
    %c0_50 = arith.constant 0 : index
    %144 = vector.load %arg12[%c0_48, %c0_49, %c0_50] : memref<2x8x32xf32, #tpu.memory_space<vmem>>, vector<1x8x32xf32>
    %145 = vector.shape_cast %144 : vector<1x8x32xf32> to vector<8x32xf32>
    %146 = arith.addf %143, %145 : vector<8x32xf32>
    %c1_51 = arith.constant 1 : index
    %c0_52 = arith.constant 0 : index
    %c0_53 = arith.constant 0 : index
    %147 = vector.load %arg3[%c1_51, %c0_52, %c0_53] : memref<2x32x96xf32, #tpu.memory_space<vmem>>, vector<1x32x96xf32>
    %148 = vector.shape_cast %147 : vector<1x32x96xf32> to vector<32x96xf32>
    %cst_54 = arith.constant dense<0.000000e+00> : vector<8x96xf32>
    %149 = tpu.matmul %146, %148, %cst_54 {dimension_numbers = #tpu.dot_dimension_numbers<[1], [0], [0], [1], [0, 0, 1, 1], [], []>, precision = #tpu.contract_precision<fp32>} : vector<8x32xf32>, vector<32x96xf32>, vector<8x96xf32> -> vector<8x96xf32>
    %c1_55 = arith.constant 1 : index
    %c0_56 = arith.constant 0 : index
    %c0_57 = arith.constant 0 : index
    %150 = vector.load %arg4[%c1_55, %c0_56, %c0_57] : memref<2x1x96xf32, #tpu.memory_space<vmem>>, vector<1x1x96xf32>
    %151 = vector.shape_cast %150 : vector<1x1x96xf32> to vector<1x96xf32>
    %152 = vector.broadcast %151 : vector<1x96xf32> to vector<8x96xf32>
    %153 = arith.addf %149, %152 : vector<8x96xf32>
    %154 = vector.extract_strided_slice %153 {offsets = [0, 0], sizes = [8, 32], strides = [1, 1]} : vector<8x96xf32> to vector<8x32xf32>
    %155 = vector.extract_strided_slice %153 {offsets = [0, 32], sizes = [8, 32], strides = [1, 1]} : vector<8x96xf32> to vector<8x32xf32>
    %156 = vector.extract_strided_slice %153 {offsets = [0, 64], sizes = [8, 32], strides = [1, 1]} : vector<8x96xf32> to vector<8x32xf32>
    %cst_58 = arith.constant dense<0.000000e+00> : vector<8x8xf32>
    %157 = tpu.matmul %154, %155, %cst_58 {dimension_numbers = #tpu.dot_dimension_numbers<[1], [1], [0], [0], [0, 0, 1, 0], [], []>, precision = #tpu.contract_precision<fp32>} : vector<8x32xf32>, vector<8x32xf32>, vector<8x8xf32> -> vector<8x8xf32>
    %cst_59 = arith.constant dense<0xFF800000> : vector<8xf32>
    %158 = vector.multi_reduction <maximumf>, %157, %cst_59 [1] : vector<8x8xf32> to vector<8xf32>
    %159 = vector.shape_cast %158 : vector<8xf32> to vector<8x1xf32>
    %160 = vector.broadcast %159 : vector<8x1xf32> to vector<8x8xf32>
    %161 = arith.subf %157, %160 : vector<8x8xf32>
    %162 = math.exp %161 : vector<8x8xf32>
    %cst_60 = arith.constant dense<0.000000e+00> : vector<8xf32>
    %163 = vector.multi_reduction <add>, %162, %cst_60 [1] : vector<8x8xf32> to vector<8xf32>
    %164 = vector.shape_cast %163 : vector<8xf32> to vector<8x1xf32>
    %165 = tpu.reciprocal %164 {approx = true} : vector<8x1xf32> -> vector<8x1xf32>
    %166 = vector.broadcast %165 : vector<8x1xf32> to vector<8x8xf32>
    %167 = arith.mulf %162, %166 : vector<8x8xf32>
    %cst_61 = arith.constant dense<0.000000e+00> : vector<8x32xf32>
    %168 = tpu.matmul %167, %156, %cst_61 {dimension_numbers = #tpu.dot_dimension_numbers<[1], [0], [0], [1], [0, 0, 1, 1], [], []>, precision = #tpu.contract_precision<fp32>} : vector<8x8xf32>, vector<8x32xf32>, vector<8x32xf32> -> vector<8x32xf32>
    %169 = arith.addf %168, %146 : vector<8x32xf32>
    %170 = vector.shape_cast %169 : vector<8x32xf32> to vector<1x8x32xf32>
    %cst_62 = arith.constant dense<0.000000e+00> : vector<1xf32>
    %171 = vector.multi_reduction <add>, %170, %cst_62 [1, 2] : vector<1x8x32xf32> to vector<1xf32>
    %172 = vector.shape_cast %171 : vector<1xf32> to vector<1x1x1xf32>
    %173 = vector.extract %172[0, 0, 0] : f32 from vector<1x1x1xf32>
    %cst_63 = arith.constant 2.560000e+02 : f32
    %174 = arith.divf %173, %cst_63 : f32
    %175 = arith.mulf %169, %169 : vector<8x32xf32>
    %176 = vector.shape_cast %175 : vector<8x32xf32> to vector<1x8x32xf32>
    %cst_64 = arith.constant dense<0.000000e+00> : vector<1xf32>
    %177 = vector.multi_reduction <add>, %176, %cst_64 [1, 2] : vector<1x8x32xf32> to vector<1xf32>
    %178 = vector.shape_cast %177 : vector<1xf32> to vector<1x1x1xf32>
    %179 = vector.extract %178[0, 0, 0] : f32 from vector<1x1x1xf32>
    %cst_65 = arith.constant 2.560000e+02 : f32
    %180 = arith.divf %179, %cst_65 : f32
    %181 = arith.mulf %174, %174 : f32
    %182 = arith.subf %180, %181 : f32
    %c1_66 = arith.constant 1 : index
    %c0_67 = arith.constant 0 : index
    %c0_68 = arith.constant 0 : index
    %183 = vector.load %arg5[%c1_66, %c0_67, %c0_68] : memref<2x8x32xf32, #tpu.memory_space<vmem>>, vector<1x8x32xf32>
    %184 = vector.shape_cast %183 : vector<1x8x32xf32> to vector<8x32xf32>
    %185 = vector.broadcast %174 : f32 to vector<8x32xf32>
    %186 = arith.subf %169, %185 : vector<8x32xf32>
    %cst_69 = arith.constant 9.99999993E-9 : f32
    %187 = arith.addf %182, %cst_69 : f32
    %188 = math.rsqrt %187 : f32
    %189 = vector.broadcast %188 : f32 to vector<8x32xf32>
    %190 = arith.mulf %186, %189 : vector<8x32xf32>
    %191 = arith.mulf %184, %190 : vector<8x32xf32>
    %c1_70 = arith.constant 1 : index
    %c0_71 = arith.constant 0 : index
    %c0_72 = arith.constant 0 : index
    %192 = vector.load %arg6[%c1_70, %c0_71, %c0_72] : memref<2x8x32xf32, #tpu.memory_space<vmem>>, vector<1x8x32xf32>
    %193 = vector.shape_cast %192 : vector<1x8x32xf32> to vector<8x32xf32>
    %194 = arith.addf %191, %193 : vector<8x32xf32>
    %c1_73 = arith.constant 1 : index
    %c0_74 = arith.constant 0 : index
    %c0_75 = arith.constant 0 : index
    %195 = vector.load %arg7[%c1_73, %c0_74, %c0_75] : memref<2x32x32xf32, #tpu.memory_space<vmem>>, vector<1x32x32xf32>
    %196 = vector.shape_cast %195 : vector<1x32x32xf32> to vector<32x32xf32>
    %cst_76 = arith.constant dense<0.000000e+00> : vector<8x32xf32>
    %197 = tpu.matmul %194, %196, %cst_76 {dimension_numbers = #tpu.dot_dimension_numbers<[1], [0], [0], [1], [0, 0, 1, 1], [], []>, precision = #tpu.contract_precision<fp32>} : vector<8x32xf32>, vector<32x32xf32>, vector<8x32xf32> -> vector<8x32xf32>
    %c1_77 = arith.constant 1 : index
    %c0_78 = arith.constant 0 : index
    %c0_79 = arith.constant 0 : index
    %198 = vector.load %arg8[%c1_77, %c0_78, %c0_79] : memref<2x1x32xf32, #tpu.memory_space<vmem>>, vector<1x1x32xf32>
    %199 = vector.shape_cast %198 : vector<1x1x32xf32> to vector<1x32xf32>
    %200 = vector.broadcast %199 : vector<1x32xf32> to vector<8x32xf32>
    %201 = arith.addf %197, %200 : vector<8x32xf32>
    %cst_80 = arith.constant 0.000000e+00 : f32
    %202 = vector.broadcast %cst_80 : f32 to vector<8x32xf32>
    %203 = arith.maximumf %201, %202 : vector<8x32xf32>
    %c1_81 = arith.constant 1 : index
    %c0_82 = arith.constant 0 : index
    %c0_83 = arith.constant 0 : index
    %204 = vector.load %arg9[%c1_81, %c0_82, %c0_83] : memref<2x32x32xf32, #tpu.memory_space<vmem>>, vector<1x32x32xf32>
    %205 = vector.shape_cast %204 : vector<1x32x32xf32> to vector<32x32xf32>
    %cst_84 = arith.constant dense<0.000000e+00> : vector<8x32xf32>
    %206 = tpu.matmul %203, %205, %cst_84 {dimension_numbers = #tpu.dot_dimension_numbers<[1], [0], [0], [1], [0, 0, 1, 1], [], []>, precision = #tpu.contract_precision<fp32>} : vector<8x32xf32>, vector<32x32xf32>, vector<8x32xf32> -> vector<8x32xf32>
    %c1_85 = arith.constant 1 : index
    %c0_86 = arith.constant 0 : index
    %c0_87 = arith.constant 0 : index
    %207 = vector.load %arg10[%c1_85, %c0_86, %c0_87] : memref<2x1x32xf32, #tpu.memory_space<vmem>>, vector<1x1x32xf32>
    %208 = vector.shape_cast %207 : vector<1x1x32xf32> to vector<1x32xf32>
    %209 = vector.broadcast %208 : vector<1x32xf32> to vector<8x32xf32>
    %210 = arith.addf %206, %209 : vector<8x32xf32>
    %211 = arith.addf %210, %194 : vector<8x32xf32>
    %212 = vector.shape_cast %211 : vector<8x32xf32> to vector<1x8x32xf32>
    %cst_88 = arith.constant dense<0.000000e+00> : vector<1xf32>
    %213 = vector.multi_reduction <add>, %212, %cst_88 [1, 2] : vector<1x8x32xf32> to vector<1xf32>
    %214 = vector.shape_cast %213 : vector<1xf32> to vector<1x1x1xf32>
    %215 = vector.extract %214[0, 0, 0] : f32 from vector<1x1x1xf32>
    %cst_89 = arith.constant 2.560000e+02 : f32
    %216 = arith.divf %215, %cst_89 : f32
    %217 = arith.mulf %211, %211 : vector<8x32xf32>
    %218 = vector.shape_cast %217 : vector<8x32xf32> to vector<1x8x32xf32>
    %cst_90 = arith.constant dense<0.000000e+00> : vector<1xf32>
    %219 = vector.multi_reduction <add>, %218, %cst_90 [1, 2] : vector<1x8x32xf32> to vector<1xf32>
    %220 = vector.shape_cast %219 : vector<1xf32> to vector<1x1x1xf32>
    %221 = vector.extract %220[0, 0, 0] : f32 from vector<1x1x1xf32>
    %cst_91 = arith.constant 2.560000e+02 : f32
    %222 = arith.divf %221, %cst_91 : f32
    %223 = arith.mulf %216, %216 : f32
    %224 = arith.subf %222, %223 : f32
    %c1_92 = arith.constant 1 : index
    %c0_93 = arith.constant 0 : index
    %c0_94 = arith.constant 0 : index
    %225 = vector.load %arg11[%c1_92, %c0_93, %c0_94] : memref<2x8x32xf32, #tpu.memory_space<vmem>>, vector<1x8x32xf32>
    %226 = vector.shape_cast %225 : vector<1x8x32xf32> to vector<8x32xf32>
    %227 = vector.broadcast %216 : f32 to vector<8x32xf32>
    %228 = arith.subf %211, %227 : vector<8x32xf32>
    %cst_95 = arith.constant 9.99999993E-9 : f32
    %229 = arith.addf %224, %cst_95 : f32
    %230 = math.rsqrt %229 : f32
    %231 = vector.broadcast %230 : f32 to vector<8x32xf32>
    %232 = arith.mulf %228, %231 : vector<8x32xf32>
    %233 = arith.mulf %226, %232 : vector<8x32xf32>
    %c1_96 = arith.constant 1 : index
    %c0_97 = arith.constant 0 : index
    %c0_98 = arith.constant 0 : index
    %234 = vector.load %arg12[%c1_96, %c0_97, %c0_98] : memref<2x8x32xf32, #tpu.memory_space<vmem>>, vector<1x8x32xf32>
    %235 = vector.shape_cast %234 : vector<1x8x32xf32> to vector<8x32xf32>
    %236 = arith.addf %233, %235 : vector<8x32xf32>
    %cst_99 = arith.constant dense<0.000000e+00> : vector<32xf32>
    %237 = vector.multi_reduction <add>, %236, %cst_99 [0] : vector<8x32xf32> to vector<32xf32>
    %238 = vector.shape_cast %237 : vector<32xf32> to vector<1x32xf32>
    %c0_100 = arith.constant 0 : index
    %c0_101 = arith.constant 0 : index
    %239 = vector.load %arg13[%c0_100, %c0_101] : memref<1x32xf32, #tpu.memory_space<vmem>>, vector<1x32xf32>
    %240 = arith.mulf %238, %239 : vector<1x32xf32>
    %cst_102 = arith.constant dense<0.000000e+00> : vector<1xf32>
    %241 = vector.multi_reduction <add>, %240, %cst_102 [1] : vector<1x32xf32> to vector<1xf32>
    %242 = vector.shape_cast %241 : vector<1xf32> to vector<1x1xf32>
    %c0_103 = arith.constant 0 : index
    %c0_104 = arith.constant 0 : index
    %243 = vector.load %arg14[%c0_103, %c0_104] : memref<1x1xf32, #tpu.memory_space<vmem>>, vector<1x1xf32>
    %244 = arith.addf %242, %243 : vector<1x1xf32>
    %245 = vector.shape_cast %244 : vector<1x1xf32> to vector<1x1x1xf32>
    %246 = vector.broadcast %245 : vector<1x1x1xf32> to vector<1x1x128xf32>
    %c0_105 = arith.constant 0 : index
    %c0_106 = arith.constant 0 : index
    %c0_107 = arith.constant 0 : index
    %247 = vector.load %arg15[%c0_105, %c0_106, %c0_107] : memref<1x1x128xf32, #tpu.memory_space<vmem>>, vector<1x1x128xf32>
    tpu.vector_store %arg15[%c0_105, %c0_106, %c0_107], %246 {strides = array<i32>} : memref<1x1x128xf32, #tpu.memory_space<vmem>>, vector<1x1x128xf32>,
    return
  }
  func.func @transform_0(%arg0: i32, %arg1: memref<2x8xi32, #tpu.memory_space<smem>>) -> (i32, i32) {
    %c0_i32 = arith.constant 0 : i32
    %c0_i32_0 = arith.constant 0 : i32
    %c0_i32_1 = arith.constant 0 : i32
    return %c0_i32, %c0_i32_0 : i32, i32
  }
  func.func @transform_1(%arg0: i32, %arg1: memref<2x8xi32, #tpu.memory_space<smem>>) -> (i32, i32, i32) {
    %c0_i32 = arith.constant 0 : i32
    %c0_i32_0 = arith.constant 0 : i32
    %c0_i32_1 = arith.constant 0 : i32
    %c0_i32_2 = arith.constant 0 : i32
    return %c0_i32, %c0_i32_0, %c0_i32_1 : i32, i32, i32
  }
  func.func @transform_2(%arg0: i32, %arg1: memref<2x8xi32, #tpu.memory_space<smem>>) -> (i32, i32, i32) {
    %c0_i32 = arith.constant 0 : i32
    %c0_i32_0 = arith.constant 0 : i32
    %c0_i32_1 = arith.constant 0 : i32
    %c0_i32_2 = arith.constant 0 : i32
    return %c0_i32, %c0_i32_0, %c0_i32_1 : i32, i32, i32
  }
  func.func @transform_3(%arg0: i32, %arg1: memref<2x8xi32, #tpu.memory_space<smem>>) -> (i32, i32, i32) {
    %c0_i32 = arith.constant 0 : i32
    %c0_i32_0 = arith.constant 0 : i32
    %c0_i32_1 = arith.constant 0 : i32
    %c0_i32_2 = arith.constant 0 : i32
    return %c0_i32, %c0_i32_0, %c0_i32_1 : i32, i32, i32
  }
  func.func @transform_4(%arg0: i32, %arg1: memref<2x8xi32, #tpu.memory_space<smem>>) -> (i32, i32, i32) {
    %c0_i32 = arith.constant 0 : i32
    %c0_i32_0 = arith.constant 0 : i32
    %c0_i32_1 = arith.constant 0 : i32
    %c0_i32_2 = arith.constant 0 : i32
    return %c0_i32, %c0_i32_0, %c0_i32_1 : i32, i32, i32
  }
  func.func @transform_5(%arg0: i32, %arg1: memref<2x8xi32, #tpu.memory_space<smem>>) -> (i32, i32, i32) {
    %c0_i32 = arith.constant 0 : i32
    %c0_i32_0 = arith.constant 0 : i32
    %c0_i32_1 = arith.constant 0 : i32
    %c0_i32_2 = arith.constant 0 : i32
    return %c0_i32, %c0_i32_0, %c0_i32_1 : i32, i32, i32
  }
  func.func @transform_6(%arg0: i32, %arg1: memref<2x8xi32, #tpu.memory_space<smem>>) -> (i32, i32, i32) {
    %c0_i32 = arith.constant 0 : i32
    %c0_i32_0 = arith.constant 0 : i32
    %c0_i32_1 = arith.constant 0 : i32
    %c0_i32_2 = arith.constant 0 : i32
    return %c0_i32, %c0_i32_0, %c0_i32_1 : i32, i32, i32
  }
  func.func @transform_7(%arg0: i32, %arg1: memref<2x8xi32, #tpu.memory_space<smem>>) -> (i32, i32, i32) {
    %c0_i32 = arith.constant 0 : i32
    %c0_i32_0 = arith.constant 0 : i32
    %c0_i32_1 = arith.constant 0 : i32
    %c0_i32_2 = arith.constant 0 : i32
    return %c0_i32, %c0_i32_0, %c0_i32_1 : i32, i32, i32
  }
  func.func @transform_8(%arg0: i32, %arg1: memref<2x8xi32, #tpu.memory_space<smem>>) -> (i32, i32, i32) {
    %c0_i32 = arith.constant 0 : i32
    %c0_i32_0 = arith.constant 0 : i32
    %c0_i32_1 = arith.constant 0 : i32
    %c0_i32_2 = arith.constant 0 : i32
    return %c0_i32, %c0_i32_0, %c0_i32_1 : i32, i32, i32
  }
  func.func @transform_9(%arg0: i32, %arg1: memref<2x8xi32, #tpu.memory_space<smem>>) -> (i32, i32, i32) {
    %c0_i32 = arith.constant 0 : i32
    %c0_i32_0 = arith.constant 0 : i32
    %c0_i32_1 = arith.constant 0 : i32
    %c0_i32_2 = arith.constant 0 : i32
    return %c0_i32, %c0_i32_0, %c0_i32_1 : i32, i32, i32
  }
  func.func @transform_10(%arg0: i32, %arg1: memref<2x8xi32, #tpu.memory_space<smem>>) -> (i32, i32, i32) {
    %c0_i32 = arith.constant 0 : i32
    %c0_i32_0 = arith.constant 0 : i32
    %c0_i32_1 = arith.constant 0 : i32
    %c0_i32_2 = arith.constant 0 : i32
    return %c0_i32, %c0_i32_0, %c0_i32_1 : i32, i32, i32
  }
  func.func @transform_11(%arg0: i32, %arg1: memref<2x8xi32, #tpu.memory_space<smem>>) -> (i32, i32) {
    %c0_i32 = arith.constant 0 : i32
    %c0_i32_0 = arith.constant 0 : i32
    %c0_i32_1 = arith.constant 0 : i32
    return %c0_i32, %c0_i32_0 : i32, i32
  }
  func.func @transform_12(%arg0: i32, %arg1: memref<2x8xi32, #tpu.memory_space<smem>>) -> (i32, i32) {
    %c0_i32 = arith.constant 0 : i32
    %c0_i32_0 = arith.constant 0 : i32
    %c0_i32_1 = arith.constant 0 : i32
    return %c0_i32, %c0_i32_0 : i32, i32
  }
  func.func @transform_13(%arg0: i32, %arg1: memref<2x8xi32, #tpu.memory_space<smem>>) -> (i32, i32, i32) {
    %c0_i32 = arith.constant 0 : i32
    %c0_i32_0 = arith.constant 0 : i32
    %c0_i32_1 = arith.constant 0 : i32
    return %arg0, %c0_i32, %c0_i32_0 : i32, i32, i32
  }
}

</mosaic_0001>

<llo_original>
// kernel: tpu_custom_call.1
$region0: #{tpu_custom_call.1}
  #allocation0 [shape = 'u32[]', space=smem, size = 0x4, offset = 0x4, fixed_abs, tag = 'smem constant byte address 0x4 - core index']
  #allocation1 [shape = 'u32[144,128]{1,0:T(1,128)}', space=vmem, size = 0x12000, scoped, tag = 'internal scratch']
  #allocation2 [shape = 's32[1]{0}', space=sflag, size = 0x4, scoped, tag = 'scoped memory for tpu_custom_call.1']
  #allocation3 [shape = 'u8[1024]{0}', space=smem, size = 0x400, scoped, tag = 'prefetched SMEM operand 0']
  #allocation4 [shape = 'f32[1,1]{1,0:T(1,128)S(1)}', space=vmem, size = 0x200, scoped, tag = 'scoped memory for tpu_custom_call.1']
  %s0 = inlined_call_operand.hbm [shape: s32[2,8], index: 0, kind: input, shape index: {}]
  %s1 = inlined_call_operand.vmem [shape: f32[50,32], index: 1, kind: input, shape index: {}]
  %s2 = inlined_call_operand.vmem [shape: f32[2,32,96], index: 2, kind: input, shape index: {}]
  %s3 = inlined_call_operand.hbm [shape: f32[2,1,96], index: 3, kind: input, shape index: {}]
  %s4 = inlined_call_operand.vmem [shape: f32[2,8,32], index: 4, kind: input, shape index: {}]
  %s5 = inlined_call_operand.vmem [shape: f32[2,8,32], index: 5, kind: input, shape index: {}]
  %s6 = inlined_call_operand.hbm [shape: f32[2,32,32], index: 6, kind: input, shape index: {}]
  %s7 = inlined_call_operand.hbm [shape: f32[2,1,32], index: 7, kind: input, shape index: {}]
  %s8 = inlined_call_operand.hbm [shape: f32[2,32,32], index: 8, kind: input, shape index: {}]
  %s9 = inlined_call_operand.hbm [shape: f32[2,1,32], index: 9, kind: input, shape index: {}]
  %s10 = inlined_call_operand.vmem [shape: f32[2,8,32], index: 10, kind: input, shape index: {}]
  %s11 = inlined_call_operand.vmem [shape: f32[2,8,32], index: 11, kind: input, shape index: {}]
  %s12 = inlined_call_operand.vmem [shape: f32[1,32], index: 12, kind: input, shape index: {}]
  %s13 = inlined_call_operand.<no memory space> [shape: f32[1,1], index: 13, kind: input, shape index: {}]
  %s14 = inlined_call_operand.hbm [shape: f32[2,1,128], index: 14, kind: output, shape index: {}]
  %s15 = sld [smem:[#allocation0]]
  $region105: #{tpu_custom_call.1} parent=0
    _
  %s17 = ssub.s32 1, %s15
  %s18 = scalar_select 0, %s17, %s15
  %20 = dma.hbm_to_smem %s0, 32, [#allocation3], [#allocation2]
  %v21 = vstv %s13
  %22 = vst [vmem:[#allocation4] sm:$0x1] %v21
  %23 = dma.done [#allocation2], 32
  %24 = sfence
  $region1: #{tpu_custom_call.1} parent=0
    #allocation5 [shape = 'u8[1024]{0}', space=vmem, size = 0x400, scoped, tag = 'input window, operand 3, single buffered']
    #allocation6 [shape = 's32[2]{0}', space=sflag, size = 0x8, scoped, tag = 'scoped memory for tpu_custom_call.1']
    #allocation7 [shape = 's32[2]{0}', space=sflag, size = 0x8, scoped, tag = 'scoped memory for tpu_custom_call.1']
    #allocation8 [shape = 'u8[32768]{0}', space=vmem, size = 0x8000, scoped, tag = 'input window, operand 6, single buffered']
    #allocation9 [shape = 's32[1]{0}', space=sflag, size = 0x4, scoped, tag = 'scoped memory for tpu_custom_call.1']
    #allocation10 [shape = 'u8[1024]{0}', space=vmem, size = 0x400, scoped, tag = 'input window, operand 7, single buffered']
    #allocation11 [shape = 'u8[32768]{0}', space=vmem, size = 0x8000, scoped, tag = 'input window, operand 8, single buffered']
    #allocation12 [shape = 's32[1]{0}', space=sflag, size = 0x4, scoped, tag = 'scoped memory for tpu_custom_call.1']
    #allocation13 [shape = 'u8[1024]{0}', space=vmem, size = 0x400, scoped, tag = 'input window, operand 9, single buffered']
    #allocation14 [shape = 'u8[1024]{0}', space=vmem, size = 0x400, scoped, tag = 'output window, operand 0']
    %25 = vsyncpa [#allocation6], 0
    %26 = vsyncpa [#allocation9], 0
    %27 = vsyncpa [#allocation12], 0
    %28 = vsyncpa [#allocation7], 0
    %s29 = scalar_lea.sflag [#allocation7], 1
    %30 = vsyncpa %s29, 0
    loop: start=0, step=1, limit=4
    $region2: #{tpu_custom_call.1} parent=1 // loop_pre_header
      _
    $region3: #{tpu_custom_call.1} parent=1 // loop_header
      %s32 = sphi 0, %s36
      %p33 = scmp.ge.s32.totalorder %s32, 4
      %s40 = sphi 0, %s40
      %s42 = sphi 0, %s40
      %s43 = sphi 0, %s42
      %s57 = sphi 0, %s43
      %s61 = sphi 0, %s61
      %s63 = sphi 0, %s61
      %s64 = sphi 0, %s63
      %s78 = sphi 0, %s64
      %s82 = sphi 0, %s82
      %s84 = sphi 0, %s82
      %s85 = sphi 0, %s84
      %s99 = sphi 0, %s85
      %s103 = sphi 0, %s103
      %s105 = sphi 0, %s103
      %s106 = sphi 0, %s105
      %s120 = sphi 0, %s106
      %s124 = sphi 0, %s124
      %s126 = sphi 0, %s124
      %s127 = sphi 0, %s126
      %s141 = sphi 0, %s127
      %s145 = sphi 0, %s145
      %s147 = sphi 0, %s145
      %s148 = sphi 0, %s147
      %s162 = sphi 0, %s148
      %s166 = sphi 0, %s166
      %s168 = sphi 0, %s166
      %s169 = sphi 0, %s168
      %s183 = sphi 0, %s169
      %s187 = sphi 0, %s187
      %s189 = sphi 0, %s187
      %s190 = sphi 0, %s189
      %s204 = sphi 0, %s190
      %s208 = sphi 0, %s208
      %s210 = sphi 0, %s208
      %s211 = sphi 0, %s210
      %s225 = sphi 0, %s211
      %s229 = sphi 0, %s229
      %s231 = sphi 0, %s229
      %s232 = sphi 0, %s231
      %s246 = sphi 0, %s232
      %s250 = sphi 0, %s250
      %s252 = sphi 0, %s250
      %s253 = sphi 0, %s252
      %s267 = sphi 0, %s253
      %s271 = sphi 0, %s271
      %s273 = sphi 0, %s271
      %s274 = sphi 0, %s273
      %s288 = sphi 0, %s274
      %s292 = sphi 0, %s292
      %s294 = sphi 0, %s292
      %s295 = sphi 0, %s294
      %s309 = sphi 0, %s295
      %s315 = sphi 0, %s317
      %s318 = sphi 0, %s315
      %s319 = sphi 0, %s318
      %s335 = sphi 0, %s319
    $region4: #{tpu_custom_call.1} parent=1 // loop_header_branch
      %35 = sbr.rel (%p33) target = $region8
    $region5: #{tpu_custom_call.1} parent=1 // loop_body
      %s37 = ssub.s32 %s32, 1
      %s38 = ssub.s32 %s32, 2
      %s39 = sadd.s32 %s32, 1
      %s41 = sadd.s32 %s40, 1
      %p44 = scmp.eq.s32.totalorder %s32, 1
      %p45 = scmp.ne.s32.totalorder %s40, %s42
      %p46 = scmp.eq.s32.totalorder %s32, 0
      %p47 = por %p45, %p46
      %p48 = scmp.ne.s32.totalorder %s40, %s42
      %p49 = scmp.eq.s32.totalorder %s37, 1
      %p50 = por %p48, %p49
      %p51 = scmp.ne.s32.totalorder %s42, %s43
      %p52 = scmp.eq.s32.totalorder %s37, 0
      %p53 = por %p51, %p52
      %p54 = scmp.ne.s32.totalorder %s42, %s43
      %p55 = scmp.eq.s32.totalorder %s38, 1
      %p56 = por %p54, %p55
      %p58 = scmp.ne.s32.totalorder %s43, %s57
      %p59 = scmp.eq.s32.totalorder %s38, 0
      %p60 = por %p58, %p59
      %s62 = sadd.s32 %s61, 1
      %p65 = scmp.eq.s32.totalorder %s32, 1
      %p66 = scmp.ne.s32.totalorder %s61, %s63
      %p67 = scmp.eq.s32.totalorder %s32, 0
      %p68 = por %p66, %p67
      %p69 = scmp.ne.s32.totalorder %s61, %s63
      %p70 = scmp.eq.s32.totalorder %s37, 1
      %p71 = por %p69, %p70
      %p72 = scmp.ne.s32.totalorder %s63, %s64
      %p73 = scmp.eq.s32.totalorder %s37, 0
      %p74 = por %p72, %p73
      %p75 = scmp.ne.s32.totalorder %s63, %s64
      %p76 = scmp.eq.s32.totalorder %s38, 1
      %p77 = por %p75, %p76
      %p79 = scmp.ne.s32.totalorder %s64, %s78
      %p80 = scmp.eq.s32.totalorder %s38, 0
      %p81 = por %p79, %p80
      %s83 = sadd.s32 %s82, 1
      %p86 = scmp.eq.s32.totalorder %s32, 1
      %p87 = scmp.ne.s32.totalorder %s82, %s84
      %p88 = scmp.eq.s32.totalorder %s32, 0
      %p89 = por %p87, %p88
      %p90 = scmp.ne.s32.totalorder %s82, %s84
      %p91 = scmp.eq.s32.totalorder %s37, 1
      %p92 = por %p90, %p91
      %p93 = scmp.ne.s32.totalorder %s84, %s85
      %p94 = scmp.eq.s32.totalorder %s37, 0
      %p95 = por %p93, %p94
      %p96 = scmp.ne.s32.totalorder %s84, %s85
      %p97 = scmp.eq.s32.totalorder %s38, 1
      %p98 = por %p96, %p97
      %p100 = scmp.ne.s32.totalorder %s85, %s99
      %p101 = scmp.eq.s32.totalorder %s38, 0
      %p102 = por %p100, %p101
      %s104 = sadd.s32 %s103, 1
      %p107 = scmp.eq.s32.totalorder %s32, 1
      %p108 = scmp.ne.s32.totalorder %s103, %s105
      %p109 = scmp.eq.s32.totalorder %s32, 0
      %p110 = por %p108, %p109
      %p111 = scmp.ne.s32.totalorder %s103, %s105
      %p112 = scmp.eq.s32.totalorder %s37, 1
      %p113 = por %p111, %p112
      %p114 = scmp.ne.s32.totalorder %s105, %s106
      %p115 = scmp.eq.s32.totalorder %s37, 0
      %p116 = por %p114, %p115
      %p117 = scmp.ne.s32.totalorder %s105, %s106
      %p118 = scmp.eq.s32.totalorder %s38, 1
      %p119 = por %p117, %p118
      %p121 = scmp.ne.s32.totalorder %s106, %s120
      %p122 = scmp.eq.s32.totalorder %s38, 0
      %p123 = por %p121, %p122
      %s125 = sadd.s32 %s124, 1
      %p128 = scmp.eq.s32.totalorder %s32, 1
      %p129 = scmp.ne.s32.totalorder %s124, %s126
      %p130 = scmp.eq.s32.totalorder %s32, 0
      %p131 = por %p129, %p130
      %p132 = scmp.ne.s32.totalorder %s124, %s126
      %p133 = scmp.eq.s32.totalorder %s37, 1
      %p134 = por %p132, %p133
      %p135 = scmp.ne.s32.totalorder %s126, %s127
      %p136 = scmp.eq.s32.totalorder %s37, 0
      %p137 = por %p135, %p136
      %p138 = scmp.ne.s32.totalorder %s126, %s127
      %p139 = scmp.eq.s32.totalorder %s38, 1
      %p140 = por %p138, %p139
      %p142 = scmp.ne.s32.totalorder %s127, %s141
      %p143 = scmp.eq.s32.totalorder %s38, 0
      %p144 = por %p142, %p143
      %s146 = sadd.s32 %s145, 1
      %p149 = scmp.eq.s32.totalorder %s32, 1
      %p150 = scmp.ne.s32.totalorder %s145, %s147
      %p151 = scmp.eq.s32.totalorder %s32, 0
      %p152 = por %p150, %p151
      %p153 = scmp.ne.s32.totalorder %s145, %s147
      %p154 = scmp.eq.s32.totalorder %s37, 1
      %p155 = por %p153, %p154
      %p156 = scmp.ne.s32.totalorder %s147, %s148
      %p157 = scmp.eq.s32.totalorder %s37, 0
      %p158 = por %p156, %p157
      %p159 = scmp.ne.s32.totalorder %s147, %s148
      %p160 = scmp.eq.s32.totalorder %s38, 1
      %p161 = por %p159, %p160
      %p163 = scmp.ne.s32.totalorder %s148, %s162
      %p164 = scmp.eq.s32.totalorder %s38, 0
      %p165 = por %p163, %p164
      %s167 = sadd.s32 %s166, 1
      %p170 = scmp.eq.s32.totalorder %s32, 1
      %p171 = scmp.ne.s32.totalorder %s166, %s168
      %p172 = scmp.eq.s32.totalorder %s32, 0
      %p173 = por %p171, %p172
      %p174 = scmp.ne.s32.totalorder %s166, %s168
      %p175 = scmp.eq.s32.totalorder %s37, 1
      %p176 = por %p174, %p175
      %p177 = scmp.ne.s32.totalorder %s168, %s169
      %p178 = scmp.eq.s32.totalorder %s37, 0
      %p179 = por %p177, %p178
      %p180 = scmp.ne.s32.totalorder %s168, %s169
      %p181 = scmp.eq.s32.totalorder %s38, 1
      %p182 = por %p180, %p181
      %p184 = scmp.ne.s32.totalorder %s169, %s183
      %p185 = scmp.eq.s32.totalorder %s38, 0
      %p186 = por %p184, %p185
      %s188 = sadd.s32 %s187, 1
      %p191 = scmp.eq.s32.totalorder %s32, 1
      %p192 = scmp.ne.s32.totalorder %s187, %s189
      %p193 = scmp.eq.s32.totalorder %s32, 0
      %p194 = por %p192, %p193
      %p195 = scmp.ne.s32.totalorder %s187, %s189
      %p196 = scmp.eq.s32.totalorder %s37, 1
      %p197 = por %p195, %p196
      %p198 = scmp.ne.s32.totalorder %s189, %s190
      %p199 = scmp.eq.s32.totalorder %s37, 0
      %p200 = por %p198, %p199
      %p201 = scmp.ne.s32.totalorder %s189, %s190
      %p202 = scmp.eq.s32.totalorder %s38, 1
      %p203 = por %p201, %p202
      %p205 = scmp.ne.s32.totalorder %s190, %s204
      %p206 = scmp.eq.s32.totalorder %s38, 0
      %p207 = por %p205, %p206
      %s209 = sadd.s32 %s208, 1
      %p212 = scmp.eq.s32.totalorder %s32, 1
      %p213 = scmp.ne.s32.totalorder %s208, %s210
      %p214 = scmp.eq.s32.totalorder %s32, 0
      %p215 = por %p213, %p214
      %p216 = scmp.ne.s32.totalorder %s208, %s210
      %p217 = scmp.eq.s32.totalorder %s37, 1
      %p218 = por %p216, %p217
      %p219 = scmp.ne.s32.totalorder %s210, %s211
      %p220 = scmp.eq.s32.totalorder %s37, 0
      %p221 = por %p219, %p220
      %p222 = scmp.ne.s32.totalorder %s210, %s211
      %p223 = scmp.eq.s32.totalorder %s38, 1
      %p224 = por %p222, %p223
      %p226 = scmp.ne.s32.totalorder %s211, %s225
      %p227 = scmp.eq.s32.totalorder %s38, 0
      %p228 = por %p226, %p227
      %s230 = sadd.s32 %s229, 1
      %p233 = scmp.eq.s32.totalorder %s32, 1
      %p234 = scmp.ne.s32.totalorder %s229, %s231
      %p235 = scmp.eq.s32.totalorder %s32, 0
      %p236 = por %p234, %p235
      %p237 = scmp.ne.s32.totalorder %s229, %s231
      %p238 = scmp.eq.s32.totalorder %s37, 1
      %p239 = por %p237, %p238
      %p240 = scmp.ne.s32.totalorder %s231, %s232
      %p241 = scmp.eq.s32.totalorder %s37, 0
      %p242 = por %p240, %p241
      %p243 = scmp.ne.s32.totalorder %s231, %s232
      %p244 = scmp.eq.s32.totalorder %s38, 1
      %p245 = por %p243, %p244
      %p247 = scmp.ne.s32.totalorder %s232, %s246
      %p248 = scmp.eq.s32.totalorder %s38, 0
      %p249 = por %p247, %p248
      %s251 = sadd.s32 %s250, 1
      %p254 = scmp.eq.s32.totalorder %s32, 1
      %p255 = scmp.ne.s32.totalorder %s250, %s252
      %p256 = scmp.eq.s32.totalorder %s32, 0
      %p257 = por %p255, %p256
      %p258 = scmp.ne.s32.totalorder %s250, %s252
      %p259 = scmp.eq.s32.totalorder %s37, 1
      %p260 = por %p258, %p259
      %p261 = scmp.ne.s32.totalorder %s252, %s253
      %p262 = scmp.eq.s32.totalorder %s37, 0
      %p263 = por %p261, %p262
      %p264 = scmp.ne.s32.totalorder %s252, %s253
      %p265 = scmp.eq.s32.totalorder %s38, 1
      %p266 = por %p264, %p265
      %p268 = scmp.ne.s32.totalorder %s253, %s267
      %p269 = scmp.eq.s32.totalorder %s38, 0
      %p270 = por %p268, %p269
      %s272 = sadd.s32 %s271, 1
      %p275 = scmp.eq.s32.totalorder %s32, 1
      %p276 = scmp.ne.s32.totalorder %s271, %s273
      %p277 = scmp.eq.s32.totalorder %s32, 0
      %p278 = por %p276, %p277
      %p279 = scmp.ne.s32.totalorder %s271, %s273
      %p280 = scmp.eq.s32.totalorder %s37, 1
      %p281 = por %p279, %p280
      %p282 = scmp.ne.s32.totalorder %s273, %s274
      %p283 = scmp.eq.s32.totalorder %s37, 0
      %p284 = por %p282, %p283
      %p285 = scmp.ne.s32.totalorder %s273, %s274
      %p286 = scmp.eq.s32.totalorder %s38, 1
      %p287 = por %p285, %p286
      %p289 = scmp.ne.s32.totalorder %s274, %s288
      %p290 = scmp.eq.s32.totalorder %s38, 0
      %p291 = por %p289, %p290
      %s293 = sadd.s32 %s292, 1
      %p296 = scmp.eq.s32.totalorder %s32, 1
      %p297 = scmp.ne.s32.totalorder %s292, %s294
      %p298 = scmp.eq.s32.totalorder %s32, 0
      %p299 = por %p297, %p298
      %p300 = scmp.ne.s32.totalorder %s292, %s294
      %p301 = scmp.eq.s32.totalorder %s37, 1
      %p302 = por %p300, %p301
      %p303 = scmp.ne.s32.totalorder %s294, %s295
      %p304 = scmp.eq.s32.totalorder %s37, 0
      %p305 = por %p303, %p304
      %p306 = scmp.ne.s32.totalorder %s294, %s295
      %p307 = scmp.eq.s32.totalorder %s38, 1
      %p308 = por %p306, %p307
      %p310 = scmp.ne.s32.totalorder %s295, %s309
      %p311 = scmp.eq.s32.totalorder %s38, 0
      %p312 = por %p310, %p311
      %s313 = ssub.s32 %s32, %s39
      %p314 = scmp.eq.s32.totalorder %s313, 0
      %s316 = sadd.s32 %s315, 1
      %s317 = scalar_select %p314, %s315, %s316
      %p320 = pneg %p314
      %p321 = scmp.eq.s32.totalorder %s32, 1
      %p322 = por %p320, %p321
      %p323 = scmp.ne.s32.totalorder %s315, %s318
      %p324 = scmp.eq.s32.totalorder %s32, 0
      %p325 = por %p323, %p324
      %p326 = scmp.ne.s32.totalorder %s315, %s318
      %p327 = scmp.eq.s32.totalorder %s37, 1
      %p328 = por %p326, %p327
      %p329 = scmp.ne.s32.totalorder %s318, %s319
      %p330 = scmp.eq.s32.totalorder %s37, 0
      %p331 = por %p329, %p330
      %p332 = scmp.ne.s32.totalorder %s318, %s319
      %p333 = scmp.eq.s32.totalorder %s38, 1
      %p334 = por %p332, %p333
      %p336 = scmp.ne.s32.totalorder %s319, %s335
      %p337 = scmp.eq.s32.totalorder %s38, 0
      %p338 = por %p336, %p337
      %p339 = scmp.le.s32.totalorder 1, %s32
      %p340 = scmp.lt.s32.totalorder %s32, 3
      %p341 = pnand %p339, %p340
      %p342 = pneg %p341
      // Predicated region
      $region9: #{tpu_custom_call.1} parent=5 // pred_check
        _
      $region10: #{tpu_custom_call.1} parent=5 // pred_check_branch
        %344 = sbr.rel (%p341) target = $region12
      $region11: #{tpu_custom_call.1} parent=5 // pred_region
        %s345 = ssub.s32 %s32, 1
        // Predicated region
        $region13: #{tpu_custom_call.1} parent=11 // pred_check
          %p346 = pneg %p53
        $region14: #{tpu_custom_call.1} parent=11 // pred_check_branch
          %348 = sbr.rel (%p346) target = $region16
        $region15: #{tpu_custom_call.1} parent=11 // pred_region
          _
        $region16: #{tpu_custom_call.1} parent=11 // pred_fallthru
          _
        // Predicated region
        $region17: #{tpu_custom_call.1} parent=11 // pred_check
          %p349 = pneg %p74
        $region18: #{tpu_custom_call.1} parent=11 // pred_check_branch
          %351 = sbr.rel (%p349) target = $region20
        $region19: #{tpu_custom_call.1} parent=11 // pred_region
          _
        $region20: #{tpu_custom_call.1} parent=11 // pred_fallthru
          _
        // Predicated region
        $region21: #{tpu_custom_call.1} parent=11 // pred_check
          %p352 = pneg %p95
        $region22: #{tpu_custom_call.1} parent=11 // pred_check_branch
          %354 = sbr.rel (%p352) target = $region24
        $region23: #{tpu_custom_call.1} parent=11 // pred_region
          %s356 = ssub.s32 32, 32
          %357 = vsyncadd [#allocation6], %s356
          %s358 = sshll.u32 [#allocation5], 4
          %s359 = int_to_ptr.vmem [resolvable:$true] %s358
          %364 = dma.hbm_to_vmem [thread:$0]  %s3, 32, %s359, [#allocation6], 16, 16, 1
        $region24: #{tpu_custom_call.1} parent=11 // pred_fallthru
          _
        // Predicated region
        $region25: #{tpu_custom_call.1} parent=11 // pred_check
          %p365 = pneg %p116
        $region26: #{tpu_custom_call.1} parent=11 // pred_check_branch
          %367 = sbr.rel (%p365) target = $region28
        $region27: #{tpu_custom_call.1} parent=11 // pred_region
          _
        $region28: #{tpu_custom_call.1} parent=11 // pred_fallthru
          _
        // Predicated region
        $region29: #{tpu_custom_call.1} parent=11 // pred_check
          %p368 = pneg %p137
        $region30: #{tpu_custom_call.1} parent=11 // pred_check_branch
          %370 = sbr.rel (%p368) target = $region32
        $region31: #{tpu_custom_call.1} parent=11 // pred_region
          _
        $region32: #{tpu_custom_call.1} parent=11 // pred_fallthru
          _
        // Predicated region
        $region33: #{tpu_custom_call.1} parent=11 // pred_check
          %p371 = pneg %p158
        $region34: #{tpu_custom_call.1} parent=11 // pred_check_branch
          %373 = sbr.rel (%p371) target = $region36
        $region35: #{tpu_custom_call.1} parent=11 // pred_region
          %s375 = ssub.s32 1024, 1024
          %376 = vsyncadd [#allocation9], %s375
          %s377 = sshll.u32 [#allocation8], 4
          %s378 = int_to_ptr.vmem [resolvable:$true] %s377
          %383 = dma.hbm_to_vmem [thread:$0]  %s6, 1024, %s378, [#allocation9], 128, 128, 8
        $region36: #{tpu_custom_call.1} parent=11 // pred_fallthru
          _
        // Predicated region
        $region37: #{tpu_custom_call.1} parent=11 // pred_check
          %p384 = pneg %p179
        $region38: #{tpu_custom_call.1} parent=11 // pred_check_branch
          %386 = sbr.rel (%p384) target = $region40
        $region39: #{tpu_custom_call.1} parent=11 // pred_region
          %s388 = ssub.s32 32, 32
          %389 = vsyncadd [#allocation9], %s388
          %s390 = sshll.u32 [#allocation10], 4
          %s391 = int_to_ptr.vmem [resolvable:$true] %s390
          %396 = dma.hbm_to_vmem [thread:$0]  %s7, 32, %s391, [#allocation9], 16, 16, 1
        $region40: #{tpu_custom_call.1} parent=11 // pred_fallthru
          _
        // Predicated region
        $region41: #{tpu_custom_call.1} parent=11 // pred_check
          %p397 = pneg %p200
        $region42: #{tpu_custom_call.1} parent=11 // pred_check_branch
          %399 = sbr.rel (%p397) target = $region44
        $region43: #{tpu_custom_call.1} parent=11 // pred_region
          %s401 = ssub.s32 1024, 1024
          %402 = vsyncadd [#allocation12], %s401
          %s403 = sshll.u32 [#allocation11], 4
          %s404 = int_to_ptr.vmem [resolvable:$true] %s403
          %409 = dma.hbm_to_vmem [thread:$0]  %s8, 1024, %s404, [#allocation12], 128, 128, 8
        $region44: #{tpu_custom_call.1} parent=11 // pred_fallthru
          _
        // Predicated region
        $region45: #{tpu_custom_call.1} parent=11 // pred_check
          %p410 = pneg %p221
        $region46: #{tpu_custom_call.1} parent=11 // pred_check_branch
          %412 = sbr.rel (%p410) target = $region48
        $region47: #{tpu_custom_call.1} parent=11 // pred_region
          %s414 = ssub.s32 32, 32
          %415 = vsyncadd [#allocation12], %s414
          %s416 = sshll.u32 [#allocation13], 4
          %s417 = int_to_ptr.vmem [resolvable:$true] %s416
          %422 = dma.hbm_to_vmem [thread:$0]  %s9, 32, %s417, [#allocation12], 16, 16, 1
        $region48: #{tpu_custom_call.1} parent=11 // pred_fallthru
          _
        // Predicated region
        $region49: #{tpu_custom_call.1} parent=11 // pred_check
          %p423 = pneg %p242
        $region50: #{tpu_custom_call.1} parent=11 // pred_check_branch
          %425 = sbr.rel (%p423) target = $region52
        $region51: #{tpu_custom_call.1} parent=11 // pred_region
          _
        $region52: #{tpu_custom_call.1} parent=11 // pred_fallthru
          _
        // Predicated region
        $region53: #{tpu_custom_call.1} parent=11 // pred_check
          %p426 = pneg %p263
        $region54: #{tpu_custom_call.1} parent=11 // pred_check_branch
          %428 = sbr.rel (%p426) target = $region56
        $region55: #{tpu_custom_call.1} parent=11 // pred_region
          _
        $region56: #{tpu_custom_call.1} parent=11 // pred_fallthru
          _
        // Predicated region
        $region57: #{tpu_custom_call.1} parent=11 // pred_check
          %p429 = pneg %p284
        $region58: #{tpu_custom_call.1} parent=11 // pred_check_branch
          %431 = sbr.rel (%p429) target = $region60
        $region59: #{tpu_custom_call.1} parent=11 // pred_region
          _
        $region60: #{tpu_custom_call.1} parent=11 // pred_fallthru
          _
        // Predicated region
        $region61: #{tpu_custom_call.1} parent=11 // pred_check
          %p432 = pneg %p305
        $region62: #{tpu_custom_call.1} parent=11 // pred_check_branch
          %434 = sbr.rel (%p432) target = $region64
        $region63: #{tpu_custom_call.1} parent=11 // pred_region
          _
        $region64: #{tpu_custom_call.1} parent=11 // pred_fallthru
          _
      $region12: #{tpu_custom_call.1} parent=5 // pred_fallthru
        _
      %p435 = scmp.lt.s32.totalorder %s32, 2
      // Predicated region
      $region65: #{tpu_custom_call.1} parent=5 // pred_check
        %p436 = pneg %p435
      $region66: #{tpu_custom_call.1} parent=5 // pred_check_branch
        %438 = sbr.rel (%p436) target = $region68
      $region67: #{tpu_custom_call.1} parent=5 // pred_region
        _
      $region68: #{tpu_custom_call.1} parent=5 // pred_fallthru
        _
      %p439 = scmp.le.s32.totalorder 1, %s32
      %p440 = scmp.lt.s32.totalorder %s32, 3
      %p441 = pnand %p439, %p440
      %p442 = pneg %p441
      // Predicated region
      $region69: #{tpu_custom_call.1} parent=5 // pred_check
        _
      $region70: #{tpu_custom_call.1} parent=5 // pred_check_branch
        %444 = sbr.rel (%p441) target = $region72
      $region71: #{tpu_custom_call.1} parent=5 // pred_region
        %s445 = ssub.s32 %s32, 1
        // Predicated region
        $region73: #{tpu_custom_call.1} parent=71 // pred_check
          %p446 = pneg %p95
        $region74: #{tpu_custom_call.1} parent=71 // pred_check_branch
          %448 = sbr.rel (%p446) target = $region76
        $region75: #{tpu_custom_call.1} parent=71 // pred_region
          %449 = dma.done [#allocation6], 32
        $region76: #{tpu_custom_call.1} parent=71 // pred_fallthru
          _
        // Predicated region
        $region77: #{tpu_custom_call.1} parent=71 // pred_check
          %p450 = pneg %p158
        $region78: #{tpu_custom_call.1} parent=71 // pred_check_branch
          %452 = sbr.rel (%p450) target = $region80
        $region79: #{tpu_custom_call.1} parent=71 // pred_region
          %453 = dma.done [#allocation9], 1024
        $region80: #{tpu_custom_call.1} parent=71 // pred_fallthru
          _
        // Predicated region
        $region81: #{tpu_custom_call.1} parent=71 // pred_check
          %p454 = pneg %p179
        $region82: #{tpu_custom_call.1} parent=71 // pred_check_branch
          %456 = sbr.rel (%p454) target = $region84
        $region83: #{tpu_custom_call.1} parent=71 // pred_region
          %457 = dma.done [#allocation9], 32
        $region84: #{tpu_custom_call.1} parent=71 // pred_fallthru
          _
        // Predicated region
        $region85: #{tpu_custom_call.1} parent=71 // pred_check
          %p458 = pneg %p200
        $region86: #{tpu_custom_call.1} parent=71 // pred_check_branch
          %460 = sbr.rel (%p458) target = $region88
        $region87: #{tpu_custom_call.1} parent=71 // pred_region
          %461 = dma.done [#allocation12], 1024
        $region88: #{tpu_custom_call.1} parent=71 // pred_fallthru
          _
        // Predicated region
        $region89: #{tpu_custom_call.1} parent=71 // pred_check
          %p462 = pneg %p221
        $region90: #{tpu_custom_call.1} parent=71 // pred_check_branch
          %464 = sbr.rel (%p462) target = $region92
        $region91: #{tpu_custom_call.1} parent=71 // pred_region
          %465 = dma.done [#allocation12], 32
        $region92: #{tpu_custom_call.1} parent=71 // pred_fallthru
          _
        %p466 = pneg %p53
        %p467 = pneg %p50
        %p468 = pneg %p74
        %p469 = pneg %p71
        %p470 = pneg %p95
        %p471 = pneg %p92
        %p472 = pneg %p116
        %p473 = pneg %p113
        %p474 = pneg %p137
        %p475 = pneg %p134
        %p476 = pneg %p158
        %p477 = pneg %p155
        %p478 = pneg %p179
        %p479 = pneg %p176
        %p480 = pneg %p200
        %p481 = pneg %p197
        %p482 = pneg %p221
        %p483 = pneg %p218
        %p484 = pneg %p242
        %p485 = pneg %p239
        %p486 = pneg %p263
        %p487 = pneg %p260
        %p488 = pneg %p284
        %p489 = pneg %p281
        %p490 = pneg %p305
        %p491 = pneg %p302
        %p492 = pneg %p331
        %p493 = pneg %p328
        %s494 = sand.u32 %s318, 1
        %s495 = scalar_lea.sflag [#allocation7], %s494
        %s496 = sand.u32 %s318, 1
        %s497 = scalar_lea.vmem [#allocation14], %s496
        %v498 = vlaneseq
        %v499 = vshrl.u32 %v498, 7
        %vm500 = vcmp.eq.s32.totalorder %v499, 0
        %s501 = smul.u32 %s37, 128
        %s502 = sld [smem:[#allocation3 + %s501]]
        %v503 = vstv %s502
        %v504 = vsel %vm500, %v503, 0
        %vm505 = vcmp.eq.s32.totalorder %v499, 1
        %s506 = sadd.s32 %s501, 1
        %s507 = sld [smem:[#allocation3 + %s506]]
        %v508 = vstv %s507
        %v509 = vsel %vm505, %v508, %v504
        %vm510 = vcmp.eq.s32.totalorder %v499, 2
        %s511 = sadd.s32 %s501, 2
        %s512 = sld [smem:[#allocation3 + %s511]]
        %v513 = vstv %s512
        %v514 = vsel %vm510, %v513, %v509
        %vm515 = vcmp.eq.s32.totalorder %v499, 3
        %s516 = sadd.s32 %s501, 3
        %s517 = sld [smem:[#allocation3 + %s516]]
        %v518 = vstv %s517
        %v519 = vsel %vm515, %v518, %v514
        %vm520 = vcmp.eq.s32.totalorder %v499, 4
        %s521 = sadd.s32 %s501, 4
        %s522 = sld [smem:[#allocation3 + %s521]]
        %v523 = vstv %s522
        %v524 = vsel %vm520, %v523, %v519
        %vm525 = vcmp.eq.s32.totalorder %v499, 5
        %s526 = sadd.s32 %s501, 5
        %s527 = sld [smem:[#allocation3 + %s526]]
        %v528 = vstv %s527
        %v529 = vsel %vm525, %v528, %v524
        %vm530 = vcmp.eq.s32.totalorder %v499, 6
        %s531 = sadd.s32 %s501, 6
        %s532 = sld [smem:[#allocation3 + %s531]]
        %v533 = vstv %s532
        %v534 = vsel %vm530, %v533, %v529
        %vm535 = vcmp.eq.s32.totalorder %v499, 7
        %s536 = sadd.s32 %s501, 7
        %s537 = sld [smem:[#allocation3 + %s536]]
        %v538 = vstv %s537
        %v539 = vsel %vm535, %v538, %v534
        %v540 = vlaneseq
        %v541 = vand.u32 %v540, 127
        %vm542 = vcmp.eq.s32.totalorder %v539, %v541
        %v543 = vsel %vm542, 1, 0
        %v544 = vcvt.s32.f32 %v543
        %v545 = vld [vmem:[%s1] sm:$0xff]
        %v546 = vld [vmem:[%s1 + $0x8] sm:$0xff]
        %v547 = vld [vmem:[%s1 + $0x10] sm:$0xff]
        %v548 = vld [vmem:[%s1 + $0x18] sm:$0xff]
        %v549 = vld [vmem:[%s1 + $0x20] sm:$0xff]
        %v550 = vld [vmem:[%s1 + $0x28] sm:$0xff]
        %v551 = vld [vmem:[%s1 + $0x30] sm:$0x3]
        %vm552 = vcmask 408576
        %v554 = vsel %vm552, %v544, 0
        %vm556 = vcmask 1041408
        %v558 = vsel %vm556, %v551, 0
        %560 = vmatprep.subr.mxu0 0.0
        %v561 = vand.u32 %v545, 4294901760
        %562 = vmatpush1.msra.mxu0 %v561
        %563 = vmatprep.subr.mxu0 0.0
        %v564 = vand.u32 %v546, 4294901760
        %565 = vmatpush1.msra.mxu0 %v564
        %566 = vmatprep.subr.mxu0 0.0
        %v567 = vand.u32 %v547, 4294901760
        %568 = vmatpush1.msra.mxu0 %v567
        %569 = vmatprep.subr.mxu0 0.0
        %v570 = vand.u32 %v548, 4294901760
        %571 = vmatpush1.msra.mxu0 %v570
        %572 = vmatprep.subr.mxu0 0.0
        %v573 = vand.u32 %v549, 4294901760
        %574 = vmatpush1.msra.mxu0 %v573
        %575 = vmatprep.subr.mxu0 0.0
        %v576 = vand.u32 %v550, 4294901760
        %577 = vmatpush1.msra.mxu0 %v576
        %578 = vmatprep.subr.mxu0 0.0
        %v579 = vand.u32 %v558, 4294901760
        %580 = vmatpush1.msra.mxu0 %v579
        %581 = vmatprep.subr.mxu0 0.0
        %582 = vmatpush1.msra.mxu0 0.0
        %583 = vmatprep.subr.mxu0 0.0
        %584 = vmatpush1.msra.mxu0 0.0
        %585 = vmatprep.subr.mxu0 0.0
        %586 = vmatpush1.msra.mxu0 0.0
        %587 = vmatprep.subr.mxu0 0.0
        %588 = vmatpush1.msra.mxu0 0.0
        %589 = vmatprep.subr.mxu0 0.0
        %590 = vmatpush1.msra.mxu0 0.0
        %591 = vmatprep.subr.mxu0 0.0
        %592 = vmatpush1.msra.mxu0 0.0
        %593 = vmatprep.subr.mxu0 0.0
        %594 = vmatpush1.msra.mxu0 0.0
        %595 = vmatprep.subr.mxu0 0.0
        %596 = vmatpush1.msra.mxu0 0.0
        %597 = vmatprep.subr.mxu0 0.0
        %598 = vmatpush1.msra.mxu0 0.0
        %599 = vmatprep.subr.mxu0 0.0
        %600 = vmatpush1.msra.mxu0 0.0
        %601 = vmatprep.subr.mxu0 0.0
        %602 = vmatpush1.msra.mxu0 0.0
        %603 = vmatprep.subr.mxu0 0.0
        %604 = vmatpush1.msra.mxu0 0.0
        %605 = vmatprep.subr.mxu0 0.0
        %606 = vmatpush1.msra.mxu0 0.0
        %607 = vmatprep.subr.mxu0 0.0
        %608 = vmatpush1.msra.mxu0 0.0
        %609 = vmatprep.subr.mxu0 0.0
        %610 = vmatpush1.msra.mxu0 0.0
        %611 = vmatprep.subr.mxu0 0.0
        %612 = vmatpush1.msra.mxu0 0.0
        %613 = vmatprep.subr.mxu0 0.0
        %614 = vmatpush1.msra.mxu0 0.0
        %615 = vmatprep.subr.mxu0 0.0
        %616 = vmatpush1.msra.mxu0 0.0
        %617 = vmatprep.subr.mxu0 0.0
        %618 = vmatpush1.msra.mxu0 0.0
        %619 = vmatprep.subr.mxu0 0.0
        %620 = vmatpush1.msra.mxu0 0.0
        %621 = vmatprep.subr.mxu0 0.0
        %622 = vmatpush1.msra.mxu0 0.0
        %623 = vmatprep.subr.mxu0 0.0
        %624 = vmatpush1.msra.mxu0 0.0
        %625 = vmatprep.subr.mxu0 0.0
        %626 = vmatpush1.msra.mxu0 0.0
        %627 = vmatprep.subr.mxu0 0.0
        %628 = vmatpush1.msra.mxu0 0.0
        %629 = vmatprep.subr.mxu0 0.0
        %630 = vmatpush1.msra.mxu0 0.0
        %631 = vmatprep.mubr.f32.mxu0 0.0
        %v632 = vand.u32 %v554, 4294901760
        %v633 = vsub.f32 %v554, %v632
        %v634 = vand.u32 %v633, 4294901760
        %v635 = vsub.f32 %v633, %v634
        %v636 = vand.u32 %v635, 4294901760
        %637 = vmatmul.mubr.f32.gmra.mrb[0].mxu0 %v636
        %v638 = vpop.f32.mrb[0].mxu0
        %v639 = vadd.f32 0.0, %v638
        %v640 = vpop.f32.mrb[0].mxu0
        %641 = vdwg.mxu0
        %642 = vmatprep.subr.mxu0 0.0
        %v643 = vand.u32 %v545, 4294901760
        %v644 = vsub.f32 %v545, %v643
        %v645 = vand.u32 %v644, 4294901760
        %v646 = vsub.f32 %v644, %v645
        %v647 = vand.u32 %v646, 4294901760
        %648 = vmatpush1.msra.mxu0 %v647
        %649 = vmatprep.subr.mxu0 0.0
        %v650 = vand.u32 %v546, 4294901760
        %v651 = vsub.f32 %v546, %v650
        %v652 = vand.u32 %v651, 4294901760
        %v653 = vsub.f32 %v651, %v652
        %v654 = vand.u32 %v653, 4294901760
        %655 = vmatpush1.msra.mxu0 %v654
        %656 = vmatprep.subr.mxu0 0.0
        %v657 = vand.u32 %v547, 4294901760
        %v658 = vsub.f32 %v547, %v657
        %v659 = vand.u32 %v658, 4294901760
        %v660 = vsub.f32 %v658, %v659
        %v661 = vand.u32 %v660, 4294901760
        %662 = vmatpush1.msra.mxu0 %v661
        %663 = vmatprep.subr.mxu0 0.0
        %v664 = vand.u32 %v548, 4294901760
        %v665 = vsub.f32 %v548, %v664
        %v666 = vand.u32 %v665, 4294901760
        %v667 = vsub.f32 %v665, %v666
        %v668 = vand.u32 %v667, 4294901760
        %669 = vmatpush1.msra.mxu0 %v668
        %670 = vmatprep.subr.mxu0 0.0
        %v671 = vand.u32 %v549, 4294901760
        %v672 = vsub.f32 %v549, %v671
        %v673 = vand.u32 %v672, 4294901760
        %v674 = vsub.f32 %v672, %v673
        %v675 = vand.u32 %v674, 4294901760
        %676 = vmatpush1.msra.mxu0 %v675
        %677 = vmatprep.subr.mxu0 0.0
        %v678 = vand.u32 %v550, 4294901760
        %v679 = vsub.f32 %v550, %v678
        %v680 = vand.u32 %v679, 4294901760
        %v681 = vsub.f32 %v679, %v680
        %v682 = vand.u32 %v681, 4294901760
        %683 = vmatpush1.msra.mxu0 %v682
        %684 = vmatprep.subr.mxu0 0.0
        %v685 = vand.u32 %v558, 4294901760
        %v686 = vsub.f32 %v558, %v685
        %v687 = vand.u32 %v686, 4294901760
        %v688 = vsub.f32 %v686, %v687
        %v689 = vand.u32 %v688, 4294901760
        %690 = vmatpush1.msra.mxu0 %v689
        %691 = vmatprep.subr.mxu0 0.0
        %692 = vmatpush1.msra.mxu0 0.0
        %693 = vmatprep.subr.mxu0 0.0
        %694 = vmatpush1.msra.mxu0 0.0
        %695 = vmatprep.subr.mxu0 0.0
        %696 = vmatpush1.msra.mxu0 0.0
        %697 = vmatprep.subr.mxu0 0.0
        %698 = vmatpush1.msra.mxu0 0.0
        %699 = vmatprep.subr.mxu0 0.0
        %700 = vmatpush1.msra.mxu0 0.0
        %701 = vmatprep.subr.mxu0 0.0
        %702 = vmatpush1.msra.mxu0 0.0
        %703 = vmatprep.subr.mxu0 0.0
        %704 = vmatpush1.msra.mxu0 0.0
        %705 = vmatprep.subr.mxu0 0.0
        %706 = vmatpush1.msra.mxu0 0.0
        %707 = vmatprep.subr.mxu0 0.0
        %708 = vmatpush1.msra.mxu0 0.0
        %709 = vmatprep.subr.mxu0 0.0
        %710 = vmatpush1.msra.mxu0 0.0
        %711 = vmatprep.subr.mxu0 0.0
        %712 = vmatpush1.msra.mxu0 0.0
        %713 = vmatprep.subr.mxu0 0.0
        %714 = vmatpush1.msra.mxu0 0.0
        %715 = vmatprep.subr.mxu0 0.0
        %716 = vmatpush1.msra.mxu0 0.0
        %717 = vmatprep.subr.mxu0 0.0
        %718 = vmatpush1.msra.mxu0 0.0
        %719 = vmatprep.subr.mxu0 0.0
        %720 = vmatpush1.msra.mxu0 0.0
        %721 = vmatprep.subr.mxu0 0.0
        %722 = vmatpush1.msra.mxu0 0.0
        %723 = vmatprep.subr.mxu0 0.0
        %724 = vmatpush1.msra.mxu0 0.0
        %725 = vmatprep.subr.mxu0 0.0
        %726 = vmatpush1.msra.mxu0 0.0
        %727 = vmatprep.subr.mxu0 0.0
        %728 = vmatpush1.msra.mxu0 0.0
        %729 = vmatprep.subr.mxu0 0.0
        %730 = vmatpush1.msra.mxu0 0.0
        %731 = vmatprep.subr.mxu0 0.0
        %732 = vmatpush1.msra.mxu0 0.0
        %733 = vmatprep.subr.mxu0 0.0
        %734 = vmatpush1.msra.mxu0 0.0
        %735 = vmatprep.subr.mxu0 0.0
        %736 = vmatpush1.msra.mxu0 0.0
        %737 = vmatprep.subr.mxu0 0.0
        %738 = vmatpush1.msra.mxu0 0.0
        %739 = vmatprep.subr.mxu0 0.0
        %740 = vmatpush1.msra.mxu0 0.0
        %741 = vmatprep.mubr.f32.mxu0 0.0
        %v742 = vand.u32 %v554, 4294901760
        %743 = vmatmul.mubr.f32.gmra.mrb[0].mxu0 %v742
        %v744 = vpop.f32.mrb[0].mxu0
        %v745 = vadd.f32 %v639, %v744
        %v746 = vpop.f32.mrb[0].mxu0
        %747 = vdwg.mxu0
        %748 = vmatprep.subr.mxu0 0.0
        %v749 = vand.u32 %v545, 4294901760
        %v750 = vsub.f32 %v545, %v749
        %751 = vmatpush1.msra.mxu0 %v750
        %752 = vmatprep.subr.mxu0 0.0
        %v753 = vand.u32 %v546, 4294901760
        %v754 = vsub.f32 %v546, %v753
        %755 = vmatpush1.msra.mxu0 %v754
        %756 = vmatprep.subr.mxu0 0.0
        %v757 = vand.u32 %v547, 4294901760
        %v758 = vsub.f32 %v547, %v757
        %759 = vmatpush1.msra.mxu0 %v758
        %760 = vmatprep.subr.mxu0 0.0
        %v761 = vand.u32 %v548, 4294901760
        %v762 = vsub.f32 %v548, %v761
        %763 = vmatpush1.msra.mxu0 %v762
        %764 = vmatprep.subr.mxu0 0.0
        %v765 = vand.u32 %v549, 4294901760
        %v766 = vsub.f32 %v549, %v765
        %767 = vmatpush1.msra.mxu0 %v766
        %768 = vmatprep.subr.mxu0 0.0
        %v769 = vand.u32 %v550, 4294901760
        %v770 = vsub.f32 %v550, %v769
        %771 = vmatpush1.msra.mxu0 %v770
        %772 = vmatprep.subr.mxu0 0.0
        %v773 = vand.u32 %v558, 4294901760
        %v774 = vsub.f32 %v558, %v773
        %775 = vmatpush1.msra.mxu0 %v774
        %776 = vmatprep.subr.mxu0 0.0
        %777 = vmatpush1.msra.mxu0 0.0
        %778 = vmatprep.subr.mxu0 0.0
        %779 = vmatpush1.msra.mxu0 0.0
        %780 = vmatprep.subr.mxu0 0.0
        %781 = vmatpush1.msra.mxu0 0.0
        %782 = vmatprep.subr.mxu0 0.0
        %783 = vmatpush1.msra.mxu0 0.0
        %784 = vmatprep.subr.mxu0 0.0
        %785 = vmatpush1.msra.mxu0 0.0
        %786 = vmatprep.subr.mxu0 0.0
        %787 = vmatpush1.msra.mxu0 0.0
        %788 = vmatprep.subr.mxu0 0.0
        %789 = vmatpush1.msra.mxu0 0.0
        %790 = vmatprep.subr.mxu0 0.0
        %791 = vmatpush1.msra.mxu0 0.0
        %792 = vmatprep.subr.mxu0 0.0
        %793 = vmatpush1.msra.mxu0 0.0
        %794 = vmatprep.subr.mxu0 0.0
        %795 = vmatpush1.msra.mxu0 0.0
        %796 = vmatprep.subr.mxu0 0.0
        %797 = vmatpush1.msra.mxu0 0.0
        %798 = vmatprep.subr.mxu0 0.0
        %799 = vmatpush1.msra.mxu0 0.0
        %800 = vmatprep.subr.mxu0 0.0
        %801 = vmatpush1.msra.mxu0 0.0
        %802 = vmatprep.subr.mxu0 0.0
        %803 = vmatpush1.msra.mxu0 0.0
        %804 = vmatprep.subr.mxu0 0.0
        %805 = vmatpush1.msra.mxu0 0.0
        %806 = vmatprep.subr.mxu0 0.0
        %807 = vmatpush1.msra.mxu0 0.0
        %808 = vmatprep.subr.mxu0 0.0
        %809 = vmatpush1.msra.mxu0 0.0
        %810 = vmatprep.subr.mxu0 0.0
        %811 = vmatpush1.msra.mxu0 0.0
        %812 = vmatprep.subr.mxu0 0.0
        %813 = vmatpush1.msra.mxu0 0.0
        %814 = vmatprep.subr.mxu0 0.0
        %815 = vmatpush1.msra.mxu0 0.0
        %816 = vmatprep.subr.mxu0 0.0
        %817 = vmatpush1.msra.mxu0 0.0
        %818 = vmatprep.subr.mxu0 0.0
        %819 = vmatpush1.msra.mxu0 0.0
        %820 = vmatprep.subr.mxu0 0.0
        %821 = vmatpush1.msra.mxu0 0.0
        %822 = vmatprep.subr.mxu0 0.0
        %823 = vmatpush1.msra.mxu0 0.0
        %824 = vmatprep.subr.mxu0 0.0
        %825 = vmatpush1.msra.mxu0 0.0
        %826 = vmatprep.mubr.f32.mxu0 0.0
        %v827 = vand.u32 %v554, 4294901760
        %v828 = vsub.f32 %v554, %v827
        %829 = vmatmul.mubr.f32.gmra.mrb[0].mxu0 %v828
        %v830 = vpop.f32.mrb[0].mxu0
        %v831 = vadd.f32 %v745, %v830
        %v832 = vpop.f32.mrb[0].mxu0
        %833 = vdwg.mxu0
        %834 = vmatprep.subr.mxu0 0.0
        %v835 = vand.u32 %v545, 4294901760
        %836 = vmatpush1.msra.mxu0 %v835
        %837 = vmatprep.subr.mxu0 0.0
        %v838 = vand.u32 %v546, 4294901760
        %839 = vmatpush1.msra.mxu0 %v838
        %840 = vmatprep.subr.mxu0 0.0
        %v841 = vand.u32 %v547, 4294901760
        %842 = vmatpush1.msra.mxu0 %v841
        %843 = vmatprep.subr.mxu0 0.0
        %v844 = vand.u32 %v548, 4294901760
        %845 = vmatpush1.msra.mxu0 %v844
        %846 = vmatprep.subr.mxu0 0.0
        %v847 = vand.u32 %v549, 4294901760
        %848 = vmatpush1.msra.mxu0 %v847
        %849 = vmatprep.subr.mxu0 0.0
        %v850 = vand.u32 %v550, 4294901760
        %851 = vmatpush1.msra.mxu0 %v850
        %852 = vmatprep.subr.mxu0 0.0
        %v853 = vand.u32 %v558, 4294901760
        %854 = vmatpush1.msra.mxu0 %v853
        %855 = vmatprep.subr.mxu0 0.0
        %856 = vmatpush1.msra.mxu0 0.0
        %857 = vmatprep.subr.mxu0 0.0
        %858 = vmatpush1.msra.mxu0 0.0
        %859 = vmatprep.subr.mxu0 0.0
        %860 = vmatpush1.msra.mxu0 0.0
        %861 = vmatprep.subr.mxu0 0.0
        %862 = vmatpush1.msra.mxu0 0.0
        %863 = vmatprep.subr.mxu0 0.0
        %864 = vmatpush1.msra.mxu0 0.0
        %865 = vmatprep.subr.mxu0 0.0
        %866 = vmatpush1.msra.mxu0 0.0
        %867 = vmatprep.subr.mxu0 0.0
        %868 = vmatpush1.msra.mxu0 0.0
        %869 = vmatprep.subr.mxu0 0.0
        %870 = vmatpush1.msra.mxu0 0.0
        %871 = vmatprep.subr.mxu0 0.0
        %872 = vmatpush1.msra.mxu0 0.0
        %873 = vmatprep.subr.mxu0 0.0
        %874 = vmatpush1.msra.mxu0 0.0
        %875 = vmatprep.subr.mxu0 0.0
        %876 = vmatpush1.msra.mxu0 0.0
        %877 = vmatprep.subr.mxu0 0.0
        %878 = vmatpush1.msra.mxu0 0.0
        %879 = vmatprep.subr.mxu0 0.0
        %880 = vmatpush1.msra.mxu0 0.0
        %881 = vmatprep.subr.mxu0 0.0
        %882 = vmatpush1.msra.mxu0 0.0
        %883 = vmatprep.subr.mxu0 0.0
        %884 = vmatpush1.msra.mxu0 0.0
        %885 = vmatprep.subr.mxu0 0.0
        %886 = vmatpush1.msra.mxu0 0.0
        %887 = vmatprep.subr.mxu0 0.0
        %888 = vmatpush1.msra.mxu0 0.0
        %889 = vmatprep.subr.mxu0 0.0
        %890 = vmatpush1.msra.mxu0 0.0
        %891 = vmatprep.subr.mxu0 0.0
        %892 = vmatpush1.msra.mxu0 0.0
        %893 = vmatprep.subr.mxu0 0.0
        %894 = vmatpush1.msra.mxu0 0.0
        %895 = vmatprep.subr.mxu0 0.0
        %896 = vmatpush1.msra.mxu0 0.0
        %897 = vmatprep.subr.mxu0 0.0
        %898 = vmatpush1.msra.mxu0 0.0
        %899 = vmatprep.subr.mxu0 0.0
        %900 = vmatpush1.msra.mxu0 0.0
        %901 = vmatprep.subr.mxu0 0.0
        %902 = vmatpush1.msra.mxu0 0.0
        %903 = vmatprep.subr.mxu0 0.0
        %904 = vmatpush1.msra.mxu0 0.0
        %905 = vmatprep.mubr.f32.mxu0 0.0
        %v906 = vand.u32 %v554, 4294901760
        %v907 = vsub.f32 %v554, %v906
        %v908 = vand.u32 %v907, 4294901760
        %909 = vmatmul.mubr.f32.gmra.mrb[0].mxu0 %v908
        %v910 = vpop.f32.mrb[0].mxu0
        %v911 = vadd.f32 %v831, %v910
        %v912 = vpop.f32.mrb[0].mxu0
        %913 = vdwg.mxu0
        %914 = vmatprep.subr.mxu0 0.0
        %v915 = vand.u32 %v545, 4294901760
        %v916 = vsub.f32 %v545, %v915
        %v917 = vand.u32 %v916, 4294901760
        %918 = vmatpush1.msra.mxu0 %v917
        %919 = vmatprep.subr.mxu0 0.0
        %v920 = vand.u32 %v546, 4294901760
        %v921 = vsub.f32 %v546, %v920
        %v922 = vand.u32 %v921, 4294901760
        %923 = vmatpush1.msra.mxu0 %v922
        %924 = vmatprep.subr.mxu0 0.0
        %v925 = vand.u32 %v547, 4294901760
        %v926 = vsub.f32 %v547, %v925
        %v927 = vand.u32 %v926, 4294901760
        %928 = vmatpush1.msra.mxu0 %v927
        %929 = vmatprep.subr.mxu0 0.0
        %v930 = vand.u32 %v548, 4294901760
        %v931 = vsub.f32 %v548, %v930
        %v932 = vand.u32 %v931, 4294901760
        %933 = vmatpush1.msra.mxu0 %v932
        %934 = vmatprep.subr.mxu0 0.0
        %v935 = vand.u32 %v549, 4294901760
        %v936 = vsub.f32 %v549, %v935
        %v937 = vand.u32 %v936, 4294901760
        %938 = vmatpush1.msra.mxu0 %v937
        %939 = vmatprep.subr.mxu0 0.0
        %v940 = vand.u32 %v550, 4294901760
        %v941 = vsub.f32 %v550, %v940
        %v942 = vand.u32 %v941, 4294901760
        %943 = vmatpush1.msra.mxu0 %v942
        %944 = vmatprep.subr.mxu0 0.0
        %v945 = vand.u32 %v558, 4294901760
        %v946 = vsub.f32 %v558, %v945
        %v947 = vand.u32 %v946, 4294901760
        %948 = vmatpush1.msra.mxu0 %v947
        %949 = vmatprep.subr.mxu0 0.0
        %950 = vmatpush1.msra.mxu0 0.0
        %951 = vmatprep.subr.mxu0 0.0
        %952 = vmatpush1.msra.mxu0 0.0
        %953 = vmatprep.subr.mxu0 0.0
        %954 = vmatpush1.msra.mxu0 0.0
        %955 = vmatprep.subr.mxu0 0.0
        %956 = vmatpush1.msra.mxu0 0.0
        %957 = vmatprep.subr.mxu0 0.0
        %958 = vmatpush1.msra.mxu0 0.0
        %959 = vmatprep.subr.mxu0 0.0
        %960 = vmatpush1.msra.mxu0 0.0
        %961 = vmatprep.subr.mxu0 0.0
        %962 = vmatpush1.msra.mxu0 0.0
        %963 = vmatprep.subr.mxu0 0.0
        %964 = vmatpush1.msra.mxu0 0.0
        %965 = vmatprep.subr.mxu0 0.0
        %966 = vmatpush1.msra.mxu0 0.0
        %967 = vmatprep.subr.mxu0 0.0
        %968 = vmatpush1.msra.mxu0 0.0
        %969 = vmatprep.subr.mxu0 0.0
        %970 = vmatpush1.msra.mxu0 0.0
        %971 = vmatprep.subr.mxu0 0.0
        %972 = vmatpush1.msra.mxu0 0.0
        %973 = vmatprep.subr.mxu0 0.0
        %974 = vmatpush1.msra.mxu0 0.0
        %975 = vmatprep.subr.mxu0 0.0
        %976 = vmatpush1.msra.mxu0 0.0
        %977 = vmatprep.subr.mxu0 0.0
        %978 = vmatpush1.msra.mxu0 0.0
        %979 = vmatprep.subr.mxu0 0.0
        %980 = vmatpush1.msra.mxu0 0.0
        %981 = vmatprep.subr.mxu0 0.0
        %982 = vmatpush1.msra.mxu0 0.0
        %983 = vmatprep.subr.mxu0 0.0
        %984 = vmatpush1.msra.mxu0 0.0
        %985 = vmatprep.subr.mxu0 0.0
        %986 = vmatpush1.msra.mxu0 0.0
        %987 = vmatprep.subr.mxu0 0.0
        %988 = vmatpush1.msra.mxu0 0.0
        %989 = vmatprep.subr.mxu0 0.0
        %990 = vmatpush1.msra.mxu0 0.0
        %991 = vmatprep.subr.mxu0 0.0
        %992 = vmatpush1.msra.mxu0 0.0
        %993 = vmatprep.subr.mxu0 0.0
        %994 = vmatpush1.msra.mxu0 0.0
        %995 = vmatprep.subr.mxu0 0.0
        %996 = vmatpush1.msra.mxu0 0.0
        %997 = vmatprep.subr.mxu0 0.0
        %998 = vmatpush1.msra.mxu0 0.0
        %999 = vmatprep.mubr.f32.mxu0 0.0
        %v1000 = vand.u32 %v554, 4294901760
        %1001 = vmatmul.mubr.f32.gmra.mrb[0].mxu0 %v1000
        %v1002 = vpop.f32.mrb[0].mxu0
        %v1003 = vadd.f32 %v911, %v1002
        %v1004 = vpop.f32.mrb[0].mxu0
        %1005 = vdwg.mxu0
        %1006 = vmatprep.subr.mxu0 0.0
        %v1007 = vand.u32 %v545, 4294901760
        %1008 = vmatpush1.msra.mxu0 %v1007
        %1009 = vmatprep.subr.mxu0 0.0
        %v1010 = vand.u32 %v546, 4294901760
        %1011 = vmatpush1.msra.mxu0 %v1010
        %1012 = vmatprep.subr.mxu0 0.0
        %v1013 = vand.u32 %v547, 4294901760
        %1014 = vmatpush1.msra.mxu0 %v1013
        %1015 = vmatprep.subr.mxu0 0.0
        %v1016 = vand.u32 %v548, 4294901760
        %1017 = vmatpush1.msra.mxu0 %v1016
        %1018 = vmatprep.subr.mxu0 0.0
        %v1019 = vand.u32 %v549, 4294901760
        %1020 = vmatpush1.msra.mxu0 %v1019
        %1021 = vmatprep.subr.mxu0 0.0
        %v1022 = vand.u32 %v550, 4294901760
        %1023 = vmatpush1.msra.mxu0 %v1022
        %1024 = vmatprep.subr.mxu0 0.0
        %v1025 = vand.u32 %v558, 4294901760
        %1026 = vmatpush1.msra.mxu0 %v1025
        %1027 = vmatprep.subr.mxu0 0.0
        %1028 = vmatpush1.msra.mxu0 0.0
        %1029 = vmatprep.subr.mxu0 0.0
        %1030 = vmatpush1.msra.mxu0 0.0
        %1031 = vmatprep.subr.mxu0 0.0
        %1032 = vmatpush1.msra.mxu0 0.0
        %1033 = vmatprep.subr.mxu0 0.0
        %1034 = vmatpush1.msra.mxu0 0.0
        %1035 = vmatprep.subr.mxu0 0.0
        %1036 = vmatpush1.msra.mxu0 0.0
        %1037 = vmatprep.subr.mxu0 0.0
        %1038 = vmatpush1.msra.mxu0 0.0
        %1039 = vmatprep.subr.mxu0 0.0
        %1040 = vmatpush1.msra.mxu0 0.0
        %1041 = vmatprep.subr.mxu0 0.0
        %1042 = vmatpush1.msra.mxu0 0.0
        %1043 = vmatprep.subr.mxu0 0.0
        %1044 = vmatpush1.msra.mxu0 0.0
        %1045 = vmatprep.subr.mxu0 0.0
        %1046 = vmatpush1.msra.mxu0 0.0
        %1047 = vmatprep.subr.mxu0 0.0
        %1048 = vmatpush1.msra.mxu0 0.0
        %1049 = vmatprep.subr.mxu0 0.0
        %1050 = vmatpush1.msra.mxu0 0.0
        %1051 = vmatprep.subr.mxu0 0.0
        %1052 = vmatpush1.msra.mxu0 0.0
        %1053 = vmatprep.subr.mxu0 0.0
        %1054 = vmatpush1.msra.mxu0 0.0
        %1055 = vmatprep.subr.mxu0 0.0
        %1056 = vmatpush1.msra.mxu0 0.0
        %1057 = vmatprep.subr.mxu0 0.0
        %1058 = vmatpush1.msra.mxu0 0.0
        %1059 = vmatprep.subr.mxu0 0.0
        %1060 = vmatpush1.msra.mxu0 0.0
        %1061 = vmatprep.subr.mxu0 0.0
        %1062 = vmatpush1.msra.mxu0 0.0
        %1063 = vmatprep.subr.mxu0 0.0
        %1064 = vmatpush1.msra.mxu0 0.0
        %1065 = vmatprep.subr.mxu0 0.0
        %1066 = vmatpush1.msra.mxu0 0.0
        %1067 = vmatprep.subr.mxu0 0.0
        %1068 = vmatpush1.msra.mxu0 0.0
        %1069 = vmatprep.subr.mxu0 0.0
        %1070 = vmatpush1.msra.mxu0 0.0
        %1071 = vmatprep.subr.mxu0 0.0
        %1072 = vmatpush1.msra.mxu0 0.0
        %1073 = vmatprep.subr.mxu0 0.0
        %1074 = vmatpush1.msra.mxu0 0.0
        %1075 = vmatprep.subr.mxu0 0.0
        %1076 = vmatpush1.msra.mxu0 0.0
        %1077 = vmatprep.mubr.f32.mxu0 0.0
        %v1078 = vand.u32 %v554, 4294901760
        %1079 = vmatmul.mubr.f32.gmra.mrb[0].mxu0 %v1078
        %v1080 = vpop.f32.mrb[0].mxu0
        %v1081 = vadd.f32 %v1003, %v1080
        %v1082 = vpop.f32.mrb[0].mxu0
        %1083 = vdwg.mxu0
        %v1084 = vld [vmem:[%s2] sm:$0xff]
        %v1085 = vld [vmem:[%s2 + $0x8] sm:$0xff]
        %v1086 = vld [vmem:[%s2 + $0x10] sm:$0xff]
        %v1087 = vld [vmem:[%s2 + $0x18] sm:$0xff]
        %v1088 = vld [vmem:[#allocation5] sm:$0x1]
        %v1090 = vlaneseq
        %v1091 = vshrl.u32 %v1090, 7
        %v1092 = vsub.s32 0, %v1091
        %v1093 = vrot.slane %v1088, %v1092
        %vm1095 = vcmask 261120
        %v1097 = vsel %vm1095, %v1081, 0
        %1099 = vmatprep.subr.mxu0 0.0
        %v1100 = vand.u32 %v1084, 4294901760
        %1101 = vmatpush1.msra.mxu0 %v1100
        %1102 = vmatprep.subr.mxu0 0.0
        %v1103 = vand.u32 %v1085, 4294901760
        %1104 = vmatpush1.msra.mxu0 %v1103
        %1105 = vmatprep.subr.mxu0 0.0
        %v1106 = vand.u32 %v1086, 4294901760
        %1107 = vmatpush1.msra.mxu0 %v1106
        %1108 = vmatprep.subr.mxu0 0.0
        %v1109 = vand.u32 %v1087, 4294901760
        %1110 = vmatpush1.msra.mxu0 %v1109
        %1111 = vmatprep.subr.mxu0 0.0
        %1112 = vmatpush1.msra.mxu0 0.0
        %1113 = vmatprep.subr.mxu0 0.0
        %1114 = vmatpush1.msra.mxu0 0.0
        %1115 = vmatprep.subr.mxu0 0.0
        %1116 = vmatpush1.msra.mxu0 0.0
        %1117 = vmatprep.subr.mxu0 0.0
        %1118 = vmatpush1.msra.mxu0 0.0
        %1119 = vmatprep.subr.mxu0 0.0
        %1120 = vmatpush1.msra.mxu0 0.0
        %1121 = vmatprep.subr.mxu0 0.0
        %1122 = vmatpush1.msra.mxu0 0.0
        %1123 = vmatprep.subr.mxu0 0.0
        %1124 = vmatpush1.msra.mxu0 0.0
        %1125 = vmatprep.subr.mxu0 0.0
        %1126 = vmatpush1.msra.mxu0 0.0
        %1127 = vmatprep.subr.mxu0 0.0
        %1128 = vmatpush1.msra.mxu0 0.0
        %1129 = vmatprep.subr.mxu0 0.0
        %1130 = vmatpush1.msra.mxu0 0.0
        %1131 = vmatprep.subr.mxu0 0.0
        %1132 = vmatpush1.msra.mxu0 0.0
        %1133 = vmatprep.subr.mxu0 0.0
        %1134 = vmatpush1.msra.mxu0 0.0
        %1135 = vmatprep.subr.mxu0 0.0
        %1136 = vmatpush1.msra.mxu0 0.0
        %1137 = vmatprep.subr.mxu0 0.0
        %1138 = vmatpush1.msra.mxu0 0.0
        %1139 = vmatprep.subr.mxu0 0.0
        %1140 = vmatpush1.msra.mxu0 0.0
        %1141 = vmatprep.subr.mxu0 0.0
        %1142 = vmatpush1.msra.mxu0 0.0
        %1143 = vmatprep.subr.mxu0 0.0
        %1144 = vmatpush1.msra.mxu0 0.0
        %1145 = vmatprep.subr.mxu0 0.0
        %1146 = vmatpush1.msra.mxu0 0.0
        %1147 = vmatprep.subr.mxu0 0.0
        %1148 = vmatpush1.msra.mxu0 0.0
        %1149 = vmatprep.subr.mxu0 0.0
        %1150 = vmatpush1.msra.mxu0 0.0
        %1151 = vmatprep.subr.mxu0 0.0
        %1152 = vmatpush1.msra.mxu0 0.0
        %1153 = vmatprep.subr.mxu0 0.0
        %1154 = vmatpush1.msra.mxu0 0.0
        %1155 = vmatprep.subr.mxu0 0.0
        %1156 = vmatpush1.msra.mxu0 0.0
        %1157 = vmatprep.subr.mxu0 0.0
        %1158 = vmatpush1.msra.mxu0 0.0
        %1159 = vmatprep.subr.mxu0 0.0
        %1160 = vmatpush1.msra.mxu0 0.0
        %1161 = vmatprep.subr.mxu0 0.0
        %1162 = vmatpush1.msra.mxu0 0.0
        %1163 = vmatprep.subr.mxu0 0.0
        %1164 = vmatpush1.msra.mxu0 0.0
        %1165 = vmatprep.subr.mxu0 0.0
        %1166 = vmatpush1.msra.mxu0 0.0
        %1167 = vmatprep.mubr.f32.mxu0 0.0
        %v1168 = vand.u32 %v1097, 4294901760
        %v1169 = vsub.f32 %v1097, %v1168
        %v1170 = vand.u32 %v1169, 4294901760
        %v1171 = vsub.f32 %v1169, %v1170
        %v1172 = vand.u32 %v1171, 4294901760
        %1173 = vmatmul.mubr.f32.gmra.mrb[0].mxu0 %v1172
        %v1174 = vpop.f32.mrb[0].mxu0
        %v1175 = vadd.f32 %v1093, %v1174
        %v1176 = vpop.f32.mrb[0].mxu0
        %1177 = vdwg.mxu0
        %1178 = vmatprep.subr.mxu0 0.0
        %v1179 = vand.u32 %v1084, 4294901760
        %v1180 = vsub.f32 %v1084, %v1179
        %v1181 = vand.u32 %v1180, 4294901760
        %v1182 = vsub.f32 %v1180, %v1181
        %v1183 = vand.u32 %v1182, 4294901760
        %1184 = vmatpush1.msra.mxu0 %v1183
        %1185 = vmatprep.subr.mxu0 0.0
        %v1186 = vand.u32 %v1085, 4294901760
        %v1187 = vsub.f32 %v1085, %v1186
        %v1188 = vand.u32 %v1187, 4294901760
        %v1189 = vsub.f32 %v1187, %v1188
        %v1190 = vand.u32 %v1189, 4294901760
        %1191 = vmatpush1.msra.mxu0 %v1190
        %1192 = vmatprep.subr.mxu0 0.0
        %v1193 = vand.u32 %v1086, 4294901760
        %v1194 = vsub.f32 %v1086, %v1193
        %v1195 = vand.u32 %v1194, 4294901760
        %v1196 = vsub.f32 %v1194, %v1195
        %v1197 = vand.u32 %v1196, 4294901760
        %1198 = vmatpush1.msra.mxu0 %v1197
        %1199 = vmatprep.subr.mxu0 0.0
        %v1200 = vand.u32 %v1087, 4294901760
        %v1201 = vsub.f32 %v1087, %v1200
        %v1202 = vand.u32 %v1201, 4294901760
        %v1203 = vsub.f32 %v1201, %v1202
        %v1204 = vand.u32 %v1203, 4294901760
        %1205 = vmatpush1.msra.mxu0 %v1204
        %1206 = vmatprep.subr.mxu0 0.0
        %1207 = vmatpush1.msra.mxu0 0.0
        %1208 = vmatprep.subr.mxu0 0.0
        %1209 = vmatpush1.msra.mxu0 0.0
        %1210 = vmatprep.subr.mxu0 0.0
        %1211 = vmatpush1.msra.mxu0 0.0
        %1212 = vmatprep.subr.mxu0 0.0
        %1213 = vmatpush1.msra.mxu0 0.0
        %1214 = vmatprep.subr.mxu0 0.0
        %1215 = vmatpush1.msra.mxu0 0.0
        %1216 = vmatprep.subr.mxu0 0.0
        %1217 = vmatpush1.msra.mxu0 0.0
        %1218 = vmatprep.subr.mxu0 0.0
        %1219 = vmatpush1.msra.mxu0 0.0
        %1220 = vmatprep.subr.mxu0 0.0
        %1221 = vmatpush1.msra.mxu0 0.0
        %1222 = vmatprep.subr.mxu0 0.0
        %1223 = vmatpush1.msra.mxu0 0.0
        %1224 = vmatprep.subr.mxu0 0.0
        %1225 = vmatpush1.msra.mxu0 0.0
        %1226 = vmatprep.subr.mxu0 0.0
        %1227 = vmatpush1.msra.mxu0 0.0
        %1228 = vmatprep.subr.mxu0 0.0
        %1229 = vmatpush1.msra.mxu0 0.0
        %1230 = vmatprep.subr.mxu0 0.0
        %1231 = vmatpush1.msra.mxu0 0.0
        %1232 = vmatprep.subr.mxu0 0.0
        %1233 = vmatpush1.msra.mxu0 0.0
        %1234 = vmatprep.subr.mxu0 0.0
        %1235 = vmatpush1.msra.mxu0 0.0
        %1236 = vmatprep.subr.mxu0 0.0
        %1237 = vmatpush1.msra.mxu0 0.0
        %1238 = vmatprep.subr.mxu0 0.0
        %1239 = vmatpush1.msra.mxu0 0.0
        %1240 = vmatprep.subr.mxu0 0.0
        %1241 = vmatpush1.msra.mxu0 0.0
        %1242 = vmatprep.subr.mxu0 0.0
        %1243 = vmatpush1.msra.mxu0 0.0
        %1244 = vmatprep.subr.mxu0 0.0
        %1245 = vmatpush1.msra.mxu0 0.0
        %1246 = vmatprep.subr.mxu0 0.0
        %1247 = vmatpush1.msra.mxu0 0.0
        %1248 = vmatprep.subr.mxu0 0.0
        %1249 = vmatpush1.msra.mxu0 0.0
        %1250 = vmatprep.subr.mxu0 0.0
        %1251 = vmatpush1.msra.mxu0 0.0
        %1252 = vmatprep.subr.mxu0 0.0
        %1253 = vmatpush1.msra.mxu0 0.0
        %1254 = vmatprep.subr.mxu0 0.0
        %1255 = vmatpush1.msra.mxu0 0.0
        %1256 = vmatprep.subr.mxu0 0.0
        %1257 = vmatpush1.msra.mxu0 0.0
        %1258 = vmatprep.subr.mxu0 0.0
        %1259 = vmatpush1.msra.mxu0 0.0
        %1260 = vmatprep.subr.mxu0 0.0
        %1261 = vmatpush1.msra.mxu0 0.0
        %1262 = vmatprep.mubr.f32.mxu0 0.0
        %v1263 = vand.u32 %v1097, 4294901760
        %1264 = vmatmul.mubr.f32.gmra.mrb[0].mxu0 %v1263
        %v1265 = vpop.f32.mrb[0].mxu0
        %v1266 = vadd.f32 %v1175, %v1265
        %v1267 = vpop.f32.mrb[0].mxu0
        %1268 = vdwg.mxu0
        %1269 = vmatprep.subr.mxu0 0.0
        %v1270 = vand.u32 %v1084, 4294901760
        %v1271 = vsub.f32 %v1084, %v1270
        %1272 = vmatpush1.msra.mxu0 %v1271
        %1273 = vmatprep.subr.mxu0 0.0
        %v1274 = vand.u32 %v1085, 4294901760
        %v1275 = vsub.f32 %v1085, %v1274
        %1276 = vmatpush1.msra.mxu0 %v1275
        %1277 = vmatprep.subr.mxu0 0.0
        %v1278 = vand.u32 %v1086, 4294901760
        %v1279 = vsub.f32 %v1086, %v1278
        %1280 = vmatpush1.msra.mxu0 %v1279
        %1281 = vmatprep.subr.mxu0 0.0
        %v1282 = vand.u32 %v1087, 4294901760
        %v1283 = vsub.f32 %v1087, %v1282
        %1284 = vmatpush1.msra.mxu0 %v1283
        %1285 = vmatprep.subr.mxu0 0.0
        %1286 = vmatpush1.msra.mxu0 0.0
        %1287 = vmatprep.subr.mxu0 0.0
        %1288 = vmatpush1.msra.mxu0 0.0
        %1289 = vmatprep.subr.mxu0 0.0
        %1290 = vmatpush1.msra.mxu0 0.0
        %1291 = vmatprep.subr.mxu0 0.0
        %1292 = vmatpush1.msra.mxu0 0.0
        %1293 = vmatprep.subr.mxu0 0.0
        %1294 = vmatpush1.msra.mxu0 0.0
        %1295 = vmatprep.subr.mxu0 0.0
        %1296 = vmatpush1.msra.mxu0 0.0
        %1297 = vmatprep.subr.mxu0 0.0
        %1298 = vmatpush1.msra.mxu0 0.0
        %1299 = vmatprep.subr.mxu0 0.0
        %1300 = vmatpush1.msra.mxu0 0.0
        %1301 = vmatprep.subr.mxu0 0.0
        %1302 = vmatpush1.msra.mxu0 0.0
        %1303 = vmatprep.subr.mxu0 0.0
        %1304 = vmatpush1.msra.mxu0 0.0
        %1305 = vmatprep.subr.mxu0 0.0
        %1306 = vmatpush1.msra.mxu0 0.0
        %1307 = vmatprep.subr.mxu0 0.0
        %1308 = vmatpush1.msra.mxu0 0.0
        %1309 = vmatprep.subr.mxu0 0.0
        %1310 = vmatpush1.msra.mxu0 0.0
        %1311 = vmatprep.subr.mxu0 0.0
        %1312 = vmatpush1.msra.mxu0 0.0
        %1313 = vmatprep.subr.mxu0 0.0
        %1314 = vmatpush1.msra.mxu0 0.0
        %1315 = vmatprep.subr.mxu0 0.0
        %1316 = vmatpush1.msra.mxu0 0.0
        %1317 = vmatprep.subr.mxu0 0.0
        %1318 = vmatpush1.msra.mxu0 0.0
        %1319 = vmatprep.subr.mxu0 0.0
        %1320 = vmatpush1.msra.mxu0 0.0
        %1321 = vmatprep.subr.mxu0 0.0
        %1322 = vmatpush1.msra.mxu0 0.0
        %1323 = vmatprep.subr.mxu0 0.0
        %1324 = vmatpush1.msra.mxu0 0.0
        %1325 = vmatprep.subr.mxu0 0.0
        %1326 = vmatpush1.msra.mxu0 0.0
        %1327 = vmatprep.subr.mxu0 0.0
        %1328 = vmatpush1.msra.mxu0 0.0
        %1329 = vmatprep.subr.mxu0 0.0
        %1330 = vmatpush1.msra.mxu0 0.0
        %1331 = vmatprep.subr.mxu0 0.0
        %1332 = vmatpush1.msra.mxu0 0.0
        %1333 = vmatprep.subr.mxu0 0.0
        %1334 = vmatpush1.msra.mxu0 0.0
        %1335 = vmatprep.subr.mxu0 0.0
        %1336 = vmatpush1.msra.mxu0 0.0
        %1337 = vmatprep.subr.mxu0 0.0
        %1338 = vmatpush1.msra.mxu0 0.0
        %1339 = vmatprep.subr.mxu0 0.0
        %1340 = vmatpush1.msra.mxu0 0.0
        %1341 = vmatprep.mubr.f32.mxu0 0.0
        %v1342 = vand.u32 %v1097, 4294901760
        %v1343 = vsub.f32 %v1097, %v1342
        %1344 = vmatmul.mubr.f32.gmra.mrb[0].mxu0 %v1343
        %v1345 = vpop.f32.mrb[0].mxu0
        %v1346 = vadd.f32 %v1266, %v1345
        %v1347 = vpop.f32.mrb[0].mxu0
        %1348 = vdwg.mxu0
        %1349 = vmatprep.subr.mxu0 0.0
        %v1350 = vand.u32 %v1084, 4294901760
        %1351 = vmatpush1.msra.mxu0 %v1350
        %1352 = vmatprep.subr.mxu0 0.0
        %v1353 = vand.u32 %v1085, 4294901760
        %1354 = vmatpush1.msra.mxu0 %v1353
        %1355 = vmatprep.subr.mxu0 0.0
        %v1356 = vand.u32 %v1086, 4294901760
        %1357 = vmatpush1.msra.mxu0 %v1356
        %1358 = vmatprep.subr.mxu0 0.0
        %v1359 = vand.u32 %v1087, 4294901760
        %1360 = vmatpush1.msra.mxu0 %v1359
        %1361 = vmatprep.subr.mxu0 0.0
        %1362 = vmatpush1.msra.mxu0 0.0
        %1363 = vmatprep.subr.mxu0 0.0
        %1364 = vmatpush1.msra.mxu0 0.0
        %1365 = vmatprep.subr.mxu0 0.0
        %1366 = vmatpush1.msra.mxu0 0.0
        %1367 = vmatprep.subr.mxu0 0.0
        %1368 = vmatpush1.msra.mxu0 0.0
        %1369 = vmatprep.subr.mxu0 0.0
        %1370 = vmatpush1.msra.mxu0 0.0
        %1371 = vmatprep.subr.mxu0 0.0
        %1372 = vmatpush1.msra.mxu0 0.0
        %1373 = vmatprep.subr.mxu0 0.0
        %1374 = vmatpush1.msra.mxu0 0.0
        %1375 = vmatprep.subr.mxu0 0.0
        %1376 = vmatpush1.msra.mxu0 0.0
        %1377 = vmatprep.subr.mxu0 0.0
        %1378 = vmatpush1.msra.mxu0 0.0
        %1379 = vmatprep.subr.mxu0 0.0
        %1380 = vmatpush1.msra.mxu0 0.0
        %1381 = vmatprep.subr.mxu0 0.0
        %1382 = vmatpush1.msra.mxu0 0.0
        %1383 = vmatprep.subr.mxu0 0.0
        %1384 = vmatpush1.msra.mxu0 0.0
        %1385 = vmatprep.subr.mxu0 0.0
        %1386 = vmatpush1.msra.mxu0 0.0
        %1387 = vmatprep.subr.mxu0 0.0
        %1388 = vmatpush1.msra.mxu0 0.0
        %1389 = vmatprep.subr.mxu0 0.0
        %1390 = vmatpush1.msra.mxu0 0.0
        %1391 = vmatprep.subr.mxu0 0.0
        %1392 = vmatpush1.msra.mxu0 0.0
        %1393 = vmatprep.subr.mxu0 0.0
        %1394 = vmatpush1.msra.mxu0 0.0
        %1395 = vmatprep.subr.mxu0 0.0
        %1396 = vmatpush1.msra.mxu0 0.0
        %1397 = vmatprep.subr.mxu0 0.0
        %1398 = vmatpush1.msra.mxu0 0.0
        %1399 = vmatprep.subr.mxu0 0.0
        %1400 = vmatpush1.msra.mxu0 0.0
        %1401 = vmatprep.subr.mxu0 0.0
        %1402 = vmatpush1.msra.mxu0 0.0
        %1403 = vmatprep.subr.mxu0 0.0
        %1404 = vmatpush1.msra.mxu0 0.0
        %1405 = vmatprep.subr.mxu0 0.0
        %1406 = vmatpush1.msra.mxu0 0.0
        %1407 = vmatprep.subr.mxu0 0.0
        %1408 = vmatpush1.msra.mxu0 0.0
        %1409 = vmatprep.subr.mxu0 0.0
        %1410 = vmatpush1.msra.mxu0 0.0
        %1411 = vmatprep.subr.mxu0 0.0
        %1412 = vmatpush1.msra.mxu0 0.0
        %1413 = vmatprep.subr.mxu0 0.0
        %1414 = vmatpush1.msra.mxu0 0.0
        %1415 = vmatprep.subr.mxu0 0.0
        %1416 = vmatpush1.msra.mxu0 0.0
        %1417 = vmatprep.mubr.f32.mxu0 0.0
        %v1418 = vand.u32 %v1097, 4294901760
        %v1419 = vsub.f32 %v1097, %v1418
        %v1420 = vand.u32 %v1419, 4294901760
        %1421 = vmatmul.mubr.f32.gmra.mrb[0].mxu0 %v1420
        %v1422 = vpop.f32.mrb[0].mxu0
        %v1423 = vadd.f32 %v1346, %v1422
        %v1424 = vpop.f32.mrb[0].mxu0
        %1425 = vdwg.mxu0
        %1426 = vmatprep.subr.mxu0 0.0
        %v1427 = vand.u32 %v1084, 4294901760
        %v1428 = vsub.f32 %v1084, %v1427
        %v1429 = vand.u32 %v1428, 4294901760
        %1430 = vmatpush1.msra.mxu0 %v1429
        %1431 = vmatprep.subr.mxu0 0.0
        %v1432 = vand.u32 %v1085, 4294901760
        %v1433 = vsub.f32 %v1085, %v1432
        %v1434 = vand.u32 %v1433, 4294901760
        %1435 = vmatpush1.msra.mxu0 %v1434
        %1436 = vmatprep.subr.mxu0 0.0
        %v1437 = vand.u32 %v1086, 4294901760
        %v1438 = vsub.f32 %v1086, %v1437
        %v1439 = vand.u32 %v1438, 4294901760
        %1440 = vmatpush1.msra.mxu0 %v1439
        %1441 = vmatprep.subr.mxu0 0.0
        %v1442 = vand.u32 %v1087, 4294901760
        %v1443 = vsub.f32 %v1087, %v1442
        %v1444 = vand.u32 %v1443, 4294901760
        %1445 = vmatpush1.msra.mxu0 %v1444
        %1446 = vmatprep.subr.mxu0 0.0
        %1447 = vmatpush1.msra.mxu0 0.0
        %1448 = vmatprep.subr.mxu0 0.0
        %1449 = vmatpush1.msra.mxu0 0.0
        %1450 = vmatprep.subr.mxu0 0.0
        %1451 = vmatpush1.msra.mxu0 0.0
        %1452 = vmatprep.subr.mxu0 0.0
        %1453 = vmatpush1.msra.mxu0 0.0
        %1454 = vmatprep.subr.mxu0 0.0
        %1455 = vmatpush1.msra.mxu0 0.0
        %1456 = vmatprep.subr.mxu0 0.0
        %1457 = vmatpush1.msra.mxu0 0.0
        %1458 = vmatprep.subr.mxu0 0.0
        %1459 = vmatpush1.msra.mxu0 0.0
        %1460 = vmatprep.subr.mxu0 0.0
        %1461 = vmatpush1.msra.mxu0 0.0
        %1462 = vmatprep.subr.mxu0 0.0
        %1463 = vmatpush1.msra.mxu0 0.0
        %1464 = vmatprep.subr.mxu0 0.0
        %1465 = vmatpush1.msra.mxu0 0.0
        %1466 = vmatprep.subr.mxu0 0.0
        %1467 = vmatpush1.msra.mxu0 0.0
        %1468 = vmatprep.subr.mxu0 0.0
        %1469 = vmatpush1.msra.mxu0 0.0
        %1470 = vmatprep.subr.mxu0 0.0
        %1471 = vmatpush1.msra.mxu0 0.0
        %1472 = vmatprep.subr.mxu0 0.0
        %1473 = vmatpush1.msra.mxu0 0.0
        %1474 = vmatprep.subr.mxu0 0.0
        %1475 = vmatpush1.msra.mxu0 0.0
        %1476 = vmatprep.subr.mxu0 0.0
        %1477 = vmatpush1.msra.mxu0 0.0
        %1478 = vmatprep.subr.mxu0 0.0
        %1479 = vmatpush1.msra.mxu0 0.0
        %1480 = vmatprep.subr.mxu0 0.0
        %1481 = vmatpush1.msra.mxu0 0.0
        %1482 = vmatprep.subr.mxu0 0.0
        %1483 = vmatpush1.msra.mxu0 0.0
        %1484 = vmatprep.subr.mxu0 0.0
        %1485 = vmatpush1.msra.mxu0 0.0
        %1486 = vmatprep.subr.mxu0 0.0
        %1487 = vmatpush1.msra.mxu0 0.0
        %1488 = vmatprep.subr.mxu0 0.0
        %1489 = vmatpush1.msra.mxu0 0.0
        %1490 = vmatprep.subr.mxu0 0.0
        %1491 = vmatpush1.msra.mxu0 0.0
        %1492 = vmatprep.subr.mxu0 0.0
        %1493 = vmatpush1.msra.mxu0 0.0
        %1494 = vmatprep.subr.mxu0 0.0
        %1495 = vmatpush1.msra.mxu0 0.0
        %1496 = vmatprep.subr.mxu0 0.0
        %1497 = vmatpush1.msra.mxu0 0.0
        %1498 = vmatprep.subr.mxu0 0.0
        %1499 = vmatpush1.msra.mxu0 0.0
        %1500 = vmatprep.subr.mxu0 0.0
        %1501 = vmatpush1.msra.mxu0 0.0
        %1502 = vmatprep.mubr.f32.mxu0 0.0
        %v1503 = vand.u32 %v1097, 4294901760
        %1504 = vmatmul.mubr.f32.gmra.mrb[0].mxu0 %v1503
        %v1505 = vpop.f32.mrb[0].mxu0
        %v1506 = vadd.f32 %v1423, %v1505
        %v1507 = vpop.f32.mrb[0].mxu0
        %1508 = vdwg.mxu0
        %1509 = vmatprep.subr.mxu0 0.0
        %v1510 = vand.u32 %v1084, 4294901760
        %1511 = vmatpush1.msra.mxu0 %v1510
        %1512 = vmatprep.subr.mxu0 0.0
        %v1513 = vand.u32 %v1085, 4294901760
        %1514 = vmatpush1.msra.mxu0 %v1513
        %1515 = vmatprep.subr.mxu0 0.0
        %v1516 = vand.u32 %v1086, 4294901760
        %1517 = vmatpush1.msra.mxu0 %v1516
        %1518 = vmatprep.subr.mxu0 0.0
        %v1519 = vand.u32 %v1087, 4294901760
        %1520 = vmatpush1.msra.mxu0 %v1519
        %1521 = vmatprep.subr.mxu0 0.0
        %1522 = vmatpush1.msra.mxu0 0.0
        %1523 = vmatprep.subr.mxu0 0.0
        %1524 = vmatpush1.msra.mxu0 0.0
        %1525 = vmatprep.subr.mxu0 0.0
        %1526 = vmatpush1.msra.mxu0 0.0
        %1527 = vmatprep.subr.mxu0 0.0
        %1528 = vmatpush1.msra.mxu0 0.0
        %1529 = vmatprep.subr.mxu0 0.0
        %1530 = vmatpush1.msra.mxu0 0.0
        %1531 = vmatprep.subr.mxu0 0.0
        %1532 = vmatpush1.msra.mxu0 0.0
        %1533 = vmatprep.subr.mxu0 0.0
        %1534 = vmatpush1.msra.mxu0 0.0
        %1535 = vmatprep.subr.mxu0 0.0
        %1536 = vmatpush1.msra.mxu0 0.0
        %1537 = vmatprep.subr.mxu0 0.0
        %1538 = vmatpush1.msra.mxu0 0.0
        %1539 = vmatprep.subr.mxu0 0.0
        %1540 = vmatpush1.msra.mxu0 0.0
        %1541 = vmatprep.subr.mxu0 0.0
        %1542 = vmatpush1.msra.mxu0 0.0
        %1543 = vmatprep.subr.mxu0 0.0
        %1544 = vmatpush1.msra.mxu0 0.0
        %1545 = vmatprep.subr.mxu0 0.0
        %1546 = vmatpush1.msra.mxu0 0.0
        %1547 = vmatprep.subr.mxu0 0.0
        %1548 = vmatpush1.msra.mxu0 0.0
        %1549 = vmatprep.subr.mxu0 0.0
        %1550 = vmatpush1.msra.mxu0 0.0
        %1551 = vmatprep.subr.mxu0 0.0
        %1552 = vmatpush1.msra.mxu0 0.0
        %1553 = vmatprep.subr.mxu0 0.0
        %1554 = vmatpush1.msra.mxu0 0.0
        %1555 = vmatprep.subr.mxu0 0.0
        %1556 = vmatpush1.msra.mxu0 0.0
        %1557 = vmatprep.subr.mxu0 0.0
        %1558 = vmatpush1.msra.mxu0 0.0
        %1559 = vmatprep.subr.mxu0 0.0
        %1560 = vmatpush1.msra.mxu0 0.0
        %1561 = vmatprep.subr.mxu0 0.0
        %1562 = vmatpush1.msra.mxu0 0.0
        %1563 = vmatprep.subr.mxu0 0.0
        %1564 = vmatpush1.msra.mxu0 0.0
        %1565 = vmatprep.subr.mxu0 0.0
        %1566 = vmatpush1.msra.mxu0 0.0
        %1567 = vmatprep.subr.mxu0 0.0
        %1568 = vmatpush1.msra.mxu0 0.0
        %1569 = vmatprep.subr.mxu0 0.0
        %1570 = vmatpush1.msra.mxu0 0.0
        %1571 = vmatprep.subr.mxu0 0.0
        %1572 = vmatpush1.msra.mxu0 0.0
        %1573 = vmatprep.subr.mxu0 0.0
        %1574 = vmatpush1.msra.mxu0 0.0
        %1575 = vmatprep.subr.mxu0 0.0
        %1576 = vmatpush1.msra.mxu0 0.0
        %1577 = vmatprep.mubr.f32.mxu0 0.0
        %v1578 = vand.u32 %v1097, 4294901760
        %1579 = vmatmul.mubr.f32.gmra.mrb[0].mxu0 %v1578
        %v1580 = vpop.f32.mrb[0].mxu0
        %v1581 = vadd.f32 %v1506, %v1580
        %v1582 = vpop.f32.mrb[0].mxu0
        %1583 = vdwg.mxu0
        %1585 = vrot.lane.b32.xlu0 %v1581, 96
        %v1586 = vpop.permute.xlu0 %1585
        %v1587 = vsel %vm1095, %v1581, 0
        %v1589 = vsel %vm1095, %v1586, 0
        %1591 = vmatprep.subr.mxu0 0.0
        %v1592 = vand.u32 %v1589, 4294901760
        %1593 = vmatpush1.xpose.msra.mxu0 %v1592
        %1594 = vmatprep.subr.mxu0 0.0
        %1595 = vmatpush1.xpose.msra.mxu0 0.0
        %1596 = vmatprep.subr.mxu0 0.0
        %1597 = vmatpush1.xpose.msra.mxu0 0.0
        %1598 = vmatprep.subr.mxu0 0.0
        %1599 = vmatpush1.xpose.msra.mxu0 0.0
        %1600 = vmatprep.subr.mxu0 0.0
        %1601 = vmatpush1.xpose.msra.mxu0 0.0
        %1602 = vmatprep.subr.mxu0 0.0
        %1603 = vmatpush1.xpose.msra.mxu0 0.0
        %1604 = vmatprep.subr.mxu0 0.0
        %1605 = vmatpush1.xpose.msra.mxu0 0.0
        %1606 = vmatprep.subr.mxu0 0.0
        %1607 = vmatpush1.xpose.msra.mxu0 0.0
        %1608 = vmatprep.subr.mxu0 0.0
        %1609 = vmatpush1.xpose.msra.mxu0 0.0
        %1610 = vmatprep.subr.mxu0 0.0
        %1611 = vmatpush1.xpose.msra.mxu0 0.0
        %1612 = vmatprep.subr.mxu0 0.0
        %1613 = vmatpush1.xpose.msra.mxu0 0.0
        %1614 = vmatprep.subr.mxu0 0.0
        %1615 = vmatpush1.xpose.msra.mxu0 0.0
        %1616 = vmatprep.subr.mxu0 0.0
        %1617 = vmatpush1.xpose.msra.mxu0 0.0
        %1618 = vmatprep.subr.mxu0 0.0
        %1619 = vmatpush1.xpose.msra.mxu0 0.0
        %1620 = vmatprep.subr.mxu0 0.0
        %1621 = vmatpush1.xpose.msra.mxu0 0.0
        %1622 = vmatprep.subr.mxu0 0.0
        %1623 = vmatpush1.xpose.msra.mxu0 0.0
        %1624 = vmatprep.subr.mxu0 0.0
        %1625 = vmatpush1.xpose.msra.mxu0 0.0
        %1626 = vmatprep.subr.mxu0 0.0
        %1627 = vmatpush1.xpose.msra.mxu0 0.0
        %1628 = vmatprep.subr.mxu0 0.0
        %1629 = vmatpush1.xpose.msra.mxu0 0.0
        %1630 = vmatprep.subr.mxu0 0.0
        %1631 = vmatpush1.xpose.msra.mxu0 0.0
        %1632 = vmatprep.subr.mxu0 0.0
        %1633 = vmatpush1.xpose.msra.mxu0 0.0
        %1634 = vmatprep.subr.mxu0 0.0
        %1635 = vmatpush1.xpose.msra.mxu0 0.0
        %1636 = vmatprep.subr.mxu0 0.0
        %1637 = vmatpush1.xpose.msra.mxu0 0.0
        %1638 = vmatprep.subr.mxu0 0.0
        %1639 = vmatpush1.xpose.msra.mxu0 0.0
        %1640 = vmatprep.subr.mxu0 0.0
        %1641 = vmatpush1.xpose.msra.mxu0 0.0
        %1642 = vmatprep.subr.mxu0 0.0
        %1643 = vmatpush1.xpose.msra.mxu0 0.0
        %1644 = vmatprep.subr.mxu0 0.0
        %1645 = vmatpush1.xpose.msra.mxu0 0.0
        %1646 = vmatprep.subr.mxu0 0.0
        %1647 = vmatpush1.xpose.msra.mxu0 0.0
        %1648 = vmatprep.subr.mxu0 0.0
        %1649 = vmatpush1.xpose.msra.mxu0 0.0
        %1650 = vmatprep.subr.mxu0 0.0
        %1651 = vmatpush1.xpose.msra.mxu0 0.0
        %1652 = vmatprep.subr.mxu0 0.0
        %1653 = vmatpush1.xpose.msra.mxu0 0.0
        %1654 = vmatprep.subr.mxu0 0.0
        %1655 = vmatpush1.xpose.msra.mxu0 0.0
        %1656 = vmatprep.mubr.f32.mxu0 0.0
        %v1657 = vand.u32 %v1587, 4294901760
        %v1658 = vsub.f32 %v1587, %v1657
        %v1659 = vand.u32 %v1658, 4294901760
        %v1660 = vsub.f32 %v1658, %v1659
        %v1661 = vand.u32 %v1660, 4294901760
        %1662 = vmatmul.mubr.f32.gmra.mrb[0].mxu0 %v1661
        %v1663 = vpop.f32.mrb[0].mxu0
        %v1664 = vadd.f32 0.0, %v1663
        %v1665 = vpop.f32.mrb[0].mxu0
        %1666 = vdwg.mxu0
        %1667 = vmatprep.subr.mxu0 0.0
        %v1668 = vand.u32 %v1589, 4294901760
        %v1669 = vsub.f32 %v1589, %v1668
        %v1670 = vand.u32 %v1669, 4294901760
        %v1671 = vsub.f32 %v1669, %v1670
        %v1672 = vand.u32 %v1671, 4294901760
        %1673 = vmatpush1.xpose.msra.mxu0 %v1672
        %1674 = vmatprep.subr.mxu0 0.0
        %1675 = vmatpush1.xpose.msra.mxu0 0.0
        %1676 = vmatprep.subr.mxu0 0.0
        %1677 = vmatpush1.xpose.msra.mxu0 0.0
        %1678 = vmatprep.subr.mxu0 0.0
        %1679 = vmatpush1.xpose.msra.mxu0 0.0
        %1680 = vmatprep.subr.mxu0 0.0
        %1681 = vmatpush1.xpose.msra.mxu0 0.0
        %1682 = vmatprep.subr.mxu0 0.0
        %1683 = vmatpush1.xpose.msra.mxu0 0.0
        %1684 = vmatprep.subr.mxu0 0.0
        %1685 = vmatpush1.xpose.msra.mxu0 0.0
        %1686 = vmatprep.subr.mxu0 0.0
        %1687 = vmatpush1.xpose.msra.mxu0 0.0
        %1688 = vmatprep.subr.mxu0 0.0
        %1689 = vmatpush1.xpose.msra.mxu0 0.0
        %1690 = vmatprep.subr.mxu0 0.0
        %1691 = vmatpush1.xpose.msra.mxu0 0.0
        %1692 = vmatprep.subr.mxu0 0.0
        %1693 = vmatpush1.xpose.msra.mxu0 0.0
        %1694 = vmatprep.subr.mxu0 0.0
        %1695 = vmatpush1.xpose.msra.mxu0 0.0
        %1696 = vmatprep.subr.mxu0 0.0
        %1697 = vmatpush1.xpose.msra.mxu0 0.0
        %1698 = vmatprep.subr.mxu0 0.0
        %1699 = vmatpush1.xpose.msra.mxu0 0.0
        %1700 = vmatprep.subr.mxu0 0.0
        %1701 = vmatpush1.xpose.msra.mxu0 0.0
        %1702 = vmatprep.subr.mxu0 0.0
        %1703 = vmatpush1.xpose.msra.mxu0 0.0
        %1704 = vmatprep.subr.mxu0 0.0
        %1705 = vmatpush1.xpose.msra.mxu0 0.0
        %1706 = vmatprep.subr.mxu0 0.0
        %1707 = vmatpush1.xpose.msra.mxu0 0.0
        %1708 = vmatprep.subr.mxu0 0.0
        %1709 = vmatpush1.xpose.msra.mxu0 0.0
        %1710 = vmatprep.subr.mxu0 0.0
        %1711 = vmatpush1.xpose.msra.mxu0 0.0
        %1712 = vmatprep.subr.mxu0 0.0
        %1713 = vmatpush1.xpose.msra.mxu0 0.0
        %1714 = vmatprep.subr.mxu0 0.0
        %1715 = vmatpush1.xpose.msra.mxu0 0.0
        %1716 = vmatprep.subr.mxu0 0.0
        %1717 = vmatpush1.xpose.msra.mxu0 0.0
        %1718 = vmatprep.subr.mxu0 0.0
        %1719 = vmatpush1.xpose.msra.mxu0 0.0
        %1720 = vmatprep.subr.mxu0 0.0
        %1721 = vmatpush1.xpose.msra.mxu0 0.0
        %1722 = vmatprep.subr.mxu0 0.0
        %1723 = vmatpush1.xpose.msra.mxu0 0.0
        %1724 = vmatprep.subr.mxu0 0.0
        %1725 = vmatpush1.xpose.msra.mxu0 0.0
        %1726 = vmatprep.subr.mxu0 0.0
        %1727 = vmatpush1.xpose.msra.mxu0 0.0
        %1728 = vmatprep.subr.mxu0 0.0
        %1729 = vmatpush1.xpose.msra.mxu0 0.0
        %1730 = vmatprep.subr.mxu0 0.0
        %1731 = vmatpush1.xpose.msra.mxu0 0.0
        %1732 = vmatprep.subr.mxu0 0.0
        %1733 = vmatpush1.xpose.msra.mxu0 0.0
        %1734 = vmatprep.subr.mxu0 0.0
        %1735 = vmatpush1.xpose.msra.mxu0 0.0
        %1736 = vmatprep.mubr.f32.mxu0 0.0
        %v1737 = vand.u32 %v1587, 4294901760
        %1738 = vmatmul.mubr.f32.gmra.mrb[0].mxu0 %v1737
        %v1739 = vpop.f32.mrb[0].mxu0
        %v1740 = vadd.f32 %v1664, %v1739
        %v1741 = vpop.f32.mrb[0].mxu0
        %1742 = vdwg.mxu0
        %1743 = vmatprep.subr.mxu0 0.0
        %v1744 = vand.u32 %v1589, 4294901760
        %v1745 = vsub.f32 %v1589, %v1744
        %1746 = vmatpush1.xpose.msra.mxu0 %v1745
        %1747 = vmatprep.subr.mxu0 0.0
        %1748 = vmatpush1.xpose.msra.mxu0 0.0
        %1749 = vmatprep.subr.mxu0 0.0
        %1750 = vmatpush1.xpose.msra.mxu0 0.0
        %1751 = vmatprep.subr.mxu0 0.0
        %1752 = vmatpush1.xpose.msra.mxu0 0.0
        %1753 = vmatprep.subr.mxu0 0.0
        %1754 = vmatpush1.xpose.msra.mxu0 0.0
        %1755 = vmatprep.subr.mxu0 0.0
        %1756 = vmatpush1.xpose.msra.mxu0 0.0
        %1757 = vmatprep.subr.mxu0 0.0
        %1758 = vmatpush1.xpose.msra.mxu0 0.0
        %1759 = vmatprep.subr.mxu0 0.0
        %1760 = vmatpush1.xpose.msra.mxu0 0.0
        %1761 = vmatprep.subr.mxu0 0.0
        %1762 = vmatpush1.xpose.msra.mxu0 0.0
        %1763 = vmatprep.subr.mxu0 0.0
        %1764 = vmatpush1.xpose.msra.mxu0 0.0
        %1765 = vmatprep.subr.mxu0 0.0
        %1766 = vmatpush1.xpose.msra.mxu0 0.0
        %1767 = vmatprep.subr.mxu0 0.0
        %1768 = vmatpush1.xpose.msra.mxu0 0.0
        %1769 = vmatprep.subr.mxu0 0.0
        %1770 = vmatpush1.xpose.msra.mxu0 0.0
        %1771 = vmatprep.subr.mxu0 0.0
        %1772 = vmatpush1.xpose.msra.mxu0 0.0
        %1773 = vmatprep.subr.mxu0 0.0
        %1774 = vmatpush1.xpose.msra.mxu0 0.0
        %1775 = vmatprep.subr.mxu0 0.0
        %1776 = vmatpush1.xpose.msra.mxu0 0.0
        %1777 = vmatprep.subr.mxu0 0.0
        %1778 = vmatpush1.xpose.msra.mxu0 0.0
        %1779 = vmatprep.subr.mxu0 0.0
        %1780 = vmatpush1.xpose.msra.mxu0 0.0
        %1781 = vmatprep.subr.mxu0 0.0
        %1782 = vmatpush1.xpose.msra.mxu0 0.0
        %1783 = vmatprep.subr.mxu0 0.0
        %1784 = vmatpush1.xpose.msra.mxu0 0.0
        %1785 = vmatprep.subr.mxu0 0.0
        %1786 = vmatpush1.xpose.msra.mxu0 0.0
        %1787 = vmatprep.subr.mxu0 0.0
        %1788 = vmatpush1.xpose.msra.mxu0 0.0
        %1789 = vmatprep.subr.mxu0 0.0
        %1790 = vmatpush1.xpose.msra.mxu0 0.0
        %1791 = vmatprep.subr.mxu0 0.0
        %1792 = vmatpush1.xpose.msra.mxu0 0.0
        %1793 = vmatprep.subr.mxu0 0.0
        %1794 = vmatpush1.xpose.msra.mxu0 0.0
        %1795 = vmatprep.subr.mxu0 0.0
        %1796 = vmatpush1.xpose.msra.mxu0 0.0
        %1797 = vmatprep.subr.mxu0 0.0
        %1798 = vmatpush1.xpose.msra.mxu0 0.0
        %1799 = vmatprep.subr.mxu0 0.0
        %1800 = vmatpush1.xpose.msra.mxu0 0.0
        %1801 = vmatprep.subr.mxu0 0.0
        %1802 = vmatpush1.xpose.msra.mxu0 0.0
        %1803 = vmatprep.subr.mxu0 0.0
        %1804 = vmatpush1.xpose.msra.mxu0 0.0
        %1805 = vmatprep.subr.mxu0 0.0
        %1806 = vmatpush1.xpose.msra.mxu0 0.0
        %1807 = vmatprep.subr.mxu0 0.0
        %1808 = vmatpush1.xpose.msra.mxu0 0.0
        %1809 = vmatprep.mubr.f32.mxu0 0.0
        %v1810 = vand.u32 %v1587, 4294901760
        %v1811 = vsub.f32 %v1587, %v1810
        %1812 = vmatmul.mubr.f32.gmra.mrb[0].mxu0 %v1811
        %v1813 = vpop.f32.mrb[0].mxu0
        %v1814 = vadd.f32 %v1740, %v1813
        %v1815 = vpop.f32.mrb[0].mxu0
        %1816 = vdwg.mxu0
        %1817 = vmatprep.subr.mxu0 0.0
        %v1818 = vand.u32 %v1589, 4294901760
        %1819 = vmatpush1.xpose.msra.mxu0 %v1818
        %1820 = vmatprep.subr.mxu0 0.0
        %1821 = vmatpush1.xpose.msra.mxu0 0.0
        %1822 = vmatprep.subr.mxu0 0.0
        %1823 = vmatpush1.xpose.msra.mxu0 0.0
        %1824 = vmatprep.subr.mxu0 0.0
        %1825 = vmatpush1.xpose.msra.mxu0 0.0
        %1826 = vmatprep.subr.mxu0 0.0
        %1827 = vmatpush1.xpose.msra.mxu0 0.0
        %1828 = vmatprep.subr.mxu0 0.0
        %1829 = vmatpush1.xpose.msra.mxu0 0.0
        %1830 = vmatprep.subr.mxu0 0.0
        %1831 = vmatpush1.xpose.msra.mxu0 0.0
        %1832 = vmatprep.subr.mxu0 0.0
        %1833 = vmatpush1.xpose.msra.mxu0 0.0
        %1834 = vmatprep.subr.mxu0 0.0
        %1835 = vmatpush1.xpose.msra.mxu0 0.0
        %1836 = vmatprep.subr.mxu0 0.0
        %1837 = vmatpush1.xpose.msra.mxu0 0.0
        %1838 = vmatprep.subr.mxu0 0.0
        %1839 = vmatpush1.xpose.msra.mxu0 0.0
        %1840 = vmatprep.subr.mxu0 0.0
        %1841 = vmatpush1.xpose.msra.mxu0 0.0
        %1842 = vmatprep.subr.mxu0 0.0
        %1843 = vmatpush1.xpose.msra.mxu0 0.0
        %1844 = vmatprep.subr.mxu0 0.0
        %1845 = vmatpush1.xpose.msra.mxu0 0.0
        %1846 = vmatprep.subr.mxu0 0.0
        %1847 = vmatpush1.xpose.msra.mxu0 0.0
        %1848 = vmatprep.subr.mxu0 0.0
        %1849 = vmatpush1.xpose.msra.mxu0 0.0
        %1850 = vmatprep.subr.mxu0 0.0
        %1851 = vmatpush1.xpose.msra.mxu0 0.0
        %1852 = vmatprep.subr.mxu0 0.0
        %1853 = vmatpush1.xpose.msra.mxu0 0.0
        %1854 = vmatprep.subr.mxu0 0.0
        %1855 = vmatpush1.xpose.msra.mxu0 0.0
        %1856 = vmatprep.subr.mxu0 0.0
        %1857 = vmatpush1.xpose.msra.mxu0 0.0
        %1858 = vmatprep.subr.mxu0 0.0
        %1859 = vmatpush1.xpose.msra.mxu0 0.0
        %1860 = vmatprep.subr.mxu0 0.0
        %1861 = vmatpush1.xpose.msra.mxu0 0.0
        %1862 = vmatprep.subr.mxu0 0.0
        %1863 = vmatpush1.xpose.msra.mxu0 0.0
        %1864 = vmatprep.subr.mxu0 0.0
        %1865 = vmatpush1.xpose.msra.mxu0 0.0
        %1866 = vmatprep.subr.mxu0 0.0
        %1867 = vmatpush1.xpose.msra.mxu0 0.0
        %1868 = vmatprep.subr.mxu0 0.0
        %1869 = vmatpush1.xpose.msra.mxu0 0.0
        %1870 = vmatprep.subr.mxu0 0.0
        %1871 = vmatpush1.xpose.msra.mxu0 0.0
        %1872 = vmatprep.subr.mxu0 0.0
        %1873 = vmatpush1.xpose.msra.mxu0 0.0
        %1874 = vmatprep.subr.mxu0 0.0
        %1875 = vmatpush1.xpose.msra.mxu0 0.0
        %1876 = vmatprep.subr.mxu0 0.0
        %1877 = vmatpush1.xpose.msra.mxu0 0.0
        %1878 = vmatprep.subr.mxu0 0.0
        %1879 = vmatpush1.xpose.msra.mxu0 0.0
        %1880 = vmatprep.subr.mxu0 0.0
        %1881 = vmatpush1.xpose.msra.mxu0 0.0
        %1882 = vmatprep.mubr.f32.mxu0 0.0
        %v1883 = vand.u32 %v1587, 4294901760
        %v1884 = vsub.f32 %v1587, %v1883
        %v1885 = vand.u32 %v1884, 4294901760
        %1886 = vmatmul.mubr.f32.gmra.mrb[0].mxu0 %v1885
        %v1887 = vpop.f32.mrb[0].mxu0
        %v1888 = vadd.f32 %v1814, %v1887
        %v1889 = vpop.f32.mrb[0].mxu0
        %1890 = vdwg.mxu0
        %1891 = vmatprep.subr.mxu0 0.0
        %v1892 = vand.u32 %v1589, 4294901760
        %v1893 = vsub.f32 %v1589, %v1892
        %v1894 = vand.u32 %v1893, 4294901760
        %1895 = vmatpush1.xpose.msra.mxu0 %v1894
        %1896 = vmatprep.subr.mxu0 0.0
        %1897 = vmatpush1.xpose.msra.mxu0 0.0
        %1898 = vmatprep.subr.mxu0 0.0
        %1899 = vmatpush1.xpose.msra.mxu0 0.0
        %1900 = vmatprep.subr.mxu0 0.0
        %1901 = vmatpush1.xpose.msra.mxu0 0.0
        %1902 = vmatprep.subr.mxu0 0.0
        %1903 = vmatpush1.xpose.msra.mxu0 0.0
        %1904 = vmatprep.subr.mxu0 0.0
        %1905 = vmatpush1.xpose.msra.mxu0 0.0
        %1906 = vmatprep.subr.mxu0 0.0
        %1907 = vmatpush1.xpose.msra.mxu0 0.0
        %1908 = vmatprep.subr.mxu0 0.0
        %1909 = vmatpush1.xpose.msra.mxu0 0.0
        %1910 = vmatprep.subr.mxu0 0.0
        %1911 = vmatpush1.xpose.msra.mxu0 0.0
        %1912 = vmatprep.subr.mxu0 0.0
        %1913 = vmatpush1.xpose.msra.mxu0 0.0
        %1914 = vmatprep.subr.mxu0 0.0
        %1915 = vmatpush1.xpose.msra.mxu0 0.0
        %1916 = vmatprep.subr.mxu0 0.0
        %1917 = vmatpush1.xpose.msra.mxu0 0.0
        %1918 = vmatprep.subr.mxu0 0.0
        %1919 = vmatpush1.xpose.msra.mxu0 0.0
        %1920 = vmatprep.subr.mxu0 0.0
        %1921 = vmatpush1.xpose.msra.mxu0 0.0
        %1922 = vmatprep.subr.mxu0 0.0
        %1923 = vmatpush1.xpose.msra.mxu0 0.0
        %1924 = vmatprep.subr.mxu0 0.0
        %1925 = vmatpush1.xpose.msra.mxu0 0.0
        %1926 = vmatprep.subr.mxu0 0.0
        %1927 = vmatpush1.xpose.msra.mxu0 0.0
        %1928 = vmatprep.subr.mxu0 0.0
        %1929 = vmatpush1.xpose.msra.mxu0 0.0
        %1930 = vmatprep.subr.mxu0 0.0
        %1931 = vmatpush1.xpose.msra.mxu0 0.0
        %1932 = vmatprep.subr.mxu0 0.0
        %1933 = vmatpush1.xpose.msra.mxu0 0.0
        %1934 = vmatprep.subr.mxu0 0.0
        %1935 = vmatpush1.xpose.msra.mxu0 0.0
        %1936 = vmatprep.subr.mxu0 0.0
        %1937 = vmatpush1.xpose.msra.mxu0 0.0
        %1938 = vmatprep.subr.mxu0 0.0
        %1939 = vmatpush1.xpose.msra.mxu0 0.0
        %1940 = vmatprep.subr.mxu0 0.0
        %1941 = vmatpush1.xpose.msra.mxu0 0.0
        %1942 = vmatprep.subr.mxu0 0.0
        %1943 = vmatpush1.xpose.msra.mxu0 0.0
        %1944 = vmatprep.subr.mxu0 0.0
        %1945 = vmatpush1.xpose.msra.mxu0 0.0
        %1946 = vmatprep.subr.mxu0 0.0
        %1947 = vmatpush1.xpose.msra.mxu0 0.0
        %1948 = vmatprep.subr.mxu0 0.0
        %1949 = vmatpush1.xpose.msra.mxu0 0.0
        %1950 = vmatprep.subr.mxu0 0.0
        %1951 = vmatpush1.xpose.msra.mxu0 0.0
        %1952 = vmatprep.subr.mxu0 0.0
        %1953 = vmatpush1.xpose.msra.mxu0 0.0
        %1954 = vmatprep.subr.mxu0 0.0
        %1955 = vmatpush1.xpose.msra.mxu0 0.0
        %1956 = vmatprep.subr.mxu0 0.0
        %1957 = vmatpush1.xpose.msra.mxu0 0.0
        %1958 = vmatprep.mubr.f32.mxu0 0.0
        %v1959 = vand.u32 %v1587, 4294901760
        %1960 = vmatmul.mubr.f32.gmra.mrb[0].mxu0 %v1959
        %v1961 = vpop.f32.mrb[0].mxu0
        %v1962 = vadd.f32 %v1888, %v1961
        %v1963 = vpop.f32.mrb[0].mxu0
        %1964 = vdwg.mxu0
        %1965 = vmatprep.subr.mxu0 0.0
        %v1966 = vand.u32 %v1589, 4294901760
        %1967 = vmatpush1.xpose.msra.mxu0 %v1966
        %1968 = vmatprep.subr.mxu0 0.0
        %1969 = vmatpush1.xpose.msra.mxu0 0.0
        %1970 = vmatprep.subr.mxu0 0.0
        %1971 = vmatpush1.xpose.msra.mxu0 0.0
        %1972 = vmatprep.subr.mxu0 0.0
        %1973 = vmatpush1.xpose.msra.mxu0 0.0
        %1974 = vmatprep.subr.mxu0 0.0
        %1975 = vmatpush1.xpose.msra.mxu0 0.0
        %1976 = vmatprep.subr.mxu0 0.0
        %1977 = vmatpush1.xpose.msra.mxu0 0.0
        %1978 = vmatprep.subr.mxu0 0.0
        %1979 = vmatpush1.xpose.msra.mxu0 0.0
        %1980 = vmatprep.subr.mxu0 0.0
        %1981 = vmatpush1.xpose.msra.mxu0 0.0
        %1982 = vmatprep.subr.mxu0 0.0
        %1983 = vmatpush1.xpose.msra.mxu0 0.0
        %1984 = vmatprep.subr.mxu0 0.0
        %1985 = vmatpush1.xpose.msra.mxu0 0.0
        %1986 = vmatprep.subr.mxu0 0.0
        %1987 = vmatpush1.xpose.msra.mxu0 0.0
        %1988 = vmatprep.subr.mxu0 0.0
        %1989 = vmatpush1.xpose.msra.mxu0 0.0
        %1990 = vmatprep.subr.mxu0 0.0
        %1991 = vmatpush1.xpose.msra.mxu0 0.0
        %1992 = vmatprep.subr.mxu0 0.0
        %1993 = vmatpush1.xpose.msra.mxu0 0.0
        %1994 = vmatprep.subr.mxu0 0.0
        %1995 = vmatpush1.xpose.msra.mxu0 0.0
        %1996 = vmatprep.subr.mxu0 0.0
        %1997 = vmatpush1.xpose.msra.mxu0 0.0
        %1998 = vmatprep.subr.mxu0 0.0
        %1999 = vmatpush1.xpose.msra.mxu0 0.0
        %2000 = vmatprep.subr.mxu0 0.0
        %2001 = vmatpush1.xpose.msra.mxu0 0.0
        %2002 = vmatprep.subr.mxu0 0.0
        %2003 = vmatpush1.xpose.msra.mxu0 0.0
        %2004 = vmatprep.subr.mxu0 0.0
        %2005 = vmatpush1.xpose.msra.mxu0 0.0
        %2006 = vmatprep.subr.mxu0 0.0
        %2007 = vmatpush1.xpose.msra.mxu0 0.0
        %2008 = vmatprep.subr.mxu0 0.0
        %2009 = vmatpush1.xpose.msra.mxu0 0.0
        %2010 = vmatprep.subr.mxu0 0.0
        %2011 = vmatpush1.xpose.msra.mxu0 0.0
        %2012 = vmatprep.subr.mxu0 0.0
        %2013 = vmatpush1.xpose.msra.mxu0 0.0
        %2014 = vmatprep.subr.mxu0 0.0
        %2015 = vmatpush1.xpose.msra.mxu0 0.0
        %2016 = vmatprep.subr.mxu0 0.0
        %2017 = vmatpush1.xpose.msra.mxu0 0.0
        %2018 = vmatprep.subr.mxu0 0.0
        %2019 = vmatpush1.xpose.msra.mxu0 0.0
        %2020 = vmatprep.subr.mxu0 0.0
        %2021 = vmatpush1.xpose.msra.mxu0 0.0
        %2022 = vmatprep.subr.mxu0 0.0
        %2023 = vmatpush1.xpose.msra.mxu0 0.0
        %2024 = vmatprep.subr.mxu0 0.0
        %2025 = vmatpush1.xpose.msra.mxu0 0.0
        %2026 = vmatprep.subr.mxu0 0.0
        %2027 = vmatpush1.xpose.msra.mxu0 0.0
        %2028 = vmatprep.subr.mxu0 0.0
        %2029 = vmatpush1.xpose.msra.mxu0 0.0
        %2030 = vmatprep.mubr.f32.mxu0 0.0
        %v2031 = vand.u32 %v1587, 4294901760
        %2032 = vmatmul.mubr.f32.gmra.mrb[0].mxu0 %v2031
        %v2033 = vpop.f32.mrb[0].mxu0
        %v2034 = vadd.f32 %v1962, %v2033
        %v2035 = vpop.f32.mrb[0].mxu0
        %2036 = vdwg.mxu0
        %vm2037 = vcmask 64512
        %v2038 = vsel %vm2037, %v2034, -inf
        %2039 = vmax.xlane.f32.xlu0 %v2038
        %v2040 = vpop.xlane.xlu0 %2039
        %v2041 = vsub.f32 %v2034, %v2040
        %v2042 = vmul.f32 %v2041, 1.442695
        %v2043 = vpow.pop %v2042
        %v2044 = vsel %vm2037, %v2043, 0.0
        %2045 = vadd.xlane.f32.xlu0 %v2044
        %v2046 = vpop.xlane.xlu0 %2045
        %v2047 = vrcp.pop %v2046
        %v2048 = vmul.f32 %v2043, %v2047
        %2049 = vrot.lane.b32.xlu0 %v1581, 64
        %v2050 = vpop.permute.xlu0 %2049
        %v2053 = vsel %vm2037, %v2048, 0
        %2055 = vmatprep.subr.mxu0 0.0
        %v2056 = vand.u32 %v2050, 4294901760
        %2057 = vmatpush1.msra.mxu0 %v2056
        %2058 = vmatprep.subr.mxu0 0.0
        %2059 = vmatpush1.msra.mxu0 0.0
        %2060 = vmatprep.subr.mxu0 0.0
        %2061 = vmatpush1.msra.mxu0 0.0
        %2062 = vmatprep.subr.mxu0 0.0
        %2063 = vmatpush1.msra.mxu0 0.0
        %2064 = vmatprep.subr.mxu0 0.0
        %2065 = vmatpush1.msra.mxu0 0.0
        %2066 = vmatprep.subr.mxu0 0.0
        %2067 = vmatpush1.msra.mxu0 0.0
        %2068 = vmatprep.subr.mxu0 0.0
        %2069 = vmatpush1.msra.mxu0 0.0
        %2070 = vmatprep.subr.mxu0 0.0
        %2071 = vmatpush1.msra.mxu0 0.0
        %2072 = vmatprep.subr.mxu0 0.0
        %2073 = vmatpush1.msra.mxu0 0.0
        %2074 = vmatprep.subr.mxu0 0.0
        %2075 = vmatpush1.msra.mxu0 0.0
        %2076 = vmatprep.subr.mxu0 0.0
        %2077 = vmatpush1.msra.mxu0 0.0
        %2078 = vmatprep.subr.mxu0 0.0
        %2079 = vmatpush1.msra.mxu0 0.0
        %2080 = vmatprep.subr.mxu0 0.0
        %2081 = vmatpush1.msra.mxu0 0.0
        %2082 = vmatprep.subr.mxu0 0.0
        %2083 = vmatpush1.msra.mxu0 0.0
        %2084 = vmatprep.subr.mxu0 0.0
        %2085 = vmatpush1.msra.mxu0 0.0
        %2086 = vmatprep.subr.mxu0 0.0
        %2087 = vmatpush1.msra.mxu0 0.0
        %2088 = vmatprep.subr.mxu0 0.0
        %2089 = vmatpush1.msra.mxu0 0.0
        %2090 = vmatprep.subr.mxu0 0.0
        %2091 = vmatpush1.msra.mxu0 0.0
        %2092 = vmatprep.subr.mxu0 0.0
        %2093 = vmatpush1.msra.mxu0 0.0
        %2094 = vmatprep.subr.mxu0 0.0
        %2095 = vmatpush1.msra.mxu0 0.0
        %2096 = vmatprep.subr.mxu0 0.0
        %2097 = vmatpush1.msra.mxu0 0.0
        %2098 = vmatprep.subr.mxu0 0.0
        %2099 = vmatpush1.msra.mxu0 0.0
        %2100 = vmatprep.subr.mxu0 0.0
        %2101 = vmatpush1.msra.mxu0 0.0
        %2102 = vmatprep.subr.mxu0 0.0
        %2103 = vmatpush1.msra.mxu0 0.0
        %2104 = vmatprep.subr.mxu0 0.0
        %2105 = vmatpush1.msra.mxu0 0.0
        %2106 = vmatprep.subr.mxu0 0.0
        %2107 = vmatpush1.msra.mxu0 0.0
        %2108 = vmatprep.subr.mxu0 0.0
        %2109 = vmatpush1.msra.mxu0 0.0
        %2110 = vmatprep.subr.mxu0 0.0
        %2111 = vmatpush1.msra.mxu0 0.0
        %2112 = vmatprep.subr.mxu0 0.0
        %2113 = vmatpush1.msra.mxu0 0.0
        %2114 = vmatprep.subr.mxu0 0.0
        %2115 = vmatpush1.msra.mxu0 0.0
        %2116 = vmatprep.subr.mxu0 0.0
        %2117 = vmatpush1.msra.mxu0 0.0
        %2118 = vmatprep.subr.mxu0 0.0
        %2119 = vmatpush1.msra.mxu0 0.0
        %2120 = vmatprep.mubr.f32.mxu0 0.0
        %v2121 = vand.u32 %v2053, 4294901760
        %v2122 = vsub.f32 %v2053, %v2121
        %v2123 = vand.u32 %v2122, 4294901760
        %v2124 = vsub.f32 %v2122, %v2123
        %v2125 = vand.u32 %v2124, 4294901760
        %2126 = vmatmul.mubr.f32.gmra.mrb[0].mxu0 %v2125
        %v2127 = vpop.f32.mrb[0].mxu0
        %v2128 = vadd.f32 %v1081, %v2127
        %v2129 = vpop.f32.mrb[0].mxu0
        %2130 = vdwg.mxu0
        %2131 = vmatprep.subr.mxu0 0.0
        %v2132 = vand.u32 %v2050, 4294901760
        %v2133 = vsub.f32 %v2050, %v2132
        %v2134 = vand.u32 %v2133, 4294901760
        %v2135 = vsub.f32 %v2133, %v2134
        %v2136 = vand.u32 %v2135, 4294901760
        %2137 = vmatpush1.msra.mxu0 %v2136
        %2138 = vmatprep.subr.mxu0 0.0
        %2139 = vmatpush1.msra.mxu0 0.0
        %2140 = vmatprep.subr.mxu0 0.0
        %2141 = vmatpush1.msra.mxu0 0.0
        %2142 = vmatprep.subr.mxu0 0.0
        %2143 = vmatpush1.msra.mxu0 0.0
        %2144 = vmatprep.subr.mxu0 0.0
        %2145 = vmatpush1.msra.mxu0 0.0
        %2146 = vmatprep.subr.mxu0 0.0
        %2147 = vmatpush1.msra.mxu0 0.0
        %2148 = vmatprep.subr.mxu0 0.0
        %2149 = vmatpush1.msra.mxu0 0.0
        %2150 = vmatprep.subr.mxu0 0.0
        %2151 = vmatpush1.msra.mxu0 0.0
        %2152 = vmatprep.subr.mxu0 0.0
        %2153 = vmatpush1.msra.mxu0 0.0
        %2154 = vmatprep.subr.mxu0 0.0
        %2155 = vmatpush1.msra.mxu0 0.0
        %2156 = vmatprep.subr.mxu0 0.0
        %2157 = vmatpush1.msra.mxu0 0.0
        %2158 = vmatprep.subr.mxu0 0.0
        %2159 = vmatpush1.msra.mxu0 0.0
        %2160 = vmatprep.subr.mxu0 0.0
        %2161 = vmatpush1.msra.mxu0 0.0
        %2162 = vmatprep.subr.mxu0 0.0
        %2163 = vmatpush1.msra.mxu0 0.0
        %2164 = vmatprep.subr.mxu0 0.0
        %2165 = vmatpush1.msra.mxu0 0.0
        %2166 = vmatprep.subr.mxu0 0.0
        %2167 = vmatpush1.msra.mxu0 0.0
        %2168 = vmatprep.subr.mxu0 0.0
        %2169 = vmatpush1.msra.mxu0 0.0
        %2170 = vmatprep.subr.mxu0 0.0
        %2171 = vmatpush1.msra.mxu0 0.0
        %2172 = vmatprep.subr.mxu0 0.0
        %2173 = vmatpush1.msra.mxu0 0.0
        %2174 = vmatprep.subr.mxu0 0.0
        %2175 = vmatpush1.msra.mxu0 0.0
        %2176 = vmatprep.subr.mxu0 0.0
        %2177 = vmatpush1.msra.mxu0 0.0
        %2178 = vmatprep.subr.mxu0 0.0
        %2179 = vmatpush1.msra.mxu0 0.0
        %2180 = vmatprep.subr.mxu0 0.0
        %2181 = vmatpush1.msra.mxu0 0.0
        %2182 = vmatprep.subr.mxu0 0.0
        %2183 = vmatpush1.msra.mxu0 0.0
        %2184 = vmatprep.subr.mxu0 0.0
        %2185 = vmatpush1.msra.mxu0 0.0
        %2186 = vmatprep.subr.mxu0 0.0
        %2187 = vmatpush1.msra.mxu0 0.0
        %2188 = vmatprep.subr.mxu0 0.0
        %2189 = vmatpush1.msra.mxu0 0.0
        %2190 = vmatprep.subr.mxu0 0.0
        %2191 = vmatpush1.msra.mxu0 0.0
        %2192 = vmatprep.subr.mxu0 0.0
        %2193 = vmatpush1.msra.mxu0 0.0
        %2194 = vmatprep.subr.mxu0 0.0
        %2195 = vmatpush1.msra.mxu0 0.0
        %2196 = vmatprep.subr.mxu0 0.0
        %2197 = vmatpush1.msra.mxu0 0.0
        %2198 = vmatprep.subr.mxu0 0.0
        %2199 = vmatpush1.msra.mxu0 0.0
        %2200 = vmatprep.mubr.f32.mxu0 0.0
        %v2201 = vand.u32 %v2053, 4294901760
        %2202 = vmatmul.mubr.f32.gmra.mrb[0].mxu0 %v2201
        %v2203 = vpop.f32.mrb[0].mxu0
        %v2204 = vadd.f32 %v2128, %v2203
        %v2205 = vpop.f32.mrb[0].mxu0
        %2206 = vdwg.mxu0
        %2207 = vmatprep.subr.mxu0 0.0
        %v2208 = vand.u32 %v2050, 4294901760
        %v2209 = vsub.f32 %v2050, %v2208
        %2210 = vmatpush1.msra.mxu0 %v2209
        %2211 = vmatprep.subr.mxu0 0.0
        %2212 = vmatpush1.msra.mxu0 0.0
        %2213 = vmatprep.subr.mxu0 0.0
        %2214 = vmatpush1.msra.mxu0 0.0
        %2215 = vmatprep.subr.mxu0 0.0
        %2216 = vmatpush1.msra.mxu0 0.0
        %2217 = vmatprep.subr.mxu0 0.0
        %2218 = vmatpush1.msra.mxu0 0.0
        %2219 = vmatprep.subr.mxu0 0.0
        %2220 = vmatpush1.msra.mxu0 0.0
        %2221 = vmatprep.subr.mxu0 0.0
        %2222 = vmatpush1.msra.mxu0 0.0
        %2223 = vmatprep.subr.mxu0 0.0
        %2224 = vmatpush1.msra.mxu0 0.0
        %2225 = vmatprep.subr.mxu0 0.0
        %2226 = vmatpush1.msra.mxu0 0.0
        %2227 = vmatprep.subr.mxu0 0.0
        %2228 = vmatpush1.msra.mxu0 0.0
        %2229 = vmatprep.subr.mxu0 0.0
        %2230 = vmatpush1.msra.mxu0 0.0
        %2231 = vmatprep.subr.mxu0 0.0
        %2232 = vmatpush1.msra.mxu0 0.0
        %2233 = vmatprep.subr.mxu0 0.0
        %2234 = vmatpush1.msra.mxu0 0.0
        %2235 = vmatprep.subr.mxu0 0.0
        %2236 = vmatpush1.msra.mxu0 0.0
        %2237 = vmatprep.subr.mxu0 0.0
        %2238 = vmatpush1.msra.mxu0 0.0
        %2239 = vmatprep.subr.mxu0 0.0
        %2240 = vmatpush1.msra.mxu0 0.0
        %2241 = vmatprep.subr.mxu0 0.0
        %2242 = vmatpush1.msra.mxu0 0.0
        %2243 = vmatprep.subr.mxu0 0.0
        %2244 = vmatpush1.msra.mxu0 0.0
        %2245 = vmatprep.subr.mxu0 0.0
        %2246 = vmatpush1.msra.mxu0 0.0
        %2247 = vmatprep.subr.mxu0 0.0
        %2248 = vmatpush1.msra.mxu0 0.0
        %2249 = vmatprep.subr.mxu0 0.0
        %2250 = vmatpush1.msra.mxu0 0.0
        %2251 = vmatprep.subr.mxu0 0.0
        %2252 = vmatpush1.msra.mxu0 0.0
        %2253 = vmatprep.subr.mxu0 0.0
        %2254 = vmatpush1.msra.mxu0 0.0
        %2255 = vmatprep.subr.mxu0 0.0
        %2256 = vmatpush1.msra.mxu0 0.0
        %2257 = vmatprep.subr.mxu0 0.0
        %2258 = vmatpush1.msra.mxu0 0.0
        %2259 = vmatprep.subr.mxu0 0.0
        %2260 = vmatpush1.msra.mxu0 0.0
        %2261 = vmatprep.subr.mxu0 0.0
        %2262 = vmatpush1.msra.mxu0 0.0
        %2263 = vmatprep.subr.mxu0 0.0
        %2264 = vmatpush1.msra.mxu0 0.0
        %2265 = vmatprep.subr.mxu0 0.0
        %2266 = vmatpush1.msra.mxu0 0.0
        %2267 = vmatprep.subr.mxu0 0.0
        %2268 = vmatpush1.msra.mxu0 0.0
        %2269 = vmatprep.subr.mxu0 0.0
        %2270 = vmatpush1.msra.mxu0 0.0
        %2271 = vmatprep.subr.mxu0 0.0
        %2272 = vmatpush1.msra.mxu0 0.0
        %2273 = vmatprep.mubr.f32.mxu0 0.0
        %v2274 = vand.u32 %v2053, 4294901760
        %v2275 = vsub.f32 %v2053, %v2274
        %2276 = vmatmul.mubr.f32.gmra.mrb[0].mxu0 %v2275
        %v2277 = vpop.f32.mrb[0].mxu0
        %v2278 = vadd.f32 %v2204, %v2277
        %v2279 = vpop.f32.mrb[0].mxu0
        %2280 = vdwg.mxu0
        %2281 = vmatprep.subr.mxu0 0.0
        %v2282 = vand.u32 %v2050, 4294901760
        %2283 = vmatpush1.msra.mxu0 %v2282
        %2284 = vmatprep.subr.mxu0 0.0
        %2285 = vmatpush1.msra.mxu0 0.0
        %2286 = vmatprep.subr.mxu0 0.0
        %2287 = vmatpush1.msra.mxu0 0.0
        %2288 = vmatprep.subr.mxu0 0.0
        %2289 = vmatpush1.msra.mxu0 0.0
        %2290 = vmatprep.subr.mxu0 0.0
        %2291 = vmatpush1.msra.mxu0 0.0
        %2292 = vmatprep.subr.mxu0 0.0
        %2293 = vmatpush1.msra.mxu0 0.0
        %2294 = vmatprep.subr.mxu0 0.0
        %2295 = vmatpush1.msra.mxu0 0.0
        %2296 = vmatprep.subr.mxu0 0.0
        %2297 = vmatpush1.msra.mxu0 0.0
        %2298 = vmatprep.subr.mxu0 0.0
        %2299 = vmatpush1.msra.mxu0 0.0
        %2300 = vmatprep.subr.mxu0 0.0
        %2301 = vmatpush1.msra.mxu0 0.0
        %2302 = vmatprep.subr.mxu0 0.0
        %2303 = vmatpush1.msra.mxu0 0.0
        %2304 = vmatprep.subr.mxu0 0.0
        %2305 = vmatpush1.msra.mxu0 0.0
        %2306 = vmatprep.subr.mxu0 0.0
        %2307 = vmatpush1.msra.mxu0 0.0
        %2308 = vmatprep.subr.mxu0 0.0
        %2309 = vmatpush1.msra.mxu0 0.0
        %2310 = vmatprep.subr.mxu0 0.0
        %2311 = vmatpush1.msra.mxu0 0.0
        %2312 = vmatprep.subr.mxu0 0.0
        %2313 = vmatpush1.msra.mxu0 0.0
        %2314 = vmatprep.subr.mxu0 0.0
        %2315 = vmatpush1.msra.mxu0 0.0
        %2316 = vmatprep.subr.mxu0 0.0
        %2317 = vmatpush1.msra.mxu0 0.0
        %2318 = vmatprep.subr.mxu0 0.0
        %2319 = vmatpush1.msra.mxu0 0.0
        %2320 = vmatprep.subr.mxu0 0.0
        %2321 = vmatpush1.msra.mxu0 0.0
        %2322 = vmatprep.subr.mxu0 0.0
        %2323 = vmatpush1.msra.mxu0 0.0
        %2324 = vmatprep.subr.mxu0 0.0
        %2325 = vmatpush1.msra.mxu0 0.0
        %2326 = vmatprep.subr.mxu0 0.0
        %2327 = vmatpush1.msra.mxu0 0.0
        %2328 = vmatprep.subr.mxu0 0.0
        %2329 = vmatpush1.msra.mxu0 0.0
        %2330 = vmatprep.subr.mxu0 0.0
        %2331 = vmatpush1.msra.mxu0 0.0
        %2332 = vmatprep.subr.mxu0 0.0
        %2333 = vmatpush1.msra.mxu0 0.0
        %2334 = vmatprep.subr.mxu0 0.0
        %2335 = vmatpush1.msra.mxu0 0.0
        %2336 = vmatprep.subr.mxu0 0.0
        %2337 = vmatpush1.msra.mxu0 0.0
        %2338 = vmatprep.subr.mxu0 0.0
        %2339 = vmatpush1.msra.mxu0 0.0
        %2340 = vmatprep.subr.mxu0 0.0
        %2341 = vmatpush1.msra.mxu0 0.0
        %2342 = vmatprep.subr.mxu0 0.0
        %2343 = vmatpush1.msra.mxu0 0.0
        %2344 = vmatprep.subr.mxu0 0.0
        %2345 = vmatpush1.msra.mxu0 0.0
        %2346 = vmatprep.mubr.f32.mxu0 0.0
        %v2347 = vand.u32 %v2053, 4294901760
        %v2348 = vsub.f32 %v2053, %v2347
        %v2349 = vand.u32 %v2348, 4294901760
        %2350 = vmatmul.mubr.f32.gmra.mrb[0].mxu0 %v2349
        %v2351 = vpop.f32.mrb[0].mxu0
        %v2352 = vadd.f32 %v2278, %v2351
        %v2353 = vpop.f32.mrb[0].mxu0
        %2354 = vdwg.mxu0
        %2355 = vmatprep.subr.mxu0 0.0
        %v2356 = vand.u32 %v2050, 4294901760
        %v2357 = vsub.f32 %v2050, %v2356
        %v2358 = vand.u32 %v2357, 4294901760
        %2359 = vmatpush1.msra.mxu0 %v2358
        %2360 = vmatprep.subr.mxu0 0.0
        %2361 = vmatpush1.msra.mxu0 0.0
        %2362 = vmatprep.subr.mxu0 0.0
        %2363 = vmatpush1.msra.mxu0 0.0
        %2364 = vmatprep.subr.mxu0 0.0
        %2365 = vmatpush1.msra.mxu0 0.0
        %2366 = vmatprep.subr.mxu0 0.0
        %2367 = vmatpush1.msra.mxu0 0.0
        %2368 = vmatprep.subr.mxu0 0.0
        %2369 = vmatpush1.msra.mxu0 0.0
        %2370 = vmatprep.subr.mxu0 0.0
        %2371 = vmatpush1.msra.mxu0 0.0
        %2372 = vmatprep.subr.mxu0 0.0
        %2373 = vmatpush1.msra.mxu0 0.0
        %2374 = vmatprep.subr.mxu0 0.0
        %2375 = vmatpush1.msra.mxu0 0.0
        %2376 = vmatprep.subr.mxu0 0.0
        %2377 = vmatpush1.msra.mxu0 0.0
        %2378 = vmatprep.subr.mxu0 0.0
        %2379 = vmatpush1.msra.mxu0 0.0
        %2380 = vmatprep.subr.mxu0 0.0
        %2381 = vmatpush1.msra.mxu0 0.0
        %2382 = vmatprep.subr.mxu0 0.0
        %2383 = vmatpush1.msra.mxu0 0.0
        %2384 = vmatprep.subr.mxu0 0.0
        %2385 = vmatpush1.msra.mxu0 0.0
        %2386 = vmatprep.subr.mxu0 0.0
        %2387 = vmatpush1.msra.mxu0 0.0
        %2388 = vmatprep.subr.mxu0 0.0
        %2389 = vmatpush1.msra.mxu0 0.0
        %2390 = vmatprep.subr.mxu0 0.0
        %2391 = vmatpush1.msra.mxu0 0.0
        %2392 = vmatprep.subr.mxu0 0.0
        %2393 = vmatpush1.msra.mxu0 0.0
        %2394 = vmatprep.subr.mxu0 0.0
        %2395 = vmatpush1.msra.mxu0 0.0
        %2396 = vmatprep.subr.mxu0 0.0
        %2397 = vmatpush1.msra.mxu0 0.0
        %2398 = vmatprep.subr.mxu0 0.0
        %2399 = vmatpush1.msra.mxu0 0.0
        %2400 = vmatprep.subr.mxu0 0.0
        %2401 = vmatpush1.msra.mxu0 0.0
        %2402 = vmatprep.subr.mxu0 0.0
        %2403 = vmatpush1.msra.mxu0 0.0
        %2404 = vmatprep.subr.mxu0 0.0
        %2405 = vmatpush1.msra.mxu0 0.0
        %2406 = vmatprep.subr.mxu0 0.0
        %2407 = vmatpush1.msra.mxu0 0.0
        %2408 = vmatprep.subr.mxu0 0.0
        %2409 = vmatpush1.msra.mxu0 0.0
        %2410 = vmatprep.subr.mxu0 0.0
        %2411 = vmatpush1.msra.mxu0 0.0
        %2412 = vmatprep.subr.mxu0 0.0
        %2413 = vmatpush1.msra.mxu0 0.0
        %2414 = vmatprep.subr.mxu0 0.0
        %2415 = vmatpush1.msra.mxu0 0.0
        %2416 = vmatprep.subr.mxu0 0.0
        %2417 = vmatpush1.msra.mxu0 0.0
        %2418 = vmatprep.subr.mxu0 0.0
        %2419 = vmatpush1.msra.mxu0 0.0
        %2420 = vmatprep.subr.mxu0 0.0
        %2421 = vmatpush1.msra.mxu0 0.0
        %2422 = vmatprep.mubr.f32.mxu0 0.0
        %v2423 = vand.u32 %v2053, 4294901760
        %2424 = vmatmul.mubr.f32.gmra.mrb[0].mxu0 %v2423
        %v2425 = vpop.f32.mrb[0].mxu0
        %v2426 = vadd.f32 %v2352, %v2425
        %v2427 = vpop.f32.mrb[0].mxu0
        %2428 = vdwg.mxu0
        %2429 = vmatprep.subr.mxu0 0.0
        %v2430 = vand.u32 %v2050, 4294901760
        %2431 = vmatpush1.msra.mxu0 %v2430
        %2432 = vmatprep.subr.mxu0 0.0
        %2433 = vmatpush1.msra.mxu0 0.0
        %2434 = vmatprep.subr.mxu0 0.0
        %2435 = vmatpush1.msra.mxu0 0.0
        %2436 = vmatprep.subr.mxu0 0.0
        %2437 = vmatpush1.msra.mxu0 0.0
        %2438 = vmatprep.subr.mxu0 0.0
        %2439 = vmatpush1.msra.mxu0 0.0
        %2440 = vmatprep.subr.mxu0 0.0
        %2441 = vmatpush1.msra.mxu0 0.0
        %2442 = vmatprep.subr.mxu0 0.0
        %2443 = vmatpush1.msra.mxu0 0.0
        %2444 = vmatprep.subr.mxu0 0.0
        %2445 = vmatpush1.msra.mxu0 0.0
        %2446 = vmatprep.subr.mxu0 0.0
        %2447 = vmatpush1.msra.mxu0 0.0
        %2448 = vmatprep.subr.mxu0 0.0
        %2449 = vmatpush1.msra.mxu0 0.0
        %2450 = vmatprep.subr.mxu0 0.0
        %2451 = vmatpush1.msra.mxu0 0.0
        %2452 = vmatprep.subr.mxu0 0.0
        %2453 = vmatpush1.msra.mxu0 0.0
        %2454 = vmatprep.subr.mxu0 0.0
        %2455 = vmatpush1.msra.mxu0 0.0
        %2456 = vmatprep.subr.mxu0 0.0
        %2457 = vmatpush1.msra.mxu0 0.0
        %2458 = vmatprep.subr.mxu0 0.0
        %2459 = vmatpush1.msra.mxu0 0.0
        %2460 = vmatprep.subr.mxu0 0.0
        %2461 = vmatpush1.msra.mxu0 0.0
        %2462 = vmatprep.subr.mxu0 0.0
        %2463 = vmatpush1.msra.mxu0 0.0
        %2464 = vmatprep.subr.mxu0 0.0
        %2465 = vmatpush1.msra.mxu0 0.0
        %2466 = vmatprep.subr.mxu0 0.0
        %2467 = vmatpush1.msra.mxu0 0.0
        %2468 = vmatprep.subr.mxu0 0.0
        %2469 = vmatpush1.msra.mxu0 0.0
        %2470 = vmatprep.subr.mxu0 0.0
        %2471 = vmatpush1.msra.mxu0 0.0
        %2472 = vmatprep.subr.mxu0 0.0
        %2473 = vmatpush1.msra.mxu0 0.0
        %2474 = vmatprep.subr.mxu0 0.0
        %2475 = vmatpush1.msra.mxu0 0.0
        %2476 = vmatprep.subr.mxu0 0.0
        %2477 = vmatpush1.msra.mxu0 0.0
        %2478 = vmatprep.subr.mxu0 0.0
        %2479 = vmatpush1.msra.mxu0 0.0
        %2480 = vmatprep.subr.mxu0 0.0
        %2481 = vmatpush1.msra.mxu0 0.0
        %2482 = vmatprep.subr.mxu0 0.0
        %2483 = vmatpush1.msra.mxu0 0.0
        %2484 = vmatprep.subr.mxu0 0.0
        %2485 = vmatpush1.msra.mxu0 0.0
        %2486 = vmatprep.subr.mxu0 0.0
        %2487 = vmatpush1.msra.mxu0 0.0
        %2488 = vmatprep.subr.mxu0 0.0
        %2489 = vmatpush1.msra.mxu0 0.0
        %2490 = vmatprep.subr.mxu0 0.0
        %2491 = vmatpush1.msra.mxu0 0.0
        %2492 = vmatprep.subr.mxu0 0.0
        %2493 = vmatpush1.msra.mxu0 0.0
        %2494 = vmatprep.mubr.f32.mxu0 0.0
        %v2495 = vand.u32 %v2053, 4294901760
        %2496 = vmatmul.mubr.f32.gmra.mrb[0].mxu0 %v2495
        %v2497 = vpop.f32.mrb[0].mxu0
        %v2498 = vadd.f32 %v2426, %v2497
        %v2499 = vpop.f32.mrb[0].mxu0
        %2500 = vdwg.mxu0
        %v2501 = vsel %vm1095, %v2498, 0.0
        %2502 = vadd.xlane.f32.xlu0 %v2501
        %v2503 = vpop.xlane.xlu0 %2502
        %v2504 = vrot.slane %v2503, 4
        %v2505 = vadd.f32 %v2503, %v2504
        %v2506 = vrot.slane %v2505, 2
        %v2507 = vadd.f32 %v2505, %v2506
        %v2508 = vrot.slane %v2507, 1
        %v2509 = vadd.f32 %v2507, %v2508
        %s2510 = vtos %v2509
        %v2511 = vrcp.pop 256.0
        %s2512 = vtos %v2511
        %s2513 = smul.f32 %s2510, %s2512
        %v2514 = vmul.f32 %v2498, %v2498
        %v2515 = vsel %vm1095, %v2514, 0.0
        %2516 = vadd.xlane.f32.xlu0 %v2515
        %v2517 = vpop.xlane.xlu0 %2516
        %v2518 = vrot.slane %v2517, 4
        %v2519 = vadd.f32 %v2517, %v2518
        %v2520 = vrot.slane %v2519, 2
        %v2521 = vadd.f32 %v2519, %v2520
        %v2522 = vrot.slane %v2521, 1
        %v2523 = vadd.f32 %v2521, %v2522
        %s2524 = vtos %v2523
        %v2525 = vrcp.pop 256.0
        %s2526 = vtos %v2525
        %s2527 = smul.f32 %s2524, %s2526
        %s2528 = smul.f32 %s2513, %s2513
        %s2529 = ssub.f32 %s2527, %s2528
        %v2530 = vld [vmem:[%s4] sm:$0xff]
        %v2531 = vstv %s2513
        %v2532 = vsub.f32 %v2498, %v2531
        %s2533 = sadd.f32 %s2529, 1e-08
        %v2534 = vstv %s2533
        %v2535 = vrsqrt.pop %v2534
        %s2536 = vtos %v2535
        %v2537 = vstv %s2536
        %v2538 = vmul.f32 %v2532, %v2537
        %v2539 = vmul.f32 %v2530, %v2538
        %v2540 = vld [vmem:[%s5] sm:$0xff]
        %v2541 = vadd.f32 %v2539, %v2540
        %v2542 = vld [vmem:[#allocation8] sm:$0xff]
        %v2543 = vld [vmem:[#allocation8 + $0x8] sm:$0xff]
        %v2544 = vld [vmem:[#allocation8 + $0x10] sm:$0xff]
        %v2545 = vld [vmem:[#allocation8 + $0x18] sm:$0xff]
        %v2546 = vld [vmem:[#allocation10] sm:$0x1]
        %v2548 = vlaneseq
        %v2549 = vshrl.u32 %v2548, 7
        %v2550 = vsub.s32 0, %v2549
        %v2551 = vrot.slane %v2546, %v2550
        %v2554 = vsel %vm1095, %v2541, 0
        %2556 = vmatprep.subr.mxu0 0.0
        %v2557 = vand.u32 %v2542, 4294901760
        %2558 = vmatpush1.msra.mxu0 %v2557
        %2559 = vmatprep.subr.mxu0 0.0
        %v2560 = vand.u32 %v2543, 4294901760
        %2561 = vmatpush1.msra.mxu0 %v2560
        %2562 = vmatprep.subr.mxu0 0.0
        %v2563 = vand.u32 %v2544, 4294901760
        %2564 = vmatpush1.msra.mxu0 %v2563
        %2565 = vmatprep.subr.mxu0 0.0
        %v2566 = vand.u32 %v2545, 4294901760
        %2567 = vmatpush1.msra.mxu0 %v2566
        %2568 = vmatprep.subr.mxu0 0.0
        %2569 = vmatpush1.msra.mxu0 0.0
        %2570 = vmatprep.subr.mxu0 0.0
        %2571 = vmatpush1.msra.mxu0 0.0
        %2572 = vmatprep.subr.mxu0 0.0
        %2573 = vmatpush1.msra.mxu0 0.0
        %2574 = vmatprep.subr.mxu0 0.0
        %2575 = vmatpush1.msra.mxu0 0.0
        %2576 = vmatprep.subr.mxu0 0.0
        %2577 = vmatpush1.msra.mxu0 0.0
        %2578 = vmatprep.subr.mxu0 0.0
        %2579 = vmatpush1.msra.mxu0 0.0
        %2580 = vmatprep.subr.mxu0 0.0
        %2581 = vmatpush1.msra.mxu0 0.0
        %2582 = vmatprep.subr.mxu0 0.0
        %2583 = vmatpush1.msra.mxu0 0.0
        %2584 = vmatprep.subr.mxu0 0.0
        %2585 = vmatpush1.msra.mxu0 0.0
        %2586 = vmatprep.subr.mxu0 0.0
        %2587 = vmatpush1.msra.mxu0 0.0
        %2588 = vmatprep.subr.mxu0 0.0
        %2589 = vmatpush1.msra.mxu0 0.0
        %2590 = vmatprep.subr.mxu0 0.0
        %2591 = vmatpush1.msra.mxu0 0.0
        %2592 = vmatprep.subr.mxu0 0.0
        %2593 = vmatpush1.msra.mxu0 0.0
        %2594 = vmatprep.subr.mxu0 0.0
        %2595 = vmatpush1.msra.mxu0 0.0
        %2596 = vmatprep.subr.mxu0 0.0
        %2597 = vmatpush1.msra.mxu0 0.0
        %2598 = vmatprep.subr.mxu0 0.0
        %2599 = vmatpush1.msra.mxu0 0.0
        %2600 = vmatprep.subr.mxu0 0.0
        %2601 = vmatpush1.msra.mxu0 0.0
        %2602 = vmatprep.subr.mxu0 0.0
        %2603 = vmatpush1.msra.mxu0 0.0
        %2604 = vmatprep.subr.mxu0 0.0
        %2605 = vmatpush1.msra.mxu0 0.0
        %2606 = vmatprep.subr.mxu0 0.0
        %2607 = vmatpush1.msra.mxu0 0.0
        %2608 = vmatprep.subr.mxu0 0.0
        %2609 = vmatpush1.msra.mxu0 0.0
        %2610 = vmatprep.subr.mxu0 0.0
        %2611 = vmatpush1.msra.mxu0 0.0
        %2612 = vmatprep.subr.mxu0 0.0
        %2613 = vmatpush1.msra.mxu0 0.0
        %2614 = vmatprep.subr.mxu0 0.0
        %2615 = vmatpush1.msra.mxu0 0.0
        %2616 = vmatprep.subr.mxu0 0.0
        %2617 = vmatpush1.msra.mxu0 0.0
        %2618 = vmatprep.subr.mxu0 0.0
        %2619 = vmatpush1.msra.mxu0 0.0
        %2620 = vmatprep.subr.mxu0 0.0
        %2621 = vmatpush1.msra.mxu0 0.0
        %2622 = vmatprep.subr.mxu0 0.0
        %2623 = vmatpush1.msra.mxu0 0.0
        %2624 = vmatprep.mubr.f32.mxu0 0.0
        %v2625 = vand.u32 %v2554, 4294901760
        %v2626 = vsub.f32 %v2554, %v2625
        %v2627 = vand.u32 %v2626, 4294901760
        %v2628 = vsub.f32 %v2626, %v2627
        %v2629 = vand.u32 %v2628, 4294901760
        %2630 = vmatmul.mubr.f32.gmra.mrb[0].mxu0 %v2629
        %v2631 = vpop.f32.mrb[0].mxu0
        %v2632 = vadd.f32 %v2551, %v2631
        %v2633 = vpop.f32.mrb[0].mxu0
        %2634 = vdwg.mxu0
        %2635 = vmatprep.subr.mxu0 0.0
        %v2636 = vand.u32 %v2542, 4294901760
        %v2637 = vsub.f32 %v2542, %v2636
        %v2638 = vand.u32 %v2637, 4294901760
        %v2639 = vsub.f32 %v2637, %v2638
        %v2640 = vand.u32 %v2639, 4294901760
        %2641 = vmatpush1.msra.mxu0 %v2640
        %2642 = vmatprep.subr.mxu0 0.0
        %v2643 = vand.u32 %v2543, 4294901760
        %v2644 = vsub.f32 %v2543, %v2643
        %v2645 = vand.u32 %v2644, 4294901760
        %v2646 = vsub.f32 %v2644, %v2645
        %v2647 = vand.u32 %v2646, 4294901760
        %2648 = vmatpush1.msra.mxu0 %v2647
        %2649 = vmatprep.subr.mxu0 0.0
        %v2650 = vand.u32 %v2544, 4294901760
        %v2651 = vsub.f32 %v2544, %v2650
        %v2652 = vand.u32 %v2651, 4294901760
        %v2653 = vsub.f32 %v2651, %v2652
        %v2654 = vand.u32 %v2653, 4294901760
        %2655 = vmatpush1.msra.mxu0 %v2654
        %2656 = vmatprep.subr.mxu0 0.0
        %v2657 = vand.u32 %v2545, 4294901760
        %v2658 = vsub.f32 %v2545, %v2657
        %v2659 = vand.u32 %v2658, 4294901760
        %v2660 = vsub.f32 %v2658, %v2659
        %v2661 = vand.u32 %v2660, 4294901760
        %2662 = vmatpush1.msra.mxu0 %v2661
        %2663 = vmatprep.subr.mxu0 0.0
        %2664 = vmatpush1.msra.mxu0 0.0
        %2665 = vmatprep.subr.mxu0 0.0
        %2666 = vmatpush1.msra.mxu0 0.0
        %2667 = vmatprep.subr.mxu0 0.0
        %2668 = vmatpush1.msra.mxu0 0.0
        %2669 = vmatprep.subr.mxu0 0.0
        %2670 = vmatpush1.msra.mxu0 0.0
        %2671 = vmatprep.subr.mxu0 0.0
        %2672 = vmatpush1.msra.mxu0 0.0
        %2673 = vmatprep.subr.mxu0 0.0
        %2674 = vmatpush1.msra.mxu0 0.0
        %2675 = vmatprep.subr.mxu0 0.0
        %2676 = vmatpush1.msra.mxu0 0.0
        %2677 = vmatprep.subr.mxu0 0.0
        %2678 = vmatpush1.msra.mxu0 0.0
        %2679 = vmatprep.subr.mxu0 0.0
        %2680 = vmatpush1.msra.mxu0 0.0
        %2681 = vmatprep.subr.mxu0 0.0
        %2682 = vmatpush1.msra.mxu0 0.0
        %2683 = vmatprep.subr.mxu0 0.0
        %2684 = vmatpush1.msra.mxu0 0.0
        %2685 = vmatprep.subr.mxu0 0.0
        %2686 = vmatpush1.msra.mxu0 0.0
        %2687 = vmatprep.subr.mxu0 0.0
        %2688 = vmatpush1.msra.mxu0 0.0
        %2689 = vmatprep.subr.mxu0 0.0
        %2690 = vmatpush1.msra.mxu0 0.0
        %2691 = vmatprep.subr.mxu0 0.0
        %2692 = vmatpush1.msra.mxu0 0.0
        %2693 = vmatprep.subr.mxu0 0.0
        %2694 = vmatpush1.msra.mxu0 0.0
        %2695 = vmatprep.subr.mxu0 0.0
        %2696 = vmatpush1.msra.mxu0 0.0
        %2697 = vmatprep.subr.mxu0 0.0
        %2698 = vmatpush1.msra.mxu0 0.0
        %2699 = vmatprep.subr.mxu0 0.0
        %2700 = vmatpush1.msra.mxu0 0.0
        %2701 = vmatprep.subr.mxu0 0.0
        %2702 = vmatpush1.msra.mxu0 0.0
        %2703 = vmatprep.subr.mxu0 0.0
        %2704 = vmatpush1.msra.mxu0 0.0
        %2705 = vmatprep.subr.mxu0 0.0
        %2706 = vmatpush1.msra.mxu0 0.0
        %2707 = vmatprep.subr.mxu0 0.0
        %2708 = vmatpush1.msra.mxu0 0.0
        %2709 = vmatprep.subr.mxu0 0.0
        %2710 = vmatpush1.msra.mxu0 0.0
        %2711 = vmatprep.subr.mxu0 0.0
        %2712 = vmatpush1.msra.mxu0 0.0
        %2713 = vmatprep.subr.mxu0 0.0
        %2714 = vmatpush1.msra.mxu0 0.0
        %2715 = vmatprep.subr.mxu0 0.0
        %2716 = vmatpush1.msra.mxu0 0.0
        %2717 = vmatprep.subr.mxu0 0.0
        %2718 = vmatpush1.msra.mxu0 0.0
        %2719 = vmatprep.mubr.f32.mxu0 0.0
        %v2720 = vand.u32 %v2554, 4294901760
        %2721 = vmatmul.mubr.f32.gmra.mrb[0].mxu0 %v2720
        %v2722 = vpop.f32.mrb[0].mxu0
        %v2723 = vadd.f32 %v2632, %v2722
        %v2724 = vpop.f32.mrb[0].mxu0
        %2725 = vdwg.mxu0
        %2726 = vmatprep.subr.mxu0 0.0
        %v2727 = vand.u32 %v2542, 4294901760
        %v2728 = vsub.f32 %v2542, %v2727
        %2729 = vmatpush1.msra.mxu0 %v2728
        %2730 = vmatprep.subr.mxu0 0.0
        %v2731 = vand.u32 %v2543, 4294901760
        %v2732 = vsub.f32 %v2543, %v2731
        %2733 = vmatpush1.msra.mxu0 %v2732
        %2734 = vmatprep.subr.mxu0 0.0
        %v2735 = vand.u32 %v2544, 4294901760
        %v2736 = vsub.f32 %v2544, %v2735
        %2737 = vmatpush1.msra.mxu0 %v2736
        %2738 = vmatprep.subr.mxu0 0.0
        %v2739 = vand.u32 %v2545, 4294901760
        %v2740 = vsub.f32 %v2545, %v2739
        %2741 = vmatpush1.msra.mxu0 %v2740
        %2742 = vmatprep.subr.mxu0 0.0
        %2743 = vmatpush1.msra.mxu0 0.0
        %2744 = vmatprep.subr.mxu0 0.0
        %2745 = vmatpush1.msra.mxu0 0.0
        %2746 = vmatprep.subr.mxu0 0.0
        %2747 = vmatpush1.msra.mxu0 0.0
        %2748 = vmatprep.subr.mxu0 0.0
        %2749 = vmatpush1.msra.mxu0 0.0
        %2750 = vmatprep.subr.mxu0 0.0
        %2751 = vmatpush1.msra.mxu0 0.0
        %2752 = vmatprep.subr.mxu0 0.0
        %2753 = vmatpush1.msra.mxu0 0.0
        %2754 = vmatprep.subr.mxu0 0.0
        %2755 = vmatpush1.msra.mxu0 0.0
        %2756 = vmatprep.subr.mxu0 0.0
        %2757 = vmatpush1.msra.mxu0 0.0
        %2758 = vmatprep.subr.mxu0 0.0
        %2759 = vmatpush1.msra.mxu0 0.0
        %2760 = vmatprep.subr.mxu0 0.0
        %2761 = vmatpush1.msra.mxu0 0.0
        %2762 = vmatprep.subr.mxu0 0.0
        %2763 = vmatpush1.msra.mxu0 0.0
        %2764 = vmatprep.subr.mxu0 0.0
        %2765 = vmatpush1.msra.mxu0 0.0
        %2766 = vmatprep.subr.mxu0 0.0
        %2767 = vmatpush1.msra.mxu0 0.0
        %2768 = vmatprep.subr.mxu0 0.0
        %2769 = vmatpush1.msra.mxu0 0.0
        %2770 = vmatprep.subr.mxu0 0.0
        %2771 = vmatpush1.msra.mxu0 0.0
        %2772 = vmatprep.subr.mxu0 0.0
        %2773 = vmatpush1.msra.mxu0 0.0
        %2774 = vmatprep.subr.mxu0 0.0
        %2775 = vmatpush1.msra.mxu0 0.0
        %2776 = vmatprep.subr.mxu0 0.0
        %2777 = vmatpush1.msra.mxu0 0.0
        %2778 = vmatprep.subr.mxu0 0.0
        %2779 = vmatpush1.msra.mxu0 0.0
        %2780 = vmatprep.subr.mxu0 0.0
        %2781 = vmatpush1.msra.mxu0 0.0
        %2782 = vmatprep.subr.mxu0 0.0
        %2783 = vmatpush1.msra.mxu0 0.0
        %2784 = vmatprep.subr.mxu0 0.0
        %2785 = vmatpush1.msra.mxu0 0.0
        %2786 = vmatprep.subr.mxu0 0.0
        %2787 = vmatpush1.msra.mxu0 0.0
        %2788 = vmatprep.subr.mxu0 0.0
        %2789 = vmatpush1.msra.mxu0 0.0
        %2790 = vmatprep.subr.mxu0 0.0
        %2791 = vmatpush1.msra.mxu0 0.0
        %2792 = vmatprep.subr.mxu0 0.0
        %2793 = vmatpush1.msra.mxu0 0.0
        %2794 = vmatprep.subr.mxu0 0.0
        %2795 = vmatpush1.msra.mxu0 0.0
        %2796 = vmatprep.subr.mxu0 0.0
        %2797 = vmatpush1.msra.mxu0 0.0
        %2798 = vmatprep.mubr.f32.mxu0 0.0
        %v2799 = vand.u32 %v2554, 4294901760
        %v2800 = vsub.f32 %v2554, %v2799
        %2801 = vmatmul.mubr.f32.gmra.mrb[0].mxu0 %v2800
        %v2802 = vpop.f32.mrb[0].mxu0
        %v2803 = vadd.f32 %v2723, %v2802
        %v2804 = vpop.f32.mrb[0].mxu0
        %2805 = vdwg.mxu0
        %2806 = vmatprep.subr.mxu0 0.0
        %v2807 = vand.u32 %v2542, 4294901760
        %2808 = vmatpush1.msra.mxu0 %v2807
        %2809 = vmatprep.subr.mxu0 0.0
        %v2810 = vand.u32 %v2543, 4294901760
        %2811 = vmatpush1.msra.mxu0 %v2810
        %2812 = vmatprep.subr.mxu0 0.0
        %v2813 = vand.u32 %v2544, 4294901760
        %2814 = vmatpush1.msra.mxu0 %v2813
        %2815 = vmatprep.subr.mxu0 0.0
        %v2816 = vand.u32 %v2545, 4294901760
        %2817 = vmatpush1.msra.mxu0 %v2816
        %2818 = vmatprep.subr.mxu0 0.0
        %2819 = vmatpush1.msra.mxu0 0.0
        %2820 = vmatprep.subr.mxu0 0.0
        %2821 = vmatpush1.msra.mxu0 0.0
        %2822 = vmatprep.subr.mxu0 0.0
        %2823 = vmatpush1.msra.mxu0 0.0
        %2824 = vmatprep.subr.mxu0 0.0
        %2825 = vmatpush1.msra.mxu0 0.0
        %2826 = vmatprep.subr.mxu0 0.0
        %2827 = vmatpush1.msra.mxu0 0.0
        %2828 = vmatprep.subr.mxu0 0.0
        %2829 = vmatpush1.msra.mxu0 0.0
        %2830 = vmatprep.subr.mxu0 0.0
        %2831 = vmatpush1.msra.mxu0 0.0
        %2832 = vmatprep.subr.mxu0 0.0
        %2833 = vmatpush1.msra.mxu0 0.0
        %2834 = vmatprep.subr.mxu0 0.0
        %2835 = vmatpush1.msra.mxu0 0.0
        %2836 = vmatprep.subr.mxu0 0.0
        %2837 = vmatpush1.msra.mxu0 0.0
        %2838 = vmatprep.subr.mxu0 0.0
        %2839 = vmatpush1.msra.mxu0 0.0
        %2840 = vmatprep.subr.mxu0 0.0
        %2841 = vmatpush1.msra.mxu0 0.0
        %2842 = vmatprep.subr.mxu0 0.0
        %2843 = vmatpush1.msra.mxu0 0.0
        %2844 = vmatprep.subr.mxu0 0.0
        %2845 = vmatpush1.msra.mxu0 0.0
        %2846 = vmatprep.subr.mxu0 0.0
        %2847 = vmatpush1.msra.mxu0 0.0
        %2848 = vmatprep.subr.mxu0 0.0
        %2849 = vmatpush1.msra.mxu0 0.0
        %2850 = vmatprep.subr.mxu0 0.0
        %2851 = vmatpush1.msra.mxu0 0.0
        %2852 = vmatprep.subr.mxu0 0.0
        %2853 = vmatpush1.msra.mxu0 0.0
        %2854 = vmatprep.subr.mxu0 0.0
        %2855 = vmatpush1.msra.mxu0 0.0
        %2856 = vmatprep.subr.mxu0 0.0
        %2857 = vmatpush1.msra.mxu0 0.0
        %2858 = vmatprep.subr.mxu0 0.0
        %2859 = vmatpush1.msra.mxu0 0.0
        %2860 = vmatprep.subr.mxu0 0.0
        %2861 = vmatpush1.msra.mxu0 0.0
        %2862 = vmatprep.subr.mxu0 0.0
        %2863 = vmatpush1.msra.mxu0 0.0
        %2864 = vmatprep.subr.mxu0 0.0
        %2865 = vmatpush1.msra.mxu0 0.0
        %2866 = vmatprep.subr.mxu0 0.0
        %2867 = vmatpush1.msra.mxu0 0.0
        %2868 = vmatprep.subr.mxu0 0.0
        %2869 = vmatpush1.msra.mxu0 0.0
        %2870 = vmatprep.subr.mxu0 0.0
        %2871 = vmatpush1.msra.mxu0 0.0
        %2872 = vmatprep.subr.mxu0 0.0
        %2873 = vmatpush1.msra.mxu0 0.0
        %2874 = vmatprep.mubr.f32.mxu0 0.0
        %v2875 = vand.u32 %v2554, 4294901760
        %v2876 = vsub.f32 %v2554, %v2875
        %v2877 = vand.u32 %v2876, 4294901760
        %2878 = vmatmul.mubr.f32.gmra.mrb[0].mxu0 %v2877
        %v2879 = vpop.f32.mrb[0].mxu0
        %v2880 = vadd.f32 %v2803, %v2879
        %v2881 = vpop.f32.mrb[0].mxu0
        %2882 = vdwg.mxu0
        %2883 = vmatprep.subr.mxu0 0.0
        %v2884 = vand.u32 %v2542, 4294901760
        %v2885 = vsub.f32 %v2542, %v2884
        %v2886 = vand.u32 %v2885, 4294901760
        %2887 = vmatpush1.msra.mxu0 %v2886
        %2888 = vmatprep.subr.mxu0 0.0
        %v2889 = vand.u32 %v2543, 4294901760
        %v2890 = vsub.f32 %v2543, %v2889
        %v2891 = vand.u32 %v2890, 4294901760
        %2892 = vmatpush1.msra.mxu0 %v2891
        %2893 = vmatprep.subr.mxu0 0.0
        %v2894 = vand.u32 %v2544, 4294901760
        %v2895 = vsub.f32 %v2544, %v2894
        %v2896 = vand.u32 %v2895, 4294901760
        %2897 = vmatpush1.msra.mxu0 %v2896
        %2898 = vmatprep.subr.mxu0 0.0
        %v2899 = vand.u32 %v2545, 4294901760
        %v2900 = vsub.f32 %v2545, %v2899
        %v2901 = vand.u32 %v2900, 4294901760
        %2902 = vmatpush1.msra.mxu0 %v2901
        %2903 = vmatprep.subr.mxu0 0.0
        %2904 = vmatpush1.msra.mxu0 0.0
        %2905 = vmatprep.subr.mxu0 0.0
        %2906 = vmatpush1.msra.mxu0 0.0
        %2907 = vmatprep.subr.mxu0 0.0
        %2908 = vmatpush1.msra.mxu0 0.0
        %2909 = vmatprep.subr.mxu0 0.0
        %2910 = vmatpush1.msra.mxu0 0.0
        %2911 = vmatprep.subr.mxu0 0.0
        %2912 = vmatpush1.msra.mxu0 0.0
        %2913 = vmatprep.subr.mxu0 0.0
        %2914 = vmatpush1.msra.mxu0 0.0
        %2915 = vmatprep.subr.mxu0 0.0
        %2916 = vmatpush1.msra.mxu0 0.0
        %2917 = vmatprep.subr.mxu0 0.0
        %2918 = vmatpush1.msra.mxu0 0.0
        %2919 = vmatprep.subr.mxu0 0.0
        %2920 = vmatpush1.msra.mxu0 0.0
        %2921 = vmatprep.subr.mxu0 0.0
        %2922 = vmatpush1.msra.mxu0 0.0
        %2923 = vmatprep.subr.mxu0 0.0
        %2924 = vmatpush1.msra.mxu0 0.0
        %2925 = vmatprep.subr.mxu0 0.0
        %2926 = vmatpush1.msra.mxu0 0.0
        %2927 = vmatprep.subr.mxu0 0.0
        %2928 = vmatpush1.msra.mxu0 0.0
        %2929 = vmatprep.subr.mxu0 0.0
        %2930 = vmatpush1.msra.mxu0 0.0
        %2931 = vmatprep.subr.mxu0 0.0
        %2932 = vmatpush1.msra.mxu0 0.0
        %2933 = vmatprep.subr.mxu0 0.0
        %2934 = vmatpush1.msra.mxu0 0.0
        %2935 = vmatprep.subr.mxu0 0.0
        %2936 = vmatpush1.msra.mxu0 0.0
        %2937 = vmatprep.subr.mxu0 0.0
        %2938 = vmatpush1.msra.mxu0 0.0
        %2939 = vmatprep.subr.mxu0 0.0
        %2940 = vmatpush1.msra.mxu0 0.0
        %2941 = vmatprep.subr.mxu0 0.0
        %2942 = vmatpush1.msra.mxu0 0.0
        %2943 = vmatprep.subr.mxu0 0.0
        %2944 = vmatpush1.msra.mxu0 0.0
        %2945 = vmatprep.subr.mxu0 0.0
        %2946 = vmatpush1.msra.mxu0 0.0
        %2947 = vmatprep.subr.mxu0 0.0
        %2948 = vmatpush1.msra.mxu0 0.0
        %2949 = vmatprep.subr.mxu0 0.0
        %2950 = vmatpush1.msra.mxu0 0.0
        %2951 = vmatprep.subr.mxu0 0.0
        %2952 = vmatpush1.msra.mxu0 0.0
        %2953 = vmatprep.subr.mxu0 0.0
        %2954 = vmatpush1.msra.mxu0 0.0
        %2955 = vmatprep.subr.mxu0 0.0
        %2956 = vmatpush1.msra.mxu0 0.0
        %2957 = vmatprep.subr.mxu0 0.0
        %2958 = vmatpush1.msra.mxu0 0.0
        %2959 = vmatprep.mubr.f32.mxu0 0.0
        %v2960 = vand.u32 %v2554, 4294901760
        %2961 = vmatmul.mubr.f32.gmra.mrb[0].mxu0 %v2960
        %v2962 = vpop.f32.mrb[0].mxu0
        %v2963 = vadd.f32 %v2880, %v2962
        %v2964 = vpop.f32.mrb[0].mxu0
        %2965 = vdwg.mxu0
        %2966 = vmatprep.subr.mxu0 0.0
        %v2967 = vand.u32 %v2542, 4294901760
        %2968 = vmatpush1.msra.mxu0 %v2967
        %2969 = vmatprep.subr.mxu0 0.0
        %v2970 = vand.u32 %v2543, 4294901760
        %2971 = vmatpush1.msra.mxu0 %v2970
        %2972 = vmatprep.subr.mxu0 0.0
        %v2973 = vand.u32 %v2544, 4294901760
        %2974 = vmatpush1.msra.mxu0 %v2973
        %2975 = vmatprep.subr.mxu0 0.0
        %v2976 = vand.u32 %v2545, 4294901760
        %2977 = vmatpush1.msra.mxu0 %v2976
        %2978 = vmatprep.subr.mxu0 0.0
        %2979 = vmatpush1.msra.mxu0 0.0
        %2980 = vmatprep.subr.mxu0 0.0
        %2981 = vmatpush1.msra.mxu0 0.0
        %2982 = vmatprep.subr.mxu0 0.0
        %2983 = vmatpush1.msra.mxu0 0.0
        %2984 = vmatprep.subr.mxu0 0.0
        %2985 = vmatpush1.msra.mxu0 0.0
        %2986 = vmatprep.subr.mxu0 0.0
        %2987 = vmatpush1.msra.mxu0 0.0
        %2988 = vmatprep.subr.mxu0 0.0
        %2989 = vmatpush1.msra.mxu0 0.0
        %2990 = vmatprep.subr.mxu0 0.0
        %2991 = vmatpush1.msra.mxu0 0.0
        %2992 = vmatprep.subr.mxu0 0.0
        %2993 = vmatpush1.msra.mxu0 0.0
        %2994 = vmatprep.subr.mxu0 0.0
        %2995 = vmatpush1.msra.mxu0 0.0
        %2996 = vmatprep.subr.mxu0 0.0
        %2997 = vmatpush1.msra.mxu0 0.0
        %2998 = vmatprep.subr.mxu0 0.0
        %2999 = vmatpush1.msra.mxu0 0.0
        %3000 = vmatprep.subr.mxu0 0.0
        %3001 = vmatpush1.msra.mxu0 0.0
        %3002 = vmatprep.subr.mxu0 0.0
        %3003 = vmatpush1.msra.mxu0 0.0
        %3004 = vmatprep.subr.mxu0 0.0
        %3005 = vmatpush1.msra.mxu0 0.0
        %3006 = vmatprep.subr.mxu0 0.0
        %3007 = vmatpush1.msra.mxu0 0.0
        %3008 = vmatprep.subr.mxu0 0.0
        %3009 = vmatpush1.msra.mxu0 0.0
        %3010 = vmatprep.subr.mxu0 0.0
        %3011 = vmatpush1.msra.mxu0 0.0
        %3012 = vmatprep.subr.mxu0 0.0
        %3013 = vmatpush1.msra.mxu0 0.0
        %3014 = vmatprep.subr.mxu0 0.0
        %3015 = vmatpush1.msra.mxu0 0.0
        %3016 = vmatprep.subr.mxu0 0.0
        %3017 = vmatpush1.msra.mxu0 0.0
        %3018 = vmatprep.subr.mxu0 0.0
        %3019 = vmatpush1.msra.mxu0 0.0
        %3020 = vmatprep.subr.mxu0 0.0
        %3021 = vmatpush1.msra.mxu0 0.0
        %3022 = vmatprep.subr.mxu0 0.0
        %3023 = vmatpush1.msra.mxu0 0.0
        %3024 = vmatprep.subr.mxu0 0.0
        %3025 = vmatpush1.msra.mxu0 0.0
        %3026 = vmatprep.subr.mxu0 0.0
        %3027 = vmatpush1.msra.mxu0 0.0
        %3028 = vmatprep.subr.mxu0 0.0
        %3029 = vmatpush1.msra.mxu0 0.0
        %3030 = vmatprep.subr.mxu0 0.0
        %3031 = vmatpush1.msra.mxu0 0.0
        %3032 = vmatprep.subr.mxu0 0.0
        %3033 = vmatpush1.msra.mxu0 0.0
        %3034 = vmatprep.mubr.f32.mxu0 0.0
        %v3035 = vand.u32 %v2554, 4294901760
        %3036 = vmatmul.mubr.f32.gmra.mrb[0].mxu0 %v3035
        %v3037 = vpop.f32.mrb[0].mxu0
        %v3038 = vadd.f32 %v2963, %v3037
        %v3039 = vpop.f32.mrb[0].mxu0
        %3040 = vdwg.mxu0
        %v3041 = vmax.f32 %v3038, 0.0
        %v3042 = vld [vmem:[#allocation11] sm:$0xff]
        %v3043 = vld [vmem:[#allocation11 + $0x8] sm:$0xff]
        %v3044 = vld [vmem:[#allocation11 + $0x10] sm:$0xff]
        %v3045 = vld [vmem:[#allocation11 + $0x18] sm:$0xff]
        %v3046 = vld [vmem:[#allocation13] sm:$0x1]
        %v3048 = vlaneseq
        %v3049 = vshrl.u32 %v3048, 7
        %v3050 = vsub.s32 0, %v3049
        %v3051 = vrot.slane %v3046, %v3050
        %v3054 = vsel %vm1095, %v3041, 0
        %3056 = vmatprep.subr.mxu0 0.0
        %v3057 = vand.u32 %v3042, 4294901760
        %3058 = vmatpush1.msra.mxu0 %v3057
        %3059 = vmatprep.subr.mxu0 0.0
        %v3060 = vand.u32 %v3043, 4294901760
        %3061 = vmatpush1.msra.mxu0 %v3060
        %3062 = vmatprep.subr.mxu0 0.0
        %v3063 = vand.u32 %v3044, 4294901760
        %3064 = vmatpush1.msra.mxu0 %v3063
        %3065 = vmatprep.subr.mxu0 0.0
        %v3066 = vand.u32 %v3045, 4294901760
        %3067 = vmatpush1.msra.mxu0 %v3066
        %3068 = vmatprep.subr.mxu0 0.0
        %3069 = vmatpush1.msra.mxu0 0.0
        %3070 = vmatprep.subr.mxu0 0.0
        %3071 = vmatpush1.msra.mxu0 0.0
        %3072 = vmatprep.subr.mxu0 0.0
        %3073 = vmatpush1.msra.mxu0 0.0
        %3074 = vmatprep.subr.mxu0 0.0
        %3075 = vmatpush1.msra.mxu0 0.0
        %3076 = vmatprep.subr.mxu0 0.0
        %3077 = vmatpush1.msra.mxu0 0.0
        %3078 = vmatprep.subr.mxu0 0.0
        %3079 = vmatpush1.msra.mxu0 0.0
        %3080 = vmatprep.subr.mxu0 0.0
        %3081 = vmatpush1.msra.mxu0 0.0
        %3082 = vmatprep.subr.mxu0 0.0
        %3083 = vmatpush1.msra.mxu0 0.0
        %3084 = vmatprep.subr.mxu0 0.0
        %3085 = vmatpush1.msra.mxu0 0.0
        %3086 = vmatprep.subr.mxu0 0.0
        %3087 = vmatpush1.msra.mxu0 0.0
        %3088 = vmatprep.subr.mxu0 0.0
        %3089 = vmatpush1.msra.mxu0 0.0
        %3090 = vmatprep.subr.mxu0 0.0
        %3091 = vmatpush1.msra.mxu0 0.0
        %3092 = vmatprep.subr.mxu0 0.0
        %3093 = vmatpush1.msra.mxu0 0.0
        %3094 = vmatprep.subr.mxu0 0.0
        %3095 = vmatpush1.msra.mxu0 0.0
        %3096 = vmatprep.subr.mxu0 0.0
        %3097 = vmatpush1.msra.mxu0 0.0
        %3098 = vmatprep.subr.mxu0 0.0
        %3099 = vmatpush1.msra.mxu0 0.0
        %3100 = vmatprep.subr.mxu0 0.0
        %3101 = vmatpush1.msra.mxu0 0.0
        %3102 = vmatprep.subr.mxu0 0.0
        %3103 = vmatpush1.msra.mxu0 0.0
        %3104 = vmatprep.subr.mxu0 0.0
        %3105 = vmatpush1.msra.mxu0 0.0
        %3106 = vmatprep.subr.mxu0 0.0
        %3107 = vmatpush1.msra.mxu0 0.0
        %3108 = vmatprep.subr.mxu0 0.0
        %3109 = vmatpush1.msra.mxu0 0.0
        %3110 = vmatprep.subr.mxu0 0.0
        %3111 = vmatpush1.msra.mxu0 0.0
        %3112 = vmatprep.subr.mxu0 0.0
        %3113 = vmatpush1.msra.mxu0 0.0
        %3114 = vmatprep.subr.mxu0 0.0
        %3115 = vmatpush1.msra.mxu0 0.0
        %3116 = vmatprep.subr.mxu0 0.0
        %3117 = vmatpush1.msra.mxu0 0.0
        %3118 = vmatprep.subr.mxu0 0.0
        %3119 = vmatpush1.msra.mxu0 0.0
        %3120 = vmatprep.subr.mxu0 0.0
        %3121 = vmatpush1.msra.mxu0 0.0
        %3122 = vmatprep.subr.mxu0 0.0
        %3123 = vmatpush1.msra.mxu0 0.0
        %3124 = vmatprep.mubr.f32.mxu0 0.0
        %v3125 = vand.u32 %v3054, 4294901760
        %v3126 = vsub.f32 %v3054, %v3125
        %v3127 = vand.u32 %v3126, 4294901760
        %v3128 = vsub.f32 %v3126, %v3127
        %v3129 = vand.u32 %v3128, 4294901760
        %3130 = vmatmul.mubr.f32.gmra.mrb[0].mxu0 %v3129
        %v3131 = vpop.f32.mrb[0].mxu0
        %v3132 = vadd.f32 %v3051, %v3131
        %v3133 = vpop.f32.mrb[0].mxu0
        %3134 = vdwg.mxu0
        %3135 = vmatprep.subr.mxu0 0.0
        %v3136 = vand.u32 %v3042, 4294901760
        %v3137 = vsub.f32 %v3042, %v3136
        %v3138 = vand.u32 %v3137, 4294901760
        %v3139 = vsub.f32 %v3137, %v3138
        %v3140 = vand.u32 %v3139, 4294901760
        %3141 = vmatpush1.msra.mxu0 %v3140
        %3142 = vmatprep.subr.mxu0 0.0
        %v3143 = vand.u32 %v3043, 4294901760
        %v3144 = vsub.f32 %v3043, %v3143
        %v3145 = vand.u32 %v3144, 4294901760
        %v3146 = vsub.f32 %v3144, %v3145
        %v3147 = vand.u32 %v3146, 4294901760
        %3148 = vmatpush1.msra.mxu0 %v3147
        %3149 = vmatprep.subr.mxu0 0.0
        %v3150 = vand.u32 %v3044, 4294901760
        %v3151 = vsub.f32 %v3044, %v3150
        %v3152 = vand.u32 %v3151, 4294901760
        %v3153 = vsub.f32 %v3151, %v3152
        %v3154 = vand.u32 %v3153, 4294901760
        %3155 = vmatpush1.msra.mxu0 %v3154
        %3156 = vmatprep.subr.mxu0 0.0
        %v3157 = vand.u32 %v3045, 4294901760
        %v3158 = vsub.f32 %v3045, %v3157
        %v3159 = vand.u32 %v3158, 4294901760
        %v3160 = vsub.f32 %v3158, %v3159
        %v3161 = vand.u32 %v3160, 4294901760
        %3162 = vmatpush1.msra.mxu0 %v3161
        %3163 = vmatprep.subr.mxu0 0.0
        %3164 = vmatpush1.msra.mxu0 0.0
        %3165 = vmatprep.subr.mxu0 0.0
        %3166 = vmatpush1.msra.mxu0 0.0
        %3167 = vmatprep.subr.mxu0 0.0
        %3168 = vmatpush1.msra.mxu0 0.0
        %3169 = vmatprep.subr.mxu0 0.0
        %3170 = vmatpush1.msra.mxu0 0.0
        %3171 = vmatprep.subr.mxu0 0.0
        %3172 = vmatpush1.msra.mxu0 0.0
        %3173 = vmatprep.subr.mxu0 0.0
        %3174 = vmatpush1.msra.mxu0 0.0
        %3175 = vmatprep.subr.mxu0 0.0
        %3176 = vmatpush1.msra.mxu0 0.0
        %3177 = vmatprep.subr.mxu0 0.0
        %3178 = vmatpush1.msra.mxu0 0.0
        %3179 = vmatprep.subr.mxu0 0.0
        %3180 = vmatpush1.msra.mxu0 0.0
        %3181 = vmatprep.subr.mxu0 0.0
        %3182 = vmatpush1.msra.mxu0 0.0
        %3183 = vmatprep.subr.mxu0 0.0
        %3184 = vmatpush1.msra.mxu0 0.0
        %3185 = vmatprep.subr.mxu0 0.0
        %3186 = vmatpush1.msra.mxu0 0.0
        %3187 = vmatprep.subr.mxu0 0.0
        %3188 = vmatpush1.msra.mxu0 0.0
        %3189 = vmatprep.subr.mxu0 0.0
        %3190 = vmatpush1.msra.mxu0 0.0
        %3191 = vmatprep.subr.mxu0 0.0
        %3192 = vmatpush1.msra.mxu0 0.0
        %3193 = vmatprep.subr.mxu0 0.0
        %3194 = vmatpush1.msra.mxu0 0.0
        %3195 = vmatprep.subr.mxu0 0.0
        %3196 = vmatpush1.msra.mxu0 0.0
        %3197 = vmatprep.subr.mxu0 0.0
        %3198 = vmatpush1.msra.mxu0 0.0
        %3199 = vmatprep.subr.mxu0 0.0
        %3200 = vmatpush1.msra.mxu0 0.0
        %3201 = vmatprep.subr.mxu0 0.0
        %3202 = vmatpush1.msra.mxu0 0.0
        %3203 = vmatprep.subr.mxu0 0.0
        %3204 = vmatpush1.msra.mxu0 0.0
        %3205 = vmatprep.subr.mxu0 0.0
        %3206 = vmatpush1.msra.mxu0 0.0
        %3207 = vmatprep.subr.mxu0 0.0
        %3208 = vmatpush1.msra.mxu0 0.0
        %3209 = vmatprep.subr.mxu0 0.0
        %3210 = vmatpush1.msra.mxu0 0.0
        %3211 = vmatprep.subr.mxu0 0.0
        %3212 = vmatpush1.msra.mxu0 0.0
        %3213 = vmatprep.subr.mxu0 0.0
        %3214 = vmatpush1.msra.mxu0 0.0
        %3215 = vmatprep.subr.mxu0 0.0
        %3216 = vmatpush1.msra.mxu0 0.0
        %3217 = vmatprep.subr.mxu0 0.0
        %3218 = vmatpush1.msra.mxu0 0.0
        %3219 = vmatprep.mubr.f32.mxu0 0.0
        %v3220 = vand.u32 %v3054, 4294901760
        %3221 = vmatmul.mubr.f32.gmra.mrb[0].mxu0 %v3220
        %v3222 = vpop.f32.mrb[0].mxu0
        %v3223 = vadd.f32 %v3132, %v3222
        %v3224 = vpop.f32.mrb[0].mxu0
        %3225 = vdwg.mxu0
        %3226 = vmatprep.subr.mxu0 0.0
        %v3227 = vand.u32 %v3042, 4294901760
        %v3228 = vsub.f32 %v3042, %v3227
        %3229 = vmatpush1.msra.mxu0 %v3228
        %3230 = vmatprep.subr.mxu0 0.0
        %v3231 = vand.u32 %v3043, 4294901760
        %v3232 = vsub.f32 %v3043, %v3231
        %3233 = vmatpush1.msra.mxu0 %v3232
        %3234 = vmatprep.subr.mxu0 0.0
        %v3235 = vand.u32 %v3044, 4294901760
        %v3236 = vsub.f32 %v3044, %v3235
        %3237 = vmatpush1.msra.mxu0 %v3236
        %3238 = vmatprep.subr.mxu0 0.0
        %v3239 = vand.u32 %v3045, 4294901760
        %v3240 = vsub.f32 %v3045, %v3239
        %3241 = vmatpush1.msra.mxu0 %v3240
        %3242 = vmatprep.subr.mxu0 0.0
        %3243 = vmatpush1.msra.mxu0 0.0
        %3244 = vmatprep.subr.mxu0 0.0
        %3245 = vmatpush1.msra.mxu0 0.0
        %3246 = vmatprep.subr.mxu0 0.0
        %3247 = vmatpush1.msra.mxu0 0.0
        %3248 = vmatprep.subr.mxu0 0.0
        %3249 = vmatpush1.msra.mxu0 0.0
        %3250 = vmatprep.subr.mxu0 0.0
        %3251 = vmatpush1.msra.mxu0 0.0
        %3252 = vmatprep.subr.mxu0 0.0
        %3253 = vmatpush1.msra.mxu0 0.0
        %3254 = vmatprep.subr.mxu0 0.0
        %3255 = vmatpush1.msra.mxu0 0.0
        %3256 = vmatprep.subr.mxu0 0.0
        %3257 = vmatpush1.msra.mxu0 0.0
        %3258 = vmatprep.subr.mxu0 0.0
        %3259 = vmatpush1.msra.mxu0 0.0
        %3260 = vmatprep.subr.mxu0 0.0
        %3261 = vmatpush1.msra.mxu0 0.0
        %3262 = vmatprep.subr.mxu0 0.0
        %3263 = vmatpush1.msra.mxu0 0.0
        %3264 = vmatprep.subr.mxu0 0.0
        %3265 = vmatpush1.msra.mxu0 0.0
        %3266 = vmatprep.subr.mxu0 0.0
        %3267 = vmatpush1.msra.mxu0 0.0
        %3268 = vmatprep.subr.mxu0 0.0
        %3269 = vmatpush1.msra.mxu0 0.0
        %3270 = vmatprep.subr.mxu0 0.0
        %3271 = vmatpush1.msra.mxu0 0.0
        %3272 = vmatprep.subr.mxu0 0.0
        %3273 = vmatpush1.msra.mxu0 0.0
        %3274 = vmatprep.subr.mxu0 0.0
        %3275 = vmatpush1.msra.mxu0 0.0
        %3276 = vmatprep.subr.mxu0 0.0
        %3277 = vmatpush1.msra.mxu0 0.0
        %3278 = vmatprep.subr.mxu0 0.0
        %3279 = vmatpush1.msra.mxu0 0.0
        %3280 = vmatprep.subr.mxu0 0.0
        %3281 = vmatpush1.msra.mxu0 0.0
        %3282 = vmatprep.subr.mxu0 0.0
        %3283 = vmatpush1.msra.mxu0 0.0
        %3284 = vmatprep.subr.mxu0 0.0
        %3285 = vmatpush1.msra.mxu0 0.0
        %3286 = vmatprep.subr.mxu0 0.0
        %3287 = vmatpush1.msra.mxu0 0.0
        %3288 = vmatprep.subr.mxu0 0.0
        %3289 = vmatpush1.msra.mxu0 0.0
        %3290 = vmatprep.subr.mxu0 0.0
        %3291 = vmatpush1.msra.mxu0 0.0
        %3292 = vmatprep.subr.mxu0 0.0
        %3293 = vmatpush1.msra.mxu0 0.0
        %3294 = vmatprep.subr.mxu0 0.0
        %3295 = vmatpush1.msra.mxu0 0.0
        %3296 = vmatprep.subr.mxu0 0.0
        %3297 = vmatpush1.msra.mxu0 0.0
        %3298 = vmatprep.mubr.f32.mxu0 0.0
        %v3299 = vand.u32 %v3054, 4294901760
        %v3300 = vsub.f32 %v3054, %v3299
        %3301 = vmatmul.mubr.f32.gmra.mrb[0].mxu0 %v3300
        %v3302 = vpop.f32.mrb[0].mxu0
        %v3303 = vadd.f32 %v3223, %v3302
        %v3304 = vpop.f32.mrb[0].mxu0
        %3305 = vdwg.mxu0
        %3306 = vmatprep.subr.mxu0 0.0
        %v3307 = vand.u32 %v3042, 4294901760
        %3308 = vmatpush1.msra.mxu0 %v3307
        %3309 = vmatprep.subr.mxu0 0.0
        %v3310 = vand.u32 %v3043, 4294901760
        %3311 = vmatpush1.msra.mxu0 %v3310
        %3312 = vmatprep.subr.mxu0 0.0
        %v3313 = vand.u32 %v3044, 4294901760
        %3314 = vmatpush1.msra.mxu0 %v3313
        %3315 = vmatprep.subr.mxu0 0.0
        %v3316 = vand.u32 %v3045, 4294901760
        %3317 = vmatpush1.msra.mxu0 %v3316
        %3318 = vmatprep.subr.mxu0 0.0
        %3319 = vmatpush1.msra.mxu0 0.0
        %3320 = vmatprep.subr.mxu0 0.0
        %3321 = vmatpush1.msra.mxu0 0.0
        %3322 = vmatprep.subr.mxu0 0.0
        %3323 = vmatpush1.msra.mxu0 0.0
        %3324 = vmatprep.subr.mxu0 0.0
        %3325 = vmatpush1.msra.mxu0 0.0
        %3326 = vmatprep.subr.mxu0 0.0
        %3327 = vmatpush1.msra.mxu0 0.0
        %3328 = vmatprep.subr.mxu0 0.0
        %3329 = vmatpush1.msra.mxu0 0.0
        %3330 = vmatprep.subr.mxu0 0.0
        %3331 = vmatpush1.msra.mxu0 0.0
        %3332 = vmatprep.subr.mxu0 0.0
        %3333 = vmatpush1.msra.mxu0 0.0
        %3334 = vmatprep.subr.mxu0 0.0
        %3335 = vmatpush1.msra.mxu0 0.0
        %3336 = vmatprep.subr.mxu0 0.0
        %3337 = vmatpush1.msra.mxu0 0.0
        %3338 = vmatprep.subr.mxu0 0.0
        %3339 = vmatpush1.msra.mxu0 0.0
        %3340 = vmatprep.subr.mxu0 0.0
        %3341 = vmatpush1.msra.mxu0 0.0
        %3342 = vmatprep.subr.mxu0 0.0
        %3343 = vmatpush1.msra.mxu0 0.0
        %3344 = vmatprep.subr.mxu0 0.0
        %3345 = vmatpush1.msra.mxu0 0.0
        %3346 = vmatprep.subr.mxu0 0.0
        %3347 = vmatpush1.msra.mxu0 0.0
        %3348 = vmatprep.subr.mxu0 0.0
        %3349 = vmatpush1.msra.mxu0 0.0
        %3350 = vmatprep.subr.mxu0 0.0
        %3351 = vmatpush1.msra.mxu0 0.0
        %3352 = vmatprep.subr.mxu0 0.0
        %3353 = vmatpush1.msra.mxu0 0.0
        %3354 = vmatprep.subr.mxu0 0.0
        %3355 = vmatpush1.msra.mxu0 0.0
        %3356 = vmatprep.subr.mxu0 0.0
        %3357 = vmatpush1.msra.mxu0 0.0
        %3358 = vmatprep.subr.mxu0 0.0
        %3359 = vmatpush1.msra.mxu0 0.0
        %3360 = vmatprep.subr.mxu0 0.0
        %3361 = vmatpush1.msra.mxu0 0.0
        %3362 = vmatprep.subr.mxu0 0.0
        %3363 = vmatpush1.msra.mxu0 0.0
        %3364 = vmatprep.subr.mxu0 0.0
        %3365 = vmatpush1.msra.mxu0 0.0
        %3366 = vmatprep.subr.mxu0 0.0
        %3367 = vmatpush1.msra.mxu0 0.0
        %3368 = vmatprep.subr.mxu0 0.0
        %3369 = vmatpush1.msra.mxu0 0.0
        %3370 = vmatprep.subr.mxu0 0.0
        %3371 = vmatpush1.msra.mxu0 0.0
        %3372 = vmatprep.subr.mxu0 0.0
        %3373 = vmatpush1.msra.mxu0 0.0
        %3374 = vmatprep.mubr.f32.mxu0 0.0
        %v3375 = vand.u32 %v3054, 4294901760
        %v3376 = vsub.f32 %v3054, %v3375
        %v3377 = vand.u32 %v3376, 4294901760
        %3378 = vmatmul.mubr.f32.gmra.mrb[0].mxu0 %v3377
        %v3379 = vpop.f32.mrb[0].mxu0
        %v3380 = vadd.f32 %v3303, %v3379
        %v3381 = vpop.f32.mrb[0].mxu0
        %3382 = vdwg.mxu0
        %3383 = vmatprep.subr.mxu0 0.0
        %v3384 = vand.u32 %v3042, 4294901760
        %v3385 = vsub.f32 %v3042, %v3384
        %v3386 = vand.u32 %v3385, 4294901760
        %3387 = vmatpush1.msra.mxu0 %v3386
        %3388 = vmatprep.subr.mxu0 0.0
        %v3389 = vand.u32 %v3043, 4294901760
        %v3390 = vsub.f32 %v3043, %v3389
        %v3391 = vand.u32 %v3390, 4294901760
        %3392 = vmatpush1.msra.mxu0 %v3391
        %3393 = vmatprep.subr.mxu0 0.0
        %v3394 = vand.u32 %v3044, 4294901760
        %v3395 = vsub.f32 %v3044, %v3394
        %v3396 = vand.u32 %v3395, 4294901760
        %3397 = vmatpush1.msra.mxu0 %v3396
        %3398 = vmatprep.subr.mxu0 0.0
        %v3399 = vand.u32 %v3045, 4294901760
        %v3400 = vsub.f32 %v3045, %v3399
        %v3401 = vand.u32 %v3400, 4294901760
        %3402 = vmatpush1.msra.mxu0 %v3401
        %3403 = vmatprep.subr.mxu0 0.0
        %3404 = vmatpush1.msra.mxu0 0.0
        %3405 = vmatprep.subr.mxu0 0.0
        %3406 = vmatpush1.msra.mxu0 0.0
        %3407 = vmatprep.subr.mxu0 0.0
        %3408 = vmatpush1.msra.mxu0 0.0
        %3409 = vmatprep.subr.mxu0 0.0
        %3410 = vmatpush1.msra.mxu0 0.0
        %3411 = vmatprep.subr.mxu0 0.0
        %3412 = vmatpush1.msra.mxu0 0.0
        %3413 = vmatprep.subr.mxu0 0.0
        %3414 = vmatpush1.msra.mxu0 0.0
        %3415 = vmatprep.subr.mxu0 0.0
        %3416 = vmatpush1.msra.mxu0 0.0
        %3417 = vmatprep.subr.mxu0 0.0
        %3418 = vmatpush1.msra.mxu0 0.0
        %3419 = vmatprep.subr.mxu0 0.0
        %3420 = vmatpush1.msra.mxu0 0.0
        %3421 = vmatprep.subr.mxu0 0.0
        %3422 = vmatpush1.msra.mxu0 0.0
        %3423 = vmatprep.subr.mxu0 0.0
        %3424 = vmatpush1.msra.mxu0 0.0
        %3425 = vmatprep.subr.mxu0 0.0
        %3426 = vmatpush1.msra.mxu0 0.0
        %3427 = vmatprep.subr.mxu0 0.0
        %3428 = vmatpush1.msra.mxu0 0.0
        %3429 = vmatprep.subr.mxu0 0.0
        %3430 = vmatpush1.msra.mxu0 0.0
        %3431 = vmatprep.subr.mxu0 0.0
        %3432 = vmatpush1.msra.mxu0 0.0
        %3433 = vmatprep.subr.mxu0 0.0
        %3434 = vmatpush1.msra.mxu0 0.0
        %3435 = vmatprep.subr.mxu0 0.0
        %3436 = vmatpush1.msra.mxu0 0.0
        %3437 = vmatprep.subr.mxu0 0.0
        %3438 = vmatpush1.msra.mxu0 0.0
        %3439 = vmatprep.subr.mxu0 0.0
        %3440 = vmatpush1.msra.mxu0 0.0
        %3441 = vmatprep.subr.mxu0 0.0
        %3442 = vmatpush1.msra.mxu0 0.0
        %3443 = vmatprep.subr.mxu0 0.0
        %3444 = vmatpush1.msra.mxu0 0.0
        %3445 = vmatprep.subr.mxu0 0.0
        %3446 = vmatpush1.msra.mxu0 0.0
        %3447 = vmatprep.subr.mxu0 0.0
        %3448 = vmatpush1.msra.mxu0 0.0
        %3449 = vmatprep.subr.mxu0 0.0
        %3450 = vmatpush1.msra.mxu0 0.0
        %3451 = vmatprep.subr.mxu0 0.0
        %3452 = vmatpush1.msra.mxu0 0.0
        %3453 = vmatprep.subr.mxu0 0.0
        %3454 = vmatpush1.msra.mxu0 0.0
        %3455 = vmatprep.subr.mxu0 0.0
        %3456 = vmatpush1.msra.mxu0 0.0
        %3457 = vmatprep.subr.mxu0 0.0
        %3458 = vmatpush1.msra.mxu0 0.0
        %3459 = vmatprep.mubr.f32.mxu0 0.0
        %v3460 = vand.u32 %v3054, 4294901760
        %3461 = vmatmul.mubr.f32.gmra.mrb[0].mxu0 %v3460
        %v3462 = vpop.f32.mrb[0].mxu0
        %v3463 = vadd.f32 %v3380, %v3462
        %v3464 = vpop.f32.mrb[0].mxu0
        %3465 = vdwg.mxu0
        %3466 = vmatprep.subr.mxu0 0.0
        %v3467 = vand.u32 %v3042, 4294901760
        %3468 = vmatpush1.msra.mxu0 %v3467
        %3469 = vmatprep.subr.mxu0 0.0
        %v3470 = vand.u32 %v3043, 4294901760
        %3471 = vmatpush1.msra.mxu0 %v3470
        %3472 = vmatprep.subr.mxu0 0.0
        %v3473 = vand.u32 %v3044, 4294901760
        %3474 = vmatpush1.msra.mxu0 %v3473
        %3475 = vmatprep.subr.mxu0 0.0
        %v3476 = vand.u32 %v3045, 4294901760
        %3477 = vmatpush1.msra.mxu0 %v3476
        %3478 = vmatprep.subr.mxu0 0.0
        %3479 = vmatpush1.msra.mxu0 0.0
        %3480 = vmatprep.subr.mxu0 0.0
        %3481 = vmatpush1.msra.mxu0 0.0
        %3482 = vmatprep.subr.mxu0 0.0
        %3483 = vmatpush1.msra.mxu0 0.0
        %3484 = vmatprep.subr.mxu0 0.0
        %3485 = vmatpush1.msra.mxu0 0.0
        %3486 = vmatprep.subr.mxu0 0.0
        %3487 = vmatpush1.msra.mxu0 0.0
        %3488 = vmatprep.subr.mxu0 0.0
        %3489 = vmatpush1.msra.mxu0 0.0
        %3490 = vmatprep.subr.mxu0 0.0
        %3491 = vmatpush1.msra.mxu0 0.0
        %3492 = vmatprep.subr.mxu0 0.0
        %3493 = vmatpush1.msra.mxu0 0.0
        %3494 = vmatprep.subr.mxu0 0.0
        %3495 = vmatpush1.msra.mxu0 0.0
        %3496 = vmatprep.subr.mxu0 0.0
        %3497 = vmatpush1.msra.mxu0 0.0
        %3498 = vmatprep.subr.mxu0 0.0
        %3499 = vmatpush1.msra.mxu0 0.0
        %3500 = vmatprep.subr.mxu0 0.0
        %3501 = vmatpush1.msra.mxu0 0.0
        %3502 = vmatprep.subr.mxu0 0.0
        %3503 = vmatpush1.msra.mxu0 0.0
        %3504 = vmatprep.subr.mxu0 0.0
        %3505 = vmatpush1.msra.mxu0 0.0
        %3506 = vmatprep.subr.mxu0 0.0
        %3507 = vmatpush1.msra.mxu0 0.0
        %3508 = vmatprep.subr.mxu0 0.0
        %3509 = vmatpush1.msra.mxu0 0.0
        %3510 = vmatprep.subr.mxu0 0.0
        %3511 = vmatpush1.msra.mxu0 0.0
        %3512 = vmatprep.subr.mxu0 0.0
        %3513 = vmatpush1.msra.mxu0 0.0
        %3514 = vmatprep.subr.mxu0 0.0
        %3515 = vmatpush1.msra.mxu0 0.0
        %3516 = vmatprep.subr.mxu0 0.0
        %3517 = vmatpush1.msra.mxu0 0.0
        %3518 = vmatprep.subr.mxu0 0.0
        %3519 = vmatpush1.msra.mxu0 0.0
        %3520 = vmatprep.subr.mxu0 0.0
        %3521 = vmatpush1.msra.mxu0 0.0
        %3522 = vmatprep.subr.mxu0 0.0
        %3523 = vmatpush1.msra.mxu0 0.0
        %3524 = vmatprep.subr.mxu0 0.0
        %3525 = vmatpush1.msra.mxu0 0.0
        %3526 = vmatprep.subr.mxu0 0.0
        %3527 = vmatpush1.msra.mxu0 0.0
        %3528 = vmatprep.subr.mxu0 0.0
        %3529 = vmatpush1.msra.mxu0 0.0
        %3530 = vmatprep.subr.mxu0 0.0
        %3531 = vmatpush1.msra.mxu0 0.0
        %3532 = vmatprep.subr.mxu0 0.0
        %3533 = vmatpush1.msra.mxu0 0.0
        %3534 = vmatprep.mubr.f32.mxu0 0.0
        %v3535 = vand.u32 %v3054, 4294901760
        %3536 = vmatmul.mubr.f32.gmra.mrb[0].mxu0 %v3535
        %v3537 = vpop.f32.mrb[0].mxu0
        %v3538 = vadd.f32 %v3463, %v3537
        %v3539 = vpop.f32.mrb[0].mxu0
        %3540 = vdwg.mxu0
        %v3541 = vadd.f32 %v3538, %v2541
        %v3542 = vsel %vm1095, %v3541, 0.0
        %3543 = vadd.xlane.f32.xlu0 %v3542
        %v3544 = vpop.xlane.xlu0 %3543
        %v3545 = vrot.slane %v3544, 4
        %v3546 = vadd.f32 %v3544, %v3545
        %v3547 = vrot.slane %v3546, 2
        %v3548 = vadd.f32 %v3546, %v3547
        %v3549 = vrot.slane %v3548, 1
        %v3550 = vadd.f32 %v3548, %v3549
        %s3551 = vtos %v3550
        %v3552 = vrcp.pop 256.0
        %s3553 = vtos %v3552
        %s3554 = smul.f32 %s3551, %s3553
        %v3555 = vmul.f32 %v3541, %v3541
        %v3556 = vsel %vm1095, %v3555, 0.0
        %3557 = vadd.xlane.f32.xlu0 %v3556
        %v3558 = vpop.xlane.xlu0 %3557
        %v3559 = vrot.slane %v3558, 4
        %v3560 = vadd.f32 %v3558, %v3559
        %v3561 = vrot.slane %v3560, 2
        %v3562 = vadd.f32 %v3560, %v3561
        %v3563 = vrot.slane %v3562, 1
        %v3564 = vadd.f32 %v3562, %v3563
        %s3565 = vtos %v3564
        %v3566 = vrcp.pop 256.0
        %s3567 = vtos %v3566
        %s3568 = smul.f32 %s3565, %s3567
        %s3569 = smul.f32 %s3554, %s3554
        %s3570 = ssub.f32 %s3568, %s3569
        %v3571 = vld [vmem:[%s10] sm:$0xff]
        %v3572 = vstv %s3554
        %v3573 = vsub.f32 %v3541, %v3572
        %s3574 = sadd.f32 %s3570, 1e-08
        %v3575 = vstv %s3574
        %v3576 = vrsqrt.pop %v3575
        %s3577 = vtos %v3576
        %v3578 = vstv %s3577
        %v3579 = vmul.f32 %v3573, %v3578
        %v3580 = vmul.f32 %v3571, %v3579
        %v3581 = vld [vmem:[%s11] sm:$0xff]
        %v3582 = vadd.f32 %v3580, %v3581
        %s3583 = scalar_lea.vmem %s2, 32
        %v3584 = vld [vmem:[%s3583] sm:$0xff]
        %v3585 = vld [vmem:[%s3583 + $0x8] sm:$0xff]
        %v3586 = vld [vmem:[%s3583 + $0x10] sm:$0xff]
        %v3587 = vld [vmem:[%s3583 + $0x18] sm:$0xff]
        %s3588 = scalar_lea.vmem [#allocation5], 1
        %v3589 = vld [vmem:[%s3588] sm:$0x1]
        %v3591 = vlaneseq
        %v3592 = vshrl.u32 %v3591, 7
        %v3593 = vsub.s32 0, %v3592
        %v3594 = vrot.slane %v3589, %v3593
        %v3597 = vsel %vm1095, %v3582, 0
        %3599 = vmatprep.subr.mxu0 0.0
        %v3600 = vand.u32 %v3584, 4294901760
        %3601 = vmatpush1.msra.mxu0 %v3600
        %3602 = vmatprep.subr.mxu0 0.0
        %v3603 = vand.u32 %v3585, 4294901760
        %3604 = vmatpush1.msra.mxu0 %v3603
        %3605 = vmatprep.subr.mxu0 0.0
        %v3606 = vand.u32 %v3586, 4294901760
        %3607 = vmatpush1.msra.mxu0 %v3606
        %3608 = vmatprep.subr.mxu0 0.0
        %v3609 = vand.u32 %v3587, 4294901760
        %3610 = vmatpush1.msra.mxu0 %v3609
        %3611 = vmatprep.subr.mxu0 0.0
        %3612 = vmatpush1.msra.mxu0 0.0
        %3613 = vmatprep.subr.mxu0 0.0
        %3614 = vmatpush1.msra.mxu0 0.0
        %3615 = vmatprep.subr.mxu0 0.0
        %3616 = vmatpush1.msra.mxu0 0.0
        %3617 = vmatprep.subr.mxu0 0.0
        %3618 = vmatpush1.msra.mxu0 0.0
        %3619 = vmatprep.subr.mxu0 0.0
        %3620 = vmatpush1.msra.mxu0 0.0
        %3621 = vmatprep.subr.mxu0 0.0
        %3622 = vmatpush1.msra.mxu0 0.0
        %3623 = vmatprep.subr.mxu0 0.0
        %3624 = vmatpush1.msra.mxu0 0.0
        %3625 = vmatprep.subr.mxu0 0.0
        %3626 = vmatpush1.msra.mxu0 0.0
        %3627 = vmatprep.subr.mxu0 0.0
        %3628 = vmatpush1.msra.mxu0 0.0
        %3629 = vmatprep.subr.mxu0 0.0
        %3630 = vmatpush1.msra.mxu0 0.0
        %3631 = vmatprep.subr.mxu0 0.0
        %3632 = vmatpush1.msra.mxu0 0.0
        %3633 = vmatprep.subr.mxu0 0.0
        %3634 = vmatpush1.msra.mxu0 0.0
        %3635 = vmatprep.subr.mxu0 0.0
        %3636 = vmatpush1.msra.mxu0 0.0
        %3637 = vmatprep.subr.mxu0 0.0
        %3638 = vmatpush1.msra.mxu0 0.0
        %3639 = vmatprep.subr.mxu0 0.0
        %3640 = vmatpush1.msra.mxu0 0.0
        %3641 = vmatprep.subr.mxu0 0.0
        %3642 = vmatpush1.msra.mxu0 0.0
        %3643 = vmatprep.subr.mxu0 0.0
        %3644 = vmatpush1.msra.mxu0 0.0
        %3645 = vmatprep.subr.mxu0 0.0
        %3646 = vmatpush1.msra.mxu0 0.0
        %3647 = vmatprep.subr.mxu0 0.0
        %3648 = vmatpush1.msra.mxu0 0.0
        %3649 = vmatprep.subr.mxu0 0.0
        %3650 = vmatpush1.msra.mxu0 0.0
        %3651 = vmatprep.subr.mxu0 0.0
        %3652 = vmatpush1.msra.mxu0 0.0
        %3653 = vmatprep.subr.mxu0 0.0
        %3654 = vmatpush1.msra.mxu0 0.0
        %3655 = vmatprep.subr.mxu0 0.0
        %3656 = vmatpush1.msra.mxu0 0.0
        %3657 = vmatprep.subr.mxu0 0.0
        %3658 = vmatpush1.msra.mxu0 0.0
        %3659 = vmatprep.subr.mxu0 0.0
        %3660 = vmatpush1.msra.mxu0 0.0
        %3661 = vmatprep.subr.mxu0 0.0
        %3662 = vmatpush1.msra.mxu0 0.0
        %3663 = vmatprep.subr.mxu0 0.0
        %3664 = vmatpush1.msra.mxu0 0.0
        %3665 = vmatprep.subr.mxu0 0.0
        %3666 = vmatpush1.msra.mxu0 0.0
        %3667 = vmatprep.mubr.f32.mxu0 0.0
        %v3668 = vand.u32 %v3597, 4294901760
        %v3669 = vsub.f32 %v3597, %v3668
        %v3670 = vand.u32 %v3669, 4294901760
        %v3671 = vsub.f32 %v3669, %v3670
        %v3672 = vand.u32 %v3671, 4294901760
        %3673 = vmatmul.mubr.f32.gmra.mrb[0].mxu0 %v3672
        %v3674 = vpop.f32.mrb[0].mxu0
        %v3675 = vadd.f32 %v3594, %v3674
        %v3676 = vpop.f32.mrb[0].mxu0
        %3677 = vdwg.mxu0
        %3678 = vmatprep.subr.mxu0 0.0
        %v3679 = vand.u32 %v3584, 4294901760
        %v3680 = vsub.f32 %v3584, %v3679
        %v3681 = vand.u32 %v3680, 4294901760
        %v3682 = vsub.f32 %v3680, %v3681
        %v3683 = vand.u32 %v3682, 4294901760
        %3684 = vmatpush1.msra.mxu0 %v3683
        %3685 = vmatprep.subr.mxu0 0.0
        %v3686 = vand.u32 %v3585, 4294901760
        %v3687 = vsub.f32 %v3585, %v3686
        %v3688 = vand.u32 %v3687, 4294901760
        %v3689 = vsub.f32 %v3687, %v3688
        %v3690 = vand.u32 %v3689, 4294901760
        %3691 = vmatpush1.msra.mxu0 %v3690
        %3692 = vmatprep.subr.mxu0 0.0
        %v3693 = vand.u32 %v3586, 4294901760
        %v3694 = vsub.f32 %v3586, %v3693
        %v3695 = vand.u32 %v3694, 4294901760
        %v3696 = vsub.f32 %v3694, %v3695
        %v3697 = vand.u32 %v3696, 4294901760
        %3698 = vmatpush1.msra.mxu0 %v3697
        %3699 = vmatprep.subr.mxu0 0.0
        %v3700 = vand.u32 %v3587, 4294901760
        %v3701 = vsub.f32 %v3587, %v3700
        %v3702 = vand.u32 %v3701, 4294901760
        %v3703 = vsub.f32 %v3701, %v3702
        %v3704 = vand.u32 %v3703, 4294901760
        %3705 = vmatpush1.msra.mxu0 %v3704
        %3706 = vmatprep.subr.mxu0 0.0
        %3707 = vmatpush1.msra.mxu0 0.0
        %3708 = vmatprep.subr.mxu0 0.0
        %3709 = vmatpush1.msra.mxu0 0.0
        %3710 = vmatprep.subr.mxu0 0.0
        %3711 = vmatpush1.msra.mxu0 0.0
        %3712 = vmatprep.subr.mxu0 0.0
        %3713 = vmatpush1.msra.mxu0 0.0
        %3714 = vmatprep.subr.mxu0 0.0
        %3715 = vmatpush1.msra.mxu0 0.0
        %3716 = vmatprep.subr.mxu0 0.0
        %3717 = vmatpush1.msra.mxu0 0.0
        %3718 = vmatprep.subr.mxu0 0.0
        %3719 = vmatpush1.msra.mxu0 0.0
        %3720 = vmatprep.subr.mxu0 0.0
        %3721 = vmatpush1.msra.mxu0 0.0
        %3722 = vmatprep.subr.mxu0 0.0
        %3723 = vmatpush1.msra.mxu0 0.0
        %3724 = vmatprep.subr.mxu0 0.0
        %3725 = vmatpush1.msra.mxu0 0.0
        %3726 = vmatprep.subr.mxu0 0.0
        %3727 = vmatpush1.msra.mxu0 0.0
        %3728 = vmatprep.subr.mxu0 0.0
        %3729 = vmatpush1.msra.mxu0 0.0
        %3730 = vmatprep.subr.mxu0 0.0
        %3731 = vmatpush1.msra.mxu0 0.0
        %3732 = vmatprep.subr.mxu0 0.0
        %3733 = vmatpush1.msra.mxu0 0.0
        %3734 = vmatprep.subr.mxu0 0.0
        %3735 = vmatpush1.msra.mxu0 0.0
        %3736 = vmatprep.subr.mxu0 0.0
        %3737 = vmatpush1.msra.mxu0 0.0
        %3738 = vmatprep.subr.mxu0 0.0
        %3739 = vmatpush1.msra.mxu0 0.0
        %3740 = vmatprep.subr.mxu0 0.0
        %3741 = vmatpush1.msra.mxu0 0.0
        %3742 = vmatprep.subr.mxu0 0.0
        %3743 = vmatpush1.msra.mxu0 0.0
        %3744 = vmatprep.subr.mxu0 0.0
        %3745 = vmatpush1.msra.mxu0 0.0
        %3746 = vmatprep.subr.mxu0 0.0
        %3747 = vmatpush1.msra.mxu0 0.0
        %3748 = vmatprep.subr.mxu0 0.0
        %3749 = vmatpush1.msra.mxu0 0.0
        %3750 = vmatprep.subr.mxu0 0.0
        %3751 = vmatpush1.msra.mxu0 0.0
        %3752 = vmatprep.subr.mxu0 0.0
        %3753 = vmatpush1.msra.mxu0 0.0
        %3754 = vmatprep.subr.mxu0 0.0
        %3755 = vmatpush1.msra.mxu0 0.0
        %3756 = vmatprep.subr.mxu0 0.0
        %3757 = vmatpush1.msra.mxu0 0.0
        %3758 = vmatprep.subr.mxu0 0.0
        %3759 = vmatpush1.msra.mxu0 0.0
        %3760 = vmatprep.subr.mxu0 0.0
        %3761 = vmatpush1.msra.mxu0 0.0
        %3762 = vmatprep.mubr.f32.mxu0 0.0
        %v3763 = vand.u32 %v3597, 4294901760
        %3764 = vmatmul.mubr.f32.gmra.mrb[0].mxu0 %v3763
        %v3765 = vpop.f32.mrb[0].mxu0
        %v3766 = vadd.f32 %v3675, %v3765
        %v3767 = vpop.f32.mrb[0].mxu0
        %3768 = vdwg.mxu0
        %3769 = vmatprep.subr.mxu0 0.0
        %v3770 = vand.u32 %v3584, 4294901760
        %v3771 = vsub.f32 %v3584, %v3770
        %3772 = vmatpush1.msra.mxu0 %v3771
        %3773 = vmatprep.subr.mxu0 0.0
        %v3774 = vand.u32 %v3585, 4294901760
        %v3775 = vsub.f32 %v3585, %v3774
        %3776 = vmatpush1.msra.mxu0 %v3775
        %3777 = vmatprep.subr.mxu0 0.0
        %v3778 = vand.u32 %v3586, 4294901760
        %v3779 = vsub.f32 %v3586, %v3778
        %3780 = vmatpush1.msra.mxu0 %v3779
        %3781 = vmatprep.subr.mxu0 0.0
        %v3782 = vand.u32 %v3587, 4294901760
        %v3783 = vsub.f32 %v3587, %v3782
        %3784 = vmatpush1.msra.mxu0 %v3783
        %3785 = vmatprep.subr.mxu0 0.0
        %3786 = vmatpush1.msra.mxu0 0.0
        %3787 = vmatprep.subr.mxu0 0.0
        %3788 = vmatpush1.msra.mxu0 0.0
        %3789 = vmatprep.subr.mxu0 0.0
        %3790 = vmatpush1.msra.mxu0 0.0
        %3791 = vmatprep.subr.mxu0 0.0
        %3792 = vmatpush1.msra.mxu0 0.0
        %3793 = vmatprep.subr.mxu0 0.0
        %3794 = vmatpush1.msra.mxu0 0.0
        %3795 = vmatprep.subr.mxu0 0.0
        %3796 = vmatpush1.msra.mxu0 0.0
        %3797 = vmatprep.subr.mxu0 0.0
        %3798 = vmatpush1.msra.mxu0 0.0
        %3799 = vmatprep.subr.mxu0 0.0
        %3800 = vmatpush1.msra.mxu0 0.0
        %3801 = vmatprep.subr.mxu0 0.0
        %3802 = vmatpush1.msra.mxu0 0.0
        %3803 = vmatprep.subr.mxu0 0.0
        %3804 = vmatpush1.msra.mxu0 0.0
        %3805 = vmatprep.subr.mxu0 0.0
        %3806 = vmatpush1.msra.mxu0 0.0
        %3807 = vmatprep.subr.mxu0 0.0
        %3808 = vmatpush1.msra.mxu0 0.0
        %3809 = vmatprep.subr.mxu0 0.0
        %3810 = vmatpush1.msra.mxu0 0.0
        %3811 = vmatprep.subr.mxu0 0.0
        %3812 = vmatpush1.msra.mxu0 0.0
        %3813 = vmatprep.subr.mxu0 0.0
        %3814 = vmatpush1.msra.mxu0 0.0
        %3815 = vmatprep.subr.mxu0 0.0
        %3816 = vmatpush1.msra.mxu0 0.0
        %3817 = vmatprep.subr.mxu0 0.0
        %3818 = vmatpush1.msra.mxu0 0.0
        %3819 = vmatprep.subr.mxu0 0.0
        %3820 = vmatpush1.msra.mxu0 0.0
        %3821 = vmatprep.subr.mxu0 0.0
        %3822 = vmatpush1.msra.mxu0 0.0
        %3823 = vmatprep.subr.mxu0 0.0
        %3824 = vmatpush1.msra.mxu0 0.0
        %3825 = vmatprep.subr.mxu0 0.0
        %3826 = vmatpush1.msra.mxu0 0.0
        %3827 = vmatprep.subr.mxu0 0.0
        %3828 = vmatpush1.msra.mxu0 0.0
        %3829 = vmatprep.subr.mxu0 0.0
        %3830 = vmatpush1.msra.mxu0 0.0
        %3831 = vmatprep.subr.mxu0 0.0
        %3832 = vmatpush1.msra.mxu0 0.0
        %3833 = vmatprep.subr.mxu0 0.0
        %3834 = vmatpush1.msra.mxu0 0.0
        %3835 = vmatprep.subr.mxu0 0.0
        %3836 = vmatpush1.msra.mxu0 0.0
        %3837 = vmatprep.subr.mxu0 0.0
        %3838 = vmatpush1.msra.mxu0 0.0
        %3839 = vmatprep.subr.mxu0 0.0
        %3840 = vmatpush1.msra.mxu0 0.0
        %3841 = vmatprep.mubr.f32.mxu0 0.0
        %v3842 = vand.u32 %v3597, 4294901760
        %v3843 = vsub.f32 %v3597, %v3842
        %3844 = vmatmul.mubr.f32.gmra.mrb[0].mxu0 %v3843
        %v3845 = vpop.f32.mrb[0].mxu0
        %v3846 = vadd.f32 %v3766, %v3845
        %v3847 = vpop.f32.mrb[0].mxu0
        %3848 = vdwg.mxu0
        %3849 = vmatprep.subr.mxu0 0.0
        %v3850 = vand.u32 %v3584, 4294901760
        %3851 = vmatpush1.msra.mxu0 %v3850
        %3852 = vmatprep.subr.mxu0 0.0
        %v3853 = vand.u32 %v3585, 4294901760
        %3854 = vmatpush1.msra.mxu0 %v3853
        %3855 = vmatprep.subr.mxu0 0.0
        %v3856 = vand.u32 %v3586, 4294901760
        %3857 = vmatpush1.msra.mxu0 %v3856
        %3858 = vmatprep.subr.mxu0 0.0
        %v3859 = vand.u32 %v3587, 4294901760
        %3860 = vmatpush1.msra.mxu0 %v3859
        %3861 = vmatprep.subr.mxu0 0.0
        %3862 = vmatpush1.msra.mxu0 0.0
        %3863 = vmatprep.subr.mxu0 0.0
        %3864 = vmatpush1.msra.mxu0 0.0
        %3865 = vmatprep.subr.mxu0 0.0
        %3866 = vmatpush1.msra.mxu0 0.0
        %3867 = vmatprep.subr.mxu0 0.0
        %3868 = vmatpush1.msra.mxu0 0.0
        %3869 = vmatprep.subr.mxu0 0.0
        %3870 = vmatpush1.msra.mxu0 0.0
        %3871 = vmatprep.subr.mxu0 0.0
        %3872 = vmatpush1.msra.mxu0 0.0
        %3873 = vmatprep.subr.mxu0 0.0
        %3874 = vmatpush1.msra.mxu0 0.0
        %3875 = vmatprep.subr.mxu0 0.0
        %3876 = vmatpush1.msra.mxu0 0.0
        %3877 = vmatprep.subr.mxu0 0.0
        %3878 = vmatpush1.msra.mxu0 0.0
        %3879 = vmatprep.subr.mxu0 0.0
        %3880 = vmatpush1.msra.mxu0 0.0
        %3881 = vmatprep.subr.mxu0 0.0
        %3882 = vmatpush1.msra.mxu0 0.0
        %3883 = vmatprep.subr.mxu0 0.0
        %3884 = vmatpush1.msra.mxu0 0.0
        %3885 = vmatprep.subr.mxu0 0.0
        %3886 = vmatpush1.msra.mxu0 0.0
        %3887 = vmatprep.subr.mxu0 0.0
        %3888 = vmatpush1.msra.mxu0 0.0
        %3889 = vmatprep.subr.mxu0 0.0
        %3890 = vmatpush1.msra.mxu0 0.0
        %3891 = vmatprep.subr.mxu0 0.0
        %3892 = vmatpush1.msra.mxu0 0.0
        %3893 = vmatprep.subr.mxu0 0.0
        %3894 = vmatpush1.msra.mxu0 0.0
        %3895 = vmatprep.subr.mxu0 0.0
        %3896 = vmatpush1.msra.mxu0 0.0
        %3897 = vmatprep.subr.mxu0 0.0
        %3898 = vmatpush1.msra.mxu0 0.0
        %3899 = vmatprep.subr.mxu0 0.0
        %3900 = vmatpush1.msra.mxu0 0.0
        %3901 = vmatprep.subr.mxu0 0.0
        %3902 = vmatpush1.msra.mxu0 0.0
        %3903 = vmatprep.subr.mxu0 0.0
        %3904 = vmatpush1.msra.mxu0 0.0
        %3905 = vmatprep.subr.mxu0 0.0
        %3906 = vmatpush1.msra.mxu0 0.0
        %3907 = vmatprep.subr.mxu0 0.0
        %3908 = vmatpush1.msra.mxu0 0.0
        %3909 = vmatprep.subr.mxu0 0.0
        %3910 = vmatpush1.msra.mxu0 0.0
        %3911 = vmatprep.subr.mxu0 0.0
        %3912 = vmatpush1.msra.mxu0 0.0
        %3913 = vmatprep.subr.mxu0 0.0
        %3914 = vmatpush1.msra.mxu0 0.0
        %3915 = vmatprep.subr.mxu0 0.0
        %3916 = vmatpush1.msra.mxu0 0.0
        %3917 = vmatprep.mubr.f32.mxu0 0.0
        %v3918 = vand.u32 %v3597, 4294901760
        %v3919 = vsub.f32 %v3597, %v3918
        %v3920 = vand.u32 %v3919, 4294901760
        %3921 = vmatmul.mubr.f32.gmra.mrb[0].mxu0 %v3920
        %v3922 = vpop.f32.mrb[0].mxu0
        %v3923 = vadd.f32 %v3846, %v3922
        %v3924 = vpop.f32.mrb[0].mxu0
        %3925 = vdwg.mxu0
        %3926 = vmatprep.subr.mxu0 0.0
        %v3927 = vand.u32 %v3584, 4294901760
        %v3928 = vsub.f32 %v3584, %v3927
        %v3929 = vand.u32 %v3928, 4294901760
        %3930 = vmatpush1.msra.mxu0 %v3929
        %3931 = vmatprep.subr.mxu0 0.0
        %v3932 = vand.u32 %v3585, 4294901760
        %v3933 = vsub.f32 %v3585, %v3932
        %v3934 = vand.u32 %v3933, 4294901760
        %3935 = vmatpush1.msra.mxu0 %v3934
        %3936 = vmatprep.subr.mxu0 0.0
        %v3937 = vand.u32 %v3586, 4294901760
        %v3938 = vsub.f32 %v3586, %v3937
        %v3939 = vand.u32 %v3938, 4294901760
        %3940 = vmatpush1.msra.mxu0 %v3939
        %3941 = vmatprep.subr.mxu0 0.0
        %v3942 = vand.u32 %v3587, 4294901760
        %v3943 = vsub.f32 %v3587, %v3942
        %v3944 = vand.u32 %v3943, 4294901760
        %3945 = vmatpush1.msra.mxu0 %v3944
        %3946 = vmatprep.subr.mxu0 0.0
        %3947 = vmatpush1.msra.mxu0 0.0
        %3948 = vmatprep.subr.mxu0 0.0
        %3949 = vmatpush1.msra.mxu0 0.0
        %3950 = vmatprep.subr.mxu0 0.0
        %3951 = vmatpush1.msra.mxu0 0.0
        %3952 = vmatprep.subr.mxu0 0.0
        %3953 = vmatpush1.msra.mxu0 0.0
        %3954 = vmatprep.subr.mxu0 0.0
        %3955 = vmatpush1.msra.mxu0 0.0
        %3956 = vmatprep.subr.mxu0 0.0
        %3957 = vmatpush1.msra.mxu0 0.0
        %3958 = vmatprep.subr.mxu0 0.0
        %3959 = vmatpush1.msra.mxu0 0.0
        %3960 = vmatprep.subr.mxu0 0.0
        %3961 = vmatpush1.msra.mxu0 0.0
        %3962 = vmatprep.subr.mxu0 0.0
        %3963 = vmatpush1.msra.mxu0 0.0
        %3964 = vmatprep.subr.mxu0 0.0
        %3965 = vmatpush1.msra.mxu0 0.0
        %3966 = vmatprep.subr.mxu0 0.0
        %3967 = vmatpush1.msra.mxu0 0.0
        %3968 = vmatprep.subr.mxu0 0.0
        %3969 = vmatpush1.msra.mxu0 0.0
        %3970 = vmatprep.subr.mxu0 0.0
        %3971 = vmatpush1.msra.mxu0 0.0
        %3972 = vmatprep.subr.mxu0 0.0
        %3973 = vmatpush1.msra.mxu0 0.0
        %3974 = vmatprep.subr.mxu0 0.0
        %3975 = vmatpush1.msra.mxu0 0.0
        %3976 = vmatprep.subr.mxu0 0.0
        %3977 = vmatpush1.msra.mxu0 0.0
        %3978 = vmatprep.subr.mxu0 0.0
        %3979 = vmatpush1.msra.mxu0 0.0
        %3980 = vmatprep.subr.mxu0 0.0
        %3981 = vmatpush1.msra.mxu0 0.0
        %3982 = vmatprep.subr.mxu0 0.0
        %3983 = vmatpush1.msra.mxu0 0.0
        %3984 = vmatprep.subr.mxu0 0.0
        %3985 = vmatpush1.msra.mxu0 0.0
        %3986 = vmatprep.subr.mxu0 0.0
        %3987 = vmatpush1.msra.mxu0 0.0
        %3988 = vmatprep.subr.mxu0 0.0
        %3989 = vmatpush1.msra.mxu0 0.0
        %3990 = vmatprep.subr.mxu0 0.0
        %3991 = vmatpush1.msra.mxu0 0.0
        %3992 = vmatprep.subr.mxu0 0.0
        %3993 = vmatpush1.msra.mxu0 0.0
        %3994 = vmatprep.subr.mxu0 0.0
        %3995 = vmatpush1.msra.mxu0 0.0
        %3996 = vmatprep.subr.mxu0 0.0
        %3997 = vmatpush1.msra.mxu0 0.0
        %3998 = vmatprep.subr.mxu0 0.0
        %3999 = vmatpush1.msra.mxu0 0.0
        %4000 = vmatprep.subr.mxu0 0.0
        %4001 = vmatpush1.msra.mxu0 0.0
        %4002 = vmatprep.mubr.f32.mxu0 0.0
        %v4003 = vand.u32 %v3597, 4294901760
        %4004 = vmatmul.mubr.f32.gmra.mrb[0].mxu0 %v4003
        %v4005 = vpop.f32.mrb[0].mxu0
        %v4006 = vadd.f32 %v3923, %v4005
        %v4007 = vpop.f32.mrb[0].mxu0
        %4008 = vdwg.mxu0
        %4009 = vmatprep.subr.mxu0 0.0
        %v4010 = vand.u32 %v3584, 4294901760
        %4011 = vmatpush1.msra.mxu0 %v4010
        %4012 = vmatprep.subr.mxu0 0.0
        %v4013 = vand.u32 %v3585, 4294901760
        %4014 = vmatpush1.msra.mxu0 %v4013
        %4015 = vmatprep.subr.mxu0 0.0
        %v4016 = vand.u32 %v3586, 4294901760
        %4017 = vmatpush1.msra.mxu0 %v4016
        %4018 = vmatprep.subr.mxu0 0.0
        %v4019 = vand.u32 %v3587, 4294901760
        %4020 = vmatpush1.msra.mxu0 %v4019
        %4021 = vmatprep.subr.mxu0 0.0
        %4022 = vmatpush1.msra.mxu0 0.0
        %4023 = vmatprep.subr.mxu0 0.0
        %4024 = vmatpush1.msra.mxu0 0.0
        %4025 = vmatprep.subr.mxu0 0.0
        %4026 = vmatpush1.msra.mxu0 0.0
        %4027 = vmatprep.subr.mxu0 0.0
        %4028 = vmatpush1.msra.mxu0 0.0
        %4029 = vmatprep.subr.mxu0 0.0
        %4030 = vmatpush1.msra.mxu0 0.0
        %4031 = vmatprep.subr.mxu0 0.0
        %4032 = vmatpush1.msra.mxu0 0.0
        %4033 = vmatprep.subr.mxu0 0.0
        %4034 = vmatpush1.msra.mxu0 0.0
        %4035 = vmatprep.subr.mxu0 0.0
        %4036 = vmatpush1.msra.mxu0 0.0
        %4037 = vmatprep.subr.mxu0 0.0
        %4038 = vmatpush1.msra.mxu0 0.0
        %4039 = vmatprep.subr.mxu0 0.0
        %4040 = vmatpush1.msra.mxu0 0.0
        %4041 = vmatprep.subr.mxu0 0.0
        %4042 = vmatpush1.msra.mxu0 0.0
        %4043 = vmatprep.subr.mxu0 0.0
        %4044 = vmatpush1.msra.mxu0 0.0
        %4045 = vmatprep.subr.mxu0 0.0
        %4046 = vmatpush1.msra.mxu0 0.0
        %4047 = vmatprep.subr.mxu0 0.0
        %4048 = vmatpush1.msra.mxu0 0.0
        %4049 = vmatprep.subr.mxu0 0.0
        %4050 = vmatpush1.msra.mxu0 0.0
        %4051 = vmatprep.subr.mxu0 0.0
        %4052 = vmatpush1.msra.mxu0 0.0
        %4053 = vmatprep.subr.mxu0 0.0
        %4054 = vmatpush1.msra.mxu0 0.0
        %4055 = vmatprep.subr.mxu0 0.0
        %4056 = vmatpush1.msra.mxu0 0.0
        %4057 = vmatprep.subr.mxu0 0.0
        %4058 = vmatpush1.msra.mxu0 0.0
        %4059 = vmatprep.subr.mxu0 0.0
        %4060 = vmatpush1.msra.mxu0 0.0
        %4061 = vmatprep.subr.mxu0 0.0
        %4062 = vmatpush1.msra.mxu0 0.0
        %4063 = vmatprep.subr.mxu0 0.0
        %4064 = vmatpush1.msra.mxu0 0.0
        %4065 = vmatprep.subr.mxu0 0.0
        %4066 = vmatpush1.msra.mxu0 0.0
        %4067 = vmatprep.subr.mxu0 0.0
        %4068 = vmatpush1.msra.mxu0 0.0
        %4069 = vmatprep.subr.mxu0 0.0
        %4070 = vmatpush1.msra.mxu0 0.0
        %4071 = vmatprep.subr.mxu0 0.0
        %4072 = vmatpush1.msra.mxu0 0.0
        %4073 = vmatprep.subr.mxu0 0.0
        %4074 = vmatpush1.msra.mxu0 0.0
        %4075 = vmatprep.subr.mxu0 0.0
        %4076 = vmatpush1.msra.mxu0 0.0
        %4077 = vmatprep.mubr.f32.mxu0 0.0
        %v4078 = vand.u32 %v3597, 4294901760
        %4079 = vmatmul.mubr.f32.gmra.mrb[0].mxu0 %v4078
        %v4080 = vpop.f32.mrb[0].mxu0
        %v4081 = vadd.f32 %v4006, %v4080
        %v4082 = vpop.f32.mrb[0].mxu0
        %4083 = vdwg.mxu0
        %4085 = vrot.lane.b32.xlu0 %v4081, 96
        %v4086 = vpop.permute.xlu0 %4085
        %v4087 = vsel %vm1095, %v4081, 0
        %v4089 = vsel %vm1095, %v4086, 0
        %4091 = vmatprep.subr.mxu0 0.0
        %v4092 = vand.u32 %v4089, 4294901760
        %4093 = vmatpush1.xpose.msra.mxu0 %v4092
        %4094 = vmatprep.subr.mxu0 0.0
        %4095 = vmatpush1.xpose.msra.mxu0 0.0
        %4096 = vmatprep.subr.mxu0 0.0
        %4097 = vmatpush1.xpose.msra.mxu0 0.0
        %4098 = vmatprep.subr.mxu0 0.0
        %4099 = vmatpush1.xpose.msra.mxu0 0.0
        %4100 = vmatprep.subr.mxu0 0.0
        %4101 = vmatpush1.xpose.msra.mxu0 0.0
        %4102 = vmatprep.subr.mxu0 0.0
        %4103 = vmatpush1.xpose.msra.mxu0 0.0
        %4104 = vmatprep.subr.mxu0 0.0
        %4105 = vmatpush1.xpose.msra.mxu0 0.0
        %4106 = vmatprep.subr.mxu0 0.0
        %4107 = vmatpush1.xpose.msra.mxu0 0.0
        %4108 = vmatprep.subr.mxu0 0.0
        %4109 = vmatpush1.xpose.msra.mxu0 0.0
        %4110 = vmatprep.subr.mxu0 0.0
        %4111 = vmatpush1.xpose.msra.mxu0 0.0
        %4112 = vmatprep.subr.mxu0 0.0
        %4113 = vmatpush1.xpose.msra.mxu0 0.0
        %4114 = vmatprep.subr.mxu0 0.0
        %4115 = vmatpush1.xpose.msra.mxu0 0.0
        %4116 = vmatprep.subr.mxu0 0.0
        %4117 = vmatpush1.xpose.msra.mxu0 0.0
        %4118 = vmatprep.subr.mxu0 0.0
        %4119 = vmatpush1.xpose.msra.mxu0 0.0
        %4120 = vmatprep.subr.mxu0 0.0
        %4121 = vmatpush1.xpose.msra.mxu0 0.0
        %4122 = vmatprep.subr.mxu0 0.0
        %4123 = vmatpush1.xpose.msra.mxu0 0.0
        %4124 = vmatprep.subr.mxu0 0.0
        %4125 = vmatpush1.xpose.msra.mxu0 0.0
        %4126 = vmatprep.subr.mxu0 0.0
        %4127 = vmatpush1.xpose.msra.mxu0 0.0
        %4128 = vmatprep.subr.mxu0 0.0
        %4129 = vmatpush1.xpose.msra.mxu0 0.0
        %4130 = vmatprep.subr.mxu0 0.0
        %4131 = vmatpush1.xpose.msra.mxu0 0.0
        %4132 = vmatprep.subr.mxu0 0.0
        %4133 = vmatpush1.xpose.msra.mxu0 0.0
        %4134 = vmatprep.subr.mxu0 0.0
        %4135 = vmatpush1.xpose.msra.mxu0 0.0
        %4136 = vmatprep.subr.mxu0 0.0
        %4137 = vmatpush1.xpose.msra.mxu0 0.0
        %4138 = vmatprep.subr.mxu0 0.0
        %4139 = vmatpush1.xpose.msra.mxu0 0.0
        %4140 = vmatprep.subr.mxu0 0.0
        %4141 = vmatpush1.xpose.msra.mxu0 0.0
        %4142 = vmatprep.subr.mxu0 0.0
        %4143 = vmatpush1.xpose.msra.mxu0 0.0
        %4144 = vmatprep.subr.mxu0 0.0
        %4145 = vmatpush1.xpose.msra.mxu0 0.0
        %4146 = vmatprep.subr.mxu0 0.0
        %4147 = vmatpush1.xpose.msra.mxu0 0.0
        %4148 = vmatprep.subr.mxu0 0.0
        %4149 = vmatpush1.xpose.msra.mxu0 0.0
        %4150 = vmatprep.subr.mxu0 0.0
        %4151 = vmatpush1.xpose.msra.mxu0 0.0
        %4152 = vmatprep.subr.mxu0 0.0
        %4153 = vmatpush1.xpose.msra.mxu0 0.0
        %4154 = vmatprep.subr.mxu0 0.0
        %4155 = vmatpush1.xpose.msra.mxu0 0.0
        %4156 = vmatprep.mubr.f32.mxu0 0.0
        %v4157 = vand.u32 %v4087, 4294901760
        %v4158 = vsub.f32 %v4087, %v4157
        %v4159 = vand.u32 %v4158, 4294901760
        %v4160 = vsub.f32 %v4158, %v4159
        %v4161 = vand.u32 %v4160, 4294901760
        %4162 = vmatmul.mubr.f32.gmra.mrb[0].mxu0 %v4161
        %v4163 = vpop.f32.mrb[0].mxu0
        %v4164 = vadd.f32 0.0, %v4163
        %v4165 = vpop.f32.mrb[0].mxu0
        %4166 = vdwg.mxu0
        %4167 = vmatprep.subr.mxu0 0.0
        %v4168 = vand.u32 %v4089, 4294901760
        %v4169 = vsub.f32 %v4089, %v4168
        %v4170 = vand.u32 %v4169, 4294901760
        %v4171 = vsub.f32 %v4169, %v4170
        %v4172 = vand.u32 %v4171, 4294901760
        %4173 = vmatpush1.xpose.msra.mxu0 %v4172
        %4174 = vmatprep.subr.mxu0 0.0
        %4175 = vmatpush1.xpose.msra.mxu0 0.0
        %4176 = vmatprep.subr.mxu0 0.0
        %4177 = vmatpush1.xpose.msra.mxu0 0.0
        %4178 = vmatprep.subr.mxu0 0.0
        %4179 = vmatpush1.xpose.msra.mxu0 0.0
        %4180 = vmatprep.subr.mxu0 0.0
        %4181 = vmatpush1.xpose.msra.mxu0 0.0
        %4182 = vmatprep.subr.mxu0 0.0
        %4183 = vmatpush1.xpose.msra.mxu0 0.0
        %4184 = vmatprep.subr.mxu0 0.0
        %4185 = vmatpush1.xpose.msra.mxu0 0.0
        %4186 = vmatprep.subr.mxu0 0.0
        %4187 = vmatpush1.xpose.msra.mxu0 0.0
        %4188 = vmatprep.subr.mxu0 0.0
        %4189 = vmatpush1.xpose.msra.mxu0 0.0
        %4190 = vmatprep.subr.mxu0 0.0
        %4191 = vmatpush1.xpose.msra.mxu0 0.0
        %4192 = vmatprep.subr.mxu0 0.0
        %4193 = vmatpush1.xpose.msra.mxu0 0.0
        %4194 = vmatprep.subr.mxu0 0.0
        %4195 = vmatpush1.xpose.msra.mxu0 0.0
        %4196 = vmatprep.subr.mxu0 0.0
        %4197 = vmatpush1.xpose.msra.mxu0 0.0
        %4198 = vmatprep.subr.mxu0 0.0
        %4199 = vmatpush1.xpose.msra.mxu0 0.0
        %4200 = vmatprep.subr.mxu0 0.0
        %4201 = vmatpush1.xpose.msra.mxu0 0.0
        %4202 = vmatprep.subr.mxu0 0.0
        %4203 = vmatpush1.xpose.msra.mxu0 0.0
        %4204 = vmatprep.subr.mxu0 0.0
        %4205 = vmatpush1.xpose.msra.mxu0 0.0
        %4206 = vmatprep.subr.mxu0 0.0
        %4207 = vmatpush1.xpose.msra.mxu0 0.0
        %4208 = vmatprep.subr.mxu0 0.0
        %4209 = vmatpush1.xpose.msra.mxu0 0.0
        %4210 = vmatprep.subr.mxu0 0.0
        %4211 = vmatpush1.xpose.msra.mxu0 0.0
        %4212 = vmatprep.subr.mxu0 0.0
        %4213 = vmatpush1.xpose.msra.mxu0 0.0
        %4214 = vmatprep.subr.mxu0 0.0
        %4215 = vmatpush1.xpose.msra.mxu0 0.0
        %4216 = vmatprep.subr.mxu0 0.0
        %4217 = vmatpush1.xpose.msra.mxu0 0.0
        %4218 = vmatprep.subr.mxu0 0.0
        %4219 = vmatpush1.xpose.msra.mxu0 0.0
        %4220 = vmatprep.subr.mxu0 0.0
        %4221 = vmatpush1.xpose.msra.mxu0 0.0
        %4222 = vmatprep.subr.mxu0 0.0
        %4223 = vmatpush1.xpose.msra.mxu0 0.0
        %4224 = vmatprep.subr.mxu0 0.0
        %4225 = vmatpush1.xpose.msra.mxu0 0.0
        %4226 = vmatprep.subr.mxu0 0.0
        %4227 = vmatpush1.xpose.msra.mxu0 0.0
        %4228 = vmatprep.subr.mxu0 0.0
        %4229 = vmatpush1.xpose.msra.mxu0 0.0
        %4230 = vmatprep.subr.mxu0 0.0
        %4231 = vmatpush1.xpose.msra.mxu0 0.0
        %4232 = vmatprep.subr.mxu0 0.0
        %4233 = vmatpush1.xpose.msra.mxu0 0.0
        %4234 = vmatprep.subr.mxu0 0.0
        %4235 = vmatpush1.xpose.msra.mxu0 0.0
        %4236 = vmatprep.mubr.f32.mxu0 0.0
        %v4237 = vand.u32 %v4087, 4294901760
        %4238 = vmatmul.mubr.f32.gmra.mrb[0].mxu0 %v4237
        %v4239 = vpop.f32.mrb[0].mxu0
        %v4240 = vadd.f32 %v4164, %v4239
        %v4241 = vpop.f32.mrb[0].mxu0
        %4242 = vdwg.mxu0
        %4243 = vmatprep.subr.mxu0 0.0
        %v4244 = vand.u32 %v4089, 4294901760
        %v4245 = vsub.f32 %v4089, %v4244
        %4246 = vmatpush1.xpose.msra.mxu0 %v4245
        %4247 = vmatprep.subr.mxu0 0.0
        %4248 = vmatpush1.xpose.msra.mxu0 0.0
        %4249 = vmatprep.subr.mxu0 0.0
        %4250 = vmatpush1.xpose.msra.mxu0 0.0
        %4251 = vmatprep.subr.mxu0 0.0
        %4252 = vmatpush1.xpose.msra.mxu0 0.0
        %4253 = vmatprep.subr.mxu0 0.0
        %4254 = vmatpush1.xpose.msra.mxu0 0.0
        %4255 = vmatprep.subr.mxu0 0.0
        %4256 = vmatpush1.xpose.msra.mxu0 0.0
        %4257 = vmatprep.subr.mxu0 0.0
        %4258 = vmatpush1.xpose.msra.mxu0 0.0
        %4259 = vmatprep.subr.mxu0 0.0
        %4260 = vmatpush1.xpose.msra.mxu0 0.0
        %4261 = vmatprep.subr.mxu0 0.0
        %4262 = vmatpush1.xpose.msra.mxu0 0.0
        %4263 = vmatprep.subr.mxu0 0.0
        %4264 = vmatpush1.xpose.msra.mxu0 0.0
        %4265 = vmatprep.subr.mxu0 0.0
        %4266 = vmatpush1.xpose.msra.mxu0 0.0
        %4267 = vmatprep.subr.mxu0 0.0
        %4268 = vmatpush1.xpose.msra.mxu0 0.0
        %4269 = vmatprep.subr.mxu0 0.0
        %4270 = vmatpush1.xpose.msra.mxu0 0.0
        %4271 = vmatprep.subr.mxu0 0.0
        %4272 = vmatpush1.xpose.msra.mxu0 0.0
        %4273 = vmatprep.subr.mxu0 0.0
        %4274 = vmatpush1.xpose.msra.mxu0 0.0
        %4275 = vmatprep.subr.mxu0 0.0
        %4276 = vmatpush1.xpose.msra.mxu0 0.0
        %4277 = vmatprep.subr.mxu0 0.0
        %4278 = vmatpush1.xpose.msra.mxu0 0.0
        %4279 = vmatprep.subr.mxu0 0.0
        %4280 = vmatpush1.xpose.msra.mxu0 0.0
        %4281 = vmatprep.subr.mxu0 0.0
        %4282 = vmatpush1.xpose.msra.mxu0 0.0
        %4283 = vmatprep.subr.mxu0 0.0
        %4284 = vmatpush1.xpose.msra.mxu0 0.0
        %4285 = vmatprep.subr.mxu0 0.0
        %4286 = vmatpush1.xpose.msra.mxu0 0.0
        %4287 = vmatprep.subr.mxu0 0.0
        %4288 = vmatpush1.xpose.msra.mxu0 0.0
        %4289 = vmatprep.subr.mxu0 0.0
        %4290 = vmatpush1.xpose.msra.mxu0 0.0
        %4291 = vmatprep.subr.mxu0 0.0
        %4292 = vmatpush1.xpose.msra.mxu0 0.0
        %4293 = vmatprep.subr.mxu0 0.0
        %4294 = vmatpush1.xpose.msra.mxu0 0.0
        %4295 = vmatprep.subr.mxu0 0.0
        %4296 = vmatpush1.xpose.msra.mxu0 0.0
        %4297 = vmatprep.subr.mxu0 0.0
        %4298 = vmatpush1.xpose.msra.mxu0 0.0
        %4299 = vmatprep.subr.mxu0 0.0
        %4300 = vmatpush1.xpose.msra.mxu0 0.0
        %4301 = vmatprep.subr.mxu0 0.0
        %4302 = vmatpush1.xpose.msra.mxu0 0.0
        %4303 = vmatprep.subr.mxu0 0.0
        %4304 = vmatpush1.xpose.msra.mxu0 0.0
        %4305 = vmatprep.subr.mxu0 0.0
        %4306 = vmatpush1.xpose.msra.mxu0 0.0
        %4307 = vmatprep.subr.mxu0 0.0
        %4308 = vmatpush1.xpose.msra.mxu0 0.0
        %4309 = vmatprep.mubr.f32.mxu0 0.0
        %v4310 = vand.u32 %v4087, 4294901760
        %v4311 = vsub.f32 %v4087, %v4310
        %4312 = vmatmul.mubr.f32.gmra.mrb[0].mxu0 %v4311
        %v4313 = vpop.f32.mrb[0].mxu0
        %v4314 = vadd.f32 %v4240, %v4313
        %v4315 = vpop.f32.mrb[0].mxu0
        %4316 = vdwg.mxu0
        %4317 = vmatprep.subr.mxu0 0.0
        %v4318 = vand.u32 %v4089, 4294901760
        %4319 = vmatpush1.xpose.msra.mxu0 %v4318
        %4320 = vmatprep.subr.mxu0 0.0
        %4321 = vmatpush1.xpose.msra.mxu0 0.0
        %4322 = vmatprep.subr.mxu0 0.0
        %4323 = vmatpush1.xpose.msra.mxu0 0.0
        %4324 = vmatprep.subr.mxu0 0.0
        %4325 = vmatpush1.xpose.msra.mxu0 0.0
        %4326 = vmatprep.subr.mxu0 0.0
        %4327 = vmatpush1.xpose.msra.mxu0 0.0
        %4328 = vmatprep.subr.mxu0 0.0
        %4329 = vmatpush1.xpose.msra.mxu0 0.0
        %4330 = vmatprep.subr.mxu0 0.0
        %4331 = vmatpush1.xpose.msra.mxu0 0.0
        %4332 = vmatprep.subr.mxu0 0.0
        %4333 = vmatpush1.xpose.msra.mxu0 0.0
        %4334 = vmatprep.subr.mxu0 0.0
        %4335 = vmatpush1.xpose.msra.mxu0 0.0
        %4336 = vmatprep.subr.mxu0 0.0
        %4337 = vmatpush1.xpose.msra.mxu0 0.0
        %4338 = vmatprep.subr.mxu0 0.0
        %4339 = vmatpush1.xpose.msra.mxu0 0.0
        %4340 = vmatprep.subr.mxu0 0.0
        %4341 = vmatpush1.xpose.msra.mxu0 0.0
        %4342 = vmatprep.subr.mxu0 0.0
        %4343 = vmatpush1.xpose.msra.mxu0 0.0
        %4344 = vmatprep.subr.mxu0 0.0
        %4345 = vmatpush1.xpose.msra.mxu0 0.0
        %4346 = vmatprep.subr.mxu0 0.0
        %4347 = vmatpush1.xpose.msra.mxu0 0.0
        %4348 = vmatprep.subr.mxu0 0.0
        %4349 = vmatpush1.xpose.msra.mxu0 0.0
        %4350 = vmatprep.subr.mxu0 0.0
        %4351 = vmatpush1.xpose.msra.mxu0 0.0
        %4352 = vmatprep.subr.mxu0 0.0
        %4353 = vmatpush1.xpose.msra.mxu0 0.0
        %4354 = vmatprep.subr.mxu0 0.0
        %4355 = vmatpush1.xpose.msra.mxu0 0.0
        %4356 = vmatprep.subr.mxu0 0.0
        %4357 = vmatpush1.xpose.msra.mxu0 0.0
        %4358 = vmatprep.subr.mxu0 0.0
        %4359 = vmatpush1.xpose.msra.mxu0 0.0
        %4360 = vmatprep.subr.mxu0 0.0
        %4361 = vmatpush1.xpose.msra.mxu0 0.0
        %4362 = vmatprep.subr.mxu0 0.0
        %4363 = vmatpush1.xpose.msra.mxu0 0.0
        %4364 = vmatprep.subr.mxu0 0.0
        %4365 = vmatpush1.xpose.msra.mxu0 0.0
        %4366 = vmatprep.subr.mxu0 0.0
        %4367 = vmatpush1.xpose.msra.mxu0 0.0
        %4368 = vmatprep.subr.mxu0 0.0
        %4369 = vmatpush1.xpose.msra.mxu0 0.0
        %4370 = vmatprep.subr.mxu0 0.0
        %4371 = vmatpush1.xpose.msra.mxu0 0.0
        %4372 = vmatprep.subr.mxu0 0.0
        %4373 = vmatpush1.xpose.msra.mxu0 0.0
        %4374 = vmatprep.subr.mxu0 0.0
        %4375 = vmatpush1.xpose.msra.mxu0 0.0
        %4376 = vmatprep.subr.mxu0 0.0
        %4377 = vmatpush1.xpose.msra.mxu0 0.0
        %4378 = vmatprep.subr.mxu0 0.0
        %4379 = vmatpush1.xpose.msra.mxu0 0.0
        %4380 = vmatprep.subr.mxu0 0.0
        %4381 = vmatpush1.xpose.msra.mxu0 0.0
        %4382 = vmatprep.mubr.f32.mxu0 0.0
        %v4383 = vand.u32 %v4087, 4294901760
        %v4384 = vsub.f32 %v4087, %v4383
        %v4385 = vand.u32 %v4384, 4294901760
        %4386 = vmatmul.mubr.f32.gmra.mrb[0].mxu0 %v4385
        %v4387 = vpop.f32.mrb[0].mxu0
        %v4388 = vadd.f32 %v4314, %v4387
        %v4389 = vpop.f32.mrb[0].mxu0
        %4390 = vdwg.mxu0
        %4391 = vmatprep.subr.mxu0 0.0
        %v4392 = vand.u32 %v4089, 4294901760
        %v4393 = vsub.f32 %v4089, %v4392
        %v4394 = vand.u32 %v4393, 4294901760
        %4395 = vmatpush1.xpose.msra.mxu0 %v4394
        %4396 = vmatprep.subr.mxu0 0.0
        %4397 = vmatpush1.xpose.msra.mxu0 0.0
        %4398 = vmatprep.subr.mxu0 0.0
        %4399 = vmatpush1.xpose.msra.mxu0 0.0
        %4400 = vmatprep.subr.mxu0 0.0
        %4401 = vmatpush1.xpose.msra.mxu0 0.0
        %4402 = vmatprep.subr.mxu0 0.0
        %4403 = vmatpush1.xpose.msra.mxu0 0.0
        %4404 = vmatprep.subr.mxu0 0.0
        %4405 = vmatpush1.xpose.msra.mxu0 0.0
        %4406 = vmatprep.subr.mxu0 0.0
        %4407 = vmatpush1.xpose.msra.mxu0 0.0
        %4408 = vmatprep.subr.mxu0 0.0
        %4409 = vmatpush1.xpose.msra.mxu0 0.0
        %4410 = vmatprep.subr.mxu0 0.0
        %4411 = vmatpush1.xpose.msra.mxu0 0.0
        %4412 = vmatprep.subr.mxu0 0.0
        %4413 = vmatpush1.xpose.msra.mxu0 0.0
        %4414 = vmatprep.subr.mxu0 0.0
        %4415 = vmatpush1.xpose.msra.mxu0 0.0
        %4416 = vmatprep.subr.mxu0 0.0
        %4417 = vmatpush1.xpose.msra.mxu0 0.0
        %4418 = vmatprep.subr.mxu0 0.0
        %4419 = vmatpush1.xpose.msra.mxu0 0.0
        %4420 = vmatprep.subr.mxu0 0.0
        %4421 = vmatpush1.xpose.msra.mxu0 0.0
        %4422 = vmatprep.subr.mxu0 0.0
        %4423 = vmatpush1.xpose.msra.mxu0 0.0
        %4424 = vmatprep.subr.mxu0 0.0
        %4425 = vmatpush1.xpose.msra.mxu0 0.0
        %4426 = vmatprep.subr.mxu0 0.0
        %4427 = vmatpush1.xpose.msra.mxu0 0.0
        %4428 = vmatprep.subr.mxu0 0.0
        %4429 = vmatpush1.xpose.msra.mxu0 0.0
        %4430 = vmatprep.subr.mxu0 0.0
        %4431 = vmatpush1.xpose.msra.mxu0 0.0
        %4432 = vmatprep.subr.mxu0 0.0
        %4433 = vmatpush1.xpose.msra.mxu0 0.0
        %4434 = vmatprep.subr.mxu0 0.0
        %4435 = vmatpush1.xpose.msra.mxu0 0.0
        %4436 = vmatprep.subr.mxu0 0.0
        %4437 = vmatpush1.xpose.msra.mxu0 0.0
        %4438 = vmatprep.subr.mxu0 0.0
        %4439 = vmatpush1.xpose.msra.mxu0 0.0
        %4440 = vmatprep.subr.mxu0 0.0
        %4441 = vmatpush1.xpose.msra.mxu0 0.0
        %4442 = vmatprep.subr.mxu0 0.0
        %4443 = vmatpush1.xpose.msra.mxu0 0.0
        %4444 = vmatprep.subr.mxu0 0.0
        %4445 = vmatpush1.xpose.msra.mxu0 0.0
        %4446 = vmatprep.subr.mxu0 0.0
        %4447 = vmatpush1.xpose.msra.mxu0 0.0
        %4448 = vmatprep.subr.mxu0 0.0
        %4449 = vmatpush1.xpose.msra.mxu0 0.0
        %4450 = vmatprep.subr.mxu0 0.0
        %4451 = vmatpush1.xpose.msra.mxu0 0.0
        %4452 = vmatprep.subr.mxu0 0.0
        %4453 = vmatpush1.xpose.msra.mxu0 0.0
        %4454 = vmatprep.subr.mxu0 0.0
        %4455 = vmatpush1.xpose.msra.mxu0 0.0
        %4456 = vmatprep.subr.mxu0 0.0
        %4457 = vmatpush1.xpose.msra.mxu0 0.0
        %4458 = vmatprep.mubr.f32.mxu0 0.0
        %v4459 = vand.u32 %v4087, 4294901760
        %4460 = vmatmul.mubr.f32.gmra.mrb[0].mxu0 %v4459
        %v4461 = vpop.f32.mrb[0].mxu0
        %v4462 = vadd.f32 %v4388, %v4461
        %v4463 = vpop.f32.mrb[0].mxu0
        %4464 = vdwg.mxu0
        %4465 = vmatprep.subr.mxu0 0.0
        %v4466 = vand.u32 %v4089, 4294901760
        %4467 = vmatpush1.xpose.msra.mxu0 %v4466
        %4468 = vmatprep.subr.mxu0 0.0
        %4469 = vmatpush1.xpose.msra.mxu0 0.0
        %4470 = vmatprep.subr.mxu0 0.0
        %4471 = vmatpush1.xpose.msra.mxu0 0.0
        %4472 = vmatprep.subr.mxu0 0.0
        %4473 = vmatpush1.xpose.msra.mxu0 0.0
        %4474 = vmatprep.subr.mxu0 0.0
        %4475 = vmatpush1.xpose.msra.mxu0 0.0
        %4476 = vmatprep.subr.mxu0 0.0
        %4477 = vmatpush1.xpose.msra.mxu0 0.0
        %4478 = vmatprep.subr.mxu0 0.0
        %4479 = vmatpush1.xpose.msra.mxu0 0.0
        %4480 = vmatprep.subr.mxu0 0.0
        %4481 = vmatpush1.xpose.msra.mxu0 0.0
        %4482 = vmatprep.subr.mxu0 0.0
        %4483 = vmatpush1.xpose.msra.mxu0 0.0
        %4484 = vmatprep.subr.mxu0 0.0
        %4485 = vmatpush1.xpose.msra.mxu0 0.0
        %4486 = vmatprep.subr.mxu0 0.0
        %4487 = vmatpush1.xpose.msra.mxu0 0.0
        %4488 = vmatprep.subr.mxu0 0.0
        %4489 = vmatpush1.xpose.msra.mxu0 0.0
        %4490 = vmatprep.subr.mxu0 0.0
        %4491 = vmatpush1.xpose.msra.mxu0 0.0
        %4492 = vmatprep.subr.mxu0 0.0
        %4493 = vmatpush1.xpose.msra.mxu0 0.0
        %4494 = vmatprep.subr.mxu0 0.0
        %4495 = vmatpush1.xpose.msra.mxu0 0.0
        %4496 = vmatprep.subr.mxu0 0.0
        %4497 = vmatpush1.xpose.msra.mxu0 0.0
        %4498 = vmatprep.subr.mxu0 0.0
        %4499 = vmatpush1.xpose.msra.mxu0 0.0
        %4500 = vmatprep.subr.mxu0 0.0
        %4501 = vmatpush1.xpose.msra.mxu0 0.0
        %4502 = vmatprep.subr.mxu0 0.0
        %4503 = vmatpush1.xpose.msra.mxu0 0.0
        %4504 = vmatprep.subr.mxu0 0.0
        %4505 = vmatpush1.xpose.msra.mxu0 0.0
        %4506 = vmatprep.subr.mxu0 0.0
        %4507 = vmatpush1.xpose.msra.mxu0 0.0
        %4508 = vmatprep.subr.mxu0 0.0
        %4509 = vmatpush1.xpose.msra.mxu0 0.0
        %4510 = vmatprep.subr.mxu0 0.0
        %4511 = vmatpush1.xpose.msra.mxu0 0.0
        %4512 = vmatprep.subr.mxu0 0.0
        %4513 = vmatpush1.xpose.msra.mxu0 0.0
        %4514 = vmatprep.subr.mxu0 0.0
        %4515 = vmatpush1.xpose.msra.mxu0 0.0
        %4516 = vmatprep.subr.mxu0 0.0
        %4517 = vmatpush1.xpose.msra.mxu0 0.0
        %4518 = vmatprep.subr.mxu0 0.0
        %4519 = vmatpush1.xpose.msra.mxu0 0.0
        %4520 = vmatprep.subr.mxu0 0.0
        %4521 = vmatpush1.xpose.msra.mxu0 0.0
        %4522 = vmatprep.subr.mxu0 0.0
        %4523 = vmatpush1.xpose.msra.mxu0 0.0
        %4524 = vmatprep.subr.mxu0 0.0
        %4525 = vmatpush1.xpose.msra.mxu0 0.0
        %4526 = vmatprep.subr.mxu0 0.0
        %4527 = vmatpush1.xpose.msra.mxu0 0.0
        %4528 = vmatprep.subr.mxu0 0.0
        %4529 = vmatpush1.xpose.msra.mxu0 0.0
        %4530 = vmatprep.mubr.f32.mxu0 0.0
        %v4531 = vand.u32 %v4087, 4294901760
        %4532 = vmatmul.mubr.f32.gmra.mrb[0].mxu0 %v4531
        %v4533 = vpop.f32.mrb[0].mxu0
        %v4534 = vadd.f32 %v4462, %v4533
        %v4535 = vpop.f32.mrb[0].mxu0
        %4536 = vdwg.mxu0
        %v4537 = vsel %vm2037, %v4534, -inf
        %4538 = vmax.xlane.f32.xlu0 %v4537
        %v4539 = vpop.xlane.xlu0 %4538
        %v4540 = vsub.f32 %v4534, %v4539
        %v4541 = vmul.f32 %v4540, 1.442695
        %v4542 = vpow.pop %v4541
        %v4543 = vsel %vm2037, %v4542, 0.0
        %4544 = vadd.xlane.f32.xlu0 %v4543
        %v4545 = vpop.xlane.xlu0 %4544
        %v4546 = vrcp.pop %v4545
        %v4547 = vmul.f32 %v4542, %v4546
        %4548 = vrot.lane.b32.xlu0 %v4081, 64
        %v4549 = vpop.permute.xlu0 %4548
        %v4552 = vsel %vm2037, %v4547, 0
        %4554 = vmatprep.subr.mxu0 0.0
        %v4555 = vand.u32 %v4549, 4294901760
        %4556 = vmatpush1.msra.mxu0 %v4555
        %4557 = vmatprep.subr.mxu0 0.0
        %4558 = vmatpush1.msra.mxu0 0.0
        %4559 = vmatprep.subr.mxu0 0.0
        %4560 = vmatpush1.msra.mxu0 0.0
        %4561 = vmatprep.subr.mxu0 0.0
        %4562 = vmatpush1.msra.mxu0 0.0
        %4563 = vmatprep.subr.mxu0 0.0
        %4564 = vmatpush1.msra.mxu0 0.0
        %4565 = vmatprep.subr.mxu0 0.0
        %4566 = vmatpush1.msra.mxu0 0.0
        %4567 = vmatprep.subr.mxu0 0.0
        %4568 = vmatpush1.msra.mxu0 0.0
        %4569 = vmatprep.subr.mxu0 0.0
        %4570 = vmatpush1.msra.mxu0 0.0
        %4571 = vmatprep.subr.mxu0 0.0
        %4572 = vmatpush1.msra.mxu0 0.0
        %4573 = vmatprep.subr.mxu0 0.0
        %4574 = vmatpush1.msra.mxu0 0.0
        %4575 = vmatprep.subr.mxu0 0.0
        %4576 = vmatpush1.msra.mxu0 0.0
        %4577 = vmatprep.subr.mxu0 0.0
        %4578 = vmatpush1.msra.mxu0 0.0
        %4579 = vmatprep.subr.mxu0 0.0
        %4580 = vmatpush1.msra.mxu0 0.0
        %4581 = vmatprep.subr.mxu0 0.0
        %4582 = vmatpush1.msra.mxu0 0.0
        %4583 = vmatprep.subr.mxu0 0.0
        %4584 = vmatpush1.msra.mxu0 0.0
        %4585 = vmatprep.subr.mxu0 0.0
        %4586 = vmatpush1.msra.mxu0 0.0
        %4587 = vmatprep.subr.mxu0 0.0
        %4588 = vmatpush1.msra.mxu0 0.0
        %4589 = vmatprep.subr.mxu0 0.0
        %4590 = vmatpush1.msra.mxu0 0.0
        %4591 = vmatprep.subr.mxu0 0.0
        %4592 = vmatpush1.msra.mxu0 0.0
        %4593 = vmatprep.subr.mxu0 0.0
        %4594 = vmatpush1.msra.mxu0 0.0
        %4595 = vmatprep.subr.mxu0 0.0
        %4596 = vmatpush1.msra.mxu0 0.0
        %4597 = vmatprep.subr.mxu0 0.0
        %4598 = vmatpush1.msra.mxu0 0.0
        %4599 = vmatprep.subr.mxu0 0.0
        %4600 = vmatpush1.msra.mxu0 0.0
        %4601 = vmatprep.subr.mxu0 0.0
        %4602 = vmatpush1.msra.mxu0 0.0
        %4603 = vmatprep.subr.mxu0 0.0
        %4604 = vmatpush1.msra.mxu0 0.0
        %4605 = vmatprep.subr.mxu0 0.0
        %4606 = vmatpush1.msra.mxu0 0.0
        %4607 = vmatprep.subr.mxu0 0.0
        %4608 = vmatpush1.msra.mxu0 0.0
        %4609 = vmatprep.subr.mxu0 0.0
        %4610 = vmatpush1.msra.mxu0 0.0
        %4611 = vmatprep.subr.mxu0 0.0
        %4612 = vmatpush1.msra.mxu0 0.0
        %4613 = vmatprep.subr.mxu0 0.0
        %4614 = vmatpush1.msra.mxu0 0.0
        %4615 = vmatprep.subr.mxu0 0.0
        %4616 = vmatpush1.msra.mxu0 0.0
        %4617 = vmatprep.subr.mxu0 0.0
        %4618 = vmatpush1.msra.mxu0 0.0
        %4619 = vmatprep.mubr.f32.mxu0 0.0
        %v4620 = vand.u32 %v4552, 4294901760
        %v4621 = vsub.f32 %v4552, %v4620
        %v4622 = vand.u32 %v4621, 4294901760
        %v4623 = vsub.f32 %v4621, %v4622
        %v4624 = vand.u32 %v4623, 4294901760
        %4625 = vmatmul.mubr.f32.gmra.mrb[0].mxu0 %v4624
        %v4626 = vpop.f32.mrb[0].mxu0
        %v4627 = vadd.f32 %v3582, %v4626
        %v4628 = vpop.f32.mrb[0].mxu0
        %4629 = vdwg.mxu0
        %4630 = vmatprep.subr.mxu0 0.0
        %v4631 = vand.u32 %v4549, 4294901760
        %v4632 = vsub.f32 %v4549, %v4631
        %v4633 = vand.u32 %v4632, 4294901760
        %v4634 = vsub.f32 %v4632, %v4633
        %v4635 = vand.u32 %v4634, 4294901760
        %4636 = vmatpush1.msra.mxu0 %v4635
        %4637 = vmatprep.subr.mxu0 0.0
        %4638 = vmatpush1.msra.mxu0 0.0
        %4639 = vmatprep.subr.mxu0 0.0
        %4640 = vmatpush1.msra.mxu0 0.0
        %4641 = vmatprep.subr.mxu0 0.0
        %4642 = vmatpush1.msra.mxu0 0.0
        %4643 = vmatprep.subr.mxu0 0.0
        %4644 = vmatpush1.msra.mxu0 0.0
        %4645 = vmatprep.subr.mxu0 0.0
        %4646 = vmatpush1.msra.mxu0 0.0
        %4647 = vmatprep.subr.mxu0 0.0
        %4648 = vmatpush1.msra.mxu0 0.0
        %4649 = vmatprep.subr.mxu0 0.0
        %4650 = vmatpush1.msra.mxu0 0.0
        %4651 = vmatprep.subr.mxu0 0.0
        %4652 = vmatpush1.msra.mxu0 0.0
        %4653 = vmatprep.subr.mxu0 0.0
        %4654 = vmatpush1.msra.mxu0 0.0
        %4655 = vmatprep.subr.mxu0 0.0
        %4656 = vmatpush1.msra.mxu0 0.0
        %4657 = vmatprep.subr.mxu0 0.0
        %4658 = vmatpush1.msra.mxu0 0.0
        %4659 = vmatprep.subr.mxu0 0.0
        %4660 = vmatpush1.msra.mxu0 0.0
        %4661 = vmatprep.subr.mxu0 0.0
        %4662 = vmatpush1.msra.mxu0 0.0
        %4663 = vmatprep.subr.mxu0 0.0
        %4664 = vmatpush1.msra.mxu0 0.0
        %4665 = vmatprep.subr.mxu0 0.0
        %4666 = vmatpush1.msra.mxu0 0.0
        %4667 = vmatprep.subr.mxu0 0.0
        %4668 = vmatpush1.msra.mxu0 0.0
        %4669 = vmatprep.subr.mxu0 0.0
        %4670 = vmatpush1.msra.mxu0 0.0
        %4671 = vmatprep.subr.mxu0 0.0
        %4672 = vmatpush1.msra.mxu0 0.0
        %4673 = vmatprep.subr.mxu0 0.0
        %4674 = vmatpush1.msra.mxu0 0.0
        %4675 = vmatprep.subr.mxu0 0.0
        %4676 = vmatpush1.msra.mxu0 0.0
        %4677 = vmatprep.subr.mxu0 0.0
        %4678 = vmatpush1.msra.mxu0 0.0
        %4679 = vmatprep.subr.mxu0 0.0
        %4680 = vmatpush1.msra.mxu0 0.0
        %4681 = vmatprep.subr.mxu0 0.0
        %4682 = vmatpush1.msra.mxu0 0.0
        %4683 = vmatprep.subr.mxu0 0.0
        %4684 = vmatpush1.msra.mxu0 0.0
        %4685 = vmatprep.subr.mxu0 0.0
        %4686 = vmatpush1.msra.mxu0 0.0
        %4687 = vmatprep.subr.mxu0 0.0
        %4688 = vmatpush1.msra.mxu0 0.0
        %4689 = vmatprep.subr.mxu0 0.0
        %4690 = vmatpush1.msra.mxu0 0.0
        %4691 = vmatprep.subr.mxu0 0.0
        %4692 = vmatpush1.msra.mxu0 0.0
        %4693 = vmatprep.subr.mxu0 0.0
        %4694 = vmatpush1.msra.mxu0 0.0
        %4695 = vmatprep.subr.mxu0 0.0
        %4696 = vmatpush1.msra.mxu0 0.0
        %4697 = vmatprep.subr.mxu0 0.0
        %4698 = vmatpush1.msra.mxu0 0.0
        %4699 = vmatprep.mubr.f32.mxu0 0.0
        %v4700 = vand.u32 %v4552, 4294901760
        %4701 = vmatmul.mubr.f32.gmra.mrb[0].mxu0 %v4700
        %v4702 = vpop.f32.mrb[0].mxu0
        %v4703 = vadd.f32 %v4627, %v4702
        %v4704 = vpop.f32.mrb[0].mxu0
        %4705 = vdwg.mxu0
        %4706 = vmatprep.subr.mxu0 0.0
        %v4707 = vand.u32 %v4549, 4294901760
        %v4708 = vsub.f32 %v4549, %v4707
        %4709 = vmatpush1.msra.mxu0 %v4708
        %4710 = vmatprep.subr.mxu0 0.0
        %4711 = vmatpush1.msra.mxu0 0.0
        %4712 = vmatprep.subr.mxu0 0.0
        %4713 = vmatpush1.msra.mxu0 0.0
        %4714 = vmatprep.subr.mxu0 0.0
        %4715 = vmatpush1.msra.mxu0 0.0
        %4716 = vmatprep.subr.mxu0 0.0
        %4717 = vmatpush1.msra.mxu0 0.0
        %4718 = vmatprep.subr.mxu0 0.0
        %4719 = vmatpush1.msra.mxu0 0.0
        %4720 = vmatprep.subr.mxu0 0.0
        %4721 = vmatpush1.msra.mxu0 0.0
        %4722 = vmatprep.subr.mxu0 0.0
        %4723 = vmatpush1.msra.mxu0 0.0
        %4724 = vmatprep.subr.mxu0 0.0
        %4725 = vmatpush1.msra.mxu0 0.0
        %4726 = vmatprep.subr.mxu0 0.0
        %4727 = vmatpush1.msra.mxu0 0.0
        %4728 = vmatprep.subr.mxu0 0.0
        %4729 = vmatpush1.msra.mxu0 0.0
        %4730 = vmatprep.subr.mxu0 0.0
        %4731 = vmatpush1.msra.mxu0 0.0
        %4732 = vmatprep.subr.mxu0 0.0
        %4733 = vmatpush1.msra.mxu0 0.0
        %4734 = vmatprep.subr.mxu0 0.0
        %4735 = vmatpush1.msra.mxu0 0.0
        %4736 = vmatprep.subr.mxu0 0.0
        %4737 = vmatpush1.msra.mxu0 0.0
        %4738 = vmatprep.subr.mxu0 0.0
        %4739 = vmatpush1.msra.mxu0 0.0
        %4740 = vmatprep.subr.mxu0 0.0
        %4741 = vmatpush1.msra.mxu0 0.0
        %4742 = vmatprep.subr.mxu0 0.0
        %4743 = vmatpush1.msra.mxu0 0.0
        %4744 = vmatprep.subr.mxu0 0.0
        %4745 = vmatpush1.msra.mxu0 0.0
        %4746 = vmatprep.subr.mxu0 0.0
        %4747 = vmatpush1.msra.mxu0 0.0
        %4748 = vmatprep.subr.mxu0 0.0
        %4749 = vmatpush1.msra.mxu0 0.0
        %4750 = vmatprep.subr.mxu0 0.0
        %4751 = vmatpush1.msra.mxu0 0.0
        %4752 = vmatprep.subr.mxu0 0.0
        %4753 = vmatpush1.msra.mxu0 0.0
        %4754 = vmatprep.subr.mxu0 0.0
        %4755 = vmatpush1.msra.mxu0 0.0
        %4756 = vmatprep.subr.mxu0 0.0
        %4757 = vmatpush1.msra.mxu0 0.0
        %4758 = vmatprep.subr.mxu0 0.0
        %4759 = vmatpush1.msra.mxu0 0.0
        %4760 = vmatprep.subr.mxu0 0.0
        %4761 = vmatpush1.msra.mxu0 0.0
        %4762 = vmatprep.subr.mxu0 0.0
        %4763 = vmatpush1.msra.mxu0 0.0
        %4764 = vmatprep.subr.mxu0 0.0
        %4765 = vmatpush1.msra.mxu0 0.0
        %4766 = vmatprep.subr.mxu0 0.0
        %4767 = vmatpush1.msra.mxu0 0.0
        %4768 = vmatprep.subr.mxu0 0.0
        %4769 = vmatpush1.msra.mxu0 0.0
        %4770 = vmatprep.subr.mxu0 0.0
        %4771 = vmatpush1.msra.mxu0 0.0
        %4772 = vmatprep.mubr.f32.mxu0 0.0
        %v4773 = vand.u32 %v4552, 4294901760
        %v4774 = vsub.f32 %v4552, %v4773
        %4775 = vmatmul.mubr.f32.gmra.mrb[0].mxu0 %v4774
        %v4776 = vpop.f32.mrb[0].mxu0
        %v4777 = vadd.f32 %v4703, %v4776
        %v4778 = vpop.f32.mrb[0].mxu0
        %4779 = vdwg.mxu0
        %4780 = vmatprep.subr.mxu0 0.0
        %v4781 = vand.u32 %v4549, 4294901760
        %4782 = vmatpush1.msra.mxu0 %v4781
        %4783 = vmatprep.subr.mxu0 0.0
        %4784 = vmatpush1.msra.mxu0 0.0
        %4785 = vmatprep.subr.mxu0 0.0
        %4786 = vmatpush1.msra.mxu0 0.0
        %4787 = vmatprep.subr.mxu0 0.0
        %4788 = vmatpush1.msra.mxu0 0.0
        %4789 = vmatprep.subr.mxu0 0.0
        %4790 = vmatpush1.msra.mxu0 0.0
        %4791 = vmatprep.subr.mxu0 0.0
        %4792 = vmatpush1.msra.mxu0 0.0
        %4793 = vmatprep.subr.mxu0 0.0
        %4794 = vmatpush1.msra.mxu0 0.0
        %4795 = vmatprep.subr.mxu0 0.0
        %4796 = vmatpush1.msra.mxu0 0.0
        %4797 = vmatprep.subr.mxu0 0.0
        %4798 = vmatpush1.msra.mxu0 0.0
        %4799 = vmatprep.subr.mxu0 0.0
        %4800 = vmatpush1.msra.mxu0 0.0
        %4801 = vmatprep.subr.mxu0 0.0
        %4802 = vmatpush1.msra.mxu0 0.0
        %4803 = vmatprep.subr.mxu0 0.0
        %4804 = vmatpush1.msra.mxu0 0.0
        %4805 = vmatprep.subr.mxu0 0.0
        %4806 = vmatpush1.msra.mxu0 0.0
        %4807 = vmatprep.subr.mxu0 0.0
        %4808 = vmatpush1.msra.mxu0 0.0
        %4809 = vmatprep.subr.mxu0 0.0
        %4810 = vmatpush1.msra.mxu0 0.0
        %4811 = vmatprep.subr.mxu0 0.0
        %4812 = vmatpush1.msra.mxu0 0.0
        %4813 = vmatprep.subr.mxu0 0.0
        %4814 = vmatpush1.msra.mxu0 0.0
        %4815 = vmatprep.subr.mxu0 0.0
        %4816 = vmatpush1.msra.mxu0 0.0
        %4817 = vmatprep.subr.mxu0 0.0
        %4818 = vmatpush1.msra.mxu0 0.0
        %4819 = vmatprep.subr.mxu0 0.0
        %4820 = vmatpush1.msra.mxu0 0.0
        %4821 = vmatprep.subr.mxu0 0.0
        %4822 = vmatpush1.msra.mxu0 0.0
        %4823 = vmatprep.subr.mxu0 0.0
        %4824 = vmatpush1.msra.mxu0 0.0
        %4825 = vmatprep.subr.mxu0 0.0
        %4826 = vmatpush1.msra.mxu0 0.0
        %4827 = vmatprep.subr.mxu0 0.0
        %4828 = vmatpush1.msra.mxu0 0.0
        %4829 = vmatprep.subr.mxu0 0.0
        %4830 = vmatpush1.msra.mxu0 0.0
        %4831 = vmatprep.subr.mxu0 0.0
        %4832 = vmatpush1.msra.mxu0 0.0
        %4833 = vmatprep.subr.mxu0 0.0
        %4834 = vmatpush1.msra.mxu0 0.0
        %4835 = vmatprep.subr.mxu0 0.0
        %4836 = vmatpush1.msra.mxu0 0.0
        %4837 = vmatprep.subr.mxu0 0.0
        %4838 = vmatpush1.msra.mxu0 0.0
        %4839 = vmatprep.subr.mxu0 0.0
        %4840 = vmatpush1.msra.mxu0 0.0
        %4841 = vmatprep.subr.mxu0 0.0
        %4842 = vmatpush1.msra.mxu0 0.0
        %4843 = vmatprep.subr.mxu0 0.0
        %4844 = vmatpush1.msra.mxu0 0.0
        %4845 = vmatprep.mubr.f32.mxu0 0.0
        %v4846 = vand.u32 %v4552, 4294901760
        %v4847 = vsub.f32 %v4552, %v4846
        %v4848 = vand.u32 %v4847, 4294901760
        %4849 = vmatmul.mubr.f32.gmra.mrb[0].mxu0 %v4848
        %v4850 = vpop.f32.mrb[0].mxu0
        %v4851 = vadd.f32 %v4777, %v4850
        %v4852 = vpop.f32.mrb[0].mxu0
        %4853 = vdwg.mxu0
        %4854 = vmatprep.subr.mxu0 0.0
        %v4855 = vand.u32 %v4549, 4294901760
        %v4856 = vsub.f32 %v4549, %v4855
        %v4857 = vand.u32 %v4856, 4294901760
        %4858 = vmatpush1.msra.mxu0 %v4857
        %4859 = vmatprep.subr.mxu0 0.0
        %4860 = vmatpush1.msra.mxu0 0.0
        %4861 = vmatprep.subr.mxu0 0.0
        %4862 = vmatpush1.msra.mxu0 0.0
        %4863 = vmatprep.subr.mxu0 0.0
        %4864 = vmatpush1.msra.mxu0 0.0
        %4865 = vmatprep.subr.mxu0 0.0
        %4866 = vmatpush1.msra.mxu0 0.0
        %4867 = vmatprep.subr.mxu0 0.0
        %4868 = vmatpush1.msra.mxu0 0.0
        %4869 = vmatprep.subr.mxu0 0.0
        %4870 = vmatpush1.msra.mxu0 0.0
        %4871 = vmatprep.subr.mxu0 0.0
        %4872 = vmatpush1.msra.mxu0 0.0
        %4873 = vmatprep.subr.mxu0 0.0
        %4874 = vmatpush1.msra.mxu0 0.0
        %4875 = vmatprep.subr.mxu0 0.0
        %4876 = vmatpush1.msra.mxu0 0.0
        %4877 = vmatprep.subr.mxu0 0.0
        %4878 = vmatpush1.msra.mxu0 0.0
        %4879 = vmatprep.subr.mxu0 0.0
        %4880 = vmatpush1.msra.mxu0 0.0
        %4881 = vmatprep.subr.mxu0 0.0
        %4882 = vmatpush1.msra.mxu0 0.0
        %4883 = vmatprep.subr.mxu0 0.0
        %4884 = vmatpush1.msra.mxu0 0.0
        %4885 = vmatprep.subr.mxu0 0.0
        %4886 = vmatpush1.msra.mxu0 0.0
        %4887 = vmatprep.subr.mxu0 0.0
        %4888 = vmatpush1.msra.mxu0 0.0
        %4889 = vmatprep.subr.mxu0 0.0
        %4890 = vmatpush1.msra.mxu0 0.0
        %4891 = vmatprep.subr.mxu0 0.0
        %4892 = vmatpush1.msra.mxu0 0.0
        %4893 = vmatprep.subr.mxu0 0.0
        %4894 = vmatpush1.msra.mxu0 0.0
        %4895 = vmatprep.subr.mxu0 0.0
        %4896 = vmatpush1.msra.mxu0 0.0
        %4897 = vmatprep.subr.mxu0 0.0
        %4898 = vmatpush1.msra.mxu0 0.0
        %4899 = vmatprep.subr.mxu0 0.0
        %4900 = vmatpush1.msra.mxu0 0.0
        %4901 = vmatprep.subr.mxu0 0.0
        %4902 = vmatpush1.msra.mxu0 0.0
        %4903 = vmatprep.subr.mxu0 0.0
        %4904 = vmatpush1.msra.mxu0 0.0
        %4905 = vmatprep.subr.mxu0 0.0
        %4906 = vmatpush1.msra.mxu0 0.0
        %4907 = vmatprep.subr.mxu0 0.0
        %4908 = vmatpush1.msra.mxu0 0.0
        %4909 = vmatprep.subr.mxu0 0.0
        %4910 = vmatpush1.msra.mxu0 0.0
        %4911 = vmatprep.subr.mxu0 0.0
        %4912 = vmatpush1.msra.mxu0 0.0
        %4913 = vmatprep.subr.mxu0 0.0
        %4914 = vmatpush1.msra.mxu0 0.0
        %4915 = vmatprep.subr.mxu0 0.0
        %4916 = vmatpush1.msra.mxu0 0.0
        %4917 = vmatprep.subr.mxu0 0.0
        %4918 = vmatpush1.msra.mxu0 0.0
        %4919 = vmatprep.subr.mxu0 0.0
        %4920 = vmatpush1.msra.mxu0 0.0
        %4921 = vmatprep.mubr.f32.mxu0 0.0
        %v4922 = vand.u32 %v4552, 4294901760
        %4923 = vmatmul.mubr.f32.gmra.mrb[0].mxu0 %v4922
        %v4924 = vpop.f32.mrb[0].mxu0
        %v4925 = vadd.f32 %v4851, %v4924
        %v4926 = vpop.f32.mrb[0].mxu0
        %4927 = vdwg.mxu0
        %4928 = vmatprep.subr.mxu0 0.0
        %v4929 = vand.u32 %v4549, 4294901760
        %4930 = vmatpush1.msra.mxu0 %v4929
        %4931 = vmatprep.subr.mxu0 0.0
        %4932 = vmatpush1.msra.mxu0 0.0
        %4933 = vmatprep.subr.mxu0 0.0
        %4934 = vmatpush1.msra.mxu0 0.0
        %4935 = vmatprep.subr.mxu0 0.0
        %4936 = vmatpush1.msra.mxu0 0.0
        %4937 = vmatprep.subr.mxu0 0.0
        %4938 = vmatpush1.msra.mxu0 0.0
        %4939 = vmatprep.subr.mxu0 0.0
        %4940 = vmatpush1.msra.mxu0 0.0
        %4941 = vmatprep.subr.mxu0 0.0
        %4942 = vmatpush1.msra.mxu0 0.0
        %4943 = vmatprep.subr.mxu0 0.0
        %4944 = vmatpush1.msra.mxu0 0.0
        %4945 = vmatprep.subr.mxu0 0.0
        %4946 = vmatpush1.msra.mxu0 0.0
        %4947 = vmatprep.subr.mxu0 0.0
        %4948 = vmatpush1.msra.mxu0 0.0
        %4949 = vmatprep.subr.mxu0 0.0
        %4950 = vmatpush1.msra.mxu0 0.0
        %4951 = vmatprep.subr.mxu0 0.0
        %4952 = vmatpush1.msra.mxu0 0.0
        %4953 = vmatprep.subr.mxu0 0.0
        %4954 = vmatpush1.msra.mxu0 0.0
        %4955 = vmatprep.subr.mxu0 0.0
        %4956 = vmatpush1.msra.mxu0 0.0
        %4957 = vmatprep.subr.mxu0 0.0
        %4958 = vmatpush1.msra.mxu0 0.0
        %4959 = vmatprep.subr.mxu0 0.0
        %4960 = vmatpush1.msra.mxu0 0.0
        %4961 = vmatprep.subr.mxu0 0.0
        %4962 = vmatpush1.msra.mxu0 0.0
        %4963 = vmatprep.subr.mxu0 0.0
        %4964 = vmatpush1.msra.mxu0 0.0
        %4965 = vmatprep.subr.mxu0 0.0
        %4966 = vmatpush1.msra.mxu0 0.0
        %4967 = vmatprep.subr.mxu0 0.0
        %4968 = vmatpush1.msra.mxu0 0.0
        %4969 = vmatprep.subr.mxu0 0.0
        %4970 = vmatpush1.msra.mxu0 0.0
        %4971 = vmatprep.subr.mxu0 0.0
        %4972 = vmatpush1.msra.mxu0 0.0
        %4973 = vmatprep.subr.mxu0 0.0
        %4974 = vmatpush1.msra.mxu0 0.0
        %4975 = vmatprep.subr.mxu0 0.0
        %4976 = vmatpush1.msra.mxu0 0.0
        %4977 = vmatprep.subr.mxu0 0.0
        %4978 = vmatpush1.msra.mxu0 0.0
        %4979 = vmatprep.subr.mxu0 0.0
        %4980 = vmatpush1.msra.mxu0 0.0
        %4981 = vmatprep.subr.mxu0 0.0
        %4982 = vmatpush1.msra.mxu0 0.0
        %4983 = vmatprep.subr.mxu0 0.0
        %4984 = vmatpush1.msra.mxu0 0.0
        %4985 = vmatprep.subr.mxu0 0.0
        %4986 = vmatpush1.msra.mxu0 0.0
        %4987 = vmatprep.subr.mxu0 0.0
        %4988 = vmatpush1.msra.mxu0 0.0
        %4989 = vmatprep.subr.mxu0 0.0
        %4990 = vmatpush1.msra.mxu0 0.0
        %4991 = vmatprep.subr.mxu0 0.0
        %4992 = vmatpush1.msra.mxu0 0.0
        %4993 = vmatprep.mubr.f32.mxu0 0.0
        %v4994 = vand.u32 %v4552, 4294901760
        %4995 = vmatmul.mubr.f32.gmra.mrb[0].mxu0 %v4994
        %v4996 = vpop.f32.mrb[0].mxu0
        %v4997 = vadd.f32 %v4925, %v4996
        %v4998 = vpop.f32.mrb[0].mxu0
        %4999 = vdwg.mxu0
        %v5000 = vsel %vm1095, %v4997, 0.0
        %5001 = vadd.xlane.f32.xlu0 %v5000
        %v5002 = vpop.xlane.xlu0 %5001
        %v5003 = vrot.slane %v5002, 4
        %v5004 = vadd.f32 %v5002, %v5003
        %v5005 = vrot.slane %v5004, 2
        %v5006 = vadd.f32 %v5004, %v5005
        %v5007 = vrot.slane %v5006, 1
        %v5008 = vadd.f32 %v5006, %v5007
        %s5009 = vtos %v5008
        %v5010 = vrcp.pop 256.0
        %s5011 = vtos %v5010
        %s5012 = smul.f32 %s5009, %s5011
        %v5013 = vmul.f32 %v4997, %v4997
        %v5014 = vsel %vm1095, %v5013, 0.0
        %5015 = vadd.xlane.f32.xlu0 %v5014
        %v5016 = vpop.xlane.xlu0 %5015
        %v5017 = vrot.slane %v5016, 4
        %v5018 = vadd.f32 %v5016, %v5017
        %v5019 = vrot.slane %v5018, 2
        %v5020 = vadd.f32 %v5018, %v5019
        %v5021 = vrot.slane %v5020, 1
        %v5022 = vadd.f32 %v5020, %v5021
        %s5023 = vtos %v5022
        %v5024 = vrcp.pop 256.0
        %s5025 = vtos %v5024
        %s5026 = smul.f32 %s5023, %s5025
        %s5027 = smul.f32 %s5012, %s5012
        %s5028 = ssub.f32 %s5026, %s5027
        %s5029 = scalar_lea.vmem %s4, 8
        %v5030 = vld [vmem:[%s5029] sm:$0xff]
        %v5031 = vstv %s5012
        %v5032 = vsub.f32 %v4997, %v5031
        %s5033 = sadd.f32 %s5028, 1e-08
        %v5034 = vstv %s5033
        %v5035 = vrsqrt.pop %v5034
        %s5036 = vtos %v5035
        %v5037 = vstv %s5036
        %v5038 = vmul.f32 %v5032, %v5037
        %v5039 = vmul.f32 %v5030, %v5038
        %s5040 = scalar_lea.vmem %s5, 8
        %v5041 = vld [vmem:[%s5040] sm:$0xff]
        %v5042 = vadd.f32 %v5039, %v5041
        %s5043 = scalar_lea.vmem [#allocation8], 32
        %v5044 = vld [vmem:[%s5043] sm:$0xff]
        %v5045 = vld [vmem:[%s5043 + $0x8] sm:$0xff]
        %v5046 = vld [vmem:[%s5043 + $0x10] sm:$0xff]
        %v5047 = vld [vmem:[%s5043 + $0x18] sm:$0xff]
        %s5048 = scalar_lea.vmem [#allocation10], 1
        %v5049 = vld [vmem:[%s5048] sm:$0x1]
        %v5051 = vlaneseq
        %v5052 = vshrl.u32 %v5051, 7
        %v5053 = vsub.s32 0, %v5052
        %v5054 = vrot.slane %v5049, %v5053
        %v5057 = vsel %vm1095, %v5042, 0
        %5059 = vmatprep.subr.mxu0 0.0
        %v5060 = vand.u32 %v5044, 4294901760
        %5061 = vmatpush1.msra.mxu0 %v5060
        %5062 = vmatprep.subr.mxu0 0.0
        %v5063 = vand.u32 %v5045, 4294901760
        %5064 = vmatpush1.msra.mxu0 %v5063
        %5065 = vmatprep.subr.mxu0 0.0
        %v5066 = vand.u32 %v5046, 4294901760
        %5067 = vmatpush1.msra.mxu0 %v5066
        %5068 = vmatprep.subr.mxu0 0.0
        %v5069 = vand.u32 %v5047, 4294901760
        %5070 = vmatpush1.msra.mxu0 %v5069
        %5071 = vmatprep.subr.mxu0 0.0
        %5072 = vmatpush1.msra.mxu0 0.0
        %5073 = vmatprep.subr.mxu0 0.0
        %5074 = vmatpush1.msra.mxu0 0.0
        %5075 = vmatprep.subr.mxu0 0.0
        %5076 = vmatpush1.msra.mxu0 0.0
        %5077 = vmatprep.subr.mxu0 0.0
        %5078 = vmatpush1.msra.mxu0 0.0
        %5079 = vmatprep.subr.mxu0 0.0
        %5080 = vmatpush1.msra.mxu0 0.0
        %5081 = vmatprep.subr.mxu0 0.0
        %5082 = vmatpush1.msra.mxu0 0.0
        %5083 = vmatprep.subr.mxu0 0.0
        %5084 = vmatpush1.msra.mxu0 0.0
        %5085 = vmatprep.subr.mxu0 0.0
        %5086 = vmatpush1.msra.mxu0 0.0
        %5087 = vmatprep.subr.mxu0 0.0
        %5088 = vmatpush1.msra.mxu0 0.0
        %5089 = vmatprep.subr.mxu0 0.0
        %5090 = vmatpush1.msra.mxu0 0.0
        %5091 = vmatprep.subr.mxu0 0.0
        %5092 = vmatpush1.msra.mxu0 0.0
        %5093 = vmatprep.subr.mxu0 0.0
        %5094 = vmatpush1.msra.mxu0 0.0
        %5095 = vmatprep.subr.mxu0 0.0
        %5096 = vmatpush1.msra.mxu0 0.0
        %5097 = vmatprep.subr.mxu0 0.0
        %5098 = vmatpush1.msra.mxu0 0.0
        %5099 = vmatprep.subr.mxu0 0.0
        %5100 = vmatpush1.msra.mxu0 0.0
        %5101 = vmatprep.subr.mxu0 0.0
        %5102 = vmatpush1.msra.mxu0 0.0
        %5103 = vmatprep.subr.mxu0 0.0
        %5104 = vmatpush1.msra.mxu0 0.0
        %5105 = vmatprep.subr.mxu0 0.0
        %5106 = vmatpush1.msra.mxu0 0.0
        %5107 = vmatprep.subr.mxu0 0.0
        %5108 = vmatpush1.msra.mxu0 0.0
        %5109 = vmatprep.subr.mxu0 0.0
        %5110 = vmatpush1.msra.mxu0 0.0
        %5111 = vmatprep.subr.mxu0 0.0
        %5112 = vmatpush1.msra.mxu0 0.0
        %5113 = vmatprep.subr.mxu0 0.0
        %5114 = vmatpush1.msra.mxu0 0.0
        %5115 = vmatprep.subr.mxu0 0.0
        %5116 = vmatpush1.msra.mxu0 0.0
        %5117 = vmatprep.subr.mxu0 0.0
        %5118 = vmatpush1.msra.mxu0 0.0
        %5119 = vmatprep.subr.mxu0 0.0
        %5120 = vmatpush1.msra.mxu0 0.0
        %5121 = vmatprep.subr.mxu0 0.0
        %5122 = vmatpush1.msra.mxu0 0.0
        %5123 = vmatprep.subr.mxu0 0.0
        %5124 = vmatpush1.msra.mxu0 0.0
        %5125 = vmatprep.subr.mxu0 0.0
        %5126 = vmatpush1.msra.mxu0 0.0
        %5127 = vmatprep.mubr.f32.mxu0 0.0
        %v5128 = vand.u32 %v5057, 4294901760
        %v5129 = vsub.f32 %v5057, %v5128
        %v5130 = vand.u32 %v5129, 4294901760
        %v5131 = vsub.f32 %v5129, %v5130
        %v5132 = vand.u32 %v5131, 4294901760
        %5133 = vmatmul.mubr.f32.gmra.mrb[0].mxu0 %v5132
        %v5134 = vpop.f32.mrb[0].mxu0
        %v5135 = vadd.f32 %v5054, %v5134
        %v5136 = vpop.f32.mrb[0].mxu0
        %5137 = vdwg.mxu0
        %5138 = vmatprep.subr.mxu0 0.0
        %v5139 = vand.u32 %v5044, 4294901760
        %v5140 = vsub.f32 %v5044, %v5139
        %v5141 = vand.u32 %v5140, 4294901760
        %v5142 = vsub.f32 %v5140, %v5141
        %v5143 = vand.u32 %v5142, 4294901760
        %5144 = vmatpush1.msra.mxu0 %v5143
        %5145 = vmatprep.subr.mxu0 0.0
        %v5146 = vand.u32 %v5045, 4294901760
        %v5147 = vsub.f32 %v5045, %v5146
        %v5148 = vand.u32 %v5147, 4294901760
        %v5149 = vsub.f32 %v5147, %v5148
        %v5150 = vand.u32 %v5149, 4294901760
        %5151 = vmatpush1.msra.mxu0 %v5150
        %5152 = vmatprep.subr.mxu0 0.0
        %v5153 = vand.u32 %v5046, 4294901760
        %v5154 = vsub.f32 %v5046, %v5153
        %v5155 = vand.u32 %v5154, 4294901760
        %v5156 = vsub.f32 %v5154, %v5155
        %v5157 = vand.u32 %v5156, 4294901760
        %5158 = vmatpush1.msra.mxu0 %v5157
        %5159 = vmatprep.subr.mxu0 0.0
        %v5160 = vand.u32 %v5047, 4294901760
        %v5161 = vsub.f32 %v5047, %v5160
        %v5162 = vand.u32 %v5161, 4294901760
        %v5163 = vsub.f32 %v5161, %v5162
        %v5164 = vand.u32 %v5163, 4294901760
        %5165 = vmatpush1.msra.mxu0 %v5164
        %5166 = vmatprep.subr.mxu0 0.0
        %5167 = vmatpush1.msra.mxu0 0.0
        %5168 = vmatprep.subr.mxu0 0.0
        %5169 = vmatpush1.msra.mxu0 0.0
        %5170 = vmatprep.subr.mxu0 0.0
        %5171 = vmatpush1.msra.mxu0 0.0
        %5172 = vmatprep.subr.mxu0 0.0
        %5173 = vmatpush1.msra.mxu0 0.0
        %5174 = vmatprep.subr.mxu0 0.0
        %5175 = vmatpush1.msra.mxu0 0.0
        %5176 = vmatprep.subr.mxu0 0.0
        %5177 = vmatpush1.msra.mxu0 0.0
        %5178 = vmatprep.subr.mxu0 0.0
        %5179 = vmatpush1.msra.mxu0 0.0
        %5180 = vmatprep.subr.mxu0 0.0
        %5181 = vmatpush1.msra.mxu0 0.0
        %5182 = vmatprep.subr.mxu0 0.0
        %5183 = vmatpush1.msra.mxu0 0.0
        %5184 = vmatprep.subr.mxu0 0.0
        %5185 = vmatpush1.msra.mxu0 0.0
        %5186 = vmatprep.subr.mxu0 0.0
        %5187 = vmatpush1.msra.mxu0 0.0
        %5188 = vmatprep.subr.mxu0 0.0
        %5189 = vmatpush1.msra.mxu0 0.0
        %5190 = vmatprep.subr.mxu0 0.0
        %5191 = vmatpush1.msra.mxu0 0.0
        %5192 = vmatprep.subr.mxu0 0.0
        %5193 = vmatpush1.msra.mxu0 0.0
        %5194 = vmatprep.subr.mxu0 0.0
        %5195 = vmatpush1.msra.mxu0 0.0
        %5196 = vmatprep.subr.mxu0 0.0
        %5197 = vmatpush1.msra.mxu0 0.0
        %5198 = vmatprep.subr.mxu0 0.0
        %5199 = vmatpush1.msra.mxu0 0.0
        %5200 = vmatprep.subr.mxu0 0.0
        %5201 = vmatpush1.msra.mxu0 0.0
        %5202 = vmatprep.subr.mxu0 0.0
        %5203 = vmatpush1.msra.mxu0 0.0
        %5204 = vmatprep.subr.mxu0 0.0
        %5205 = vmatpush1.msra.mxu0 0.0
        %5206 = vmatprep.subr.mxu0 0.0
        %5207 = vmatpush1.msra.mxu0 0.0
        %5208 = vmatprep.subr.mxu0 0.0
        %5209 = vmatpush1.msra.mxu0 0.0
        %5210 = vmatprep.subr.mxu0 0.0
        %5211 = vmatpush1.msra.mxu0 0.0
        %5212 = vmatprep.subr.mxu0 0.0
        %5213 = vmatpush1.msra.mxu0 0.0
        %5214 = vmatprep.subr.mxu0 0.0
        %5215 = vmatpush1.msra.mxu0 0.0
        %5216 = vmatprep.subr.mxu0 0.0
        %5217 = vmatpush1.msra.mxu0 0.0
        %5218 = vmatprep.subr.mxu0 0.0
        %5219 = vmatpush1.msra.mxu0 0.0
        %5220 = vmatprep.subr.mxu0 0.0
        %5221 = vmatpush1.msra.mxu0 0.0
        %5222 = vmatprep.mubr.f32.mxu0 0.0
        %v5223 = vand.u32 %v5057, 4294901760
        %5224 = vmatmul.mubr.f32.gmra.mrb[0].mxu0 %v5223
        %v5225 = vpop.f32.mrb[0].mxu0
        %v5226 = vadd.f32 %v5135, %v5225
        %v5227 = vpop.f32.mrb[0].mxu0
        %5228 = vdwg.mxu0
        %5229 = vmatprep.subr.mxu0 0.0
        %v5230 = vand.u32 %v5044, 4294901760
        %v5231 = vsub.f32 %v5044, %v5230
        %5232 = vmatpush1.msra.mxu0 %v5231
        %5233 = vmatprep.subr.mxu0 0.0
        %v5234 = vand.u32 %v5045, 4294901760
        %v5235 = vsub.f32 %v5045, %v5234
        %5236 = vmatpush1.msra.mxu0 %v5235
        %5237 = vmatprep.subr.mxu0 0.0
        %v5238 = vand.u32 %v5046, 4294901760
        %v5239 = vsub.f32 %v5046, %v5238
        %5240 = vmatpush1.msra.mxu0 %v5239
        %5241 = vmatprep.subr.mxu0 0.0
        %v5242 = vand.u32 %v5047, 4294901760
        %v5243 = vsub.f32 %v5047, %v5242
        %5244 = vmatpush1.msra.mxu0 %v5243
        %5245 = vmatprep.subr.mxu0 0.0
        %5246 = vmatpush1.msra.mxu0 0.0
        %5247 = vmatprep.subr.mxu0 0.0
        %5248 = vmatpush1.msra.mxu0 0.0
        %5249 = vmatprep.subr.mxu0 0.0
        %5250 = vmatpush1.msra.mxu0 0.0
        %5251 = vmatprep.subr.mxu0 0.0
        %5252 = vmatpush1.msra.mxu0 0.0
        %5253 = vmatprep.subr.mxu0 0.0
        %5254 = vmatpush1.msra.mxu0 0.0
        %5255 = vmatprep.subr.mxu0 0.0
        %5256 = vmatpush1.msra.mxu0 0.0
        %5257 = vmatprep.subr.mxu0 0.0
        %5258 = vmatpush1.msra.mxu0 0.0
        %5259 = vmatprep.subr.mxu0 0.0
        %5260 = vmatpush1.msra.mxu0 0.0
        %5261 = vmatprep.subr.mxu0 0.0
        %5262 = vmatpush1.msra.mxu0 0.0
        %5263 = vmatprep.subr.mxu0 0.0
        %5264 = vmatpush1.msra.mxu0 0.0
        %5265 = vmatprep.subr.mxu0 0.0
        %5266 = vmatpush1.msra.mxu0 0.0
        %5267 = vmatprep.subr.mxu0 0.0
        %5268 = vmatpush1.msra.mxu0 0.0
        %5269 = vmatprep.subr.mxu0 0.0
        %5270 = vmatpush1.msra.mxu0 0.0
        %5271 = vmatprep.subr.mxu0 0.0
        %5272 = vmatpush1.msra.mxu0 0.0
        %5273 = vmatprep.subr.mxu0 0.0
        %5274 = vmatpush1.msra.mxu0 0.0
        %5275 = vmatprep.subr.mxu0 0.0
        %5276 = vmatpush1.msra.mxu0 0.0
        %5277 = vmatprep.subr.mxu0 0.0
        %5278 = vmatpush1.msra.mxu0 0.0
        %5279 = vmatprep.subr.mxu0 0.0
        %5280 = vmatpush1.msra.mxu0 0.0
        %5281 = vmatprep.subr.mxu0 0.0
        %5282 = vmatpush1.msra.mxu0 0.0
        %5283 = vmatprep.subr.mxu0 0.0
        %5284 = vmatpush1.msra.mxu0 0.0
        %5285 = vmatprep.subr.mxu0 0.0
        %5286 = vmatpush1.msra.mxu0 0.0
        %5287 = vmatprep.subr.mxu0 0.0
        %5288 = vmatpush1.msra.mxu0 0.0
        %5289 = vmatprep.subr.mxu0 0.0
        %5290 = vmatpush1.msra.mxu0 0.0
        %5291 = vmatprep.subr.mxu0 0.0
        %5292 = vmatpush1.msra.mxu0 0.0
        %5293 = vmatprep.subr.mxu0 0.0
        %5294 = vmatpush1.msra.mxu0 0.0
        %5295 = vmatprep.subr.mxu0 0.0
        %5296 = vmatpush1.msra.mxu0 0.0
        %5297 = vmatprep.subr.mxu0 0.0
        %5298 = vmatpush1.msra.mxu0 0.0
        %5299 = vmatprep.subr.mxu0 0.0
        %5300 = vmatpush1.msra.mxu0 0.0
        %5301 = vmatprep.mubr.f32.mxu0 0.0
        %v5302 = vand.u32 %v5057, 4294901760
        %v5303 = vsub.f32 %v5057, %v5302
        %5304 = vmatmul.mubr.f32.gmra.mrb[0].mxu0 %v5303
        %v5305 = vpop.f32.mrb[0].mxu0
        %v5306 = vadd.f32 %v5226, %v5305
        %v5307 = vpop.f32.mrb[0].mxu0
        %5308 = vdwg.mxu0
        %5309 = vmatprep.subr.mxu0 0.0
        %v5310 = vand.u32 %v5044, 4294901760
        %5311 = vmatpush1.msra.mxu0 %v5310
        %5312 = vmatprep.subr.mxu0 0.0
        %v5313 = vand.u32 %v5045, 4294901760
        %5314 = vmatpush1.msra.mxu0 %v5313
        %5315 = vmatprep.subr.mxu0 0.0
        %v5316 = vand.u32 %v5046, 4294901760
        %5317 = vmatpush1.msra.mxu0 %v5316
        %5318 = vmatprep.subr.mxu0 0.0
        %v5319 = vand.u32 %v5047, 4294901760
        %5320 = vmatpush1.msra.mxu0 %v5319
        %5321 = vmatprep.subr.mxu0 0.0
        %5322 = vmatpush1.msra.mxu0 0.0
        %5323 = vmatprep.subr.mxu0 0.0
        %5324 = vmatpush1.msra.mxu0 0.0
        %5325 = vmatprep.subr.mxu0 0.0
        %5326 = vmatpush1.msra.mxu0 0.0
        %5327 = vmatprep.subr.mxu0 0.0
        %5328 = vmatpush1.msra.mxu0 0.0
        %5329 = vmatprep.subr.mxu0 0.0
        %5330 = vmatpush1.msra.mxu0 0.0
        %5331 = vmatprep.subr.mxu0 0.0
        %5332 = vmatpush1.msra.mxu0 0.0
        %5333 = vmatprep.subr.mxu0 0.0
        %5334 = vmatpush1.msra.mxu0 0.0
        %5335 = vmatprep.subr.mxu0 0.0
        %5336 = vmatpush1.msra.mxu0 0.0
        %5337 = vmatprep.subr.mxu0 0.0
        %5338 = vmatpush1.msra.mxu0 0.0
        %5339 = vmatprep.subr.mxu0 0.0
        %5340 = vmatpush1.msra.mxu0 0.0
        %5341 = vmatprep.subr.mxu0 0.0
        %5342 = vmatpush1.msra.mxu0 0.0
        %5343 = vmatprep.subr.mxu0 0.0
        %5344 = vmatpush1.msra.mxu0 0.0
        %5345 = vmatprep.subr.mxu0 0.0
        %5346 = vmatpush1.msra.mxu0 0.0
        %5347 = vmatprep.subr.mxu0 0.0
        %5348 = vmatpush1.msra.mxu0 0.0
        %5349 = vmatprep.subr.mxu0 0.0
        %5350 = vmatpush1.msra.mxu0 0.0
        %5351 = vmatprep.subr.mxu0 0.0
        %5352 = vmatpush1.msra.mxu0 0.0
        %5353 = vmatprep.subr.mxu0 0.0
        %5354 = vmatpush1.msra.mxu0 0.0
        %5355 = vmatprep.subr.mxu0 0.0
        %5356 = vmatpush1.msra.mxu0 0.0
        %5357 = vmatprep.subr.mxu0 0.0
        %5358 = vmatpush1.msra.mxu0 0.0
        %5359 = vmatprep.subr.mxu0 0.0
        %5360 = vmatpush1.msra.mxu0 0.0
        %5361 = vmatprep.subr.mxu0 0.0
        %5362 = vmatpush1.msra.mxu0 0.0
        %5363 = vmatprep.subr.mxu0 0.0
        %5364 = vmatpush1.msra.mxu0 0.0
        %5365 = vmatprep.subr.mxu0 0.0
        %5366 = vmatpush1.msra.mxu0 0.0
        %5367 = vmatprep.subr.mxu0 0.0
        %5368 = vmatpush1.msra.mxu0 0.0
        %5369 = vmatprep.subr.mxu0 0.0
        %5370 = vmatpush1.msra.mxu0 0.0
        %5371 = vmatprep.subr.mxu0 0.0
        %5372 = vmatpush1.msra.mxu0 0.0
        %5373 = vmatprep.subr.mxu0 0.0
        %5374 = vmatpush1.msra.mxu0 0.0
        %5375 = vmatprep.subr.mxu0 0.0
        %5376 = vmatpush1.msra.mxu0 0.0
        %5377 = vmatprep.mubr.f32.mxu0 0.0
        %v5378 = vand.u32 %v5057, 4294901760
        %v5379 = vsub.f32 %v5057, %v5378
        %v5380 = vand.u32 %v5379, 4294901760
        %5381 = vmatmul.mubr.f32.gmra.mrb[0].mxu0 %v5380
        %v5382 = vpop.f32.mrb[0].mxu0
        %v5383 = vadd.f32 %v5306, %v5382
        %v5384 = vpop.f32.mrb[0].mxu0
        %5385 = vdwg.mxu0
        %5386 = vmatprep.subr.mxu0 0.0
        %v5387 = vand.u32 %v5044, 4294901760
        %v5388 = vsub.f32 %v5044, %v5387
        %v5389 = vand.u32 %v5388, 4294901760
        %5390 = vmatpush1.msra.mxu0 %v5389
        %5391 = vmatprep.subr.mxu0 0.0
        %v5392 = vand.u32 %v5045, 4294901760
        %v5393 = vsub.f32 %v5045, %v5392
        %v5394 = vand.u32 %v5393, 4294901760
        %5395 = vmatpush1.msra.mxu0 %v5394
        %5396 = vmatprep.subr.mxu0 0.0
        %v5397 = vand.u32 %v5046, 4294901760
        %v5398 = vsub.f32 %v5046, %v5397
        %v5399 = vand.u32 %v5398, 4294901760
        %5400 = vmatpush1.msra.mxu0 %v5399
        %5401 = vmatprep.subr.mxu0 0.0
        %v5402 = vand.u32 %v5047, 4294901760
        %v5403 = vsub.f32 %v5047, %v5402
        %v5404 = vand.u32 %v5403, 4294901760
        %5405 = vmatpush1.msra.mxu0 %v5404
        %5406 = vmatprep.subr.mxu0 0.0
        %5407 = vmatpush1.msra.mxu0 0.0
        %5408 = vmatprep.subr.mxu0 0.0
        %5409 = vmatpush1.msra.mxu0 0.0
        %5410 = vmatprep.subr.mxu0 0.0
        %5411 = vmatpush1.msra.mxu0 0.0
        %5412 = vmatprep.subr.mxu0 0.0
        %5413 = vmatpush1.msra.mxu0 0.0
        %5414 = vmatprep.subr.mxu0 0.0
        %5415 = vmatpush1.msra.mxu0 0.0
        %5416 = vmatprep.subr.mxu0 0.0
        %5417 = vmatpush1.msra.mxu0 0.0
        %5418 = vmatprep.subr.mxu0 0.0
        %5419 = vmatpush1.msra.mxu0 0.0
        %5420 = vmatprep.subr.mxu0 0.0
        %5421 = vmatpush1.msra.mxu0 0.0
        %5422 = vmatprep.subr.mxu0 0.0
        %5423 = vmatpush1.msra.mxu0 0.0
        %5424 = vmatprep.subr.mxu0 0.0
        %5425 = vmatpush1.msra.mxu0 0.0
        %5426 = vmatprep.subr.mxu0 0.0
        %5427 = vmatpush1.msra.mxu0 0.0
        %5428 = vmatprep.subr.mxu0 0.0
        %5429 = vmatpush1.msra.mxu0 0.0
        %5430 = vmatprep.subr.mxu0 0.0
        %5431 = vmatpush1.msra.mxu0 0.0
        %5432 = vmatprep.subr.mxu0 0.0
        %5433 = vmatpush1.msra.mxu0 0.0
        %5434 = vmatprep.subr.mxu0 0.0
        %5435 = vmatpush1.msra.mxu0 0.0
        %5436 = vmatprep.subr.mxu0 0.0
        %5437 = vmatpush1.msra.mxu0 0.0
        %5438 = vmatprep.subr.mxu0 0.0
        %5439 = vmatpush1.msra.mxu0 0.0
        %5440 = vmatprep.subr.mxu0 0.0
        %5441 = vmatpush1.msra.mxu0 0.0
        %5442 = vmatprep.subr.mxu0 0.0
        %5443 = vmatpush1.msra.mxu0 0.0
        %5444 = vmatprep.subr.mxu0 0.0
        %5445 = vmatpush1.msra.mxu0 0.0
        %5446 = vmatprep.subr.mxu0 0.0
        %5447 = vmatpush1.msra.mxu0 0.0
        %5448 = vmatprep.subr.mxu0 0.0
        %5449 = vmatpush1.msra.mxu0 0.0
        %5450 = vmatprep.subr.mxu0 0.0
        %5451 = vmatpush1.msra.mxu0 0.0
        %5452 = vmatprep.subr.mxu0 0.0
        %5453 = vmatpush1.msra.mxu0 0.0
        %5454 = vmatprep.subr.mxu0 0.0
        %5455 = vmatpush1.msra.mxu0 0.0
        %5456 = vmatprep.subr.mxu0 0.0
        %5457 = vmatpush1.msra.mxu0 0.0
        %5458 = vmatprep.subr.mxu0 0.0
        %5459 = vmatpush1.msra.mxu0 0.0
        %5460 = vmatprep.subr.mxu0 0.0
        %5461 = vmatpush1.msra.mxu0 0.0
        %5462 = vmatprep.mubr.f32.mxu0 0.0
        %v5463 = vand.u32 %v5057, 4294901760
        %5464 = vmatmul.mubr.f32.gmra.mrb[0].mxu0 %v5463
        %v5465 = vpop.f32.mrb[0].mxu0
        %v5466 = vadd.f32 %v5383, %v5465
        %v5467 = vpop.f32.mrb[0].mxu0
        %5468 = vdwg.mxu0
        %5469 = vmatprep.subr.mxu0 0.0
        %v5470 = vand.u32 %v5044, 4294901760
        %5471 = vmatpush1.msra.mxu0 %v5470
        %5472 = vmatprep.subr.mxu0 0.0
        %v5473 = vand.u32 %v5045, 4294901760
        %5474 = vmatpush1.msra.mxu0 %v5473
        %5475 = vmatprep.subr.mxu0 0.0
        %v5476 = vand.u32 %v5046, 4294901760
        %5477 = vmatpush1.msra.mxu0 %v5476
        %5478 = vmatprep.subr.mxu0 0.0
        %v5479 = vand.u32 %v5047, 4294901760
        %5480 = vmatpush1.msra.mxu0 %v5479
        %5481 = vmatprep.subr.mxu0 0.0
        %5482 = vmatpush1.msra.mxu0 0.0
        %5483 = vmatprep.subr.mxu0 0.0
        %5484 = vmatpush1.msra.mxu0 0.0
        %5485 = vmatprep.subr.mxu0 0.0
        %5486 = vmatpush1.msra.mxu0 0.0
        %5487 = vmatprep.subr.mxu0 0.0
        %5488 = vmatpush1.msra.mxu0 0.0
        %5489 = vmatprep.subr.mxu0 0.0
        %5490 = vmatpush1.msra.mxu0 0.0
        %5491 = vmatprep.subr.mxu0 0.0
        %5492 = vmatpush1.msra.mxu0 0.0
        %5493 = vmatprep.subr.mxu0 0.0
        %5494 = vmatpush1.msra.mxu0 0.0
        %5495 = vmatprep.subr.mxu0 0.0
        %5496 = vmatpush1.msra.mxu0 0.0
        %5497 = vmatprep.subr.mxu0 0.0
        %5498 = vmatpush1.msra.mxu0 0.0
        %5499 = vmatprep.subr.mxu0 0.0
        %5500 = vmatpush1.msra.mxu0 0.0
        %5501 = vmatprep.subr.mxu0 0.0
        %5502 = vmatpush1.msra.mxu0 0.0
        %5503 = vmatprep.subr.mxu0 0.0
        %5504 = vmatpush1.msra.mxu0 0.0
        %5505 = vmatprep.subr.mxu0 0.0
        %5506 = vmatpush1.msra.mxu0 0.0
        %5507 = vmatprep.subr.mxu0 0.0
        %5508 = vmatpush1.msra.mxu0 0.0
        %5509 = vmatprep.subr.mxu0 0.0
        %5510 = vmatpush1.msra.mxu0 0.0
        %5511 = vmatprep.subr.mxu0 0.0
        %5512 = vmatpush1.msra.mxu0 0.0
        %5513 = vmatprep.subr.mxu0 0.0
        %5514 = vmatpush1.msra.mxu0 0.0
        %5515 = vmatprep.subr.mxu0 0.0
        %5516 = vmatpush1.msra.mxu0 0.0
        %5517 = vmatprep.subr.mxu0 0.0
        %5518 = vmatpush1.msra.mxu0 0.0
        %5519 = vmatprep.subr.mxu0 0.0
        %5520 = vmatpush1.msra.mxu0 0.0
        %5521 = vmatprep.subr.mxu0 0.0
        %5522 = vmatpush1.msra.mxu0 0.0
        %5523 = vmatprep.subr.mxu0 0.0
        %5524 = vmatpush1.msra.mxu0 0.0
        %5525 = vmatprep.subr.mxu0 0.0
        %5526 = vmatpush1.msra.mxu0 0.0
        %5527 = vmatprep.subr.mxu0 0.0
        %5528 = vmatpush1.msra.mxu0 0.0
        %5529 = vmatprep.subr.mxu0 0.0
        %5530 = vmatpush1.msra.mxu0 0.0
        %5531 = vmatprep.subr.mxu0 0.0
        %5532 = vmatpush1.msra.mxu0 0.0
        %5533 = vmatprep.subr.mxu0 0.0
        %5534 = vmatpush1.msra.mxu0 0.0
        %5535 = vmatprep.subr.mxu0 0.0
        %5536 = vmatpush1.msra.mxu0 0.0
        %5537 = vmatprep.mubr.f32.mxu0 0.0
        %v5538 = vand.u32 %v5057, 4294901760
        %5539 = vmatmul.mubr.f32.gmra.mrb[0].mxu0 %v5538
        %v5540 = vpop.f32.mrb[0].mxu0
        %v5541 = vadd.f32 %v5466, %v5540
        %v5542 = vpop.f32.mrb[0].mxu0
        %5543 = vdwg.mxu0
        %v5544 = vmax.f32 %v5541, 0.0
        %s5545 = scalar_lea.vmem [#allocation11], 32
        %v5546 = vld [vmem:[%s5545] sm:$0xff]
        %v5547 = vld [vmem:[%s5545 + $0x8] sm:$0xff]
        %v5548 = vld [vmem:[%s5545 + $0x10] sm:$0xff]
        %v5549 = vld [vmem:[%s5545 + $0x18] sm:$0xff]
        %s5550 = scalar_lea.vmem [#allocation13], 1
        %v5551 = vld [vmem:[%s5550] sm:$0x1]
        %v5553 = vlaneseq
        %v5554 = vshrl.u32 %v5553, 7
        %v5555 = vsub.s32 0, %v5554
        %v5556 = vrot.slane %v5551, %v5555
        %v5559 = vsel %vm1095, %v5544, 0
        %5561 = vmatprep.subr.mxu0 0.0
        %v5562 = vand.u32 %v5546, 4294901760
        %5563 = vmatpush1.msra.mxu0 %v5562
        %5564 = vmatprep.subr.mxu0 0.0
        %v5565 = vand.u32 %v5547, 4294901760
        %5566 = vmatpush1.msra.mxu0 %v5565
        %5567 = vmatprep.subr.mxu0 0.0
        %v5568 = vand.u32 %v5548, 4294901760
        %5569 = vmatpush1.msra.mxu0 %v5568
        %5570 = vmatprep.subr.mxu0 0.0
        %v5571 = vand.u32 %v5549, 4294901760
        %5572 = vmatpush1.msra.mxu0 %v5571
        %5573 = vmatprep.subr.mxu0 0.0
        %5574 = vmatpush1.msra.mxu0 0.0
        %5575 = vmatprep.subr.mxu0 0.0
        %5576 = vmatpush1.msra.mxu0 0.0
        %5577 = vmatprep.subr.mxu0 0.0
        %5578 = vmatpush1.msra.mxu0 0.0
        %5579 = vmatprep.subr.mxu0 0.0
        %5580 = vmatpush1.msra.mxu0 0.0
        %5581 = vmatprep.subr.mxu0 0.0
        %5582 = vmatpush1.msra.mxu0 0.0
        %5583 = vmatprep.subr.mxu0 0.0
        %5584 = vmatpush1.msra.mxu0 0.0
        %5585 = vmatprep.subr.mxu0 0.0
        %5586 = vmatpush1.msra.mxu0 0.0
        %5587 = vmatprep.subr.mxu0 0.0
        %5588 = vmatpush1.msra.mxu0 0.0
        %5589 = vmatprep.subr.mxu0 0.0
        %5590 = vmatpush1.msra.mxu0 0.0
        %5591 = vmatprep.subr.mxu0 0.0
        %5592 = vmatpush1.msra.mxu0 0.0
        %5593 = vmatprep.subr.mxu0 0.0
        %5594 = vmatpush1.msra.mxu0 0.0
        %5595 = vmatprep.subr.mxu0 0.0
        %5596 = vmatpush1.msra.mxu0 0.0
        %5597 = vmatprep.subr.mxu0 0.0
        %5598 = vmatpush1.msra.mxu0 0.0
        %5599 = vmatprep.subr.mxu0 0.0
        %5600 = vmatpush1.msra.mxu0 0.0
        %5601 = vmatprep.subr.mxu0 0.0
        %5602 = vmatpush1.msra.mxu0 0.0
        %5603 = vmatprep.subr.mxu0 0.0
        %5604 = vmatpush1.msra.mxu0 0.0
        %5605 = vmatprep.subr.mxu0 0.0
        %5606 = vmatpush1.msra.mxu0 0.0
        %5607 = vmatprep.subr.mxu0 0.0
        %5608 = vmatpush1.msra.mxu0 0.0
        %5609 = vmatprep.subr.mxu0 0.0
        %5610 = vmatpush1.msra.mxu0 0.0
        %5611 = vmatprep.subr.mxu0 0.0
        %5612 = vmatpush1.msra.mxu0 0.0
        %5613 = vmatprep.subr.mxu0 0.0
        %5614 = vmatpush1.msra.mxu0 0.0
        %5615 = vmatprep.subr.mxu0 0.0
        %5616 = vmatpush1.msra.mxu0 0.0
        %5617 = vmatprep.subr.mxu0 0.0
        %5618 = vmatpush1.msra.mxu0 0.0
        %5619 = vmatprep.subr.mxu0 0.0
        %5620 = vmatpush1.msra.mxu0 0.0
        %5621 = vmatprep.subr.mxu0 0.0
        %5622 = vmatpush1.msra.mxu0 0.0
        %5623 = vmatprep.subr.mxu0 0.0
        %5624 = vmatpush1.msra.mxu0 0.0
        %5625 = vmatprep.subr.mxu0 0.0
        %5626 = vmatpush1.msra.mxu0 0.0
        %5627 = vmatprep.subr.mxu0 0.0
        %5628 = vmatpush1.msra.mxu0 0.0
        %5629 = vmatprep.mubr.f32.mxu0 0.0
        %v5630 = vand.u32 %v5559, 4294901760
        %v5631 = vsub.f32 %v5559, %v5630
        %v5632 = vand.u32 %v5631, 4294901760
        %v5633 = vsub.f32 %v5631, %v5632
        %v5634 = vand.u32 %v5633, 4294901760
        %5635 = vmatmul.mubr.f32.gmra.mrb[0].mxu0 %v5634
        %v5636 = vpop.f32.mrb[0].mxu0
        %v5637 = vadd.f32 %v5556, %v5636
        %v5638 = vpop.f32.mrb[0].mxu0
        %5639 = vdwg.mxu0
        %5640 = vmatprep.subr.mxu0 0.0
        %v5641 = vand.u32 %v5546, 4294901760
        %v5642 = vsub.f32 %v5546, %v5641
        %v5643 = vand.u32 %v5642, 4294901760
        %v5644 = vsub.f32 %v5642, %v5643
        %v5645 = vand.u32 %v5644, 4294901760
        %5646 = vmatpush1.msra.mxu0 %v5645
        %5647 = vmatprep.subr.mxu0 0.0
        %v5648 = vand.u32 %v5547, 4294901760
        %v5649 = vsub.f32 %v5547, %v5648
        %v5650 = vand.u32 %v5649, 4294901760
        %v5651 = vsub.f32 %v5649, %v5650
        %v5652 = vand.u32 %v5651, 4294901760
        %5653 = vmatpush1.msra.mxu0 %v5652
        %5654 = vmatprep.subr.mxu0 0.0
        %v5655 = vand.u32 %v5548, 4294901760
        %v5656 = vsub.f32 %v5548, %v5655
        %v5657 = vand.u32 %v5656, 4294901760
        %v5658 = vsub.f32 %v5656, %v5657
        %v5659 = vand.u32 %v5658, 4294901760
        %5660 = vmatpush1.msra.mxu0 %v5659
        %5661 = vmatprep.subr.mxu0 0.0
        %v5662 = vand.u32 %v5549, 4294901760
        %v5663 = vsub.f32 %v5549, %v5662
        %v5664 = vand.u32 %v5663, 4294901760
        %v5665 = vsub.f32 %v5663, %v5664
        %v5666 = vand.u32 %v5665, 4294901760
        %5667 = vmatpush1.msra.mxu0 %v5666
        %5668 = vmatprep.subr.mxu0 0.0
        %5669 = vmatpush1.msra.mxu0 0.0
        %5670 = vmatprep.subr.mxu0 0.0
        %5671 = vmatpush1.msra.mxu0 0.0
        %5672 = vmatprep.subr.mxu0 0.0
        %5673 = vmatpush1.msra.mxu0 0.0
        %5674 = vmatprep.subr.mxu0 0.0
        %5675 = vmatpush1.msra.mxu0 0.0
        %5676 = vmatprep.subr.mxu0 0.0
        %5677 = vmatpush1.msra.mxu0 0.0
        %5678 = vmatprep.subr.mxu0 0.0
        %5679 = vmatpush1.msra.mxu0 0.0
        %5680 = vmatprep.subr.mxu0 0.0
        %5681 = vmatpush1.msra.mxu0 0.0
        %5682 = vmatprep.subr.mxu0 0.0
        %5683 = vmatpush1.msra.mxu0 0.0
        %5684 = vmatprep.subr.mxu0 0.0
        %5685 = vmatpush1.msra.mxu0 0.0
        %5686 = vmatprep.subr.mxu0 0.0
        %5687 = vmatpush1.msra.mxu0 0.0
        %5688 = vmatprep.subr.mxu0 0.0
        %5689 = vmatpush1.msra.mxu0 0.0
        %5690 = vmatprep.subr.mxu0 0.0
        %5691 = vmatpush1.msra.mxu0 0.0
        %5692 = vmatprep.subr.mxu0 0.0
        %5693 = vmatpush1.msra.mxu0 0.0
        %5694 = vmatprep.subr.mxu0 0.0
        %5695 = vmatpush1.msra.mxu0 0.0
        %5696 = vmatprep.subr.mxu0 0.0
        %5697 = vmatpush1.msra.mxu0 0.0
        %5698 = vmatprep.subr.mxu0 0.0
        %5699 = vmatpush1.msra.mxu0 0.0
        %5700 = vmatprep.subr.mxu0 0.0
        %5701 = vmatpush1.msra.mxu0 0.0
        %5702 = vmatprep.subr.mxu0 0.0
        %5703 = vmatpush1.msra.mxu0 0.0
        %5704 = vmatprep.subr.mxu0 0.0
        %5705 = vmatpush1.msra.mxu0 0.0
        %5706 = vmatprep.subr.mxu0 0.0
        %5707 = vmatpush1.msra.mxu0 0.0
        %5708 = vmatprep.subr.mxu0 0.0
        %5709 = vmatpush1.msra.mxu0 0.0
        %5710 = vmatprep.subr.mxu0 0.0
        %5711 = vmatpush1.msra.mxu0 0.0
        %5712 = vmatprep.subr.mxu0 0.0
        %5713 = vmatpush1.msra.mxu0 0.0
        %5714 = vmatprep.subr.mxu0 0.0
        %5715 = vmatpush1.msra.mxu0 0.0
        %5716 = vmatprep.subr.mxu0 0.0
        %5717 = vmatpush1.msra.mxu0 0.0
        %5718 = vmatprep.subr.mxu0 0.0
        %5719 = vmatpush1.msra.mxu0 0.0
        %5720 = vmatprep.subr.mxu0 0.0
        %5721 = vmatpush1.msra.mxu0 0.0
        %5722 = vmatprep.subr.mxu0 0.0
        %5723 = vmatpush1.msra.mxu0 0.0
        %5724 = vmatprep.mubr.f32.mxu0 0.0
        %v5725 = vand.u32 %v5559, 4294901760
        %5726 = vmatmul.mubr.f32.gmra.mrb[0].mxu0 %v5725
        %v5727 = vpop.f32.mrb[0].mxu0
        %v5728 = vadd.f32 %v5637, %v5727
        %v5729 = vpop.f32.mrb[0].mxu0
        %5730 = vdwg.mxu0
        %5731 = vmatprep.subr.mxu0 0.0
        %v5732 = vand.u32 %v5546, 4294901760
        %v5733 = vsub.f32 %v5546, %v5732
        %5734 = vmatpush1.msra.mxu0 %v5733
        %5735 = vmatprep.subr.mxu0 0.0
        %v5736 = vand.u32 %v5547, 4294901760
        %v5737 = vsub.f32 %v5547, %v5736
        %5738 = vmatpush1.msra.mxu0 %v5737
        %5739 = vmatprep.subr.mxu0 0.0
        %v5740 = vand.u32 %v5548, 4294901760
        %v5741 = vsub.f32 %v5548, %v5740
        %5742 = vmatpush1.msra.mxu0 %v5741
        %5743 = vmatprep.subr.mxu0 0.0
        %v5744 = vand.u32 %v5549, 4294901760
        %v5745 = vsub.f32 %v5549, %v5744
        %5746 = vmatpush1.msra.mxu0 %v5745
        %5747 = vmatprep.subr.mxu0 0.0
        %5748 = vmatpush1.msra.mxu0 0.0
        %5749 = vmatprep.subr.mxu0 0.0
        %5750 = vmatpush1.msra.mxu0 0.0
        %5751 = vmatprep.subr.mxu0 0.0
        %5752 = vmatpush1.msra.mxu0 0.0
        %5753 = vmatprep.subr.mxu0 0.0
        %5754 = vmatpush1.msra.mxu0 0.0
        %5755 = vmatprep.subr.mxu0 0.0
        %5756 = vmatpush1.msra.mxu0 0.0
        %5757 = vmatprep.subr.mxu0 0.0
        %5758 = vmatpush1.msra.mxu0 0.0
        %5759 = vmatprep.subr.mxu0 0.0
        %5760 = vmatpush1.msra.mxu0 0.0
        %5761 = vmatprep.subr.mxu0 0.0
        %5762 = vmatpush1.msra.mxu0 0.0
        %5763 = vmatprep.subr.mxu0 0.0
        %5764 = vmatpush1.msra.mxu0 0.0
        %5765 = vmatprep.subr.mxu0 0.0
        %5766 = vmatpush1.msra.mxu0 0.0
        %5767 = vmatprep.subr.mxu0 0.0
        %5768 = vmatpush1.msra.mxu0 0.0
        %5769 = vmatprep.subr.mxu0 0.0
        %5770 = vmatpush1.msra.mxu0 0.0
        %5771 = vmatprep.subr.mxu0 0.0
        %5772 = vmatpush1.msra.mxu0 0.0
        %5773 = vmatprep.subr.mxu0 0.0
        %5774 = vmatpush1.msra.mxu0 0.0
        %5775 = vmatprep.subr.mxu0 0.0
        %5776 = vmatpush1.msra.mxu0 0.0
        %5777 = vmatprep.subr.mxu0 0.0
        %5778 = vmatpush1.msra.mxu0 0.0
        %5779 = vmatprep.subr.mxu0 0.0
        %5780 = vmatpush1.msra.mxu0 0.0
        %5781 = vmatprep.subr.mxu0 0.0
        %5782 = vmatpush1.msra.mxu0 0.0
        %5783 = vmatprep.subr.mxu0 0.0
        %5784 = vmatpush1.msra.mxu0 0.0
        %5785 = vmatprep.subr.mxu0 0.0
        %5786 = vmatpush1.msra.mxu0 0.0
        %5787 = vmatprep.subr.mxu0 0.0
        %5788 = vmatpush1.msra.mxu0 0.0
        %5789 = vmatprep.subr.mxu0 0.0
        %5790 = vmatpush1.msra.mxu0 0.0
        %5791 = vmatprep.subr.mxu0 0.0
        %5792 = vmatpush1.msra.mxu0 0.0
        %5793 = vmatprep.subr.mxu0 0.0
        %5794 = vmatpush1.msra.mxu0 0.0
        %5795 = vmatprep.subr.mxu0 0.0
        %5796 = vmatpush1.msra.mxu0 0.0
        %5797 = vmatprep.subr.mxu0 0.0
        %5798 = vmatpush1.msra.mxu0 0.0
        %5799 = vmatprep.subr.mxu0 0.0
        %5800 = vmatpush1.msra.mxu0 0.0
        %5801 = vmatprep.subr.mxu0 0.0
        %5802 = vmatpush1.msra.mxu0 0.0
        %5803 = vmatprep.mubr.f32.mxu0 0.0
        %v5804 = vand.u32 %v5559, 4294901760
        %v5805 = vsub.f32 %v5559, %v5804
        %5806 = vmatmul.mubr.f32.gmra.mrb[0].mxu0 %v5805
        %v5807 = vpop.f32.mrb[0].mxu0
        %v5808 = vadd.f32 %v5728, %v5807
        %v5809 = vpop.f32.mrb[0].mxu0
        %5810 = vdwg.mxu0
        %5811 = vmatprep.subr.mxu0 0.0
        %v5812 = vand.u32 %v5546, 4294901760
        %5813 = vmatpush1.msra.mxu0 %v5812
        %5814 = vmatprep.subr.mxu0 0.0
        %v5815 = vand.u32 %v5547, 4294901760
        %5816 = vmatpush1.msra.mxu0 %v5815
        %5817 = vmatprep.subr.mxu0 0.0
        %v5818 = vand.u32 %v5548, 4294901760
        %5819 = vmatpush1.msra.mxu0 %v5818
        %5820 = vmatprep.subr.mxu0 0.0
        %v5821 = vand.u32 %v5549, 4294901760
        %5822 = vmatpush1.msra.mxu0 %v5821
        %5823 = vmatprep.subr.mxu0 0.0
        %5824 = vmatpush1.msra.mxu0 0.0
        %5825 = vmatprep.subr.mxu0 0.0
        %5826 = vmatpush1.msra.mxu0 0.0
        %5827 = vmatprep.subr.mxu0 0.0
        %5828 = vmatpush1.msra.mxu0 0.0
        %5829 = vmatprep.subr.mxu0 0.0
        %5830 = vmatpush1.msra.mxu0 0.0
        %5831 = vmatprep.subr.mxu0 0.0
        %5832 = vmatpush1.msra.mxu0 0.0
        %5833 = vmatprep.subr.mxu0 0.0
        %5834 = vmatpush1.msra.mxu0 0.0
        %5835 = vmatprep.subr.mxu0 0.0
        %5836 = vmatpush1.msra.mxu0 0.0
        %5837 = vmatprep.subr.mxu0 0.0
        %5838 = vmatpush1.msra.mxu0 0.0
        %5839 = vmatprep.subr.mxu0 0.0
        %5840 = vmatpush1.msra.mxu0 0.0
        %5841 = vmatprep.subr.mxu0 0.0
        %5842 = vmatpush1.msra.mxu0 0.0
        %5843 = vmatprep.subr.mxu0 0.0
        %5844 = vmatpush1.msra.mxu0 0.0
        %5845 = vmatprep.subr.mxu0 0.0
        %5846 = vmatpush1.msra.mxu0 0.0
        %5847 = vmatprep.subr.mxu0 0.0
        %5848 = vmatpush1.msra.mxu0 0.0
        %5849 = vmatprep.subr.mxu0 0.0
        %5850 = vmatpush1.msra.mxu0 0.0
        %5851 = vmatprep.subr.mxu0 0.0
        %5852 = vmatpush1.msra.mxu0 0.0
        %5853 = vmatprep.subr.mxu0 0.0
        %5854 = vmatpush1.msra.mxu0 0.0
        %5855 = vmatprep.subr.mxu0 0.0
        %5856 = vmatpush1.msra.mxu0 0.0
        %5857 = vmatprep.subr.mxu0 0.0
        %5858 = vmatpush1.msra.mxu0 0.0
        %5859 = vmatprep.subr.mxu0 0.0
        %5860 = vmatpush1.msra.mxu0 0.0
        %5861 = vmatprep.subr.mxu0 0.0
        %5862 = vmatpush1.msra.mxu0 0.0
        %5863 = vmatprep.subr.mxu0 0.0
        %5864 = vmatpush1.msra.mxu0 0.0
        %5865 = vmatprep.subr.mxu0 0.0
        %5866 = vmatpush1.msra.mxu0 0.0
        %5867 = vmatprep.subr.mxu0 0.0
        %5868 = vmatpush1.msra.mxu0 0.0
        %5869 = vmatprep.subr.mxu0 0.0
        %5870 = vmatpush1.msra.mxu0 0.0
        %5871 = vmatprep.subr.mxu0 0.0
        %5872 = vmatpush1.msra.mxu0 0.0
        %5873 = vmatprep.subr.mxu0 0.0
        %5874 = vmatpush1.msra.mxu0 0.0
        %5875 = vmatprep.subr.mxu0 0.0
        %5876 = vmatpush1.msra.mxu0 0.0
        %5877 = vmatprep.subr.mxu0 0.0
        %5878 = vmatpush1.msra.mxu0 0.0
        %5879 = vmatprep.mubr.f32.mxu0 0.0
        %v5880 = vand.u32 %v5559, 4294901760
        %v5881 = vsub.f32 %v5559, %v5880
        %v5882 = vand.u32 %v5881, 4294901760
        %5883 = vmatmul.mubr.f32.gmra.mrb[0].mxu0 %v5882
        %v5884 = vpop.f32.mrb[0].mxu0
        %v5885 = vadd.f32 %v5808, %v5884
        %v5886 = vpop.f32.mrb[0].mxu0
        %5887 = vdwg.mxu0
        %5888 = vmatprep.subr.mxu0 0.0
        %v5889 = vand.u32 %v5546, 4294901760
        %v5890 = vsub.f32 %v5546, %v5889
        %v5891 = vand.u32 %v5890, 4294901760
        %5892 = vmatpush1.msra.mxu0 %v5891
        %5893 = vmatprep.subr.mxu0 0.0
        %v5894 = vand.u32 %v5547, 4294901760
        %v5895 = vsub.f32 %v5547, %v5894
        %v5896 = vand.u32 %v5895, 4294901760
        %5897 = vmatpush1.msra.mxu0 %v5896
        %5898 = vmatprep.subr.mxu0 0.0
        %v5899 = vand.u32 %v5548, 4294901760
        %v5900 = vsub.f32 %v5548, %v5899
        %v5901 = vand.u32 %v5900, 4294901760
        %5902 = vmatpush1.msra.mxu0 %v5901
        %5903 = vmatprep.subr.mxu0 0.0
        %v5904 = vand.u32 %v5549, 4294901760
        %v5905 = vsub.f32 %v5549, %v5904
        %v5906 = vand.u32 %v5905, 4294901760
        %5907 = vmatpush1.msra.mxu0 %v5906
        %5908 = vmatprep.subr.mxu0 0.0
        %5909 = vmatpush1.msra.mxu0 0.0
        %5910 = vmatprep.subr.mxu0 0.0
        %5911 = vmatpush1.msra.mxu0 0.0
        %5912 = vmatprep.subr.mxu0 0.0
        %5913 = vmatpush1.msra.mxu0 0.0
        %5914 = vmatprep.subr.mxu0 0.0
        %5915 = vmatpush1.msra.mxu0 0.0
        %5916 = vmatprep.subr.mxu0 0.0
        %5917 = vmatpush1.msra.mxu0 0.0
        %5918 = vmatprep.subr.mxu0 0.0
        %5919 = vmatpush1.msra.mxu0 0.0
        %5920 = vmatprep.subr.mxu0 0.0
        %5921 = vmatpush1.msra.mxu0 0.0
        %5922 = vmatprep.subr.mxu0 0.0
        %5923 = vmatpush1.msra.mxu0 0.0
        %5924 = vmatprep.subr.mxu0 0.0
        %5925 = vmatpush1.msra.mxu0 0.0
        %5926 = vmatprep.subr.mxu0 0.0
        %5927 = vmatpush1.msra.mxu0 0.0
        %5928 = vmatprep.subr.mxu0 0.0
        %5929 = vmatpush1.msra.mxu0 0.0
        %5930 = vmatprep.subr.mxu0 0.0
        %5931 = vmatpush1.msra.mxu0 0.0
        %5932 = vmatprep.subr.mxu0 0.0
        %5933 = vmatpush1.msra.mxu0 0.0
        %5934 = vmatprep.subr.mxu0 0.0
        %5935 = vmatpush1.msra.mxu0 0.0
        %5936 = vmatprep.subr.mxu0 0.0
        %5937 = vmatpush1.msra.mxu0 0.0
        %5938 = vmatprep.subr.mxu0 0.0
        %5939 = vmatpush1.msra.mxu0 0.0
        %5940 = vmatprep.subr.mxu0 0.0
        %5941 = vmatpush1.msra.mxu0 0.0
        %5942 = vmatprep.subr.mxu0 0.0
        %5943 = vmatpush1.msra.mxu0 0.0
        %5944 = vmatprep.subr.mxu0 0.0
        %5945 = vmatpush1.msra.mxu0 0.0
        %5946 = vmatprep.subr.mxu0 0.0
        %5947 = vmatpush1.msra.mxu0 0.0
        %5948 = vmatprep.subr.mxu0 0.0
        %5949 = vmatpush1.msra.mxu0 0.0
        %5950 = vmatprep.subr.mxu0 0.0
        %5951 = vmatpush1.msra.mxu0 0.0
        %5952 = vmatprep.subr.mxu0 0.0
        %5953 = vmatpush1.msra.mxu0 0.0
        %5954 = vmatprep.subr.mxu0 0.0
        %5955 = vmatpush1.msra.mxu0 0.0
        %5956 = vmatprep.subr.mxu0 0.0
        %5957 = vmatpush1.msra.mxu0 0.0
        %5958 = vmatprep.subr.mxu0 0.0
        %5959 = vmatpush1.msra.mxu0 0.0
        %5960 = vmatprep.subr.mxu0 0.0
        %5961 = vmatpush1.msra.mxu0 0.0
        %5962 = vmatprep.subr.mxu0 0.0
        %5963 = vmatpush1.msra.mxu0 0.0
        %5964 = vmatprep.mubr.f32.mxu0 0.0
        %v5965 = vand.u32 %v5559, 4294901760
        %5966 = vmatmul.mubr.f32.gmra.mrb[0].mxu0 %v5965
        %v5967 = vpop.f32.mrb[0].mxu0
        %v5968 = vadd.f32 %v5885, %v5967
        %v5969 = vpop.f32.mrb[0].mxu0
        %5970 = vdwg.mxu0
        %5971 = vmatprep.subr.mxu0 0.0
        %v5972 = vand.u32 %v5546, 4294901760
        %5973 = vmatpush1.msra.mxu0 %v5972
        %5974 = vmatprep.subr.mxu0 0.0
        %v5975 = vand.u32 %v5547, 4294901760
        %5976 = vmatpush1.msra.mxu0 %v5975
        %5977 = vmatprep.subr.mxu0 0.0
        %v5978 = vand.u32 %v5548, 4294901760
        %5979 = vmatpush1.msra.mxu0 %v5978
        %5980 = vmatprep.subr.mxu0 0.0
        %v5981 = vand.u32 %v5549, 4294901760
        %5982 = vmatpush1.msra.mxu0 %v5981
        %5983 = vmatprep.subr.mxu0 0.0
        %5984 = vmatpush1.msra.mxu0 0.0
        %5985 = vmatprep.subr.mxu0 0.0
        %5986 = vmatpush1.msra.mxu0 0.0
        %5987 = vmatprep.subr.mxu0 0.0
        %5988 = vmatpush1.msra.mxu0 0.0
        %5989 = vmatprep.subr.mxu0 0.0
        %5990 = vmatpush1.msra.mxu0 0.0
        %5991 = vmatprep.subr.mxu0 0.0
        %5992 = vmatpush1.msra.mxu0 0.0
        %5993 = vmatprep.subr.mxu0 0.0
        %5994 = vmatpush1.msra.mxu0 0.0
        %5995 = vmatprep.subr.mxu0 0.0
        %5996 = vmatpush1.msra.mxu0 0.0
        %5997 = vmatprep.subr.mxu0 0.0
        %5998 = vmatpush1.msra.mxu0 0.0
        %5999 = vmatprep.subr.mxu0 0.0
        %6000 = vmatpush1.msra.mxu0 0.0
        %6001 = vmatprep.subr.mxu0 0.0
        %6002 = vmatpush1.msra.mxu0 0.0
        %6003 = vmatprep.subr.mxu0 0.0
        %6004 = vmatpush1.msra.mxu0 0.0
        %6005 = vmatprep.subr.mxu0 0.0
        %6006 = vmatpush1.msra.mxu0 0.0
        %6007 = vmatprep.subr.mxu0 0.0
        %6008 = vmatpush1.msra.mxu0 0.0
        %6009 = vmatprep.subr.mxu0 0.0
        %6010 = vmatpush1.msra.mxu0 0.0
        %6011 = vmatprep.subr.mxu0 0.0
        %6012 = vmatpush1.msra.mxu0 0.0
        %6013 = vmatprep.subr.mxu0 0.0
        %6014 = vmatpush1.msra.mxu0 0.0
        %6015 = vmatprep.subr.mxu0 0.0
        %6016 = vmatpush1.msra.mxu0 0.0
        %6017 = vmatprep.subr.mxu0 0.0
        %6018 = vmatpush1.msra.mxu0 0.0
        %6019 = vmatprep.subr.mxu0 0.0
        %6020 = vmatpush1.msra.mxu0 0.0
        %6021 = vmatprep.subr.mxu0 0.0
        %6022 = vmatpush1.msra.mxu0 0.0
        %6023 = vmatprep.subr.mxu0 0.0
        %6024 = vmatpush1.msra.mxu0 0.0
        %6025 = vmatprep.subr.mxu0 0.0
        %6026 = vmatpush1.msra.mxu0 0.0
        %6027 = vmatprep.subr.mxu0 0.0
        %6028 = vmatpush1.msra.mxu0 0.0
        %6029 = vmatprep.subr.mxu0 0.0
        %6030 = vmatpush1.msra.mxu0 0.0
        %6031 = vmatprep.subr.mxu0 0.0
        %6032 = vmatpush1.msra.mxu0 0.0
        %6033 = vmatprep.subr.mxu0 0.0
        %6034 = vmatpush1.msra.mxu0 0.0
        %6035 = vmatprep.subr.mxu0 0.0
        %6036 = vmatpush1.msra.mxu0 0.0
        %6037 = vmatprep.subr.mxu0 0.0
        %6038 = vmatpush1.msra.mxu0 0.0
        %6039 = vmatprep.mubr.f32.mxu0 0.0
        %v6040 = vand.u32 %v5559, 4294901760
        %6041 = vmatmul.mubr.f32.gmra.mrb[0].mxu0 %v6040
        %v6042 = vpop.f32.mrb[0].mxu0
        %v6043 = vadd.f32 %v5968, %v6042
        %v6044 = vpop.f32.mrb[0].mxu0
        %6045 = vdwg.mxu0
        %v6046 = vadd.f32 %v6043, %v5042
        %v6047 = vsel %vm1095, %v6046, 0.0
        %6048 = vadd.xlane.f32.xlu0 %v6047
        %v6049 = vpop.xlane.xlu0 %6048
        %v6050 = vrot.slane %v6049, 4
        %v6051 = vadd.f32 %v6049, %v6050
        %v6052 = vrot.slane %v6051, 2
        %v6053 = vadd.f32 %v6051, %v6052
        %v6054 = vrot.slane %v6053, 1
        %v6055 = vadd.f32 %v6053, %v6054
        %s6056 = vtos %v6055
        %v6057 = vrcp.pop 256.0
        %s6058 = vtos %v6057
        %s6059 = smul.f32 %s6056, %s6058
        %v6060 = vmul.f32 %v6046, %v6046
        %v6061 = vsel %vm1095, %v6060, 0.0
        %6062 = vadd.xlane.f32.xlu0 %v6061
        %v6063 = vpop.xlane.xlu0 %6062
        %v6064 = vrot.slane %v6063, 4
        %v6065 = vadd.f32 %v6063, %v6064
        %v6066 = vrot.slane %v6065, 2
        %v6067 = vadd.f32 %v6065, %v6066
        %v6068 = vrot.slane %v6067, 1
        %v6069 = vadd.f32 %v6067, %v6068
        %s6070 = vtos %v6069
        %v6071 = vrcp.pop 256.0
        %s6072 = vtos %v6071
        %s6073 = smul.f32 %s6070, %s6072
        %s6074 = smul.f32 %s6059, %s6059
        %s6075 = ssub.f32 %s6073, %s6074
        %s6076 = scalar_lea.vmem %s10, 8
        %v6077 = vld [vmem:[%s6076] sm:$0xff]
        %v6078 = vstv %s6059
        %v6079 = vsub.f32 %v6046, %v6078
        %s6080 = sadd.f32 %s6075, 1e-08
        %v6081 = vstv %s6080
        %v6082 = vrsqrt.pop %v6081
        %s6083 = vtos %v6082
        %v6084 = vstv %s6083
        %v6085 = vmul.f32 %v6079, %v6084
        %v6086 = vmul.f32 %v6077, %v6085
        %s6087 = scalar_lea.vmem %s11, 8
        %v6088 = vld [vmem:[%s6087] sm:$0xff]
        %v6089 = vadd.f32 %v6086, %v6088
        %v6090 = vsel %vm1095, %v6089, 0.0
        %v6091 = vrot.slane %v6090, 4
        %v6092 = vadd.f32 %v6090, %v6091
        %v6093 = vrot.slane %v6092, 2
        %v6094 = vadd.f32 %v6092, %v6093
        %v6095 = vrot.slane %v6094, 1
        %v6096 = vadd.f32 %v6094, %v6095
        %v6097 = vld [vmem:[%s12] sm:$0x1]
        %v6098 = vmul.f32 %v6096, %v6097
        %vm6099 = vcmask 253952
        %v6100 = vsel %vm6099, %v6098, 0.0
        %6101 = vadd.xlane.f32.xlu0 %v6100
        %v6102 = vpop.xlane.xlu0 %6101
        %v6103 = vld [vmem:[#allocation4] sm:$0x1]
        %v6104 = vadd.f32 %v6102, %v6103
        %6106 = vset.pattern.permute.xlu0 0
        %6107 = vperm.xlu0 %6106, %v6104
        %v6108 = vpop.permute.xlu0 %6107
        %6110 = vst [vmem:[%s497] sm:$0x1] %v6108
        %s6111 = sand.u32 %s318, 1
        %s6112 = scalar_lea.sflag [#allocation7], %s6111
        %s6113 = sand.u32 %s318, 1
        %s6114 = scalar_lea.vmem [#allocation14], %s6113
        // Predicated region
        $region93: #{tpu_custom_call.1} parent=71 // pred_check
          %p6115 = pneg %p328
        $region94: #{tpu_custom_call.1} parent=71 // pred_check_branch
          %6117 = sbr.rel (%p6115) target = $region96
        $region95: #{tpu_custom_call.1} parent=71 // pred_region
          %s6119 = ssub.s32 16, 16
          %6120 = vsyncadd %s6112, %s6119
          %s6121 = smul.addr %s37, 16
          %s6122 = scalar_lea.hbm %s14, %s6121
          %s6124 = sshll.u32 %s6114, 4
          %s6125 = int_to_ptr.vmem [resolvable:$true] %s6124
          %6127 = dma.vmem_to_hbm [thread:$0]  %s6125, 16, %s6122, %s6112
        $region96: #{tpu_custom_call.1} parent=71 // pred_fallthru
          _
      $region72: #{tpu_custom_call.1} parent=5 // pred_fallthru
        _
      %p6128 = scmp.le.s32.totalorder 2, %s32
      // Predicated region
      $region97: #{tpu_custom_call.1} parent=5 // pred_check
        %p6129 = pneg %p6128
      $region98: #{tpu_custom_call.1} parent=5 // pred_check_branch
        %6131 = sbr.rel (%p6129) target = $region100
      $region99: #{tpu_custom_call.1} parent=5 // pred_region
        %s6132 = ssub.s32 %s32, 2
        // Predicated region
        $region101: #{tpu_custom_call.1} parent=99 // pred_check
          %p6133 = pneg %p334
        $region102: #{tpu_custom_call.1} parent=99 // pred_check_branch
          %6135 = sbr.rel (%p6133) target = $region104
        $region103: #{tpu_custom_call.1} parent=99 // pred_region
          %s6136 = sand.u32 %s319, 1
          %s6137 = scalar_lea.sflag [#allocation7], %s6136
          %s6138 = sand.u32 %s319, 1
          %s6139 = scalar_lea.vmem [#allocation14], %s6138
          %6140 = dma.done %s6137, 16
        $region104: #{tpu_custom_call.1} parent=99 // pred_fallthru
          _
      $region100: #{tpu_custom_call.1} parent=5 // pred_fallthru
        _
    $region6: #{tpu_custom_call.1} parent=1 // loop_footer
      %s36 = sadd.s32 1, %s32
    $region7: #{tpu_custom_call.1} parent=1 // loop_footer_branch
      %31 = sbr.rel target = $region3
    $region8: #{tpu_custom_call.1} parent=1 // loop_exit
      _
    %6141 = vsyncpa [#allocation6], 1
    %s6142 = scalar_lea.sflag [#allocation6], 1
    %6143 = vsyncpa %s6142, 1
    %6144 = vsyncpa [#allocation9], 1
    %6145 = vsyncpa [#allocation12], 1
    %6146 = vsyncpa [#allocation7], 1
    %s6147 = scalar_lea.sflag [#allocation7], 1
    %6148 = vsyncpa %s6147, 1

</llo_original>
